<compile_context>
chip_gen: v5e
topology: v5e:2x2
jax: 0.10.0
libtpu: 0.0.40
codegen_flags: <defaults>
</compile_context>

<pallas_src>
import jax
import jax.numpy as jnp
from jax.experimental import pallas as pl
from jax.experimental.pallas import tpu as pltpu

_GN_EPS = 1e-5  # nn.GroupNorm default eps


def _make_combiner_kernel(H, W, dim, branch_dims, out_offsets, aligned):
    """Kernel body for fixed static sizes.

    branch_dims: [(C_in, C_out), ...]
    out_offsets: output-channel offset of each branch in the fused output
    aligned:     True iff dim and every C_out are multiples of 128 (direct slice stores)
    """
    n_br = len(branch_dims)
    HW = H * W

    def kernel(*refs):
        # refs: x_ref, fmap_refs[n], w_refs[n], b_refs[n], gamma_refs[n], beta_refs[n],
        #       proj_refs[n], o_ref, pad_ref (VMEM scratch)
        x_ref = refs[0]
        fmap_refs = refs[1:1 + n_br]
        w_refs = refs[1 + n_br:1 + 2 * n_br]
        b_refs = refs[1 + 2 * n_br:1 + 3 * n_br]
        gamma_refs = refs[1 + 3 * n_br:1 + 4 * n_br]
        beta_refs = refs[1 + 4 * n_br:1 + 5 * n_br]
        proj_refs = refs[1 + 5 * n_br:1 + 6 * n_br]
        o_ref = refs[1 + 6 * n_br]
        pad_ref = refs[2 + 6 * n_br]

        Cpad = pad_ref.shape[-1]
        zdt = pad_ref.dtype

        # Zero only the 1-pixel border of the conv scratch; the interior channels 0:C
        # are fully overwritten by every branch before being read.  Per grid step on
        # purpose (do NOT gate on program_id==0 while the batch axis is "parallel":
        # each megacore TC has its own scratch and must init its own border).
        pad_ref[0:1, :, :] = jnp.zeros((1, W + 2, Cpad), zdt)
        pad_ref[H + 1:H + 2, :, :] = jnp.zeros((1, W + 2, Cpad), zdt)
        pad_ref[1:H + 1, 0:1, :] = jnp.zeros((H, 1, Cpad), zdt)
        pad_ref[1:H + 1, W + 1:W + 2, :] = jnp.zeros((H, 1, Cpad), zdt)

        if aligned:
            # 128-aligned channel slices -> unmasked direct stores, nothing held live.
            o_ref[0, :, 0:dim] = x_ref[0].astype(o_ref.dtype)

        pieces = []

        for br, (C, C_out) in enumerate(branch_dims):
            f = fmap_refs[br][0].astype(jnp.float32)                 # (HW, C)

            # ---- GroupNorm(groups, C): stats via precomputed block-diag projector ----
            # proj = same_group / (HW * C_per_group), built once in the wrapper.
            proj = proj_refs[br][...]                                 # (C, C) f32
            mean = jnp.dot(jnp.sum(f, axis=0, keepdims=True), proj,
                           preferred_element_type=jnp.float32)        # (1, C)
            cen = f - mean
            var = jnp.dot(jnp.sum(cen * cen, axis=0, keepdims=True), proj,
                          preferred_element_type=jnp.float32)          # (1, C)
            y = cen * jax.lax.rsqrt(var + _GN_EPS)
            y = y * gamma_refs[br][...] + beta_refs[br][...]           # affine

            # ---- SiLU (EUP) ----
            y = y * jax.nn.sigmoid(y)

            # ---- Conv2d(C, C_out, 3, padding=1): 9 accumulated shifted-slab matmuls ----
            # One write of the activated map into the padded scratch, then each of the
            # 9 taps is a (HW,C)x(C,C_out) MXU matmul accumulated in f32.  No im2col
            # patch is ever materialized.
            pad_ref[1:H + 1, 1:W + 1, 0:C] = y.reshape(H, W, C).astype(zdt)
            acc = None
            for t in range(9):
                di, dj = divmod(t, 3)
                slab = pad_ref[di:di + H, dj:dj + W, 0:C].reshape(HW, C)
                part = jnp.dot(slab, w_refs[br][t],
                               preferred_element_type=jnp.float32)     # (HW, C_out)
                acc = part if acc is None else acc + part
            acc = acc + b_refs[br][...]                                 # bias once

            if aligned:
                off = out_offsets[br]
                o_ref[0, :, off:off + C_out] = acc.astype(o_ref.dtype)
            else:
                pieces.append(acc.astype(o_ref.dtype))

        if not aligned:
            # Unaligned channel widths: a single lane-dense store of the fused concat is
            # cheaper than many masked partial stores.  x is read only here, so it is
            # not held live across the branch loop.
            o_ref[0] = jnp.concatenate([x_ref[0].astype(o_ref.dtype)] + pieces, axis=-1)

    return kernel


def _resize_nearest_nchw(x, Ht, Wt):
    """F.interpolate(x, size=(Ht, Wt), mode='nearest') for NCHW (src = floor(dst*in/out))."""
    N, C, H, W = x.shape
    if (H, W) == (Ht, Wt):
        return x
    hi = (jnp.arange(Ht) * H) // Ht
    wi = (jnp.arange(Wt) * W) // Wt
    return x[:, :, hi, :][:, :, :, wi]


def _nbytes(shape, dtype):
    n = 1
    for s in shape:
        n *= int(s)
    return n * jnp.dtype(dtype).itemsize


def upsample_combiner(x_nchw, fmaps_nchw, params, *, groups=8, enabled=True,
                      compute_dtype=None, mxu_bf16=True):
    """Forward of UpsampleCombiner.

    x_nchw:      (N, dim, H, W)
    fmaps_nchw:  sequence of (N, C_i, h_i, w_i)
    params:      per fmap (conv_w HWIO (3,3,C_i,Cout_i), conv_b (Cout_i,),
                           gn_gamma (C_i,), gn_beta (C_i,))
    compute_dtype: optional activation/output dtype (e.g. bf16) for halved HBM traffic.
    mxu_bf16:    use bf16 conv-matmul operands with f32 accumulation (v6e/v7x native
                 MXU rate).  Set False for strict f32 parity with the PyTorch module.
    Returns (N, dim + sum(Cout_i), H, W); returns x unchanged when disabled / no fmaps.
    """
    if not enabled or len(fmaps_nchw) == 0 or len(params) == 0:
        return x_nchw
    assert len(fmaps_nchw) == len(params)
    N, dim, H, W = x_nchw.shape
    assert H == W, "module resizes fmaps to the square x.shape[-1]"
    target = W
    HW = H * W

    branch_dims = []
    for fmap, (w, b, g, bt) in zip(fmaps_nchw, params):
        C_in, C_out = w.shape[2], w.shape[3]
        assert w.shape[:2] == (3, 3) and fmap.shape[1] == C_in
        assert C_in % groups == 0, "GroupNorm requires C_in % groups == 0"
        branch_dims.append((C_in, C_out))
    C_total = dim + sum(co for _, co in branch_dims)
    C_max = max(ci for ci, _ in branch_dims)

    act_dtype = compute_dtype if compute_dtype is not None else x_nchw.dtype
    out_dtype = act_dtype
    conv_dtype = (jnp.bfloat16 if mxu_bf16
                  else (compute_dtype if compute_dtype is not None else jnp.float32))

    # Output channel offsets and 128-lane alignment of every concat slice.
    out_offsets, off = [], dim
    for _, co in branch_dims:
        out_offsets.append(off)
        off += co
    aligned = (dim % 128 == 0) and all(co % 128 == 0 for _, co in branch_dims)

    def to_lanes(a):  # NCHW -> (N, H*W, C): channels on the lane axis
        return jnp.transpose(a, (0, 2, 3, 1)).reshape(a.shape[0], -1, a.shape[1])

    x_flat = to_lanes(x_nchw).astype(act_dtype)
    fmaps_flat, ws, bs, gs, bts, projs = [], [], [], [], [], []
    for fmap, (w, b, g, bt), (ci, co) in zip(fmaps_nchw, params, branch_dims):
        fmaps_flat.append(to_lanes(_resize_nearest_nchw(fmap, target, target))
                          .astype(act_dtype))
        ws.append(w.reshape(9, ci, co).astype(conv_dtype))     # per-tap (C_in, C_out)
        bs.append(b.reshape(1, co).astype(jnp.float32))
        gs.append(g.reshape(1, ci).astype(jnp.float32))
        bts.append(bt.reshape(1, ci).astype(jnp.float32))
        # Block-diagonal group projector with 1/(HW * C_per_group) folded in.
        idx = jnp.arange(ci)
        same = (idx[:, None] // (ci // groups) == idx[None, :] // (ci // groups))
        projs.append(same.astype(jnp.float32) / float(HW * (ci // groups)))

    kernel = _make_combiner_kernel(H, W, dim, branch_dims, out_offsets, aligned)

    in_specs = [pl.BlockSpec((1, HW, dim), lambda n: (n, 0, 0))]
    in_specs += [pl.BlockSpec((1, HW, ci), lambda n: (n, 0, 0)) for ci, _ in branch_dims]
    in_specs += [pl.BlockSpec((9, ci, co), lambda n: (0, 0, 0)) for ci, co in branch_dims]
    in_specs += [pl.BlockSpec((1, co), lambda n: (0, 0)) for _, co in branch_dims]
    in_specs += [pl.BlockSpec((1, ci), lambda n: (0, 0)) for ci, _ in branch_dims]
    in_specs += [pl.BlockSpec((1, ci), lambda n: (0, 0)) for ci, _ in branch_dims]
    in_specs += [pl.BlockSpec((ci, ci), lambda n: (0, 0)) for ci, _ in branch_dims]

    # Per-step VMEM footprint (x2 for double buffering of the pipelined blocks) + pad
    # scratch + headroom; cap below v7x's 64 MiB physical VMEM, floor at the default.
    in_bytes = _nbytes((HW, dim), act_dtype)
    in_bytes += sum(_nbytes((HW, ci), act_dtype) for ci, _ in branch_dims)
    in_bytes += sum(_nbytes((9, ci, co), conv_dtype) for ci, co in branch_dims)
    in_bytes += sum(_nbytes((1, co), jnp.float32) + 2 * _nbytes((1, ci), jnp.float32)
                    + _nbytes((ci, ci), jnp.float32) for ci, co in branch_dims)
    out_bytes = _nbytes((HW, C_total), out_dtype)
    pad_bytes = _nbytes((H + 2, W + 2, C_max), conv_dtype)
    needed = 2 * (in_bytes + out_bytes) + pad_bytes + (4 << 20)
    vmem_limit = int(min(max(needed, 32 << 20), 48 << 20))

    out_flat = pl.pallas_call(
        kernel,
        out_shape=jax.ShapeDtypeStruct((N, HW, C_total), out_dtype),
        grid=(N,),
        in_specs=in_specs,
        out_specs=pl.BlockSpec((1, HW, C_total), lambda n: (n, 0, 0)),
        scratch_shapes=[pltpu.VMEM((H + 2, W + 2, C_max), conv_dtype)],
        compiler_params=pltpu.CompilerParams(
            dimension_semantics=("parallel",),       # v7x: shard batch across both TCs
            vmem_limit_bytes=vmem_limit,
        ),
    )(x_flat, *fmaps_flat, *ws, *bs, *gs, *bts, *projs)

    out = out_flat.reshape(N, H, W, C_total)
    return jnp.transpose(out, (0, 3, 1, 2))


def reference_upsample_combiner(x, fmaps, params, groups=8):
    """Pure-XLA reference matching the PyTorch module."""
    target = x.shape[-1]
    outs = [x]
    for fmap, (w, b, gamma, beta) in zip(fmaps, params):
        f = _resize_nearest_nchw(fmap, target, target)
        Nb, C, H, W = f.shape
        fg = f.reshape(Nb, groups, C // groups, H, W)
        m = jnp.mean(fg, axis=(2, 3, 4), keepdims=True)
        v = jnp.mean((fg - m) ** 2, axis=(2, 3, 4), keepdims=True)
        y = ((fg - m) * jax.lax.rsqrt(v + _GN_EPS)).reshape(Nb, C, H, W)
        y = y * gamma.reshape(1, -1, 1, 1) + beta.reshape(1, -1, 1, 1)
        y = y * jax.nn.sigmoid(y)  # SiLU
        o = jax.lax.conv_general_dilated(
            y, w, window_strides=(1, 1), padding=((1, 1), (1, 1)),
            dimension_numbers=("NCHW", "HWIO", "NCHW"))
        outs.append(o + b.reshape(1, -1, 1, 1))
    return jnp.concatenate(outs, axis=1)


if __name__ == "__main__":
    key = jax.random.PRNGKey(0)
    ks = jax.random.split(key, 8)

    # Small shapes consistent with the module: x is the finest feature map; the fmaps
    # come from coarser UNet levels and are nearest-resized up to x's resolution.
    N, dim, H, W = 2, 8, 16, 16
    dim_ins = (8, 16)          # must be divisible by GroupNorm groups (8)
    dim_outs = (8, 8)
    groups = 8

    x = jax.random.normal(ks[0], (N, dim, H, W), jnp.float32)
    fmaps = [
        jax.random.normal(ks[1], (N, dim_ins[0], 8, 8), jnp.float32),
        jax.random.normal(ks[2], (N, dim_ins[1], 4, 4), jnp.float32),
    ]

    params = []
    for i, (ci, co) in enumerate(zip(dim_ins, dim_outs)):
        kw_, kb_, kg_, kt_ = jax.random.split(ks[3 + i], 4)
        bound = 1.0 / (9 * ci) ** 0.5
        w = jax.random.uniform(kw_, (3, 3, ci, co), jnp.float32, -bound, bound)
        b = jax.random.uniform(kb_, (co,), jnp.float32, -bound, bound)
        gamma = 1.0 + 0.1 * jax.random.normal(kg_, (ci,), jnp.float32)
        beta = 0.1 * jax.random.normal(kt_, (ci,), jnp.float32)
        params.append((w, b, gamma, beta))

    ref = reference_upsample_combiner(x, fmaps, params, groups=groups)

    # Strict f32 parity (mxu_bf16=False): reduction-order differences only.
    out = upsample_combiner(x, fmaps, params, groups=groups, enabled=True,
                            mxu_bf16=False)
    out = jax.block_until_ready(out)
    assert out.shape == (N, dim + sum(dim_outs), H, W), out.shape
    err = float(jnp.max(jnp.abs(out - ref)))
    assert jnp.allclose(out, ref, atol=1e-4, rtol=1e-4), err

    # Default path: bf16 MXU operands with f32 accumulation (v6e/v7x native rate).
    out_mxu = upsample_combiner(x, fmaps, params, groups=groups, enabled=True)
    out_mxu = jax.block_until_ready(out_mxu)
    assert jnp.allclose(out_mxu, ref, atol=5e-2, rtol=5e-2)

    # bf16 activations/weights with f32 accumulation (halves HBM/VMEM traffic).
    out_bf16 = upsample_combiner(x, fmaps, params, groups=groups, enabled=True,
                                 compute_dtype=jnp.bfloat16)
    out_bf16 = jax.block_until_ready(out_bf16)
    assert jnp.allclose(out_bf16.astype(jnp.float32), ref, atol=5e-2, rtol=5e-2)

    # Disabled / no-fmaps paths return x unchanged (module semantics).
    assert upsample_combiner(x, (), (), enabled=False) is x
    assert upsample_combiner(x, (), (), enabled=True) is x

    print("KERNEL_OK")
</pallas_src>

<mosaic_0001>
module attributes {stable_mosaic.version = 11 : i64} {
  func.func @kernel(%arg0: i32, %arg1: memref<1x256x8xf32, #tpu.memory_space<vmem>>, %arg2: memref<1x256x8xf32, #tpu.memory_space<vmem>>, %arg3: memref<1x256x16xf32, #tpu.memory_space<vmem>>, %arg4: memref<9x8x8xf32, #tpu.memory_space<vmem>>, %arg5: memref<9x16x8xf32, #tpu.memory_space<vmem>>, %arg6: memref<1x8xf32, #tpu.memory_space<vmem>>, %arg7: memref<1x8xf32, #tpu.memory_space<vmem>>, %arg8: memref<1x8xf32, #tpu.memory_space<vmem>>, %arg9: memref<1x16xf32, #tpu.memory_space<vmem>>, %arg10: memref<1x8xf32, #tpu.memory_space<vmem>>, %arg11: memref<1x16xf32, #tpu.memory_space<vmem>>, %arg12: memref<8x8xf32, #tpu.memory_space<vmem>>, %arg13: memref<16x16xf32, #tpu.memory_space<vmem>>, %arg14: memref<1x256x24xf32, #tpu.memory_space<vmem>>, %arg15: memref<18x18x16xf32, #tpu.memory_space<vmem>>) attributes {dimension_semantics = [#tpu.dimension_semantics<parallel>], iteration_bounds = array<i64: 2>, scalar_prefetch = 0 : i64, scratch_operands = 1 : i64, tpu.core_type = #tpu.core_type<tc>, window_params = [{transform_indices = @transform_0, window_bounds = array<i64: 1, 256, 8>}, {transform_indices = @transform_1, window_bounds = array<i64: 1, 256, 8>}, {transform_indices = @transform_2, window_bounds = array<i64: 1, 256, 16>}, {pipeline_mode = #tpu.pipeline_mode<synchronous>, transform_indices = @transform_3, window_bounds = array<i64: 9, 8, 8>}, {pipeline_mode = #tpu.pipeline_mode<synchronous>, transform_indices = @transform_4, window_bounds = array<i64: 9, 16, 8>}, {pipeline_mode = #tpu.pipeline_mode<synchronous>, transform_indices = @transform_5, window_bounds = array<i64: 1, 8>}, {pipeline_mode = #tpu.pipeline_mode<synchronous>, transform_indices = @transform_6, window_bounds = array<i64: 1, 8>}, {pipeline_mode = #tpu.pipeline_mode<synchronous>, transform_indices = @transform_7, window_bounds = array<i64: 1, 8>}, {pipeline_mode = #tpu.pipeline_mode<synchronous>, transform_indices = @transform_8, window_bounds = array<i64: 1, 16>}, {pipeline_mode = #tpu.pipeline_mode<synchronous>, transform_indices = @transform_9, window_bounds = array<i64: 1, 8>}, {pipeline_mode = #tpu.pipeline_mode<synchronous>, transform_indices = @transform_10, window_bounds = array<i64: 1, 16>}, {pipeline_mode = #tpu.pipeline_mode<synchronous>, transform_indices = @transform_11, window_bounds = array<i64: 8, 8>}, {pipeline_mode = #tpu.pipeline_mode<synchronous>, transform_indices = @transform_12, window_bounds = array<i64: 16, 16>}, {transform_indices = @transform_13, window_bounds = array<i64: 1, 256, 24>}]} {
    %cst = arith.constant 0.000000e+00 : f32
    %0 = vector.broadcast %cst : f32 to vector<1x18x16xf32>
    %c0 = arith.constant 0 : index
    %c0_0 = arith.constant 0 : index
    %c0_1 = arith.constant 0 : index
    %1 = vector.load %arg15[%c0, %c0_0, %c0_1] : memref<18x18x16xf32, #tpu.memory_space<vmem>>, vector<1x18x16xf32>
    tpu.vector_store %arg15[%c0, %c0_0, %c0_1], %0 {strides = array<i32>} : memref<18x18x16xf32, #tpu.memory_space<vmem>>, vector<1x18x16xf32>,
    %cst_2 = arith.constant 0.000000e+00 : f32
    %2 = vector.broadcast %cst_2 : f32 to vector<1x18x16xf32>
    %c17 = arith.constant 17 : index
    %c0_3 = arith.constant 0 : index
    %c0_4 = arith.constant 0 : index
    %3 = vector.load %arg15[%c17, %c0_3, %c0_4] : memref<18x18x16xf32, #tpu.memory_space<vmem>>, vector<1x18x16xf32>
    tpu.vector_store %arg15[%c17, %c0_3, %c0_4], %2 {strides = array<i32>} : memref<18x18x16xf32, #tpu.memory_space<vmem>>, vector<1x18x16xf32>,
    %cst_5 = arith.constant 0.000000e+00 : f32
    %4 = vector.broadcast %cst_5 : f32 to vector<16x1x16xf32>
    %c1 = arith.constant 1 : index
    %c0_6 = arith.constant 0 : index
    %c0_7 = arith.constant 0 : index
    %5 = vector.load %arg15[%c1, %c0_6, %c0_7] : memref<18x18x16xf32, #tpu.memory_space<vmem>>, vector<16x1x16xf32>
    tpu.vector_store %arg15[%c1, %c0_6, %c0_7], %4 {strides = array<i32>} : memref<18x18x16xf32, #tpu.memory_space<vmem>>, vector<16x1x16xf32>,
    %cst_8 = arith.constant 0.000000e+00 : f32
    %6 = vector.broadcast %cst_8 : f32 to vector<16x1x16xf32>
    %c1_9 = arith.constant 1 : index
    %c17_10 = arith.constant 17 : index
    %c0_11 = arith.constant 0 : index
    %7 = vector.load %arg15[%c1_9, %c17_10, %c0_11] : memref<18x18x16xf32, #tpu.memory_space<vmem>>, vector<16x1x16xf32>
    tpu.vector_store %arg15[%c1_9, %c17_10, %c0_11], %6 {strides = array<i32>} : memref<18x18x16xf32, #tpu.memory_space<vmem>>, vector<16x1x16xf32>,
    %c0_12 = arith.constant 0 : index
    %c0_13 = arith.constant 0 : index
    %c0_14 = arith.constant 0 : index
    %8 = vector.load %arg2[%c0_12, %c0_13, %c0_14] : memref<1x256x8xf32, #tpu.memory_space<vmem>>, vector<1x256x8xf32>
    %9 = vector.shape_cast %8 : vector<1x256x8xf32> to vector<256x8xf32>
    %c0_15 = arith.constant 0 : index
    %c0_16 = arith.constant 0 : index
    %10 = vector.load %arg12[%c0_15, %c0_16] : memref<8x8xf32, #tpu.memory_space<vmem>>, vector<8x8xf32>
    %cst_17 = arith.constant dense<0.000000e+00> : vector<8xf32>
    %11 = vector.multi_reduction <add>, %9, %cst_17 [0] : vector<256x8xf32> to vector<8xf32>
    %12 = vector.shape_cast %11 : vector<8xf32> to vector<1x8xf32>
    %cst_18 = arith.constant dense<0.000000e+00> : vector<1x8xf32>
    %13 = tpu.matmul %12, %10, %cst_18 {dimension_numbers = #tpu.dot_dimension_numbers<[1], [0], [0], [1], [0, 0, 1, 1], [], []>} : vector<1x8xf32>, vector<8x8xf32>, vector<1x8xf32> -> vector<1x8xf32>
    %14 = vector.broadcast %13 : vector<1x8xf32> to vector<256x8xf32>
    %15 = arith.subf %9, %14 : vector<256x8xf32>
    %16 = arith.mulf %15, %15 : vector<256x8xf32>
    %cst_19 = arith.constant dense<0.000000e+00> : vector<8xf32>
    %17 = vector.multi_reduction <add>, %16, %cst_19 [0] : vector<256x8xf32> to vector<8xf32>
    %18 = vector.shape_cast %17 : vector<8xf32> to vector<1x8xf32>
    %cst_20 = arith.constant dense<0.000000e+00> : vector<1x8xf32>
    %19 = tpu.matmul %18, %10, %cst_20 {dimension_numbers = #tpu.dot_dimension_numbers<[1], [0], [0], [1], [0, 0, 1, 1], [], []>} : vector<1x8xf32>, vector<8x8xf32>, vector<1x8xf32> -> vector<1x8xf32>
    %cst_21 = arith.constant 9.99999974E-6 : f32
    %20 = vector.broadcast %cst_21 : f32 to vector<1x8xf32>
    %21 = arith.addf %19, %20 : vector<1x8xf32>
    %22 = math.rsqrt %21 : vector<1x8xf32>
    %23 = vector.broadcast %22 : vector<1x8xf32> to vector<256x8xf32>
    %24 = arith.mulf %15, %23 : vector<256x8xf32>
    %c0_22 = arith.constant 0 : index
    %c0_23 = arith.constant 0 : index
    %25 = vector.load %arg8[%c0_22, %c0_23] : memref<1x8xf32, #tpu.memory_space<vmem>>, vector<1x8xf32>
    %26 = vector.broadcast %25 : vector<1x8xf32> to vector<256x8xf32>
    %27 = arith.mulf %24, %26 : vector<256x8xf32>
    %c0_24 = arith.constant 0 : index
    %c0_25 = arith.constant 0 : index
    %28 = vector.load %arg10[%c0_24, %c0_25] : memref<1x8xf32, #tpu.memory_space<vmem>>, vector<1x8xf32>
    %29 = vector.broadcast %28 : vector<1x8xf32> to vector<256x8xf32>
    %30 = arith.addf %27, %29 : vector<256x8xf32>
    %31 = arith.negf %30 : vector<256x8xf32>
    %32 = math.exp %31 : vector<256x8xf32>
    %cst_26 = arith.constant 1.000000e+00 : f32
    %33 = vector.broadcast %cst_26 : f32 to vector<256x8xf32>
    %34 = arith.addf %33, %32 : vector<256x8xf32>
    %35 = arith.divf %33, %34 : vector<256x8xf32>
    %36 = arith.mulf %30, %35 : vector<256x8xf32>
    %37 = vector.shape_cast %36 : vector<256x8xf32> to vector<16x16x8xf32>
    %c1_27 = arith.constant 1 : index
    %c1_28 = arith.constant 1 : index
    %c0_29 = arith.constant 0 : index
    %38 = vector.load %arg15[%c1_27, %c1_28, %c0_29] : memref<18x18x16xf32, #tpu.memory_space<vmem>>, vector<16x16x8xf32>
    tpu.vector_store %arg15[%c1_27, %c1_28, %c0_29], %37 {strides = array<i32>} : memref<18x18x16xf32, #tpu.memory_space<vmem>>, vector<16x16x8xf32>,
    %c0_30 = arith.constant 0 : index
    %c0_31 = arith.constant 0 : index
    %c0_32 = arith.constant 0 : index
    %39 = vector.load %arg15[%c0_30, %c0_31, %c0_32] : memref<18x18x16xf32, #tpu.memory_space<vmem>>, vector<16x16x8xf32>
    %40 = vector.shape_cast %39 : vector<16x16x8xf32> to vector<256x8xf32>
    %c0_33 = arith.constant 0 : index
    %c0_34 = arith.constant 0 : index
    %c0_35 = arith.constant 0 : index
    %41 = vector.load %arg4[%c0_33, %c0_34, %c0_35] : memref<9x8x8xf32, #tpu.memory_space<vmem>>, vector<1x8x8xf32>
    %42 = vector.shape_cast %41 : vector<1x8x8xf32> to vector<8x8xf32>
    %cst_36 = arith.constant dense<0.000000e+00> : vector<256x8xf32>
    %43 = tpu.matmul %40, %42, %cst_36 {dimension_numbers = #tpu.dot_dimension_numbers<[1], [0], [0], [1], [0, 0, 1, 1], [], []>} : vector<256x8xf32>, vector<8x8xf32>, vector<256x8xf32> -> vector<256x8xf32>
    %c0_37 = arith.constant 0 : index
    %c1_38 = arith.constant 1 : index
    %c0_39 = arith.constant 0 : index
    %44 = vector.load %arg15[%c0_37, %c1_38, %c0_39] : memref<18x18x16xf32, #tpu.memory_space<vmem>>, vector<16x16x8xf32>
    %45 = vector.shape_cast %44 : vector<16x16x8xf32> to vector<256x8xf32>
    %c1_40 = arith.constant 1 : index
    %c0_41 = arith.constant 0 : index
    %c0_42 = arith.constant 0 : index
    %46 = vector.load %arg4[%c1_40, %c0_41, %c0_42] : memref<9x8x8xf32, #tpu.memory_space<vmem>>, vector<1x8x8xf32>
    %47 = vector.shape_cast %46 : vector<1x8x8xf32> to vector<8x8xf32>
    %cst_43 = arith.constant dense<0.000000e+00> : vector<256x8xf32>
    %48 = tpu.matmul %45, %47, %cst_43 {dimension_numbers = #tpu.dot_dimension_numbers<[1], [0], [0], [1], [0, 0, 1, 1], [], []>} : vector<256x8xf32>, vector<8x8xf32>, vector<256x8xf32> -> vector<256x8xf32>
    %49 = arith.addf %43, %48 : vector<256x8xf32>
    %c0_44 = arith.constant 0 : index
    %c2 = arith.constant 2 : index
    %c0_45 = arith.constant 0 : index
    %50 = vector.load %arg15[%c0_44, %c2, %c0_45] : memref<18x18x16xf32, #tpu.memory_space<vmem>>, vector<16x16x8xf32>
    %51 = vector.shape_cast %50 : vector<16x16x8xf32> to vector<256x8xf32>
    %c2_46 = arith.constant 2 : index
    %c0_47 = arith.constant 0 : index
    %c0_48 = arith.constant 0 : index
    %52 = vector.load %arg4[%c2_46, %c0_47, %c0_48] : memref<9x8x8xf32, #tpu.memory_space<vmem>>, vector<1x8x8xf32>
    %53 = vector.shape_cast %52 : vector<1x8x8xf32> to vector<8x8xf32>
    %cst_49 = arith.constant dense<0.000000e+00> : vector<256x8xf32>
    %54 = tpu.matmul %51, %53, %cst_49 {dimension_numbers = #tpu.dot_dimension_numbers<[1], [0], [0], [1], [0, 0, 1, 1], [], []>} : vector<256x8xf32>, vector<8x8xf32>, vector<256x8xf32> -> vector<256x8xf32>
    %55 = arith.addf %49, %54 : vector<256x8xf32>
    %c1_50 = arith.constant 1 : index
    %c0_51 = arith.constant 0 : index
    %c0_52 = arith.constant 0 : index
    %56 = vector.load %arg15[%c1_50, %c0_51, %c0_52] : memref<18x18x16xf32, #tpu.memory_space<vmem>>, vector<16x16x8xf32>
    %57 = vector.shape_cast %56 : vector<16x16x8xf32> to vector<256x8xf32>
    %c3 = arith.constant 3 : index
    %c0_53 = arith.constant 0 : index
    %c0_54 = arith.constant 0 : index
    %58 = vector.load %arg4[%c3, %c0_53, %c0_54] : memref<9x8x8xf32, #tpu.memory_space<vmem>>, vector<1x8x8xf32>
    %59 = vector.shape_cast %58 : vector<1x8x8xf32> to vector<8x8xf32>
    %cst_55 = arith.constant dense<0.000000e+00> : vector<256x8xf32>
    %60 = tpu.matmul %57, %59, %cst_55 {dimension_numbers = #tpu.dot_dimension_numbers<[1], [0], [0], [1], [0, 0, 1, 1], [], []>} : vector<256x8xf32>, vector<8x8xf32>, vector<256x8xf32> -> vector<256x8xf32>
    %61 = arith.addf %55, %60 : vector<256x8xf32>
    %c1_56 = arith.constant 1 : index
    %c1_57 = arith.constant 1 : index
    %c0_58 = arith.constant 0 : index
    %62 = vector.load %arg15[%c1_56, %c1_57, %c0_58] : memref<18x18x16xf32, #tpu.memory_space<vmem>>, vector<16x16x8xf32>
    %63 = vector.shape_cast %62 : vector<16x16x8xf32> to vector<256x8xf32>
    %c4 = arith.constant 4 : index
    %c0_59 = arith.constant 0 : index
    %c0_60 = arith.constant 0 : index
    %64 = vector.load %arg4[%c4, %c0_59, %c0_60] : memref<9x8x8xf32, #tpu.memory_space<vmem>>, vector<1x8x8xf32>
    %65 = vector.shape_cast %64 : vector<1x8x8xf32> to vector<8x8xf32>
    %cst_61 = arith.constant dense<0.000000e+00> : vector<256x8xf32>
    %66 = tpu.matmul %63, %65, %cst_61 {dimension_numbers = #tpu.dot_dimension_numbers<[1], [0], [0], [1], [0, 0, 1, 1], [], []>} : vector<256x8xf32>, vector<8x8xf32>, vector<256x8xf32> -> vector<256x8xf32>
    %67 = arith.addf %61, %66 : vector<256x8xf32>
    %c1_62 = arith.constant 1 : index
    %c2_63 = arith.constant 2 : index
    %c0_64 = arith.constant 0 : index
    %68 = vector.load %arg15[%c1_62, %c2_63, %c0_64] : memref<18x18x16xf32, #tpu.memory_space<vmem>>, vector<16x16x8xf32>
    %69 = vector.shape_cast %68 : vector<16x16x8xf32> to vector<256x8xf32>
    %c5 = arith.constant 5 : index
    %c0_65 = arith.constant 0 : index
    %c0_66 = arith.constant 0 : index
    %70 = vector.load %arg4[%c5, %c0_65, %c0_66] : memref<9x8x8xf32, #tpu.memory_space<vmem>>, vector<1x8x8xf32>
    %71 = vector.shape_cast %70 : vector<1x8x8xf32> to vector<8x8xf32>
    %cst_67 = arith.constant dense<0.000000e+00> : vector<256x8xf32>
    %72 = tpu.matmul %69, %71, %cst_67 {dimension_numbers = #tpu.dot_dimension_numbers<[1], [0], [0], [1], [0, 0, 1, 1], [], []>} : vector<256x8xf32>, vector<8x8xf32>, vector<256x8xf32> -> vector<256x8xf32>
    %73 = arith.addf %67, %72 : vector<256x8xf32>
    %c2_68 = arith.constant 2 : index
    %c0_69 = arith.constant 0 : index
    %c0_70 = arith.constant 0 : index
    %74 = vector.load %arg15[%c2_68, %c0_69, %c0_70] : memref<18x18x16xf32, #tpu.memory_space<vmem>>, vector<16x16x8xf32>
    %75 = vector.shape_cast %74 : vector<16x16x8xf32> to vector<256x8xf32>
    %c6 = arith.constant 6 : index
    %c0_71 = arith.constant 0 : index
    %c0_72 = arith.constant 0 : index
    %76 = vector.load %arg4[%c6, %c0_71, %c0_72] : memref<9x8x8xf32, #tpu.memory_space<vmem>>, vector<1x8x8xf32>
    %77 = vector.shape_cast %76 : vector<1x8x8xf32> to vector<8x8xf32>
    %cst_73 = arith.constant dense<0.000000e+00> : vector<256x8xf32>
    %78 = tpu.matmul %75, %77, %cst_73 {dimension_numbers = #tpu.dot_dimension_numbers<[1], [0], [0], [1], [0, 0, 1, 1], [], []>} : vector<256x8xf32>, vector<8x8xf32>, vector<256x8xf32> -> vector<256x8xf32>
    %79 = arith.addf %73, %78 : vector<256x8xf32>
    %c2_74 = arith.constant 2 : index
    %c1_75 = arith.constant 1 : index
    %c0_76 = arith.constant 0 : index
    %80 = vector.load %arg15[%c2_74, %c1_75, %c0_76] : memref<18x18x16xf32, #tpu.memory_space<vmem>>, vector<16x16x8xf32>
    %81 = vector.shape_cast %80 : vector<16x16x8xf32> to vector<256x8xf32>
    %c7 = arith.constant 7 : index
    %c0_77 = arith.constant 0 : index
    %c0_78 = arith.constant 0 : index
    %82 = vector.load %arg4[%c7, %c0_77, %c0_78] : memref<9x8x8xf32, #tpu.memory_space<vmem>>, vector<1x8x8xf32>
    %83 = vector.shape_cast %82 : vector<1x8x8xf32> to vector<8x8xf32>
    %cst_79 = arith.constant dense<0.000000e+00> : vector<256x8xf32>
    %84 = tpu.matmul %81, %83, %cst_79 {dimension_numbers = #tpu.dot_dimension_numbers<[1], [0], [0], [1], [0, 0, 1, 1], [], []>} : vector<256x8xf32>, vector<8x8xf32>, vector<256x8xf32> -> vector<256x8xf32>
    %85 = arith.addf %79, %84 : vector<256x8xf32>
    %c2_80 = arith.constant 2 : index
    %c2_81 = arith.constant 2 : index
    %c0_82 = arith.constant 0 : index
    %86 = vector.load %arg15[%c2_80, %c2_81, %c0_82] : memref<18x18x16xf32, #tpu.memory_space<vmem>>, vector<16x16x8xf32>
    %87 = vector.shape_cast %86 : vector<16x16x8xf32> to vector<256x8xf32>
    %c8 = arith.constant 8 : index
    %c0_83 = arith.constant 0 : index
    %c0_84 = arith.constant 0 : index
    %88 = vector.load %arg4[%c8, %c0_83, %c0_84] : memref<9x8x8xf32, #tpu.memory_space<vmem>>, vector<1x8x8xf32>
    %89 = vector.shape_cast %88 : vector<1x8x8xf32> to vector<8x8xf32>
    %cst_85 = arith.constant dense<0.000000e+00> : vector<256x8xf32>
    %90 = tpu.matmul %87, %89, %cst_85 {dimension_numbers = #tpu.dot_dimension_numbers<[1], [0], [0], [1], [0, 0, 1, 1], [], []>} : vector<256x8xf32>, vector<8x8xf32>, vector<256x8xf32> -> vector<256x8xf32>
    %91 = arith.addf %85, %90 : vector<256x8xf32>
    %c0_86 = arith.constant 0 : index
    %c0_87 = arith.constant 0 : index
    %92 = vector.load %arg6[%c0_86, %c0_87] : memref<1x8xf32, #tpu.memory_space<vmem>>, vector<1x8xf32>
    %93 = vector.broadcast %92 : vector<1x8xf32> to vector<256x8xf32>
    %94 = arith.addf %91, %93 : vector<256x8xf32>
    %c0_88 = arith.constant 0 : index
    %c0_89 = arith.constant 0 : index
    %c0_90 = arith.constant 0 : index
    %95 = vector.load %arg3[%c0_88, %c0_89, %c0_90] : memref<1x256x16xf32, #tpu.memory_space<vmem>>, vector<1x256x16xf32>
    %96 = vector.shape_cast %95 : vector<1x256x16xf32> to vector<256x16xf32>
    %c0_91 = arith.constant 0 : index
    %c0_92 = arith.constant 0 : index
    %97 = vector.load %arg13[%c0_91, %c0_92] : memref<16x16xf32, #tpu.memory_space<vmem>>, vector<16x16xf32>
    %cst_93 = arith.constant dense<0.000000e+00> : vector<16xf32>
    %98 = vector.multi_reduction <add>, %96, %cst_93 [0] : vector<256x16xf32> to vector<16xf32>
    %99 = vector.shape_cast %98 : vector<16xf32> to vector<1x16xf32>
    %cst_94 = arith.constant dense<0.000000e+00> : vector<1x16xf32>
    %100 = tpu.matmul %99, %97, %cst_94 {dimension_numbers = #tpu.dot_dimension_numbers<[1], [0], [0], [1], [0, 0, 1, 1], [], []>} : vector<1x16xf32>, vector<16x16xf32>, vector<1x16xf32> -> vector<1x16xf32>
    %101 = vector.broadcast %100 : vector<1x16xf32> to vector<256x16xf32>
    %102 = arith.subf %96, %101 : vector<256x16xf32>
    %103 = arith.mulf %102, %102 : vector<256x16xf32>
    %cst_95 = arith.constant dense<0.000000e+00> : vector<16xf32>
    %104 = vector.multi_reduction <add>, %103, %cst_95 [0] : vector<256x16xf32> to vector<16xf32>
    %105 = vector.shape_cast %104 : vector<16xf32> to vector<1x16xf32>
    %cst_96 = arith.constant dense<0.000000e+00> : vector<1x16xf32>
    %106 = tpu.matmul %105, %97, %cst_96 {dimension_numbers = #tpu.dot_dimension_numbers<[1], [0], [0], [1], [0, 0, 1, 1], [], []>} : vector<1x16xf32>, vector<16x16xf32>, vector<1x16xf32> -> vector<1x16xf32>
    %cst_97 = arith.constant 9.99999974E-6 : f32
    %107 = vector.broadcast %cst_97 : f32 to vector<1x16xf32>
    %108 = arith.addf %106, %107 : vector<1x16xf32>
    %109 = math.rsqrt %108 : vector<1x16xf32>
    %110 = vector.broadcast %109 : vector<1x16xf32> to vector<256x16xf32>
    %111 = arith.mulf %102, %110 : vector<256x16xf32>
    %c0_98 = arith.constant 0 : index
    %c0_99 = arith.constant 0 : index
    %112 = vector.load %arg9[%c0_98, %c0_99] : memref<1x16xf32, #tpu.memory_space<vmem>>, vector<1x16xf32>
    %113 = vector.broadcast %112 : vector<1x16xf32> to vector<256x16xf32>
    %114 = arith.mulf %111, %113 : vector<256x16xf32>
    %c0_100 = arith.constant 0 : index
    %c0_101 = arith.constant 0 : index
    %115 = vector.load %arg11[%c0_100, %c0_101] : memref<1x16xf32, #tpu.memory_space<vmem>>, vector<1x16xf32>
    %116 = vector.broadcast %115 : vector<1x16xf32> to vector<256x16xf32>
    %117 = arith.addf %114, %116 : vector<256x16xf32>
    %118 = arith.negf %117 : vector<256x16xf32>
    %119 = math.exp %118 : vector<256x16xf32>
    %cst_102 = arith.constant 1.000000e+00 : f32
    %120 = vector.broadcast %cst_102 : f32 to vector<256x16xf32>
    %121 = arith.addf %120, %119 : vector<256x16xf32>
    %122 = arith.divf %120, %121 : vector<256x16xf32>
    %123 = arith.mulf %117, %122 : vector<256x16xf32>
    %124 = vector.shape_cast %123 : vector<256x16xf32> to vector<16x16x16xf32>
    %c1_103 = arith.constant 1 : index
    %c1_104 = arith.constant 1 : index
    %c0_105 = arith.constant 0 : index
    %125 = vector.load %arg15[%c1_103, %c1_104, %c0_105] : memref<18x18x16xf32, #tpu.memory_space<vmem>>, vector<16x16x16xf32>
    tpu.vector_store %arg15[%c1_103, %c1_104, %c0_105], %124 {strides = array<i32>} : memref<18x18x16xf32, #tpu.memory_space<vmem>>, vector<16x16x16xf32>,
    %c0_106 = arith.constant 0 : index
    %c0_107 = arith.constant 0 : index
    %c0_108 = arith.constant 0 : index
    %126 = vector.load %arg15[%c0_106, %c0_107, %c0_108] : memref<18x18x16xf32, #tpu.memory_space<vmem>>, vector<16x16x16xf32>
    %127 = vector.shape_cast %126 : vector<16x16x16xf32> to vector<256x16xf32>
    %c0_109 = arith.constant 0 : index
    %c0_110 = arith.constant 0 : index
    %c0_111 = arith.constant 0 : index
    %128 = vector.load %arg5[%c0_109, %c0_110, %c0_111] : memref<9x16x8xf32, #tpu.memory_space<vmem>>, vector<1x16x8xf32>
    %129 = vector.shape_cast %128 : vector<1x16x8xf32> to vector<16x8xf32>
    %cst_112 = arith.constant dense<0.000000e+00> : vector<256x8xf32>
    %130 = tpu.matmul %127, %129, %cst_112 {dimension_numbers = #tpu.dot_dimension_numbers<[1], [0], [0], [1], [0, 0, 1, 1], [], []>} : vector<256x16xf32>, vector<16x8xf32>, vector<256x8xf32> -> vector<256x8xf32>
    %c0_113 = arith.constant 0 : index
    %c1_114 = arith.constant 1 : index
    %c0_115 = arith.constant 0 : index
    %131 = vector.load %arg15[%c0_113, %c1_114, %c0_115] : memref<18x18x16xf32, #tpu.memory_space<vmem>>, vector<16x16x16xf32>
    %132 = vector.shape_cast %131 : vector<16x16x16xf32> to vector<256x16xf32>
    %c1_116 = arith.constant 1 : index
    %c0_117 = arith.constant 0 : index
    %c0_118 = arith.constant 0 : index
    %133 = vector.load %arg5[%c1_116, %c0_117, %c0_118] : memref<9x16x8xf32, #tpu.memory_space<vmem>>, vector<1x16x8xf32>
    %134 = vector.shape_cast %133 : vector<1x16x8xf32> to vector<16x8xf32>
    %cst_119 = arith.constant dense<0.000000e+00> : vector<256x8xf32>
    %135 = tpu.matmul %132, %134, %cst_119 {dimension_numbers = #tpu.dot_dimension_numbers<[1], [0], [0], [1], [0, 0, 1, 1], [], []>} : vector<256x16xf32>, vector<16x8xf32>, vector<256x8xf32> -> vector<256x8xf32>
    %136 = arith.addf %130, %135 : vector<256x8xf32>
    %c0_120 = arith.constant 0 : index
    %c2_121 = arith.constant 2 : index
    %c0_122 = arith.constant 0 : index
    %137 = vector.load %arg15[%c0_120, %c2_121, %c0_122] : memref<18x18x16xf32, #tpu.memory_space<vmem>>, vector<16x16x16xf32>
    %138 = vector.shape_cast %137 : vector<16x16x16xf32> to vector<256x16xf32>
    %c2_123 = arith.constant 2 : index
    %c0_124 = arith.constant 0 : index
    %c0_125 = arith.constant 0 : index
    %139 = vector.load %arg5[%c2_123, %c0_124, %c0_125] : memref<9x16x8xf32, #tpu.memory_space<vmem>>, vector<1x16x8xf32>
    %140 = vector.shape_cast %139 : vector<1x16x8xf32> to vector<16x8xf32>
    %cst_126 = arith.constant dense<0.000000e+00> : vector<256x8xf32>
    %141 = tpu.matmul %138, %140, %cst_126 {dimension_numbers = #tpu.dot_dimension_numbers<[1], [0], [0], [1], [0, 0, 1, 1], [], []>} : vector<256x16xf32>, vector<16x8xf32>, vector<256x8xf32> -> vector<256x8xf32>
    %142 = arith.addf %136, %141 : vector<256x8xf32>
    %c1_127 = arith.constant 1 : index
    %c0_128 = arith.constant 0 : index
    %c0_129 = arith.constant 0 : index
    %143 = vector.load %arg15[%c1_127, %c0_128, %c0_129] : memref<18x18x16xf32, #tpu.memory_space<vmem>>, vector<16x16x16xf32>
    %144 = vector.shape_cast %143 : vector<16x16x16xf32> to vector<256x16xf32>
    %c3_130 = arith.constant 3 : index
    %c0_131 = arith.constant 0 : index
    %c0_132 = arith.constant 0 : index
    %145 = vector.load %arg5[%c3_130, %c0_131, %c0_132] : memref<9x16x8xf32, #tpu.memory_space<vmem>>, vector<1x16x8xf32>
    %146 = vector.shape_cast %145 : vector<1x16x8xf32> to vector<16x8xf32>
    %cst_133 = arith.constant dense<0.000000e+00> : vector<256x8xf32>
    %147 = tpu.matmul %144, %146, %cst_133 {dimension_numbers = #tpu.dot_dimension_numbers<[1], [0], [0], [1], [0, 0, 1, 1], [], []>} : vector<256x16xf32>, vector<16x8xf32>, vector<256x8xf32> -> vector<256x8xf32>
    %148 = arith.addf %142, %147 : vector<256x8xf32>
    %c1_134 = arith.constant 1 : index
    %c1_135 = arith.constant 1 : index
    %c0_136 = arith.constant 0 : index
    %149 = vector.load %arg15[%c1_134, %c1_135, %c0_136] : memref<18x18x16xf32, #tpu.memory_space<vmem>>, vector<16x16x16xf32>
    %150 = vector.shape_cast %149 : vector<16x16x16xf32> to vector<256x16xf32>
    %c4_137 = arith.constant 4 : index
    %c0_138 = arith.constant 0 : index
    %c0_139 = arith.constant 0 : index
    %151 = vector.load %arg5[%c4_137, %c0_138, %c0_139] : memref<9x16x8xf32, #tpu.memory_space<vmem>>, vector<1x16x8xf32>
    %152 = vector.shape_cast %151 : vector<1x16x8xf32> to vector<16x8xf32>
    %cst_140 = arith.constant dense<0.000000e+00> : vector<256x8xf32>
    %153 = tpu.matmul %150, %152, %cst_140 {dimension_numbers = #tpu.dot_dimension_numbers<[1], [0], [0], [1], [0, 0, 1, 1], [], []>} : vector<256x16xf32>, vector<16x8xf32>, vector<256x8xf32> -> vector<256x8xf32>
    %154 = arith.addf %148, %153 : vector<256x8xf32>
    %c1_141 = arith.constant 1 : index
    %c2_142 = arith.constant 2 : index
    %c0_143 = arith.constant 0 : index
    %155 = vector.load %arg15[%c1_141, %c2_142, %c0_143] : memref<18x18x16xf32, #tpu.memory_space<vmem>>, vector<16x16x16xf32>
    %156 = vector.shape_cast %155 : vector<16x16x16xf32> to vector<256x16xf32>
    %c5_144 = arith.constant 5 : index
    %c0_145 = arith.constant 0 : index
    %c0_146 = arith.constant 0 : index
    %157 = vector.load %arg5[%c5_144, %c0_145, %c0_146] : memref<9x16x8xf32, #tpu.memory_space<vmem>>, vector<1x16x8xf32>
    %158 = vector.shape_cast %157 : vector<1x16x8xf32> to vector<16x8xf32>
    %cst_147 = arith.constant dense<0.000000e+00> : vector<256x8xf32>
    %159 = tpu.matmul %156, %158, %cst_147 {dimension_numbers = #tpu.dot_dimension_numbers<[1], [0], [0], [1], [0, 0, 1, 1], [], []>} : vector<256x16xf32>, vector<16x8xf32>, vector<256x8xf32> -> vector<256x8xf32>
    %160 = arith.addf %154, %159 : vector<256x8xf32>
    %c2_148 = arith.constant 2 : index
    %c0_149 = arith.constant 0 : index
    %c0_150 = arith.constant 0 : index
    %161 = vector.load %arg15[%c2_148, %c0_149, %c0_150] : memref<18x18x16xf32, #tpu.memory_space<vmem>>, vector<16x16x16xf32>
    %162 = vector.shape_cast %161 : vector<16x16x16xf32> to vector<256x16xf32>
    %c6_151 = arith.constant 6 : index
    %c0_152 = arith.constant 0 : index
    %c0_153 = arith.constant 0 : index
    %163 = vector.load %arg5[%c6_151, %c0_152, %c0_153] : memref<9x16x8xf32, #tpu.memory_space<vmem>>, vector<1x16x8xf32>
    %164 = vector.shape_cast %163 : vector<1x16x8xf32> to vector<16x8xf32>
    %cst_154 = arith.constant dense<0.000000e+00> : vector<256x8xf32>
    %165 = tpu.matmul %162, %164, %cst_154 {dimension_numbers = #tpu.dot_dimension_numbers<[1], [0], [0], [1], [0, 0, 1, 1], [], []>} : vector<256x16xf32>, vector<16x8xf32>, vector<256x8xf32> -> vector<256x8xf32>
    %166 = arith.addf %160, %165 : vector<256x8xf32>
    %c2_155 = arith.constant 2 : index
    %c1_156 = arith.constant 1 : index
    %c0_157 = arith.constant 0 : index
    %167 = vector.load %arg15[%c2_155, %c1_156, %c0_157] : memref<18x18x16xf32, #tpu.memory_space<vmem>>, vector<16x16x16xf32>
    %168 = vector.shape_cast %167 : vector<16x16x16xf32> to vector<256x16xf32>
    %c7_158 = arith.constant 7 : index
    %c0_159 = arith.constant 0 : index
    %c0_160 = arith.constant 0 : index
    %169 = vector.load %arg5[%c7_158, %c0_159, %c0_160] : memref<9x16x8xf32, #tpu.memory_space<vmem>>, vector<1x16x8xf32>
    %170 = vector.shape_cast %169 : vector<1x16x8xf32> to vector<16x8xf32>
    %cst_161 = arith.constant dense<0.000000e+00> : vector<256x8xf32>
    %171 = tpu.matmul %168, %170, %cst_161 {dimension_numbers = #tpu.dot_dimension_numbers<[1], [0], [0], [1], [0, 0, 1, 1], [], []>} : vector<256x16xf32>, vector<16x8xf32>, vector<256x8xf32> -> vector<256x8xf32>
    %172 = arith.addf %166, %171 : vector<256x8xf32>
    %c2_162 = arith.constant 2 : index
    %c2_163 = arith.constant 2 : index
    %c0_164 = arith.constant 0 : index
    %173 = vector.load %arg15[%c2_162, %c2_163, %c0_164] : memref<18x18x16xf32, #tpu.memory_space<vmem>>, vector<16x16x16xf32>
    %174 = vector.shape_cast %173 : vector<16x16x16xf32> to vector<256x16xf32>
    %c8_165 = arith.constant 8 : index
    %c0_166 = arith.constant 0 : index
    %c0_167 = arith.constant 0 : index
    %175 = vector.load %arg5[%c8_165, %c0_166, %c0_167] : memref<9x16x8xf32, #tpu.memory_space<vmem>>, vector<1x16x8xf32>
    %176 = vector.shape_cast %175 : vector<1x16x8xf32> to vector<16x8xf32>
    %cst_168 = arith.constant dense<0.000000e+00> : vector<256x8xf32>
    %177 = tpu.matmul %174, %176, %cst_168 {dimension_numbers = #tpu.dot_dimension_numbers<[1], [0], [0], [1], [0, 0, 1, 1], [], []>} : vector<256x16xf32>, vector<16x8xf32>, vector<256x8xf32> -> vector<256x8xf32>
    %178 = arith.addf %172, %177 : vector<256x8xf32>
    %c0_169 = arith.constant 0 : index
    %c0_170 = arith.constant 0 : index
    %179 = vector.load %arg7[%c0_169, %c0_170] : memref<1x8xf32, #tpu.memory_space<vmem>>, vector<1x8xf32>
    %180 = vector.broadcast %179 : vector<1x8xf32> to vector<256x8xf32>
    %181 = arith.addf %178, %180 : vector<256x8xf32>
    %c0_171 = arith.constant 0 : index
    %c0_172 = arith.constant 0 : index
    %c0_173 = arith.constant 0 : index
    %182 = vector.load %arg1[%c0_171, %c0_172, %c0_173] : memref<1x256x8xf32, #tpu.memory_space<vmem>>, vector<1x256x8xf32>
    %183 = vector.shape_cast %182 : vector<1x256x8xf32> to vector<256x8xf32>
    %184 = tpu.concatenate %183, %94, %181 in 1 : vector<256x8xf32>, vector<256x8xf32>, vector<256x8xf32> -> vector<256x24xf32>
    %c0_174 = arith.constant 0 : index
    %c0_175 = arith.constant 0 : index
    %c0_176 = arith.constant 0 : index
    %185 = vector.load %arg14[%c0_174, %c0_175, %c0_176] : memref<1x256x24xf32, #tpu.memory_space<vmem>>, vector<1x256x24xf32>
    %186 = vector.shape_cast %185 : vector<1x256x24xf32> to vector<256x24xf32>
    %187 = vector.shape_cast %184 : vector<256x24xf32> to vector<1x256x24xf32>
    tpu.vector_store %arg14[%c0_174, %c0_175, %c0_176], %187 {strides = array<i32>} : memref<1x256x24xf32, #tpu.memory_space<vmem>>, vector<1x256x24xf32>,
    return
  }
  func.func @transform_0(%arg0: i32) -> (i32, i32, i32) {
    %c0_i32 = arith.constant 0 : i32
    %c0_i32_0 = arith.constant 0 : i32
    %c0_i32_1 = arith.constant 0 : i32
    return %arg0, %c0_i32, %c0_i32_0 : i32, i32, i32
  }
  func.func @transform_1(%arg0: i32) -> (i32, i32, i32) {
    %c0_i32 = arith.constant 0 : i32
    %c0_i32_0 = arith.constant 0 : i32
    %c0_i32_1 = arith.constant 0 : i32
    return %arg0, %c0_i32, %c0_i32_0 : i32, i32, i32
  }
  func.func @transform_2(%arg0: i32) -> (i32, i32, i32) {
    %c0_i32 = arith.constant 0 : i32
    %c0_i32_0 = arith.constant 0 : i32
    %c0_i32_1 = arith.constant 0 : i32
    return %arg0, %c0_i32, %c0_i32_0 : i32, i32, i32
  }
  func.func @transform_3(%arg0: i32) -> (i32, i32, i32) {
    %c0_i32 = arith.constant 0 : i32
    %c0_i32_0 = arith.constant 0 : i32
    %c0_i32_1 = arith.constant 0 : i32
    %c0_i32_2 = arith.constant 0 : i32
    return %c0_i32, %c0_i32_0, %c0_i32_1 : i32, i32, i32
  }
  func.func @transform_4(%arg0: i32) -> (i32, i32, i32) {
    %c0_i32 = arith.constant 0 : i32
    %c0_i32_0 = arith.constant 0 : i32
    %c0_i32_1 = arith.constant 0 : i32
    %c0_i32_2 = arith.constant 0 : i32
    return %c0_i32, %c0_i32_0, %c0_i32_1 : i32, i32, i32
  }
  func.func @transform_5(%arg0: i32) -> (i32, i32) {
    %c0_i32 = arith.constant 0 : i32
    %c0_i32_0 = arith.constant 0 : i32
    %c0_i32_1 = arith.constant 0 : i32
    return %c0_i32, %c0_i32_0 : i32, i32
  }
  func.func @transform_6(%arg0: i32) -> (i32, i32) {
    %c0_i32 = arith.constant 0 : i32
    %c0_i32_0 = arith.constant 0 : i32
    %c0_i32_1 = arith.constant 0 : i32
    return %c0_i32, %c0_i32_0 : i32, i32
  }
  func.func @transform_7(%arg0: i32) -> (i32, i32) {
    %c0_i32 = arith.constant 0 : i32
    %c0_i32_0 = arith.constant 0 : i32
    %c0_i32_1 = arith.constant 0 : i32
    return %c0_i32, %c0_i32_0 : i32, i32
  }
  func.func @transform_8(%arg0: i32) -> (i32, i32) {
    %c0_i32 = arith.constant 0 : i32
    %c0_i32_0 = arith.constant 0 : i32
    %c0_i32_1 = arith.constant 0 : i32
    return %c0_i32, %c0_i32_0 : i32, i32
  }
  func.func @transform_9(%arg0: i32) -> (i32, i32) {
    %c0_i32 = arith.constant 0 : i32
    %c0_i32_0 = arith.constant 0 : i32
    %c0_i32_1 = arith.constant 0 : i32
    return %c0_i32, %c0_i32_0 : i32, i32
  }
  func.func @transform_10(%arg0: i32) -> (i32, i32) {
    %c0_i32 = arith.constant 0 : i32
    %c0_i32_0 = arith.constant 0 : i32
    %c0_i32_1 = arith.constant 0 : i32
    return %c0_i32, %c0_i32_0 : i32, i32
  }
  func.func @transform_11(%arg0: i32) -> (i32, i32) {
    %c0_i32 = arith.constant 0 : i32
    %c0_i32_0 = arith.constant 0 : i32
    %c0_i32_1 = arith.constant 0 : i32
    return %c0_i32, %c0_i32_0 : i32, i32
  }
  func.func @transform_12(%arg0: i32) -> (i32, i32) {
    %c0_i32 = arith.constant 0 : i32
    %c0_i32_0 = arith.constant 0 : i32
    %c0_i32_1 = arith.constant 0 : i32
    return %c0_i32, %c0_i32_0 : i32, i32
  }
  func.func @transform_13(%arg0: i32) -> (i32, i32, i32) {
    %c0_i32 = arith.constant 0 : i32
    %c0_i32_0 = arith.constant 0 : i32
    %c0_i32_1 = arith.constant 0 : i32
    return %arg0, %c0_i32, %c0_i32_0 : i32, i32, i32
  }
}

</mosaic_0001>

<llo_original>
// kernel: tpu_custom_call.1
$region0: #{tpu_custom_call.1}
  #allocation0 [shape = 'u32[]', space=smem, size = 0x4, offset = 0x4, fixed_abs, tag = 'smem constant byte address 0x4 - core index']
  #allocation1 [shape = 'u32[72,128]{1,0:T(1,128)}', space=vmem, size = 0x9000, scoped, tag = 'internal scratch']
  #allocation2 [shape = 'f32[18,18,16]{2,1,0:T(8,128)}', space=vmem, size = 0x36000, scoped, tag = 'scratch operand']
  %s0 = inlined_call_operand.vmem [shape: f32[2,256,8], index: 0, kind: input, shape index: {}]
  %s1 = inlined_call_operand.vmem [shape: f32[2,256,8], index: 1, kind: input, shape index: {}]
  %s2 = inlined_call_operand.vmem [shape: f32[2,256,16], index: 2, kind: input, shape index: {}]
  %s3 = inlined_call_operand.vmem [shape: f32[9,8,8], index: 3, kind: input, shape index: {}]
  %s4 = inlined_call_operand.vmem [shape: f32[9,16,8], index: 4, kind: input, shape index: {}]
  %s5 = inlined_call_operand.vmem [shape: f32[1,8], index: 5, kind: input, shape index: {}]
  %s6 = inlined_call_operand.vmem [shape: f32[1,8], index: 6, kind: input, shape index: {}]
  %s7 = inlined_call_operand.vmem [shape: f32[1,8], index: 7, kind: input, shape index: {}]
  %s8 = inlined_call_operand.vmem [shape: f32[1,16], index: 8, kind: input, shape index: {}]
  %s9 = inlined_call_operand.vmem [shape: f32[1,8], index: 9, kind: input, shape index: {}]
  %s10 = inlined_call_operand.vmem [shape: f32[1,16], index: 10, kind: input, shape index: {}]
  %s11 = inlined_call_operand.vmem [shape: f32[8,8], index: 11, kind: input, shape index: {}]
  %s12 = inlined_call_operand.vmem [shape: f32[16,16], index: 12, kind: input, shape index: {}]
  %s13 = inlined_call_operand.vmem [shape: f32[2,256,24], index: 13, kind: output, shape index: {}]
  %s14 = sld [smem:[#allocation0]]
  $region85: #{tpu_custom_call.1} parent=0
    _
  %s16 = ssub.s32 1, %s14
  %s17 = scalar_select 0, %s16, %s14
  loop: start=0, step=1, limit=4
  $region2: #{tpu_custom_call.1} parent=0 // loop_pre_header
    _
  $region3: #{tpu_custom_call.1} parent=0 // loop_header
    %s19 = sphi 0, %s23
    %p20 = scmp.ge.s32.totalorder %s19, 4
    %s29 = sphi 0, %s31
    %s32 = sphi 0, %s29
    %s33 = sphi 0, %s32
    %s49 = sphi 0, %s33
    %s55 = sphi 0, %s57
    %s58 = sphi 0, %s55
    %s59 = sphi 0, %s58
    %s75 = sphi 0, %s59
    %s81 = sphi 0, %s83
    %s84 = sphi 0, %s81
    %s85 = sphi 0, %s84
    %s101 = sphi 0, %s85
    %s105 = sphi 0, %s105
    %s107 = sphi 0, %s105
    %s108 = sphi 0, %s107
    %s122 = sphi 0, %s108
    %s126 = sphi 0, %s126
    %s128 = sphi 0, %s126
    %s129 = sphi 0, %s128
    %s143 = sphi 0, %s129
    %s147 = sphi 0, %s147
    %s149 = sphi 0, %s147
    %s150 = sphi 0, %s149
    %s164 = sphi 0, %s150
    %s168 = sphi 0, %s168
    %s170 = sphi 0, %s168
    %s171 = sphi 0, %s170
    %s185 = sphi 0, %s171
    %s189 = sphi 0, %s189
    %s191 = sphi 0, %s189
    %s192 = sphi 0, %s191
    %s206 = sphi 0, %s192
    %s210 = sphi 0, %s210
    %s212 = sphi 0, %s210
    %s213 = sphi 0, %s212
    %s227 = sphi 0, %s213
    %s231 = sphi 0, %s231
    %s233 = sphi 0, %s231
    %s234 = sphi 0, %s233
    %s248 = sphi 0, %s234
    %s252 = sphi 0, %s252
    %s254 = sphi 0, %s252
    %s255 = sphi 0, %s254
    %s269 = sphi 0, %s255
    %s273 = sphi 0, %s273
    %s275 = sphi 0, %s273
    %s276 = sphi 0, %s275
    %s290 = sphi 0, %s276
    %s294 = sphi 0, %s294
    %s296 = sphi 0, %s294
    %s297 = sphi 0, %s296
    %s311 = sphi 0, %s297
    %s317 = sphi 0, %s319
    %s320 = sphi 0, %s317
    %s321 = sphi 0, %s320
    %s337 = sphi 0, %s321
  $region4: #{tpu_custom_call.1} parent=0 // loop_header_branch
    %22 = sbr.rel (%p20) target = $region8
  $region5: #{tpu_custom_call.1} parent=0 // loop_body
    %s24 = ssub.s32 %s19, 1
    %s25 = ssub.s32 %s19, 2
    %s26 = sadd.s32 %s19, 1
    %s27 = ssub.s32 %s19, %s26
    %p28 = scmp.eq.s32.totalorder %s27, 0
    %s30 = sadd.s32 %s29, 1
    %s31 = scalar_select %p28, %s29, %s30
    %p34 = pneg %p28
    %p35 = scmp.eq.s32.totalorder %s19, 1
    %p36 = por %p34, %p35
    %p37 = scmp.ne.s32.totalorder %s29, %s32
    %p38 = scmp.eq.s32.totalorder %s19, 0
    %p39 = por %p37, %p38
    %p40 = scmp.ne.s32.totalorder %s29, %s32
    %p41 = scmp.eq.s32.totalorder %s24, 1
    %p42 = por %p40, %p41
    %p43 = scmp.ne.s32.totalorder %s32, %s33
    %p44 = scmp.eq.s32.totalorder %s24, 0
    %p45 = por %p43, %p44
    %p46 = scmp.ne.s32.totalorder %s32, %s33
    %p47 = scmp.eq.s32.totalorder %s25, 1
    %p48 = por %p46, %p47
    %p50 = scmp.ne.s32.totalorder %s33, %s49
    %p51 = scmp.eq.s32.totalorder %s25, 0
    %p52 = por %p50, %p51
    %s53 = ssub.s32 %s19, %s26
    %p54 = scmp.eq.s32.totalorder %s53, 0
    %s56 = sadd.s32 %s55, 1
    %s57 = scalar_select %p54, %s55, %s56
    %p60 = pneg %p54
    %p61 = scmp.eq.s32.totalorder %s19, 1
    %p62 = por %p60, %p61
    %p63 = scmp.ne.s32.totalorder %s55, %s58
    %p64 = scmp.eq.s32.totalorder %s19, 0
    %p65 = por %p63, %p64
    %p66 = scmp.ne.s32.totalorder %s55, %s58
    %p67 = scmp.eq.s32.totalorder %s24, 1
    %p68 = por %p66, %p67
    %p69 = scmp.ne.s32.totalorder %s58, %s59
    %p70 = scmp.eq.s32.totalorder %s24, 0
    %p71 = por %p69, %p70
    %p72 = scmp.ne.s32.totalorder %s58, %s59
    %p73 = scmp.eq.s32.totalorder %s25, 1
    %p74 = por %p72, %p73
    %p76 = scmp.ne.s32.totalorder %s59, %s75
    %p77 = scmp.eq.s32.totalorder %s25, 0
    %p78 = por %p76, %p77
    %s79 = ssub.s32 %s19, %s26
    %p80 = scmp.eq.s32.totalorder %s79, 0
    %s82 = sadd.s32 %s81, 1
    %s83 = scalar_select %p80, %s81, %s82
    %p86 = pneg %p80
    %p87 = scmp.eq.s32.totalorder %s19, 1
    %p88 = por %p86, %p87
    %p89 = scmp.ne.s32.totalorder %s81, %s84
    %p90 = scmp.eq.s32.totalorder %s19, 0
    %p91 = por %p89, %p90
    %p92 = scmp.ne.s32.totalorder %s81, %s84
    %p93 = scmp.eq.s32.totalorder %s24, 1
    %p94 = por %p92, %p93
    %p95 = scmp.ne.s32.totalorder %s84, %s85
    %p96 = scmp.eq.s32.totalorder %s24, 0
    %p97 = por %p95, %p96
    %p98 = scmp.ne.s32.totalorder %s84, %s85
    %p99 = scmp.eq.s32.totalorder %s25, 1
    %p100 = por %p98, %p99
    %p102 = scmp.ne.s32.totalorder %s85, %s101
    %p103 = scmp.eq.s32.totalorder %s25, 0
    %p104 = por %p102, %p103
    %s106 = sadd.s32 %s105, 1
    %p109 = scmp.eq.s32.totalorder %s19, 1
    %p110 = scmp.ne.s32.totalorder %s105, %s107
    %p111 = scmp.eq.s32.totalorder %s19, 0
    %p112 = por %p110, %p111
    %p113 = scmp.ne.s32.totalorder %s105, %s107
    %p114 = scmp.eq.s32.totalorder %s24, 1
    %p115 = por %p113, %p114
    %p116 = scmp.ne.s32.totalorder %s107, %s108
    %p117 = scmp.eq.s32.totalorder %s24, 0
    %p118 = por %p116, %p117
    %p119 = scmp.ne.s32.totalorder %s107, %s108
    %p120 = scmp.eq.s32.totalorder %s25, 1
    %p121 = por %p119, %p120
    %p123 = scmp.ne.s32.totalorder %s108, %s122
    %p124 = scmp.eq.s32.totalorder %s25, 0
    %p125 = por %p123, %p124
    %s127 = sadd.s32 %s126, 1
    %p130 = scmp.eq.s32.totalorder %s19, 1
    %p131 = scmp.ne.s32.totalorder %s126, %s128
    %p132 = scmp.eq.s32.totalorder %s19, 0
    %p133 = por %p131, %p132
    %p134 = scmp.ne.s32.totalorder %s126, %s128
    %p135 = scmp.eq.s32.totalorder %s24, 1
    %p136 = por %p134, %p135
    %p137 = scmp.ne.s32.totalorder %s128, %s129
    %p138 = scmp.eq.s32.totalorder %s24, 0
    %p139 = por %p137, %p138
    %p140 = scmp.ne.s32.totalorder %s128, %s129
    %p141 = scmp.eq.s32.totalorder %s25, 1
    %p142 = por %p140, %p141
    %p144 = scmp.ne.s32.totalorder %s129, %s143
    %p145 = scmp.eq.s32.totalorder %s25, 0
    %p146 = por %p144, %p145
    %s148 = sadd.s32 %s147, 1
    %p151 = scmp.eq.s32.totalorder %s19, 1
    %p152 = scmp.ne.s32.totalorder %s147, %s149
    %p153 = scmp.eq.s32.totalorder %s19, 0
    %p154 = por %p152, %p153
    %p155 = scmp.ne.s32.totalorder %s147, %s149
    %p156 = scmp.eq.s32.totalorder %s24, 1
    %p157 = por %p155, %p156
    %p158 = scmp.ne.s32.totalorder %s149, %s150
    %p159 = scmp.eq.s32.totalorder %s24, 0
    %p160 = por %p158, %p159
    %p161 = scmp.ne.s32.totalorder %s149, %s150
    %p162 = scmp.eq.s32.totalorder %s25, 1
    %p163 = por %p161, %p162
    %p165 = scmp.ne.s32.totalorder %s150, %s164
    %p166 = scmp.eq.s32.totalorder %s25, 0
    %p167 = por %p165, %p166
    %s169 = sadd.s32 %s168, 1
    %p172 = scmp.eq.s32.totalorder %s19, 1
    %p173 = scmp.ne.s32.totalorder %s168, %s170
    %p174 = scmp.eq.s32.totalorder %s19, 0
    %p175 = por %p173, %p174
    %p176 = scmp.ne.s32.totalorder %s168, %s170
    %p177 = scmp.eq.s32.totalorder %s24, 1
    %p178 = por %p176, %p177
    %p179 = scmp.ne.s32.totalorder %s170, %s171
    %p180 = scmp.eq.s32.totalorder %s24, 0
    %p181 = por %p179, %p180
    %p182 = scmp.ne.s32.totalorder %s170, %s171
    %p183 = scmp.eq.s32.totalorder %s25, 1
    %p184 = por %p182, %p183
    %p186 = scmp.ne.s32.totalorder %s171, %s185
    %p187 = scmp.eq.s32.totalorder %s25, 0
    %p188 = por %p186, %p187
    %s190 = sadd.s32 %s189, 1
    %p193 = scmp.eq.s32.totalorder %s19, 1
    %p194 = scmp.ne.s32.totalorder %s189, %s191
    %p195 = scmp.eq.s32.totalorder %s19, 0
    %p196 = por %p194, %p195
    %p197 = scmp.ne.s32.totalorder %s189, %s191
    %p198 = scmp.eq.s32.totalorder %s24, 1
    %p199 = por %p197, %p198
    %p200 = scmp.ne.s32.totalorder %s191, %s192
    %p201 = scmp.eq.s32.totalorder %s24, 0
    %p202 = por %p200, %p201
    %p203 = scmp.ne.s32.totalorder %s191, %s192
    %p204 = scmp.eq.s32.totalorder %s25, 1
    %p205 = por %p203, %p204
    %p207 = scmp.ne.s32.totalorder %s192, %s206
    %p208 = scmp.eq.s32.totalorder %s25, 0
    %p209 = por %p207, %p208
    %s211 = sadd.s32 %s210, 1
    %p214 = scmp.eq.s32.totalorder %s19, 1
    %p215 = scmp.ne.s32.totalorder %s210, %s212
    %p216 = scmp.eq.s32.totalorder %s19, 0
    %p217 = por %p215, %p216
    %p218 = scmp.ne.s32.totalorder %s210, %s212
    %p219 = scmp.eq.s32.totalorder %s24, 1
    %p220 = por %p218, %p219
    %p221 = scmp.ne.s32.totalorder %s212, %s213
    %p222 = scmp.eq.s32.totalorder %s24, 0
    %p223 = por %p221, %p222
    %p224 = scmp.ne.s32.totalorder %s212, %s213
    %p225 = scmp.eq.s32.totalorder %s25, 1
    %p226 = por %p224, %p225
    %p228 = scmp.ne.s32.totalorder %s213, %s227
    %p229 = scmp.eq.s32.totalorder %s25, 0
    %p230 = por %p228, %p229
    %s232 = sadd.s32 %s231, 1
    %p235 = scmp.eq.s32.totalorder %s19, 1
    %p236 = scmp.ne.s32.totalorder %s231, %s233
    %p237 = scmp.eq.s32.totalorder %s19, 0
    %p238 = por %p236, %p237
    %p239 = scmp.ne.s32.totalorder %s231, %s233
    %p240 = scmp.eq.s32.totalorder %s24, 1
    %p241 = por %p239, %p240
    %p242 = scmp.ne.s32.totalorder %s233, %s234
    %p243 = scmp.eq.s32.totalorder %s24, 0
    %p244 = por %p242, %p243
    %p245 = scmp.ne.s32.totalorder %s233, %s234
    %p246 = scmp.eq.s32.totalorder %s25, 1
    %p247 = por %p245, %p246
    %p249 = scmp.ne.s32.totalorder %s234, %s248
    %p250 = scmp.eq.s32.totalorder %s25, 0
    %p251 = por %p249, %p250
    %s253 = sadd.s32 %s252, 1
    %p256 = scmp.eq.s32.totalorder %s19, 1
    %p257 = scmp.ne.s32.totalorder %s252, %s254
    %p258 = scmp.eq.s32.totalorder %s19, 0
    %p259 = por %p257, %p258
    %p260 = scmp.ne.s32.totalorder %s252, %s254
    %p261 = scmp.eq.s32.totalorder %s24, 1
    %p262 = por %p260, %p261
    %p263 = scmp.ne.s32.totalorder %s254, %s255
    %p264 = scmp.eq.s32.totalorder %s24, 0
    %p265 = por %p263, %p264
    %p266 = scmp.ne.s32.totalorder %s254, %s255
    %p267 = scmp.eq.s32.totalorder %s25, 1
    %p268 = por %p266, %p267
    %p270 = scmp.ne.s32.totalorder %s255, %s269
    %p271 = scmp.eq.s32.totalorder %s25, 0
    %p272 = por %p270, %p271
    %s274 = sadd.s32 %s273, 1
    %p277 = scmp.eq.s32.totalorder %s19, 1
    %p278 = scmp.ne.s32.totalorder %s273, %s275
    %p279 = scmp.eq.s32.totalorder %s19, 0
    %p280 = por %p278, %p279
    %p281 = scmp.ne.s32.totalorder %s273, %s275
    %p282 = scmp.eq.s32.totalorder %s24, 1
    %p283 = por %p281, %p282
    %p284 = scmp.ne.s32.totalorder %s275, %s276
    %p285 = scmp.eq.s32.totalorder %s24, 0
    %p286 = por %p284, %p285
    %p287 = scmp.ne.s32.totalorder %s275, %s276
    %p288 = scmp.eq.s32.totalorder %s25, 1
    %p289 = por %p287, %p288
    %p291 = scmp.ne.s32.totalorder %s276, %s290
    %p292 = scmp.eq.s32.totalorder %s25, 0
    %p293 = por %p291, %p292
    %s295 = sadd.s32 %s294, 1
    %p298 = scmp.eq.s32.totalorder %s19, 1
    %p299 = scmp.ne.s32.totalorder %s294, %s296
    %p300 = scmp.eq.s32.totalorder %s19, 0
    %p301 = por %p299, %p300
    %p302 = scmp.ne.s32.totalorder %s294, %s296
    %p303 = scmp.eq.s32.totalorder %s24, 1
    %p304 = por %p302, %p303
    %p305 = scmp.ne.s32.totalorder %s296, %s297
    %p306 = scmp.eq.s32.totalorder %s24, 0
    %p307 = por %p305, %p306
    %p308 = scmp.ne.s32.totalorder %s296, %s297
    %p309 = scmp.eq.s32.totalorder %s25, 1
    %p310 = por %p308, %p309
    %p312 = scmp.ne.s32.totalorder %s297, %s311
    %p313 = scmp.eq.s32.totalorder %s25, 0
    %p314 = por %p312, %p313
    %s315 = ssub.s32 %s19, %s26
    %p316 = scmp.eq.s32.totalorder %s315, 0
    %s318 = sadd.s32 %s317, 1
    %s319 = scalar_select %p316, %s317, %s318
    %p322 = pneg %p316
    %p323 = scmp.eq.s32.totalorder %s19, 1
    %p324 = por %p322, %p323
    %p325 = scmp.ne.s32.totalorder %s317, %s320
    %p326 = scmp.eq.s32.totalorder %s19, 0
    %p327 = por %p325, %p326
    %p328 = scmp.ne.s32.totalorder %s317, %s320
    %p329 = scmp.eq.s32.totalorder %s24, 1
    %p330 = por %p328, %p329
    %p331 = scmp.ne.s32.totalorder %s320, %s321
    %p332 = scmp.eq.s32.totalorder %s24, 0
    %p333 = por %p331, %p332
    %p334 = scmp.ne.s32.totalorder %s320, %s321
    %p335 = scmp.eq.s32.totalorder %s25, 1
    %p336 = por %p334, %p335
    %p338 = scmp.ne.s32.totalorder %s321, %s337
    %p339 = scmp.eq.s32.totalorder %s25, 0
    %p340 = por %p338, %p339
    %p341 = scmp.le.s32.totalorder 1, %s19
    %p342 = scmp.lt.s32.totalorder %s19, 3
    %p343 = pnand %p341, %p342
    %p344 = pneg %p343
    // Predicated region
    $region9: #{tpu_custom_call.1} parent=5 // pred_check
      _
    $region10: #{tpu_custom_call.1} parent=5 // pred_check_branch
      %346 = sbr.rel (%p343) target = $region12
    $region11: #{tpu_custom_call.1} parent=5 // pred_region
      %s347 = ssub.s32 %s19, 1
      // Predicated region
      $region13: #{tpu_custom_call.1} parent=11 // pred_check
        %p348 = pneg %p118
      $region14: #{tpu_custom_call.1} parent=11 // pred_check_branch
        %350 = sbr.rel (%p348) target = $region16
      $region15: #{tpu_custom_call.1} parent=11 // pred_region
        _
      $region16: #{tpu_custom_call.1} parent=11 // pred_fallthru
        _
      // Predicated region
      $region17: #{tpu_custom_call.1} parent=11 // pred_check
        %p351 = pneg %p139
      $region18: #{tpu_custom_call.1} parent=11 // pred_check_branch
        %353 = sbr.rel (%p351) target = $region20
      $region19: #{tpu_custom_call.1} parent=11 // pred_region
        _
      $region20: #{tpu_custom_call.1} parent=11 // pred_fallthru
        _
      // Predicated region
      $region21: #{tpu_custom_call.1} parent=11 // pred_check
        %p354 = pneg %p160
      $region22: #{tpu_custom_call.1} parent=11 // pred_check_branch
        %356 = sbr.rel (%p354) target = $region24
      $region23: #{tpu_custom_call.1} parent=11 // pred_region
        _
      $region24: #{tpu_custom_call.1} parent=11 // pred_fallthru
        _
      // Predicated region
      $region25: #{tpu_custom_call.1} parent=11 // pred_check
        %p357 = pneg %p181
      $region26: #{tpu_custom_call.1} parent=11 // pred_check_branch
        %359 = sbr.rel (%p357) target = $region28
      $region27: #{tpu_custom_call.1} parent=11 // pred_region
        _
      $region28: #{tpu_custom_call.1} parent=11 // pred_fallthru
        _
      // Predicated region
      $region29: #{tpu_custom_call.1} parent=11 // pred_check
        %p360 = pneg %p202
      $region30: #{tpu_custom_call.1} parent=11 // pred_check_branch
        %362 = sbr.rel (%p360) target = $region32
      $region31: #{tpu_custom_call.1} parent=11 // pred_region
        _
      $region32: #{tpu_custom_call.1} parent=11 // pred_fallthru
        _
      // Predicated region
      $region33: #{tpu_custom_call.1} parent=11 // pred_check
        %p363 = pneg %p223
      $region34: #{tpu_custom_call.1} parent=11 // pred_check_branch
        %365 = sbr.rel (%p363) target = $region36
      $region35: #{tpu_custom_call.1} parent=11 // pred_region
        _
      $region36: #{tpu_custom_call.1} parent=11 // pred_fallthru
        _
      // Predicated region
      $region37: #{tpu_custom_call.1} parent=11 // pred_check
        %p366 = pneg %p244
      $region38: #{tpu_custom_call.1} parent=11 // pred_check_branch
        %368 = sbr.rel (%p366) target = $region40
      $region39: #{tpu_custom_call.1} parent=11 // pred_region
        _
      $region40: #{tpu_custom_call.1} parent=11 // pred_fallthru
        _
      // Predicated region
      $region41: #{tpu_custom_call.1} parent=11 // pred_check
        %p369 = pneg %p265
      $region42: #{tpu_custom_call.1} parent=11 // pred_check_branch
        %371 = sbr.rel (%p369) target = $region44
      $region43: #{tpu_custom_call.1} parent=11 // pred_region
        _
      $region44: #{tpu_custom_call.1} parent=11 // pred_fallthru
        _
      // Predicated region
      $region45: #{tpu_custom_call.1} parent=11 // pred_check
        %p372 = pneg %p286
      $region46: #{tpu_custom_call.1} parent=11 // pred_check_branch
        %374 = sbr.rel (%p372) target = $region48
      $region47: #{tpu_custom_call.1} parent=11 // pred_region
        _
      $region48: #{tpu_custom_call.1} parent=11 // pred_fallthru
        _
      // Predicated region
      $region49: #{tpu_custom_call.1} parent=11 // pred_check
        %p375 = pneg %p307
      $region50: #{tpu_custom_call.1} parent=11 // pred_check_branch
        %377 = sbr.rel (%p375) target = $region52
      $region51: #{tpu_custom_call.1} parent=11 // pred_region
        _
      $region52: #{tpu_custom_call.1} parent=11 // pred_fallthru
        _
    $region12: #{tpu_custom_call.1} parent=5 // pred_fallthru
      _
    %p378 = scmp.lt.s32.totalorder %s19, 2
    // Predicated region
    $region53: #{tpu_custom_call.1} parent=5 // pred_check
      %p379 = pneg %p378
    $region54: #{tpu_custom_call.1} parent=5 // pred_check_branch
      %381 = sbr.rel (%p379) target = $region56
    $region55: #{tpu_custom_call.1} parent=5 // pred_region
      // Predicated region
      $region57: #{tpu_custom_call.1} parent=55 // pred_check
        %p382 = pneg %p39
      $region58: #{tpu_custom_call.1} parent=55 // pred_check_branch
        %384 = sbr.rel (%p382) target = $region60
      $region59: #{tpu_custom_call.1} parent=55 // pred_region
        %p385 = scmp.lt.s32.totalorder %s19, 1
        %s386 = scalar_select %p385, %s19, 1
        %s387 = smul.addr %s386, 32
        %s388 = smul.addr %s387, 8
        %s389 = scalar_lea.vmem %s0, %s388
      $region60: #{tpu_custom_call.1} parent=55 // pred_fallthru
        _
      // Predicated region
      $region61: #{tpu_custom_call.1} parent=55 // pred_check
        %p390 = pneg %p65
      $region62: #{tpu_custom_call.1} parent=55 // pred_check_branch
        %392 = sbr.rel (%p390) target = $region64
      $region63: #{tpu_custom_call.1} parent=55 // pred_region
        %p393 = scmp.lt.s32.totalorder %s19, 1
        %s394 = scalar_select %p393, %s19, 1
        %s395 = smul.addr %s394, 32
        %s396 = smul.addr %s395, 8
        %s397 = scalar_lea.vmem %s1, %s396
      $region64: #{tpu_custom_call.1} parent=55 // pred_fallthru
        _
      // Predicated region
      $region65: #{tpu_custom_call.1} parent=55 // pred_check
        %p398 = pneg %p91
      $region66: #{tpu_custom_call.1} parent=55 // pred_check_branch
        %400 = sbr.rel (%p398) target = $region68
      $region67: #{tpu_custom_call.1} parent=55 // pred_region
        %p401 = scmp.lt.s32.totalorder %s19, 1
        %s402 = scalar_select %p401, %s19, 1
        %s403 = smul.addr %s402, 32
        %s404 = smul.addr %s403, 8
        %s405 = scalar_lea.vmem %s2, %s404
      $region68: #{tpu_custom_call.1} parent=55 // pred_fallthru
        _
    $region56: #{tpu_custom_call.1} parent=5 // pred_fallthru
      _
    %p406 = scmp.le.s32.totalorder 1, %s19
    %p407 = scmp.lt.s32.totalorder %s19, 3
    %p408 = pnand %p406, %p407
    %p409 = pneg %p408
    // Predicated region
    $region69: #{tpu_custom_call.1} parent=5 // pred_check
      _
    $region70: #{tpu_custom_call.1} parent=5 // pred_check_branch
      %411 = sbr.rel (%p408) target = $region72
    $region71: #{tpu_custom_call.1} parent=5 // pred_region
      %s412 = ssub.s32 %s19, 1
      %p413 = scmp.lt.s32.totalorder %s24, 1
      %s414 = scalar_select %p413, %s24, 1
      %s415 = smul.addr %s414, 32
      %s416 = smul.addr %s415, 8
      %s417 = scalar_lea.vmem %s0, %s416
      %p418 = pneg %p45
      %p419 = pneg %p42
      %p420 = scmp.lt.s32.totalorder %s24, 1
      %s421 = scalar_select %p420, %s24, 1
      %s422 = smul.addr %s421, 32
      %s423 = smul.addr %s422, 8
      %s424 = scalar_lea.vmem %s1, %s423
      %p425 = pneg %p71
      %p426 = pneg %p68
      %p427 = scmp.lt.s32.totalorder %s24, 1
      %s428 = scalar_select %p427, %s24, 1
      %s429 = smul.addr %s428, 32
      %s430 = smul.addr %s429, 8
      %s431 = scalar_lea.vmem %s2, %s430
      %p432 = pneg %p97
      %p433 = pneg %p94
      %p434 = pneg %p118
      %p435 = pneg %p115
      %p436 = pneg %p139
      %p437 = pneg %p136
      %p438 = pneg %p160
      %p439 = pneg %p157
      %p440 = pneg %p181
      %p441 = pneg %p178
      %p442 = pneg %p202
      %p443 = pneg %p199
      %p444 = pneg %p223
      %p445 = pneg %p220
      %p446 = pneg %p244
      %p447 = pneg %p241
      %p448 = pneg %p265
      %p449 = pneg %p262
      %p450 = pneg %p286
      %p451 = pneg %p283
      %p452 = pneg %p307
      %p453 = pneg %p304
      %p454 = pneg %p333
      %p455 = pneg %p330
      %p456 = scmp.lt.s32.totalorder %s24, 1
      %s457 = scalar_select %p456, %s24, 1
      %s458 = smul.addr %s457, 32
      %s459 = smul.addr %s458, 8
      %s460 = scalar_lea.vmem %s13, %s459
      %p461 = scmp.lt.s32.totalorder %s24, 1
      %s462 = scalar_select %p461, %s24, 1
      %s463 = smul.addr %s462, 32
      %s464 = smul.addr %s463, 8
      %s465 = scalar_lea.vmem %s0, %s464
      %p466 = scmp.lt.s32.totalorder %s24, 1
      %s467 = scalar_select %p466, %s24, 1
      %s468 = smul.addr %s467, 32
      %s469 = smul.addr %s468, 8
      %s470 = scalar_lea.vmem %s1, %s469
      %p471 = scmp.lt.s32.totalorder %s24, 1
      %s472 = scalar_select %p471, %s24, 1
      %s473 = smul.addr %s472, 32
      %s474 = smul.addr %s473, 8
      %s475 = scalar_lea.vmem %s2, %s474
      %p476 = scmp.lt.s32.totalorder %s24, 1
      %s477 = scalar_select %p476, %s24, 1
      %s478 = smul.addr %s477, 32
      %s479 = smul.addr %s478, 8
      %s480 = scalar_lea.vmem %s13, %s479
      %vm481 = vcmask 130048
      %482 = vst.msk [vmem:[#allocation2] sm:$0xff] %vm481, 0.0
      %483 = vst.msk [vmem:[#allocation2 + $0x8] sm:$0xff] %vm481, 0.0
      %vm484 = vcmask 123904
      %485 = vst.msk [vmem:[#allocation2 + $0x10] sm:$0x3] %vm484, 0.0
      %s486 = scalar_lea.vmem [#allocation2], 408
      %487 = vst.msk [vmem:[%s486] sm:$0xff] %vm481, 0.0
      %488 = vst.msk [vmem:[%s486 + $0x8] sm:$0xff] %vm481, 0.0
      %489 = vst.msk [vmem:[%s486 + $0x10] sm:$0x3] %vm484, 0.0
      %s490 = scalar_lea.vmem [#allocation2], 24
      %vm491 = vcmask 122880
      %492 = vst.msk [vmem:[%s490] sm:$0x1] %vm491, 0.0
      %493 = vst.msk [vmem:[%s490 + $0x18] sm:$0x1] %vm491, 0.0
      %494 = vst.msk [vmem:[%s490 + $0x30] sm:$0x1] %vm491, 0.0
      %495 = vst.msk [vmem:[%s490 + $0x48] sm:$0x1] %vm491, 0.0
      %496 = vst.msk [vmem:[%s490 + $0x60] sm:$0x1] %vm491, 0.0
      %497 = vst.msk [vmem:[%s490 + $0x78] sm:$0x1] %vm491, 0.0
      %498 = vst.msk [vmem:[%s490 + $0x90] sm:$0x1] %vm491, 0.0
      %499 = vst.msk [vmem:[%s490 + $0xa8] sm:$0x1] %vm491, 0.0
      %500 = vst.msk [vmem:[%s490 + $0xc0] sm:$0x1] %vm491, 0.0
      %501 = vst.msk [vmem:[%s490 + $0xd8] sm:$0x1] %vm491, 0.0
      %502 = vst.msk [vmem:[%s490 + $0xf0] sm:$0x1] %vm491, 0.0
      %503 = vst.msk [vmem:[%s490 + $0x108] sm:$0x1] %vm491, 0.0
      %504 = vst.msk [vmem:[%s490 + $0x120] sm:$0x1] %vm491, 0.0
      %505 = vst.msk [vmem:[%s490 + $0x138] sm:$0x1] %vm491, 0.0
      %506 = vst.msk [vmem:[%s490 + $0x150] sm:$0x1] %vm491, 0.0
      %507 = vst.msk [vmem:[%s490 + $0x168] sm:$0x1] %vm491, 0.0
      %508 = vst.msk [vmem:[%s490 + $0x11] sm:$0x1] %vm491, 0.0
      %509 = vst.msk [vmem:[%s490 + $0x29] sm:$0x1] %vm491, 0.0
      %510 = vst.msk [vmem:[%s490 + $0x41] sm:$0x1] %vm491, 0.0
      %511 = vst.msk [vmem:[%s490 + $0x59] sm:$0x1] %vm491, 0.0
      %512 = vst.msk [vmem:[%s490 + $0x71] sm:$0x1] %vm491, 0.0
      %513 = vst.msk [vmem:[%s490 + $0x89] sm:$0x1] %vm491, 0.0
      %514 = vst.msk [vmem:[%s490 + $0xa1] sm:$0x1] %vm491, 0.0
      %515 = vst.msk [vmem:[%s490 + $0xb9] sm:$0x1] %vm491, 0.0
      %516 = vst.msk [vmem:[%s490 + $0xd1] sm:$0x1] %vm491, 0.0
      %517 = vst.msk [vmem:[%s490 + $0xe9] sm:$0x1] %vm491, 0.0
      %518 = vst.msk [vmem:[%s490 + $0x101] sm:$0x1] %vm491, 0.0
      %519 = vst.msk [vmem:[%s490 + $0x119] sm:$0x1] %vm491, 0.0
      %520 = vst.msk [vmem:[%s490 + $0x131] sm:$0x1] %vm491, 0.0
      %521 = vst.msk [vmem:[%s490 + $0x149] sm:$0x1] %vm491, 0.0
      %522 = vst.msk [vmem:[%s490 + $0x161] sm:$0x1] %vm491, 0.0
      %523 = vst.msk [vmem:[%s490 + $0x179] sm:$0x1] %vm491, 0.0
      %v524 = vld [vmem:[%s470] sm:$0xff]
      %v525 = vld [vmem:[%s470 + $0x8] sm:$0xff]
      %v526 = vld [vmem:[%s470 + $0x10] sm:$0xff]
      %v527 = vld [vmem:[%s470 + $0x18] sm:$0xff]
      %v528 = vld [vmem:[%s470 + $0x20] sm:$0xff]
      %v529 = vld [vmem:[%s470 + $0x28] sm:$0xff]
      %v530 = vld [vmem:[%s470 + $0x30] sm:$0xff]
      %v531 = vld [vmem:[%s470 + $0x38] sm:$0xff]
      %v532 = vld [vmem:[%s470 + $0x40] sm:$0xff]
      %v533 = vld [vmem:[%s470 + $0x48] sm:$0xff]
      %v534 = vld [vmem:[%s470 + $0x50] sm:$0xff]
      %v535 = vld [vmem:[%s470 + $0x58] sm:$0xff]
      %v536 = vld [vmem:[%s470 + $0x60] sm:$0xff]
      %v537 = vld [vmem:[%s470 + $0x68] sm:$0xff]
      %v538 = vld [vmem:[%s470 + $0x70] sm:$0xff]
      %v539 = vld [vmem:[%s470 + $0x78] sm:$0xff]
      %v540 = vld [vmem:[%s470 + $0x80] sm:$0xff]
      %v541 = vld [vmem:[%s470 + $0x88] sm:$0xff]
      %v542 = vld [vmem:[%s470 + $0x90] sm:$0xff]
      %v543 = vld [vmem:[%s470 + $0x98] sm:$0xff]
      %v544 = vld [vmem:[%s470 + $0xa0] sm:$0xff]
      %v545 = vld [vmem:[%s470 + $0xa8] sm:$0xff]
      %v546 = vld [vmem:[%s470 + $0xb0] sm:$0xff]
      %v547 = vld [vmem:[%s470 + $0xb8] sm:$0xff]
      %v548 = vld [vmem:[%s470 + $0xc0] sm:$0xff]
      %v549 = vld [vmem:[%s470 + $0xc8] sm:$0xff]
      %v550 = vld [vmem:[%s470 + $0xd0] sm:$0xff]
      %v551 = vld [vmem:[%s470 + $0xd8] sm:$0xff]
      %v552 = vld [vmem:[%s470 + $0xe0] sm:$0xff]
      %v553 = vld [vmem:[%s470 + $0xe8] sm:$0xff]
      %v554 = vld [vmem:[%s470 + $0xf0] sm:$0xff]
      %v555 = vld [vmem:[%s470 + $0xf8] sm:$0xff]
      %v556 = vld [vmem:[%s11] sm:$0xff]
      %vm557 = vcmask 64512
      %v558 = vsel %vm557, %v524, 0.0
      %v559 = vsel %vm557, %v525, 0.0
      %v560 = vadd.f32 %v558, %v559
      %v561 = vsel %vm557, %v526, 0.0
      %v562 = vadd.f32 %v560, %v561
      %v563 = vsel %vm557, %v527, 0.0
      %v564 = vadd.f32 %v562, %v563
      %v565 = vsel %vm557, %v528, 0.0
      %v566 = vadd.f32 %v564, %v565
      %v567 = vsel %vm557, %v529, 0.0
      %v568 = vadd.f32 %v566, %v567
      %v569 = vsel %vm557, %v530, 0.0
      %v570 = vadd.f32 %v568, %v569
      %v571 = vsel %vm557, %v531, 0.0
      %v572 = vadd.f32 %v570, %v571
      %v573 = vsel %vm557, %v532, 0.0
      %v574 = vadd.f32 %v572, %v573
      %v575 = vsel %vm557, %v533, 0.0
      %v576 = vadd.f32 %v574, %v575
      %v577 = vsel %vm557, %v534, 0.0
      %v578 = vadd.f32 %v576, %v577
      %v579 = vsel %vm557, %v535, 0.0
      %v580 = vadd.f32 %v578, %v579
      %v581 = vsel %vm557, %v536, 0.0
      %v582 = vadd.f32 %v580, %v581
      %v583 = vsel %vm557, %v537, 0.0
      %v584 = vadd.f32 %v582, %v583
      %v585 = vsel %vm557, %v538, 0.0
      %v586 = vadd.f32 %v584, %v585
      %v587 = vsel %vm557, %v539, 0.0
      %v588 = vadd.f32 %v586, %v587
      %v589 = vsel %vm557, %v540, 0.0
      %v590 = vadd.f32 %v588, %v589
      %v591 = vsel %vm557, %v541, 0.0
      %v592 = vadd.f32 %v590, %v591
      %v593 = vsel %vm557, %v542, 0.0
      %v594 = vadd.f32 %v592, %v593
      %v595 = vsel %vm557, %v543, 0.0
      %v596 = vadd.f32 %v594, %v595
      %v597 = vsel %vm557, %v544, 0.0
      %v598 = vadd.f32 %v596, %v597
      %v599 = vsel %vm557, %v545, 0.0
      %v600 = vadd.f32 %v598, %v599
      %v601 = vsel %vm557, %v546, 0.0
      %v602 = vadd.f32 %v600, %v601
      %v603 = vsel %vm557, %v547, 0.0
      %v604 = vadd.f32 %v602, %v603
      %v605 = vsel %vm557, %v548, 0.0
      %v606 = vadd.f32 %v604, %v605
      %v607 = vsel %vm557, %v549, 0.0
      %v608 = vadd.f32 %v606, %v607
      %v609 = vsel %vm557, %v550, 0.0
      %v610 = vadd.f32 %v608, %v609
      %v611 = vsel %vm557, %v551, 0.0
      %v612 = vadd.f32 %v610, %v611
      %v613 = vsel %vm557, %v552, 0.0
      %v614 = vadd.f32 %v612, %v613
      %v615 = vsel %vm557, %v553, 0.0
      %v616 = vadd.f32 %v614, %v615
      %v617 = vsel %vm557, %v554, 0.0
      %v618 = vadd.f32 %v616, %v617
      %v619 = vsel %vm557, %v555, 0.0
      %v620 = vadd.f32 %v618, %v619
      %v621 = vrot.slane %v620, 4
      %v622 = vadd.f32 %v620, %v621
      %v623 = vrot.slane %v622, 2
      %v624 = vadd.f32 %v622, %v623
      %v625 = vrot.slane %v624, 1
      %v626 = vadd.f32 %v624, %v625
      %v628 = vsel %vm557, %v626, 0
      %630 = vmatpush.msra.mxu0 0.0
      %631 = vmatpush.msra.mxu0 0.0
      %632 = vmatpush.msra.mxu0 0.0
      %633 = vmatpush.msra.mxu0 0.0
      %634 = vmatpush.msra.mxu0 0.0
      %635 = vmatpush.msra.mxu0 0.0
      %636 = vmatpush.msra.mxu0 0.0
      %637 = vmatpush.msra.mxu0 0.0
      %638 = vmatpush.msra.mxu0 0.0
      %639 = vmatpush.msra.mxu0 0.0
      %640 = vmatpush.msra.mxu0 0.0
      %641 = vmatpush.msra.mxu0 0.0
      %642 = vmatpush.msra.mxu0 0.0
      %643 = vmatpush.msra.mxu0 0.0
      %644 = vmatpush.msra.mxu0 0.0
      %645 = vmatpush.msra.mxu0 %v556
      %646 = vmatmul.f32.gmra.mxu0 %v628
      %v647 = vpop.f32.mrf.mxu0
      %v648 = vadd.f32 0.0, %v647
      %649 = vdwg.mxu0
      %v650 = vperm.slane %v648, 0
      %v651 = vsub.f32 %v524, %v650
      %v652 = vsub.f32 %v525, %v650
      %v653 = vsub.f32 %v526, %v650
      %v654 = vsub.f32 %v527, %v650
      %v655 = vsub.f32 %v528, %v650
      %v656 = vsub.f32 %v529, %v650
      %v657 = vsub.f32 %v530, %v650
      %v658 = vsub.f32 %v531, %v650
      %v659 = vsub.f32 %v532, %v650
      %v660 = vsub.f32 %v533, %v650
      %v661 = vsub.f32 %v534, %v650
      %v662 = vsub.f32 %v535, %v650
      %v663 = vsub.f32 %v536, %v650
      %v664 = vsub.f32 %v537, %v650
      %v665 = vsub.f32 %v538, %v650
      %v666 = vsub.f32 %v539, %v650
      %v667 = vsub.f32 %v540, %v650
      %v668 = vsub.f32 %v541, %v650
      %v669 = vsub.f32 %v542, %v650
      %v670 = vsub.f32 %v543, %v650
      %v671 = vsub.f32 %v544, %v650
      %v672 = vsub.f32 %v545, %v650
      %v673 = vsub.f32 %v546, %v650
      %v674 = vsub.f32 %v547, %v650
      %v675 = vsub.f32 %v548, %v650
      %v676 = vsub.f32 %v549, %v650
      %v677 = vsub.f32 %v550, %v650
      %v678 = vsub.f32 %v551, %v650
      %v679 = vsub.f32 %v552, %v650
      %v680 = vsub.f32 %v553, %v650
      %v681 = vsub.f32 %v554, %v650
      %v682 = vsub.f32 %v555, %v650
      %v683 = vmul.f32 %v651, %v651
      %v684 = vmul.f32 %v652, %v652
      %v685 = vmul.f32 %v653, %v653
      %v686 = vmul.f32 %v654, %v654
      %v687 = vmul.f32 %v655, %v655
      %v688 = vmul.f32 %v656, %v656
      %v689 = vmul.f32 %v657, %v657
      %v690 = vmul.f32 %v658, %v658
      %v691 = vmul.f32 %v659, %v659
      %v692 = vmul.f32 %v660, %v660
      %v693 = vmul.f32 %v661, %v661
      %v694 = vmul.f32 %v662, %v662
      %v695 = vmul.f32 %v663, %v663
      %v696 = vmul.f32 %v664, %v664
      %v697 = vmul.f32 %v665, %v665
      %v698 = vmul.f32 %v666, %v666
      %v699 = vmul.f32 %v667, %v667
      %v700 = vmul.f32 %v668, %v668
      %v701 = vmul.f32 %v669, %v669
      %v702 = vmul.f32 %v670, %v670
      %v703 = vmul.f32 %v671, %v671
      %v704 = vmul.f32 %v672, %v672
      %v705 = vmul.f32 %v673, %v673
      %v706 = vmul.f32 %v674, %v674
      %v707 = vmul.f32 %v675, %v675
      %v708 = vmul.f32 %v676, %v676
      %v709 = vmul.f32 %v677, %v677
      %v710 = vmul.f32 %v678, %v678
      %v711 = vmul.f32 %v679, %v679
      %v712 = vmul.f32 %v680, %v680
      %v713 = vmul.f32 %v681, %v681
      %v714 = vmul.f32 %v682, %v682
      %v715 = vsel %vm557, %v683, 0.0
      %v716 = vsel %vm557, %v684, 0.0
      %v717 = vadd.f32 %v715, %v716
      %v718 = vsel %vm557, %v685, 0.0
      %v719 = vadd.f32 %v717, %v718
      %v720 = vsel %vm557, %v686, 0.0
      %v721 = vadd.f32 %v719, %v720
      %v722 = vsel %vm557, %v687, 0.0
      %v723 = vadd.f32 %v721, %v722
      %v724 = vsel %vm557, %v688, 0.0
      %v725 = vadd.f32 %v723, %v724
      %v726 = vsel %vm557, %v689, 0.0
      %v727 = vadd.f32 %v725, %v726
      %v728 = vsel %vm557, %v690, 0.0
      %v729 = vadd.f32 %v727, %v728
      %v730 = vsel %vm557, %v691, 0.0
      %v731 = vadd.f32 %v729, %v730
      %v732 = vsel %vm557, %v692, 0.0
      %v733 = vadd.f32 %v731, %v732
      %v734 = vsel %vm557, %v693, 0.0
      %v735 = vadd.f32 %v733, %v734
      %v736 = vsel %vm557, %v694, 0.0
      %v737 = vadd.f32 %v735, %v736
      %v738 = vsel %vm557, %v695, 0.0
      %v739 = vadd.f32 %v737, %v738
      %v740 = vsel %vm557, %v696, 0.0
      %v741 = vadd.f32 %v739, %v740
      %v742 = vsel %vm557, %v697, 0.0
      %v743 = vadd.f32 %v741, %v742
      %v744 = vsel %vm557, %v698, 0.0
      %v745 = vadd.f32 %v743, %v744
      %v746 = vsel %vm557, %v699, 0.0
      %v747 = vadd.f32 %v745, %v746
      %v748 = vsel %vm557, %v700, 0.0
      %v749 = vadd.f32 %v747, %v748
      %v750 = vsel %vm557, %v701, 0.0
      %v751 = vadd.f32 %v749, %v750
      %v752 = vsel %vm557, %v702, 0.0
      %v753 = vadd.f32 %v751, %v752
      %v754 = vsel %vm557, %v703, 0.0
      %v755 = vadd.f32 %v753, %v754
      %v756 = vsel %vm557, %v704, 0.0
      %v757 = vadd.f32 %v755, %v756
      %v758 = vsel %vm557, %v705, 0.0
      %v759 = vadd.f32 %v757, %v758
      %v760 = vsel %vm557, %v706, 0.0
      %v761 = vadd.f32 %v759, %v760
      %v762 = vsel %vm557, %v707, 0.0
      %v763 = vadd.f32 %v761, %v762
      %v764 = vsel %vm557, %v708, 0.0
      %v765 = vadd.f32 %v763, %v764
      %v766 = vsel %vm557, %v709, 0.0
      %v767 = vadd.f32 %v765, %v766
      %v768 = vsel %vm557, %v710, 0.0
      %v769 = vadd.f32 %v767, %v768
      %v770 = vsel %vm557, %v711, 0.0
      %v771 = vadd.f32 %v769, %v770
      %v772 = vsel %vm557, %v712, 0.0
      %v773 = vadd.f32 %v771, %v772
      %v774 = vsel %vm557, %v713, 0.0
      %v775 = vadd.f32 %v773, %v774
      %v776 = vsel %vm557, %v714, 0.0
      %v777 = vadd.f32 %v775, %v776
      %v778 = vrot.slane %v777, 4
      %v779 = vadd.f32 %v777, %v778
      %v780 = vrot.slane %v779, 2
      %v781 = vadd.f32 %v779, %v780
      %v782 = vrot.slane %v781, 1
      %v783 = vadd.f32 %v781, %v782
      %v785 = vsel %vm557, %v783, 0
      %787 = vmatpush.msra.mxu0 0.0
      %788 = vmatpush.msra.mxu0 0.0
      %789 = vmatpush.msra.mxu0 0.0
      %790 = vmatpush.msra.mxu0 0.0
      %791 = vmatpush.msra.mxu0 0.0
      %792 = vmatpush.msra.mxu0 0.0
      %793 = vmatpush.msra.mxu0 0.0
      %794 = vmatpush.msra.mxu0 0.0
      %795 = vmatpush.msra.mxu0 0.0
      %796 = vmatpush.msra.mxu0 0.0
      %797 = vmatpush.msra.mxu0 0.0
      %798 = vmatpush.msra.mxu0 0.0
      %799 = vmatpush.msra.mxu0 0.0
      %800 = vmatpush.msra.mxu0 0.0
      %801 = vmatpush.msra.mxu0 0.0
      %802 = vmatpush.msra.mxu0 %v556
      %803 = vmatmul.f32.gmra.mxu0 %v785
      %v804 = vpop.f32.mrf.mxu0
      %v805 = vadd.f32 1e-05, %v804
      %806 = vdwg.mxu0
      %v807 = vrsqrt.pop %v805
      %v808 = vmul.f32 %v807, %v805
      %v809 = vmul.f32 %v808, %v807
      %v810 = vmul.f32 0.5, %v809
      %v811 = vsub.f32 1.5, %v810
      %v812 = vmul.f32 %v807, %v811
      %vm813 = vweird.f32 %v805
      %vm814 = vweird.f32 %v807
      %vm815 = vmor %vm813, %vm814
      %v816 = vsel %vm815, %v807, %v812
      %v817 = vperm.slane %v816, 0
      %v818 = vmul.f32 %v651, %v817
      %v819 = vmul.f32 %v652, %v817
      %v820 = vmul.f32 %v653, %v817
      %v821 = vmul.f32 %v654, %v817
      %v822 = vmul.f32 %v655, %v817
      %v823 = vmul.f32 %v656, %v817
      %v824 = vmul.f32 %v657, %v817
      %v825 = vmul.f32 %v658, %v817
      %v826 = vmul.f32 %v659, %v817
      %v827 = vmul.f32 %v660, %v817
      %v828 = vmul.f32 %v661, %v817
      %v829 = vmul.f32 %v662, %v817
      %v830 = vmul.f32 %v663, %v817
      %v831 = vmul.f32 %v664, %v817
      %v832 = vmul.f32 %v665, %v817
      %v833 = vmul.f32 %v666, %v817
      %v834 = vmul.f32 %v667, %v817
      %v835 = vmul.f32 %v668, %v817
      %v836 = vmul.f32 %v669, %v817
      %v837 = vmul.f32 %v670, %v817
      %v838 = vmul.f32 %v671, %v817
      %v839 = vmul.f32 %v672, %v817
      %v840 = vmul.f32 %v673, %v817
      %v841 = vmul.f32 %v674, %v817
      %v842 = vmul.f32 %v675, %v817
      %v843 = vmul.f32 %v676, %v817
      %v844 = vmul.f32 %v677, %v817
      %v845 = vmul.f32 %v678, %v817
      %v846 = vmul.f32 %v679, %v817
      %v847 = vmul.f32 %v680, %v817
      %v848 = vmul.f32 %v681, %v817
      %v849 = vmul.f32 %v682, %v817
      %v850 = vld [vmem:[%s7] sm:$0x1]
      %v852 = vperm.slane %v850, 0
      %v854 = vmul.f32 %v818, %v852
      %v855 = vmul.f32 %v819, %v852
      %v856 = vmul.f32 %v820, %v852
      %v857 = vmul.f32 %v821, %v852
      %v858 = vmul.f32 %v822, %v852
      %v859 = vmul.f32 %v823, %v852
      %v860 = vmul.f32 %v824, %v852
      %v861 = vmul.f32 %v825, %v852
      %v862 = vmul.f32 %v826, %v852
      %v863 = vmul.f32 %v827, %v852
      %v864 = vmul.f32 %v828, %v852
      %v865 = vmul.f32 %v829, %v852
      %v866 = vmul.f32 %v830, %v852
      %v867 = vmul.f32 %v831, %v852
      %v868 = vmul.f32 %v832, %v852
      %v869 = vmul.f32 %v833, %v852
      %v870 = vmul.f32 %v834, %v852
      %v871 = vmul.f32 %v835, %v852
      %v872 = vmul.f32 %v836, %v852
      %v873 = vmul.f32 %v837, %v852
      %v874 = vmul.f32 %v838, %v852
      %v875 = vmul.f32 %v839, %v852
      %v876 = vmul.f32 %v840, %v852
      %v877 = vmul.f32 %v841, %v852
      %v878 = vmul.f32 %v842, %v852
      %v879 = vmul.f32 %v843, %v852
      %v880 = vmul.f32 %v844, %v852
      %v881 = vmul.f32 %v845, %v852
      %v882 = vmul.f32 %v846, %v852
      %v883 = vmul.f32 %v847, %v852
      %v884 = vmul.f32 %v848, %v852
      %v885 = vmul.f32 %v849, %v852
      %v886 = vld [vmem:[%s9] sm:$0x1]
      %v888 = vperm.slane %v886, 0
      %v890 = vadd.f32 %v854, %v888
      %v891 = vadd.f32 %v855, %v888
      %v892 = vadd.f32 %v856, %v888
      %v893 = vadd.f32 %v857, %v888
      %v894 = vadd.f32 %v858, %v888
      %v895 = vadd.f32 %v859, %v888
      %v896 = vadd.f32 %v860, %v888
      %v897 = vadd.f32 %v861, %v888
      %v898 = vadd.f32 %v862, %v888
      %v899 = vadd.f32 %v863, %v888
      %v900 = vadd.f32 %v864, %v888
      %v901 = vadd.f32 %v865, %v888
      %v902 = vadd.f32 %v866, %v888
      %v903 = vadd.f32 %v867, %v888
      %v904 = vadd.f32 %v868, %v888
      %v905 = vadd.f32 %v869, %v888
      %v906 = vadd.f32 %v870, %v888
      %v907 = vadd.f32 %v871, %v888
      %v908 = vadd.f32 %v872, %v888
      %v909 = vadd.f32 %v873, %v888
      %v910 = vadd.f32 %v874, %v888
      %v911 = vadd.f32 %v875, %v888
      %v912 = vadd.f32 %v876, %v888
      %v913 = vadd.f32 %v877, %v888
      %v914 = vadd.f32 %v878, %v888
      %v915 = vadd.f32 %v879, %v888
      %v916 = vadd.f32 %v880, %v888
      %v917 = vadd.f32 %v881, %v888
      %v918 = vadd.f32 %v882, %v888
      %v919 = vadd.f32 %v883, %v888
      %v920 = vadd.f32 %v884, %v888
      %v921 = vadd.f32 %v885, %v888
      %v922 = vxor.u32 %v890, 2147483648
      %v923 = vxor.u32 %v891, 2147483648
      %v924 = vxor.u32 %v892, 2147483648
      %v925 = vxor.u32 %v893, 2147483648
      %v926 = vxor.u32 %v894, 2147483648
      %v927 = vxor.u32 %v895, 2147483648
      %v928 = vxor.u32 %v896, 2147483648
      %v929 = vxor.u32 %v897, 2147483648
      %v930 = vxor.u32 %v898, 2147483648
      %v931 = vxor.u32 %v899, 2147483648
      %v932 = vxor.u32 %v900, 2147483648
      %v933 = vxor.u32 %v901, 2147483648
      %v934 = vxor.u32 %v902, 2147483648
      %v935 = vxor.u32 %v903, 2147483648
      %v936 = vxor.u32 %v904, 2147483648
      %v937 = vxor.u32 %v905, 2147483648
      %v938 = vxor.u32 %v906, 2147483648
      %v939 = vxor.u32 %v907, 2147483648
      %v940 = vxor.u32 %v908, 2147483648
      %v941 = vxor.u32 %v909, 2147483648
      %v942 = vxor.u32 %v910, 2147483648
      %v943 = vxor.u32 %v911, 2147483648
      %v944 = vxor.u32 %v912, 2147483648
      %v945 = vxor.u32 %v913, 2147483648
      %v946 = vxor.u32 %v914, 2147483648
      %v947 = vxor.u32 %v915, 2147483648
      %v948 = vxor.u32 %v916, 2147483648
      %v949 = vxor.u32 %v917, 2147483648
      %v950 = vxor.u32 %v918, 2147483648
      %v951 = vxor.u32 %v919, 2147483648
      %v952 = vxor.u32 %v920, 2147483648
      %v953 = vxor.u32 %v921, 2147483648
      %v954 = vmul.f32 %v922, 1.442695
      %v955 = vpow.pop %v954
      %v956 = vmul.f32 %v923, 1.442695
      %v957 = vpow.pop %v956
      %v958 = vmul.f32 %v924, 1.442695
      %v959 = vpow.pop %v958
      %v960 = vmul.f32 %v925, 1.442695
      %v961 = vpow.pop %v960
      %v962 = vmul.f32 %v926, 1.442695
      %v963 = vpow.pop %v962
      %v964 = vmul.f32 %v927, 1.442695
      %v965 = vpow.pop %v964
      %v966 = vmul.f32 %v928, 1.442695
      %v967 = vpow.pop %v966
      %v968 = vmul.f32 %v929, 1.442695
      %v969 = vpow.pop %v968
      %v970 = vmul.f32 %v930, 1.442695
      %v971 = vpow.pop %v970
      %v972 = vmul.f32 %v931, 1.442695
      %v973 = vpow.pop %v972
      %v974 = vmul.f32 %v932, 1.442695
      %v975 = vpow.pop %v974
      %v976 = vmul.f32 %v933, 1.442695
      %v977 = vpow.pop %v976
      %v978 = vmul.f32 %v934, 1.442695
      %v979 = vpow.pop %v978
      %v980 = vmul.f32 %v935, 1.442695
      %v981 = vpow.pop %v980
      %v982 = vmul.f32 %v936, 1.442695
      %v983 = vpow.pop %v982
      %v984 = vmul.f32 %v937, 1.442695
      %v985 = vpow.pop %v984
      %v986 = vmul.f32 %v938, 1.442695
      %v987 = vpow.pop %v986
      %v988 = vmul.f32 %v939, 1.442695
      %v989 = vpow.pop %v988
      %v990 = vmul.f32 %v940, 1.442695
      %v991 = vpow.pop %v990
      %v992 = vmul.f32 %v941, 1.442695
      %v993 = vpow.pop %v992
      %v994 = vmul.f32 %v942, 1.442695
      %v995 = vpow.pop %v994
      %v996 = vmul.f32 %v943, 1.442695
      %v997 = vpow.pop %v996
      %v998 = vmul.f32 %v944, 1.442695
      %v999 = vpow.pop %v998
      %v1000 = vmul.f32 %v945, 1.442695
      %v1001 = vpow.pop %v1000
      %v1002 = vmul.f32 %v946, 1.442695
      %v1003 = vpow.pop %v1002
      %v1004 = vmul.f32 %v947, 1.442695
      %v1005 = vpow.pop %v1004
      %v1006 = vmul.f32 %v948, 1.442695
      %v1007 = vpow.pop %v1006
      %v1008 = vmul.f32 %v949, 1.442695
      %v1009 = vpow.pop %v1008
      %v1010 = vmul.f32 %v950, 1.442695
      %v1011 = vpow.pop %v1010
      %v1012 = vmul.f32 %v951, 1.442695
      %v1013 = vpow.pop %v1012
      %v1014 = vmul.f32 %v952, 1.442695
      %v1015 = vpow.pop %v1014
      %v1016 = vmul.f32 %v953, 1.442695
      %v1017 = vpow.pop %v1016
      %v1018 = vadd.f32 %v955, 1.0
      %v1019 = vadd.f32 %v957, 1.0
      %v1020 = vadd.f32 %v959, 1.0
      %v1021 = vadd.f32 %v961, 1.0
      %v1022 = vadd.f32 %v963, 1.0
      %v1023 = vadd.f32 %v965, 1.0
      %v1024 = vadd.f32 %v967, 1.0
      %v1025 = vadd.f32 %v969, 1.0
      %v1026 = vadd.f32 %v971, 1.0
      %v1027 = vadd.f32 %v973, 1.0
      %v1028 = vadd.f32 %v975, 1.0
      %v1029 = vadd.f32 %v977, 1.0
      %v1030 = vadd.f32 %v979, 1.0
      %v1031 = vadd.f32 %v981, 1.0
      %v1032 = vadd.f32 %v983, 1.0
      %v1033 = vadd.f32 %v985, 1.0
      %v1034 = vadd.f32 %v987, 1.0
      %v1035 = vadd.f32 %v989, 1.0
      %v1036 = vadd.f32 %v991, 1.0
      %v1037 = vadd.f32 %v993, 1.0
      %v1038 = vadd.f32 %v995, 1.0
      %v1039 = vadd.f32 %v997, 1.0
      %v1040 = vadd.f32 %v999, 1.0
      %v1041 = vadd.f32 %v1001, 1.0
      %v1042 = vadd.f32 %v1003, 1.0
      %v1043 = vadd.f32 %v1005, 1.0
      %v1044 = vadd.f32 %v1007, 1.0
      %v1045 = vadd.f32 %v1009, 1.0
      %v1046 = vadd.f32 %v1011, 1.0
      %v1047 = vadd.f32 %v1013, 1.0
      %v1048 = vadd.f32 %v1015, 1.0
      %v1049 = vadd.f32 %v1017, 1.0
      %v1050 = vrcp.pop %v1018
      %v1051 = vmul.f32 %v1018, %v1050
      %v1052 = vsub.f32 1.0, %v1051
      %v1053 = vmul.f32 %v1050, %v1052
      %v1054 = vadd.f32 %v1050, %v1053
      %vm1055 = vweird.f32 %v1018
      %vm1056 = vweird.f32 %v1050
      %vm1057 = vmor %vm1055, %vm1056
      %v1058 = vsel %vm1057, %v1050, %v1054
      %v1059 = vand.u32 2147483647, %v1018
      %vm1060 = vcmp.eq.f32.partialorder %v1059, 8.507059e+37
      %v1061 = vand.u32 %v1018, 2147483648
      %v1062 = vor.u32 1.1754944e-38, %v1061
      %v1063 = vsel %vm1060, %v1062, %v1058
      %v1064 = vmul.f32 1.0, %v1063
      %v1065 = vrcp.pop %v1019
      %v1066 = vmul.f32 %v1019, %v1065
      %v1067 = vsub.f32 1.0, %v1066
      %v1068 = vmul.f32 %v1065, %v1067
      %v1069 = vadd.f32 %v1065, %v1068
      %vm1070 = vweird.f32 %v1019
      %vm1071 = vweird.f32 %v1065
      %vm1072 = vmor %vm1070, %vm1071
      %v1073 = vsel %vm1072, %v1065, %v1069
      %v1074 = vand.u32 2147483647, %v1019
      %vm1075 = vcmp.eq.f32.partialorder %v1074, 8.507059e+37
      %v1076 = vand.u32 %v1019, 2147483648
      %v1077 = vor.u32 1.1754944e-38, %v1076
      %v1078 = vsel %vm1075, %v1077, %v1073
      %v1079 = vmul.f32 1.0, %v1078
      %v1080 = vrcp.pop %v1020
      %v1081 = vmul.f32 %v1020, %v1080
      %v1082 = vsub.f32 1.0, %v1081
      %v1083 = vmul.f32 %v1080, %v1082
      %v1084 = vadd.f32 %v1080, %v1083
      %vm1085 = vweird.f32 %v1020
      %vm1086 = vweird.f32 %v1080
      %vm1087 = vmor %vm1085, %vm1086
      %v1088 = vsel %vm1087, %v1080, %v1084
      %v1089 = vand.u32 2147483647, %v1020
      %vm1090 = vcmp.eq.f32.partialorder %v1089, 8.507059e+37
      %v1091 = vand.u32 %v1020, 2147483648
      %v1092 = vor.u32 1.1754944e-38, %v1091
      %v1093 = vsel %vm1090, %v1092, %v1088
      %v1094 = vmul.f32 1.0, %v1093
      %v1095 = vrcp.pop %v1021
      %v1096 = vmul.f32 %v1021, %v1095
      %v1097 = vsub.f32 1.0, %v1096
      %v1098 = vmul.f32 %v1095, %v1097
      %v1099 = vadd.f32 %v1095, %v1098
      %vm1100 = vweird.f32 %v1021
      %vm1101 = vweird.f32 %v1095
      %vm1102 = vmor %vm1100, %vm1101
      %v1103 = vsel %vm1102, %v1095, %v1099
      %v1104 = vand.u32 2147483647, %v1021
      %vm1105 = vcmp.eq.f32.partialorder %v1104, 8.507059e+37
      %v1106 = vand.u32 %v1021, 2147483648
      %v1107 = vor.u32 1.1754944e-38, %v1106
      %v1108 = vsel %vm1105, %v1107, %v1103
      %v1109 = vmul.f32 1.0, %v1108
      %v1110 = vrcp.pop %v1022
      %v1111 = vmul.f32 %v1022, %v1110
      %v1112 = vsub.f32 1.0, %v1111
      %v1113 = vmul.f32 %v1110, %v1112
      %v1114 = vadd.f32 %v1110, %v1113
      %vm1115 = vweird.f32 %v1022
      %vm1116 = vweird.f32 %v1110
      %vm1117 = vmor %vm1115, %vm1116
      %v1118 = vsel %vm1117, %v1110, %v1114
      %v1119 = vand.u32 2147483647, %v1022
      %vm1120 = vcmp.eq.f32.partialorder %v1119, 8.507059e+37
      %v1121 = vand.u32 %v1022, 2147483648
      %v1122 = vor.u32 1.1754944e-38, %v1121
      %v1123 = vsel %vm1120, %v1122, %v1118
      %v1124 = vmul.f32 1.0, %v1123
      %v1125 = vrcp.pop %v1023
      %v1126 = vmul.f32 %v1023, %v1125
      %v1127 = vsub.f32 1.0, %v1126
      %v1128 = vmul.f32 %v1125, %v1127
      %v1129 = vadd.f32 %v1125, %v1128
      %vm1130 = vweird.f32 %v1023
      %vm1131 = vweird.f32 %v1125
      %vm1132 = vmor %vm1130, %vm1131
      %v1133 = vsel %vm1132, %v1125, %v1129
      %v1134 = vand.u32 2147483647, %v1023
      %vm1135 = vcmp.eq.f32.partialorder %v1134, 8.507059e+37
      %v1136 = vand.u32 %v1023, 2147483648
      %v1137 = vor.u32 1.1754944e-38, %v1136
      %v1138 = vsel %vm1135, %v1137, %v1133
      %v1139 = vmul.f32 1.0, %v1138
      %v1140 = vrcp.pop %v1024
      %v1141 = vmul.f32 %v1024, %v1140
      %v1142 = vsub.f32 1.0, %v1141
      %v1143 = vmul.f32 %v1140, %v1142
      %v1144 = vadd.f32 %v1140, %v1143
      %vm1145 = vweird.f32 %v1024
      %vm1146 = vweird.f32 %v1140
      %vm1147 = vmor %vm1145, %vm1146
      %v1148 = vsel %vm1147, %v1140, %v1144
      %v1149 = vand.u32 2147483647, %v1024
      %vm1150 = vcmp.eq.f32.partialorder %v1149, 8.507059e+37
      %v1151 = vand.u32 %v1024, 2147483648
      %v1152 = vor.u32 1.1754944e-38, %v1151
      %v1153 = vsel %vm1150, %v1152, %v1148
      %v1154 = vmul.f32 1.0, %v1153
      %v1155 = vrcp.pop %v1025
      %v1156 = vmul.f32 %v1025, %v1155
      %v1157 = vsub.f32 1.0, %v1156
      %v1158 = vmul.f32 %v1155, %v1157
      %v1159 = vadd.f32 %v1155, %v1158
      %vm1160 = vweird.f32 %v1025
      %vm1161 = vweird.f32 %v1155
      %vm1162 = vmor %vm1160, %vm1161
      %v1163 = vsel %vm1162, %v1155, %v1159
      %v1164 = vand.u32 2147483647, %v1025
      %vm1165 = vcmp.eq.f32.partialorder %v1164, 8.507059e+37
      %v1166 = vand.u32 %v1025, 2147483648
      %v1167 = vor.u32 1.1754944e-38, %v1166
      %v1168 = vsel %vm1165, %v1167, %v1163
      %v1169 = vmul.f32 1.0, %v1168
      %v1170 = vrcp.pop %v1026
      %v1171 = vmul.f32 %v1026, %v1170
      %v1172 = vsub.f32 1.0, %v1171
      %v1173 = vmul.f32 %v1170, %v1172
      %v1174 = vadd.f32 %v1170, %v1173
      %vm1175 = vweird.f32 %v1026
      %vm1176 = vweird.f32 %v1170
      %vm1177 = vmor %vm1175, %vm1176
      %v1178 = vsel %vm1177, %v1170, %v1174
      %v1179 = vand.u32 2147483647, %v1026
      %vm1180 = vcmp.eq.f32.partialorder %v1179, 8.507059e+37
      %v1181 = vand.u32 %v1026, 2147483648
      %v1182 = vor.u32 1.1754944e-38, %v1181
      %v1183 = vsel %vm1180, %v1182, %v1178
      %v1184 = vmul.f32 1.0, %v1183
      %v1185 = vrcp.pop %v1027
      %v1186 = vmul.f32 %v1027, %v1185
      %v1187 = vsub.f32 1.0, %v1186
      %v1188 = vmul.f32 %v1185, %v1187
      %v1189 = vadd.f32 %v1185, %v1188
      %vm1190 = vweird.f32 %v1027
      %vm1191 = vweird.f32 %v1185
      %vm1192 = vmor %vm1190, %vm1191
      %v1193 = vsel %vm1192, %v1185, %v1189
      %v1194 = vand.u32 2147483647, %v1027
      %vm1195 = vcmp.eq.f32.partialorder %v1194, 8.507059e+37
      %v1196 = vand.u32 %v1027, 2147483648
      %v1197 = vor.u32 1.1754944e-38, %v1196
      %v1198 = vsel %vm1195, %v1197, %v1193
      %v1199 = vmul.f32 1.0, %v1198
      %v1200 = vrcp.pop %v1028
      %v1201 = vmul.f32 %v1028, %v1200
      %v1202 = vsub.f32 1.0, %v1201
      %v1203 = vmul.f32 %v1200, %v1202
      %v1204 = vadd.f32 %v1200, %v1203
      %vm1205 = vweird.f32 %v1028
      %vm1206 = vweird.f32 %v1200
      %vm1207 = vmor %vm1205, %vm1206
      %v1208 = vsel %vm1207, %v1200, %v1204
      %v1209 = vand.u32 2147483647, %v1028
      %vm1210 = vcmp.eq.f32.partialorder %v1209, 8.507059e+37
      %v1211 = vand.u32 %v1028, 2147483648
      %v1212 = vor.u32 1.1754944e-38, %v1211
      %v1213 = vsel %vm1210, %v1212, %v1208
      %v1214 = vmul.f32 1.0, %v1213
      %v1215 = vrcp.pop %v1029
      %v1216 = vmul.f32 %v1029, %v1215
      %v1217 = vsub.f32 1.0, %v1216
      %v1218 = vmul.f32 %v1215, %v1217
      %v1219 = vadd.f32 %v1215, %v1218
      %vm1220 = vweird.f32 %v1029
      %vm1221 = vweird.f32 %v1215
      %vm1222 = vmor %vm1220, %vm1221
      %v1223 = vsel %vm1222, %v1215, %v1219
      %v1224 = vand.u32 2147483647, %v1029
      %vm1225 = vcmp.eq.f32.partialorder %v1224, 8.507059e+37
      %v1226 = vand.u32 %v1029, 2147483648
      %v1227 = vor.u32 1.1754944e-38, %v1226
      %v1228 = vsel %vm1225, %v1227, %v1223
      %v1229 = vmul.f32 1.0, %v1228
      %v1230 = vrcp.pop %v1030
      %v1231 = vmul.f32 %v1030, %v1230
      %v1232 = vsub.f32 1.0, %v1231
      %v1233 = vmul.f32 %v1230, %v1232
      %v1234 = vadd.f32 %v1230, %v1233
      %vm1235 = vweird.f32 %v1030
      %vm1236 = vweird.f32 %v1230
      %vm1237 = vmor %vm1235, %vm1236
      %v1238 = vsel %vm1237, %v1230, %v1234
      %v1239 = vand.u32 2147483647, %v1030
      %vm1240 = vcmp.eq.f32.partialorder %v1239, 8.507059e+37
      %v1241 = vand.u32 %v1030, 2147483648
      %v1242 = vor.u32 1.1754944e-38, %v1241
      %v1243 = vsel %vm1240, %v1242, %v1238
      %v1244 = vmul.f32 1.0, %v1243
      %v1245 = vrcp.pop %v1031
      %v1246 = vmul.f32 %v1031, %v1245
      %v1247 = vsub.f32 1.0, %v1246
      %v1248 = vmul.f32 %v1245, %v1247
      %v1249 = vadd.f32 %v1245, %v1248
      %vm1250 = vweird.f32 %v1031
      %vm1251 = vweird.f32 %v1245
      %vm1252 = vmor %vm1250, %vm1251
      %v1253 = vsel %vm1252, %v1245, %v1249
      %v1254 = vand.u32 2147483647, %v1031
      %vm1255 = vcmp.eq.f32.partialorder %v1254, 8.507059e+37
      %v1256 = vand.u32 %v1031, 2147483648
      %v1257 = vor.u32 1.1754944e-38, %v1256
      %v1258 = vsel %vm1255, %v1257, %v1253
      %v1259 = vmul.f32 1.0, %v1258
      %v1260 = vrcp.pop %v1032
      %v1261 = vmul.f32 %v1032, %v1260
      %v1262 = vsub.f32 1.0, %v1261
      %v1263 = vmul.f32 %v1260, %v1262
      %v1264 = vadd.f32 %v1260, %v1263
      %vm1265 = vweird.f32 %v1032
      %vm1266 = vweird.f32 %v1260
      %vm1267 = vmor %vm1265, %vm1266
      %v1268 = vsel %vm1267, %v1260, %v1264
      %v1269 = vand.u32 2147483647, %v1032
      %vm1270 = vcmp.eq.f32.partialorder %v1269, 8.507059e+37
      %v1271 = vand.u32 %v1032, 2147483648
      %v1272 = vor.u32 1.1754944e-38, %v1271
      %v1273 = vsel %vm1270, %v1272, %v1268
      %v1274 = vmul.f32 1.0, %v1273
      %v1275 = vrcp.pop %v1033
      %v1276 = vmul.f32 %v1033, %v1275
      %v1277 = vsub.f32 1.0, %v1276
      %v1278 = vmul.f32 %v1275, %v1277
      %v1279 = vadd.f32 %v1275, %v1278
      %vm1280 = vweird.f32 %v1033
      %vm1281 = vweird.f32 %v1275
      %vm1282 = vmor %vm1280, %vm1281
      %v1283 = vsel %vm1282, %v1275, %v1279
      %v1284 = vand.u32 2147483647, %v1033
      %vm1285 = vcmp.eq.f32.partialorder %v1284, 8.507059e+37
      %v1286 = vand.u32 %v1033, 2147483648
      %v1287 = vor.u32 1.1754944e-38, %v1286
      %v1288 = vsel %vm1285, %v1287, %v1283
      %v1289 = vmul.f32 1.0, %v1288
      %v1290 = vrcp.pop %v1034
      %v1291 = vmul.f32 %v1034, %v1290
      %v1292 = vsub.f32 1.0, %v1291
      %v1293 = vmul.f32 %v1290, %v1292
      %v1294 = vadd.f32 %v1290, %v1293
      %vm1295 = vweird.f32 %v1034
      %vm1296 = vweird.f32 %v1290
      %vm1297 = vmor %vm1295, %vm1296
      %v1298 = vsel %vm1297, %v1290, %v1294
      %v1299 = vand.u32 2147483647, %v1034
      %vm1300 = vcmp.eq.f32.partialorder %v1299, 8.507059e+37
      %v1301 = vand.u32 %v1034, 2147483648
      %v1302 = vor.u32 1.1754944e-38, %v1301
      %v1303 = vsel %vm1300, %v1302, %v1298
      %v1304 = vmul.f32 1.0, %v1303
      %v1305 = vrcp.pop %v1035
      %v1306 = vmul.f32 %v1035, %v1305
      %v1307 = vsub.f32 1.0, %v1306
      %v1308 = vmul.f32 %v1305, %v1307
      %v1309 = vadd.f32 %v1305, %v1308
      %vm1310 = vweird.f32 %v1035
      %vm1311 = vweird.f32 %v1305
      %vm1312 = vmor %vm1310, %vm1311
      %v1313 = vsel %vm1312, %v1305, %v1309
      %v1314 = vand.u32 2147483647, %v1035
      %vm1315 = vcmp.eq.f32.partialorder %v1314, 8.507059e+37
      %v1316 = vand.u32 %v1035, 2147483648
      %v1317 = vor.u32 1.1754944e-38, %v1316
      %v1318 = vsel %vm1315, %v1317, %v1313
      %v1319 = vmul.f32 1.0, %v1318
      %v1320 = vrcp.pop %v1036
      %v1321 = vmul.f32 %v1036, %v1320
      %v1322 = vsub.f32 1.0, %v1321
      %v1323 = vmul.f32 %v1320, %v1322
      %v1324 = vadd.f32 %v1320, %v1323
      %vm1325 = vweird.f32 %v1036
      %vm1326 = vweird.f32 %v1320
      %vm1327 = vmor %vm1325, %vm1326
      %v1328 = vsel %vm1327, %v1320, %v1324
      %v1329 = vand.u32 2147483647, %v1036
      %vm1330 = vcmp.eq.f32.partialorder %v1329, 8.507059e+37
      %v1331 = vand.u32 %v1036, 2147483648
      %v1332 = vor.u32 1.1754944e-38, %v1331
      %v1333 = vsel %vm1330, %v1332, %v1328
      %v1334 = vmul.f32 1.0, %v1333
      %v1335 = vrcp.pop %v1037
      %v1336 = vmul.f32 %v1037, %v1335
      %v1337 = vsub.f32 1.0, %v1336
      %v1338 = vmul.f32 %v1335, %v1337
      %v1339 = vadd.f32 %v1335, %v1338
      %vm1340 = vweird.f32 %v1037
      %vm1341 = vweird.f32 %v1335
      %vm1342 = vmor %vm1340, %vm1341
      %v1343 = vsel %vm1342, %v1335, %v1339
      %v1344 = vand.u32 2147483647, %v1037
      %vm1345 = vcmp.eq.f32.partialorder %v1344, 8.507059e+37
      %v1346 = vand.u32 %v1037, 2147483648
      %v1347 = vor.u32 1.1754944e-38, %v1346
      %v1348 = vsel %vm1345, %v1347, %v1343
      %v1349 = vmul.f32 1.0, %v1348
      %v1350 = vrcp.pop %v1038
      %v1351 = vmul.f32 %v1038, %v1350
      %v1352 = vsub.f32 1.0, %v1351
      %v1353 = vmul.f32 %v1350, %v1352
      %v1354 = vadd.f32 %v1350, %v1353
      %vm1355 = vweird.f32 %v1038
      %vm1356 = vweird.f32 %v1350
      %vm1357 = vmor %vm1355, %vm1356
      %v1358 = vsel %vm1357, %v1350, %v1354
      %v1359 = vand.u32 2147483647, %v1038
      %vm1360 = vcmp.eq.f32.partialorder %v1359, 8.507059e+37
      %v1361 = vand.u32 %v1038, 2147483648
      %v1362 = vor.u32 1.1754944e-38, %v1361
      %v1363 = vsel %vm1360, %v1362, %v1358
      %v1364 = vmul.f32 1.0, %v1363
      %v1365 = vrcp.pop %v1039
      %v1366 = vmul.f32 %v1039, %v1365
      %v1367 = vsub.f32 1.0, %v1366
      %v1368 = vmul.f32 %v1365, %v1367
      %v1369 = vadd.f32 %v1365, %v1368
      %vm1370 = vweird.f32 %v1039
      %vm1371 = vweird.f32 %v1365
      %vm1372 = vmor %vm1370, %vm1371
      %v1373 = vsel %vm1372, %v1365, %v1369
      %v1374 = vand.u32 2147483647, %v1039
      %vm1375 = vcmp.eq.f32.partialorder %v1374, 8.507059e+37
      %v1376 = vand.u32 %v1039, 2147483648
      %v1377 = vor.u32 1.1754944e-38, %v1376
      %v1378 = vsel %vm1375, %v1377, %v1373
      %v1379 = vmul.f32 1.0, %v1378
      %v1380 = vrcp.pop %v1040
      %v1381 = vmul.f32 %v1040, %v1380
      %v1382 = vsub.f32 1.0, %v1381
      %v1383 = vmul.f32 %v1380, %v1382
      %v1384 = vadd.f32 %v1380, %v1383
      %vm1385 = vweird.f32 %v1040
      %vm1386 = vweird.f32 %v1380
      %vm1387 = vmor %vm1385, %vm1386
      %v1388 = vsel %vm1387, %v1380, %v1384
      %v1389 = vand.u32 2147483647, %v1040
      %vm1390 = vcmp.eq.f32.partialorder %v1389, 8.507059e+37
      %v1391 = vand.u32 %v1040, 2147483648
      %v1392 = vor.u32 1.1754944e-38, %v1391
      %v1393 = vsel %vm1390, %v1392, %v1388
      %v1394 = vmul.f32 1.0, %v1393
      %v1395 = vrcp.pop %v1041
      %v1396 = vmul.f32 %v1041, %v1395
      %v1397 = vsub.f32 1.0, %v1396
      %v1398 = vmul.f32 %v1395, %v1397
      %v1399 = vadd.f32 %v1395, %v1398
      %vm1400 = vweird.f32 %v1041
      %vm1401 = vweird.f32 %v1395
      %vm1402 = vmor %vm1400, %vm1401
      %v1403 = vsel %vm1402, %v1395, %v1399
      %v1404 = vand.u32 2147483647, %v1041
      %vm1405 = vcmp.eq.f32.partialorder %v1404, 8.507059e+37
      %v1406 = vand.u32 %v1041, 2147483648
      %v1407 = vor.u32 1.1754944e-38, %v1406
      %v1408 = vsel %vm1405, %v1407, %v1403
      %v1409 = vmul.f32 1.0, %v1408
      %v1410 = vrcp.pop %v1042
      %v1411 = vmul.f32 %v1042, %v1410
      %v1412 = vsub.f32 1.0, %v1411
      %v1413 = vmul.f32 %v1410, %v1412
      %v1414 = vadd.f32 %v1410, %v1413
      %vm1415 = vweird.f32 %v1042
      %vm1416 = vweird.f32 %v1410
      %vm1417 = vmor %vm1415, %vm1416
      %v1418 = vsel %vm1417, %v1410, %v1414
      %v1419 = vand.u32 2147483647, %v1042
      %vm1420 = vcmp.eq.f32.partialorder %v1419, 8.507059e+37
      %v1421 = vand.u32 %v1042, 2147483648
      %v1422 = vor.u32 1.1754944e-38, %v1421
      %v1423 = vsel %vm1420, %v1422, %v1418
      %v1424 = vmul.f32 1.0, %v1423
      %v1425 = vrcp.pop %v1043
      %v1426 = vmul.f32 %v1043, %v1425
      %v1427 = vsub.f32 1.0, %v1426
      %v1428 = vmul.f32 %v1425, %v1427
      %v1429 = vadd.f32 %v1425, %v1428
      %vm1430 = vweird.f32 %v1043
      %vm1431 = vweird.f32 %v1425
      %vm1432 = vmor %vm1430, %vm1431
      %v1433 = vsel %vm1432, %v1425, %v1429
      %v1434 = vand.u32 2147483647, %v1043
      %vm1435 = vcmp.eq.f32.partialorder %v1434, 8.507059e+37
      %v1436 = vand.u32 %v1043, 2147483648
      %v1437 = vor.u32 1.1754944e-38, %v1436
      %v1438 = vsel %vm1435, %v1437, %v1433
      %v1439 = vmul.f32 1.0, %v1438
      %v1440 = vrcp.pop %v1044
      %v1441 = vmul.f32 %v1044, %v1440
      %v1442 = vsub.f32 1.0, %v1441
      %v1443 = vmul.f32 %v1440, %v1442
      %v1444 = vadd.f32 %v1440, %v1443
      %vm1445 = vweird.f32 %v1044
      %vm1446 = vweird.f32 %v1440
      %vm1447 = vmor %vm1445, %vm1446
      %v1448 = vsel %vm1447, %v1440, %v1444
      %v1449 = vand.u32 2147483647, %v1044
      %vm1450 = vcmp.eq.f32.partialorder %v1449, 8.507059e+37
      %v1451 = vand.u32 %v1044, 2147483648
      %v1452 = vor.u32 1.1754944e-38, %v1451
      %v1453 = vsel %vm1450, %v1452, %v1448
      %v1454 = vmul.f32 1.0, %v1453
      %v1455 = vrcp.pop %v1045
      %v1456 = vmul.f32 %v1045, %v1455
      %v1457 = vsub.f32 1.0, %v1456
      %v1458 = vmul.f32 %v1455, %v1457
      %v1459 = vadd.f32 %v1455, %v1458
      %vm1460 = vweird.f32 %v1045
      %vm1461 = vweird.f32 %v1455
      %vm1462 = vmor %vm1460, %vm1461
      %v1463 = vsel %vm1462, %v1455, %v1459
      %v1464 = vand.u32 2147483647, %v1045
      %vm1465 = vcmp.eq.f32.partialorder %v1464, 8.507059e+37
      %v1466 = vand.u32 %v1045, 2147483648
      %v1467 = vor.u32 1.1754944e-38, %v1466
      %v1468 = vsel %vm1465, %v1467, %v1463
      %v1469 = vmul.f32 1.0, %v1468
      %v1470 = vrcp.pop %v1046
      %v1471 = vmul.f32 %v1046, %v1470
      %v1472 = vsub.f32 1.0, %v1471
      %v1473 = vmul.f32 %v1470, %v1472
      %v1474 = vadd.f32 %v1470, %v1473
      %vm1475 = vweird.f32 %v1046
      %vm1476 = vweird.f32 %v1470
      %vm1477 = vmor %vm1475, %vm1476
      %v1478 = vsel %vm1477, %v1470, %v1474
      %v1479 = vand.u32 2147483647, %v1046
      %vm1480 = vcmp.eq.f32.partialorder %v1479, 8.507059e+37
      %v1481 = vand.u32 %v1046, 2147483648
      %v1482 = vor.u32 1.1754944e-38, %v1481
      %v1483 = vsel %vm1480, %v1482, %v1478
      %v1484 = vmul.f32 1.0, %v1483
      %v1485 = vrcp.pop %v1047
      %v1486 = vmul.f32 %v1047, %v1485
      %v1487 = vsub.f32 1.0, %v1486
      %v1488 = vmul.f32 %v1485, %v1487
      %v1489 = vadd.f32 %v1485, %v1488
      %vm1490 = vweird.f32 %v1047
      %vm1491 = vweird.f32 %v1485
      %vm1492 = vmor %vm1490, %vm1491
      %v1493 = vsel %vm1492, %v1485, %v1489
      %v1494 = vand.u32 2147483647, %v1047
      %vm1495 = vcmp.eq.f32.partialorder %v1494, 8.507059e+37
      %v1496 = vand.u32 %v1047, 2147483648
      %v1497 = vor.u32 1.1754944e-38, %v1496
      %v1498 = vsel %vm1495, %v1497, %v1493
      %v1499 = vmul.f32 1.0, %v1498
      %v1500 = vrcp.pop %v1048
      %v1501 = vmul.f32 %v1048, %v1500
      %v1502 = vsub.f32 1.0, %v1501
      %v1503 = vmul.f32 %v1500, %v1502
      %v1504 = vadd.f32 %v1500, %v1503
      %vm1505 = vweird.f32 %v1048
      %vm1506 = vweird.f32 %v1500
      %vm1507 = vmor %vm1505, %vm1506
      %v1508 = vsel %vm1507, %v1500, %v1504
      %v1509 = vand.u32 2147483647, %v1048
      %vm1510 = vcmp.eq.f32.partialorder %v1509, 8.507059e+37
      %v1511 = vand.u32 %v1048, 2147483648
      %v1512 = vor.u32 1.1754944e-38, %v1511
      %v1513 = vsel %vm1510, %v1512, %v1508
      %v1514 = vmul.f32 1.0, %v1513
      %v1515 = vrcp.pop %v1049
      %v1516 = vmul.f32 %v1049, %v1515
      %v1517 = vsub.f32 1.0, %v1516
      %v1518 = vmul.f32 %v1515, %v1517
      %v1519 = vadd.f32 %v1515, %v1518
      %vm1520 = vweird.f32 %v1049
      %vm1521 = vweird.f32 %v1515
      %vm1522 = vmor %vm1520, %vm1521
      %v1523 = vsel %vm1522, %v1515, %v1519
      %v1524 = vand.u32 2147483647, %v1049
      %vm1525 = vcmp.eq.f32.partialorder %v1524, 8.507059e+37
      %v1526 = vand.u32 %v1049, 2147483648
      %v1527 = vor.u32 1.1754944e-38, %v1526
      %v1528 = vsel %vm1525, %v1527, %v1523
      %v1529 = vmul.f32 1.0, %v1528
      %v1530 = vmul.f32 %v890, %v1064
      %v1531 = vmul.f32 %v891, %v1079
      %v1532 = vmul.f32 %v892, %v1094
      %v1533 = vmul.f32 %v893, %v1109
      %v1534 = vmul.f32 %v894, %v1124
      %v1535 = vmul.f32 %v895, %v1139
      %v1536 = vmul.f32 %v896, %v1154
      %v1537 = vmul.f32 %v897, %v1169
      %v1538 = vmul.f32 %v898, %v1184
      %v1539 = vmul.f32 %v899, %v1199
      %v1540 = vmul.f32 %v900, %v1214
      %v1541 = vmul.f32 %v901, %v1229
      %v1542 = vmul.f32 %v902, %v1244
      %v1543 = vmul.f32 %v903, %v1259
      %v1544 = vmul.f32 %v904, %v1274
      %v1545 = vmul.f32 %v905, %v1289
      %v1546 = vmul.f32 %v906, %v1304
      %v1547 = vmul.f32 %v907, %v1319
      %v1548 = vmul.f32 %v908, %v1334
      %v1549 = vmul.f32 %v909, %v1349
      %v1550 = vmul.f32 %v910, %v1364
      %v1551 = vmul.f32 %v911, %v1379
      %v1552 = vmul.f32 %v912, %v1394
      %v1553 = vmul.f32 %v913, %v1409
      %v1554 = vmul.f32 %v914, %v1424
      %v1555 = vmul.f32 %v915, %v1439
      %v1556 = vmul.f32 %v916, %v1454
      %v1557 = vmul.f32 %v917, %v1469
      %v1558 = vmul.f32 %v918, %v1484
      %v1559 = vmul.f32 %v919, %v1499
      %v1560 = vmul.f32 %v920, %v1514
      %v1561 = vmul.f32 %v921, %v1529
      %1562 = vst.msk [vmem:[%s490 + $0x1] sm:$0xff] %vm557, %v1530
      %1563 = vst.msk [vmem:[%s490 + $0x9] sm:$0xff] %vm557, %v1531
      %1564 = vst.msk [vmem:[%s490 + $0x19] sm:$0xff] %vm557, %v1532
      %1565 = vst.msk [vmem:[%s490 + $0x21] sm:$0xff] %vm557, %v1533
      %1566 = vst.msk [vmem:[%s490 + $0x31] sm:$0xff] %vm557, %v1534
      %1567 = vst.msk [vmem:[%s490 + $0x39] sm:$0xff] %vm557, %v1535
      %1568 = vst.msk [vmem:[%s490 + $0x49] sm:$0xff] %vm557, %v1536
      %1569 = vst.msk [vmem:[%s490 + $0x51] sm:$0xff] %vm557, %v1537
      %1570 = vst.msk [vmem:[%s490 + $0x61] sm:$0xff] %vm557, %v1538
      %1571 = vst.msk [vmem:[%s490 + $0x69] sm:$0xff] %vm557, %v1539
      %1572 = vst.msk [vmem:[%s490 + $0x79] sm:$0xff] %vm557, %v1540
      %1573 = vst.msk [vmem:[%s490 + $0x81] sm:$0xff] %vm557, %v1541
      %1574 = vst.msk [vmem:[%s490 + $0x91] sm:$0xff] %vm557, %v1542
      %1575 = vst.msk [vmem:[%s490 + $0x99] sm:$0xff] %vm557, %v1543
      %1576 = vst.msk [vmem:[%s490 + $0xa9] sm:$0xff] %vm557, %v1544
      %1577 = vst.msk [vmem:[%s490 + $0xb1] sm:$0xff] %vm557, %v1545
      %1578 = vst.msk [vmem:[%s490 + $0xc1] sm:$0xff] %vm557, %v1546
      %1579 = vst.msk [vmem:[%s490 + $0xc9] sm:$0xff] %vm557, %v1547
      %1580 = vst.msk [vmem:[%s490 + $0xd9] sm:$0xff] %vm557, %v1548
      %1581 = vst.msk [vmem:[%s490 + $0xe1] sm:$0xff] %vm557, %v1549
      %1582 = vst.msk [vmem:[%s490 + $0xf1] sm:$0xff] %vm557, %v1550
      %1583 = vst.msk [vmem:[%s490 + $0xf9] sm:$0xff] %vm557, %v1551
      %1584 = vst.msk [vmem:[%s490 + $0x109] sm:$0xff] %vm557, %v1552
      %1585 = vst.msk [vmem:[%s490 + $0x111] sm:$0xff] %vm557, %v1553
      %1586 = vst.msk [vmem:[%s490 + $0x121] sm:$0xff] %vm557, %v1554
      %1587 = vst.msk [vmem:[%s490 + $0x129] sm:$0xff] %vm557, %v1555
      %1588 = vst.msk [vmem:[%s490 + $0x139] sm:$0xff] %vm557, %v1556
      %1589 = vst.msk [vmem:[%s490 + $0x141] sm:$0xff] %vm557, %v1557
      %1590 = vst.msk [vmem:[%s490 + $0x151] sm:$0xff] %vm557, %v1558
      %1591 = vst.msk [vmem:[%s490 + $0x159] sm:$0xff] %vm557, %v1559
      %1592 = vst.msk [vmem:[%s490 + $0x169] sm:$0xff] %vm557, %v1560
      %1593 = vst.msk [vmem:[%s490 + $0x171] sm:$0xff] %vm557, %v1561
      %v1594 = vld [vmem:[#allocation2] sm:$0xff]
      %v1595 = vld [vmem:[#allocation2 + $0x8] sm:$0xff]
      %v1596 = vld [vmem:[#allocation2 + $0x18] sm:$0xff]
      %v1597 = vld [vmem:[#allocation2 + $0x20] sm:$0xff]
      %v1598 = vld [vmem:[#allocation2 + $0x30] sm:$0xff]
      %v1599 = vld [vmem:[#allocation2 + $0x38] sm:$0xff]
      %v1600 = vld [vmem:[#allocation2 + $0x48] sm:$0xff]
      %v1601 = vld [vmem:[#allocation2 + $0x50] sm:$0xff]
      %v1602 = vld [vmem:[#allocation2 + $0x60] sm:$0xff]
      %v1603 = vld [vmem:[#allocation2 + $0x68] sm:$0xff]
      %v1604 = vld [vmem:[#allocation2 + $0x78] sm:$0xff]
      %v1605 = vld [vmem:[#allocation2 + $0x80] sm:$0xff]
      %v1606 = vld [vmem:[#allocation2 + $0x90] sm:$0xff]
      %v1607 = vld [vmem:[#allocation2 + $0x98] sm:$0xff]
      %v1608 = vld [vmem:[#allocation2 + $0xa8] sm:$0xff]
      %v1609 = vld [vmem:[#allocation2 + $0xb0] sm:$0xff]
      %v1610 = vld [vmem:[#allocation2 + $0xc0] sm:$0xff]
      %v1611 = vld [vmem:[#allocation2 + $0xc8] sm:$0xff]
      %v1612 = vld [vmem:[#allocation2 + $0xd8] sm:$0xff]
      %v1613 = vld [vmem:[#allocation2 + $0xe0] sm:$0xff]
      %v1614 = vld [vmem:[#allocation2 + $0xf0] sm:$0xff]
      %v1615 = vld [vmem:[#allocation2 + $0xf8] sm:$0xff]
      %v1616 = vld [vmem:[#allocation2 + $0x108] sm:$0xff]
      %v1617 = vld [vmem:[#allocation2 + $0x110] sm:$0xff]
      %v1618 = vld [vmem:[#allocation2 + $0x120] sm:$0xff]
      %v1619 = vld [vmem:[#allocation2 + $0x128] sm:$0xff]
      %v1620 = vld [vmem:[#allocation2 + $0x138] sm:$0xff]
      %v1621 = vld [vmem:[#allocation2 + $0x140] sm:$0xff]
      %v1622 = vld [vmem:[#allocation2 + $0x150] sm:$0xff]
      %v1623 = vld [vmem:[#allocation2 + $0x158] sm:$0xff]
      %v1624 = vld [vmem:[#allocation2 + $0x168] sm:$0xff]
      %v1625 = vld [vmem:[#allocation2 + $0x170] sm:$0xff]
      %v1626 = vld [vmem:[%s3] sm:$0xff]
      %v1627 = vld [vmem:[#allocation2 + $0x1] sm:$0xff]
      %v1628 = vld [vmem:[#allocation2 + $0x9] sm:$0xff]
      %v1629 = vld [vmem:[#allocation2 + $0x19] sm:$0xff]
      %v1630 = vld [vmem:[#allocation2 + $0x21] sm:$0xff]
      %v1631 = vld [vmem:[#allocation2 + $0x31] sm:$0xff]
      %v1632 = vld [vmem:[#allocation2 + $0x39] sm:$0xff]
      %v1633 = vld [vmem:[#allocation2 + $0x49] sm:$0xff]
      %v1634 = vld [vmem:[#allocation2 + $0x51] sm:$0xff]
      %v1635 = vld [vmem:[#allocation2 + $0x61] sm:$0xff]
      %v1636 = vld [vmem:[#allocation2 + $0x69] sm:$0xff]
      %v1637 = vld [vmem:[#allocation2 + $0x79] sm:$0xff]
      %v1638 = vld [vmem:[#allocation2 + $0x81] sm:$0xff]
      %v1639 = vld [vmem:[#allocation2 + $0x91] sm:$0xff]
      %v1640 = vld [vmem:[#allocation2 + $0x99] sm:$0xff]
      %v1641 = vld [vmem:[#allocation2 + $0xa9] sm:$0xff]
      %v1642 = vld [vmem:[#allocation2 + $0xb1] sm:$0xff]
      %v1643 = vld [vmem:[#allocation2 + $0xc1] sm:$0xff]
      %v1644 = vld [vmem:[#allocation2 + $0xc9] sm:$0xff]
      %v1645 = vld [vmem:[#allocation2 + $0xd9] sm:$0xff]
      %v1646 = vld [vmem:[#allocation2 + $0xe1] sm:$0xff]
      %v1647 = vld [vmem:[#allocation2 + $0xf1] sm:$0xff]
      %v1648 = vld [vmem:[#allocation2 + $0xf9] sm:$0xff]
      %v1649 = vld [vmem:[#allocation2 + $0x109] sm:$0xff]
      %v1650 = vld [vmem:[#allocation2 + $0x111] sm:$0xff]
      %v1651 = vld [vmem:[#allocation2 + $0x121] sm:$0xff]
      %v1652 = vld [vmem:[#allocation2 + $0x129] sm:$0xff]
      %v1653 = vld [vmem:[#allocation2 + $0x139] sm:$0xff]
      %v1654 = vld [vmem:[#allocation2 + $0x141] sm:$0xff]
      %v1655 = vld [vmem:[#allocation2 + $0x151] sm:$0xff]
      %v1656 = vld [vmem:[#allocation2 + $0x159] sm:$0xff]
      %v1657 = vld [vmem:[#allocation2 + $0x169] sm:$0xff]
      %v1658 = vld [vmem:[#allocation2 + $0x171] sm:$0xff]
      %s1659 = scalar_lea.vmem %s3, 8
      %v1660 = vld [vmem:[%s1659] sm:$0xff]
      %v1662 = vsel %vm557, %v1627, 0
      %v1665 = vsel %vm557, %v1628, 0
      %v1668 = vsel %vm557, %v1629, 0
      %v1671 = vsel %vm557, %v1630, 0
      %v1674 = vsel %vm557, %v1631, 0
      %v1677 = vsel %vm557, %v1632, 0
      %v1680 = vsel %vm557, %v1633, 0
      %v1683 = vsel %vm557, %v1634, 0
      %v1686 = vsel %vm557, %v1635, 0
      %v1689 = vsel %vm557, %v1636, 0
      %v1692 = vsel %vm557, %v1637, 0
      %v1695 = vsel %vm557, %v1638, 0
      %v1698 = vsel %vm557, %v1639, 0
      %v1701 = vsel %vm557, %v1640, 0
      %v1704 = vsel %vm557, %v1641, 0
      %v1707 = vsel %vm557, %v1642, 0
      %v1710 = vsel %vm557, %v1643, 0
      %v1713 = vsel %vm557, %v1644, 0
      %v1716 = vsel %vm557, %v1645, 0
      %v1719 = vsel %vm557, %v1646, 0
      %v1722 = vsel %vm557, %v1647, 0
      %v1725 = vsel %vm557, %v1648, 0
      %v1728 = vsel %vm557, %v1649, 0
      %v1731 = vsel %vm557, %v1650, 0
      %v1734 = vsel %vm557, %v1651, 0
      %v1737 = vsel %vm557, %v1652, 0
      %v1740 = vsel %vm557, %v1653, 0
      %v1743 = vsel %vm557, %v1654, 0
      %v1746 = vsel %vm557, %v1655, 0
      %v1749 = vsel %vm557, %v1656, 0
      %v1752 = vsel %vm557, %v1657, 0
      %v1755 = vsel %vm557, %v1658, 0
      %1757 = vmatpush.msra.mxu0 0.0
      %1758 = vmatpush.msra.mxu0 0.0
      %1759 = vmatpush.msra.mxu0 0.0
      %1760 = vmatpush.msra.mxu0 0.0
      %1761 = vmatpush.msra.mxu0 0.0
      %1762 = vmatpush.msra.mxu0 0.0
      %1763 = vmatpush.msra.mxu0 0.0
      %1764 = vmatpush.msra.mxu0 0.0
      %1765 = vmatpush.msra.mxu0 0.0
      %1766 = vmatpush.msra.mxu0 0.0
      %1767 = vmatpush.msra.mxu0 0.0
      %1768 = vmatpush.msra.mxu0 0.0
      %1769 = vmatpush.msra.mxu0 0.0
      %1770 = vmatpush.msra.mxu0 0.0
      %1771 = vmatpush.msra.mxu0 0.0
      %1772 = vmatpush.msra.mxu0 %v1660
      %1773 = vmatmul.f32.gmra.mxu0 %v1662
      %v1774 = vpop.f32.mrf.mxu0
      %v1775 = vadd.f32 0.0, %v1774
      %1776 = vmatmul.f32.gmra.mxu0 %v1665
      %v1777 = vpop.f32.mrf.mxu0
      %v1778 = vadd.f32 0.0, %v1777
      %1779 = vmatmul.f32.gmra.mxu0 %v1668
      %v1780 = vpop.f32.mrf.mxu0
      %v1781 = vadd.f32 0.0, %v1780
      %1782 = vmatmul.f32.gmra.mxu0 %v1671
      %v1783 = vpop.f32.mrf.mxu0
      %v1784 = vadd.f32 0.0, %v1783
      %1785 = vmatmul.f32.gmra.mxu0 %v1674
      %v1786 = vpop.f32.mrf.mxu0
      %v1787 = vadd.f32 0.0, %v1786
      %1788 = vmatmul.f32.gmra.mxu0 %v1677
      %v1789 = vpop.f32.mrf.mxu0
      %v1790 = vadd.f32 0.0, %v1789
      %1791 = vmatmul.f32.gmra.mxu0 %v1680
      %v1792 = vpop.f32.mrf.mxu0
      %v1793 = vadd.f32 0.0, %v1792
      %1794 = vmatmul.f32.gmra.mxu0 %v1683
      %v1795 = vpop.f32.mrf.mxu0
      %v1796 = vadd.f32 0.0, %v1795
      %1797 = vmatmul.f32.gmra.mxu0 %v1686
      %v1798 = vpop.f32.mrf.mxu0
      %v1799 = vadd.f32 0.0, %v1798
      %1800 = vmatmul.f32.gmra.mxu0 %v1689
      %v1801 = vpop.f32.mrf.mxu0
      %v1802 = vadd.f32 0.0, %v1801
      %1803 = vmatmul.f32.gmra.mxu0 %v1692
      %v1804 = vpop.f32.mrf.mxu0
      %v1805 = vadd.f32 0.0, %v1804
      %1806 = vmatmul.f32.gmra.mxu0 %v1695
      %v1807 = vpop.f32.mrf.mxu0
      %v1808 = vadd.f32 0.0, %v1807
      %1809 = vmatmul.f32.gmra.mxu0 %v1698
      %v1810 = vpop.f32.mrf.mxu0
      %v1811 = vadd.f32 0.0, %v1810
      %1812 = vmatmul.f32.gmra.mxu0 %v1701
      %v1813 = vpop.f32.mrf.mxu0
      %v1814 = vadd.f32 0.0, %v1813
      %1815 = vmatmul.f32.gmra.mxu0 %v1704
      %v1816 = vpop.f32.mrf.mxu0
      %v1817 = vadd.f32 0.0, %v1816
      %1818 = vmatmul.f32.gmra.mxu0 %v1707
      %v1819 = vpop.f32.mrf.mxu0
      %v1820 = vadd.f32 0.0, %v1819
      %1821 = vmatmul.f32.gmra.mxu0 %v1710
      %v1822 = vpop.f32.mrf.mxu0
      %v1823 = vadd.f32 0.0, %v1822
      %1824 = vmatmul.f32.gmra.mxu0 %v1713
      %v1825 = vpop.f32.mrf.mxu0
      %v1826 = vadd.f32 0.0, %v1825
      %1827 = vmatmul.f32.gmra.mxu0 %v1716
      %v1828 = vpop.f32.mrf.mxu0
      %v1829 = vadd.f32 0.0, %v1828
      %1830 = vmatmul.f32.gmra.mxu0 %v1719
      %v1831 = vpop.f32.mrf.mxu0
      %v1832 = vadd.f32 0.0, %v1831
      %1833 = vmatmul.f32.gmra.mxu0 %v1722
      %v1834 = vpop.f32.mrf.mxu0
      %v1835 = vadd.f32 0.0, %v1834
      %1836 = vmatmul.f32.gmra.mxu0 %v1725
      %v1837 = vpop.f32.mrf.mxu0
      %v1838 = vadd.f32 0.0, %v1837
      %1839 = vmatmul.f32.gmra.mxu0 %v1728
      %v1840 = vpop.f32.mrf.mxu0
      %v1841 = vadd.f32 0.0, %v1840
      %1842 = vmatmul.f32.gmra.mxu0 %v1731
      %v1843 = vpop.f32.mrf.mxu0
      %v1844 = vadd.f32 0.0, %v1843
      %1845 = vmatmul.f32.gmra.mxu0 %v1734
      %v1846 = vpop.f32.mrf.mxu0
      %v1847 = vadd.f32 0.0, %v1846
      %1848 = vmatmul.f32.gmra.mxu0 %v1737
      %v1849 = vpop.f32.mrf.mxu0
      %v1850 = vadd.f32 0.0, %v1849
      %1851 = vmatmul.f32.gmra.mxu0 %v1740
      %v1852 = vpop.f32.mrf.mxu0
      %v1853 = vadd.f32 0.0, %v1852
      %1854 = vmatmul.f32.gmra.mxu0 %v1743
      %v1855 = vpop.f32.mrf.mxu0
      %v1856 = vadd.f32 0.0, %v1855
      %1857 = vmatmul.f32.gmra.mxu0 %v1746
      %v1858 = vpop.f32.mrf.mxu0
      %v1859 = vadd.f32 0.0, %v1858
      %1860 = vmatmul.f32.gmra.mxu0 %v1749
      %v1861 = vpop.f32.mrf.mxu0
      %v1862 = vadd.f32 0.0, %v1861
      %1863 = vmatmul.f32.gmra.mxu0 %v1752
      %v1864 = vpop.f32.mrf.mxu0
      %v1865 = vadd.f32 0.0, %v1864
      %1866 = vmatmul.f32.gmra.mxu0 %v1755
      %v1867 = vpop.f32.mrf.mxu0
      %v1868 = vadd.f32 0.0, %v1867
      %1869 = vdwg.mxu0
      %v1871 = vsel %vm557, %v1594, 0
      %v1874 = vsel %vm557, %v1595, 0
      %v1877 = vsel %vm557, %v1596, 0
      %v1880 = vsel %vm557, %v1597, 0
      %v1883 = vsel %vm557, %v1598, 0
      %v1886 = vsel %vm557, %v1599, 0
      %v1889 = vsel %vm557, %v1600, 0
      %v1892 = vsel %vm557, %v1601, 0
      %v1895 = vsel %vm557, %v1602, 0
      %v1898 = vsel %vm557, %v1603, 0
      %v1901 = vsel %vm557, %v1604, 0
      %v1904 = vsel %vm557, %v1605, 0
      %v1907 = vsel %vm557, %v1606, 0
      %v1910 = vsel %vm557, %v1607, 0
      %v1913 = vsel %vm557, %v1608, 0
      %v1916 = vsel %vm557, %v1609, 0
      %v1919 = vsel %vm557, %v1610, 0
      %v1922 = vsel %vm557, %v1611, 0
      %v1925 = vsel %vm557, %v1612, 0
      %v1928 = vsel %vm557, %v1613, 0
      %v1931 = vsel %vm557, %v1614, 0
      %v1934 = vsel %vm557, %v1615, 0
      %v1937 = vsel %vm557, %v1616, 0
      %v1940 = vsel %vm557, %v1617, 0
      %v1943 = vsel %vm557, %v1618, 0
      %v1946 = vsel %vm557, %v1619, 0
      %v1949 = vsel %vm557, %v1620, 0
      %v1952 = vsel %vm557, %v1621, 0
      %v1955 = vsel %vm557, %v1622, 0
      %v1958 = vsel %vm557, %v1623, 0
      %v1961 = vsel %vm557, %v1624, 0
      %v1964 = vsel %vm557, %v1625, 0
      %1966 = vmatpush.msra.mxu0 0.0
      %1967 = vmatpush.msra.mxu0 0.0
      %1968 = vmatpush.msra.mxu0 0.0
      %1969 = vmatpush.msra.mxu0 0.0
      %1970 = vmatpush.msra.mxu0 0.0
      %1971 = vmatpush.msra.mxu0 0.0
      %1972 = vmatpush.msra.mxu0 0.0
      %1973 = vmatpush.msra.mxu0 0.0
      %1974 = vmatpush.msra.mxu0 0.0
      %1975 = vmatpush.msra.mxu0 0.0
      %1976 = vmatpush.msra.mxu0 0.0
      %1977 = vmatpush.msra.mxu0 0.0
      %1978 = vmatpush.msra.mxu0 0.0
      %1979 = vmatpush.msra.mxu0 0.0
      %1980 = vmatpush.msra.mxu0 0.0
      %1981 = vmatpush.msra.mxu0 %v1626
      %1982 = vmatmul.f32.gmra.mxu0 %v1871
      %v1983 = vpop.f32.mrf.mxu0
      %v1984 = vadd.f32 %v1775, %v1983
      %1985 = vmatmul.f32.gmra.mxu0 %v1874
      %v1986 = vpop.f32.mrf.mxu0
      %v1987 = vadd.f32 %v1778, %v1986
      %1988 = vmatmul.f32.gmra.mxu0 %v1877
      %v1989 = vpop.f32.mrf.mxu0
      %v1990 = vadd.f32 %v1781, %v1989
      %1991 = vmatmul.f32.gmra.mxu0 %v1880
      %v1992 = vpop.f32.mrf.mxu0
      %v1993 = vadd.f32 %v1784, %v1992
      %1994 = vmatmul.f32.gmra.mxu0 %v1883
      %v1995 = vpop.f32.mrf.mxu0
      %v1996 = vadd.f32 %v1787, %v1995
      %1997 = vmatmul.f32.gmra.mxu0 %v1886
      %v1998 = vpop.f32.mrf.mxu0
      %v1999 = vadd.f32 %v1790, %v1998
      %2000 = vmatmul.f32.gmra.mxu0 %v1889
      %v2001 = vpop.f32.mrf.mxu0
      %v2002 = vadd.f32 %v1793, %v2001
      %2003 = vmatmul.f32.gmra.mxu0 %v1892
      %v2004 = vpop.f32.mrf.mxu0
      %v2005 = vadd.f32 %v1796, %v2004
      %2006 = vmatmul.f32.gmra.mxu0 %v1895
      %v2007 = vpop.f32.mrf.mxu0
      %v2008 = vadd.f32 %v1799, %v2007
      %2009 = vmatmul.f32.gmra.mxu0 %v1898
      %v2010 = vpop.f32.mrf.mxu0
      %v2011 = vadd.f32 %v1802, %v2010
      %2012 = vmatmul.f32.gmra.mxu0 %v1901
      %v2013 = vpop.f32.mrf.mxu0
      %v2014 = vadd.f32 %v1805, %v2013
      %2015 = vmatmul.f32.gmra.mxu0 %v1904
      %v2016 = vpop.f32.mrf.mxu0
      %v2017 = vadd.f32 %v1808, %v2016
      %2018 = vmatmul.f32.gmra.mxu0 %v1907
      %v2019 = vpop.f32.mrf.mxu0
      %v2020 = vadd.f32 %v1811, %v2019
      %2021 = vmatmul.f32.gmra.mxu0 %v1910
      %v2022 = vpop.f32.mrf.mxu0
      %v2023 = vadd.f32 %v1814, %v2022
      %2024 = vmatmul.f32.gmra.mxu0 %v1913
      %v2025 = vpop.f32.mrf.mxu0
      %v2026 = vadd.f32 %v1817, %v2025
      %2027 = vmatmul.f32.gmra.mxu0 %v1916
      %v2028 = vpop.f32.mrf.mxu0
      %v2029 = vadd.f32 %v1820, %v2028
      %2030 = vmatmul.f32.gmra.mxu0 %v1919
      %v2031 = vpop.f32.mrf.mxu0
      %v2032 = vadd.f32 %v1823, %v2031
      %2033 = vmatmul.f32.gmra.mxu0 %v1922
      %v2034 = vpop.f32.mrf.mxu0
      %v2035 = vadd.f32 %v1826, %v2034
      %2036 = vmatmul.f32.gmra.mxu0 %v1925
      %v2037 = vpop.f32.mrf.mxu0
      %v2038 = vadd.f32 %v1829, %v2037
      %2039 = vmatmul.f32.gmra.mxu0 %v1928
      %v2040 = vpop.f32.mrf.mxu0
      %v2041 = vadd.f32 %v1832, %v2040
      %2042 = vmatmul.f32.gmra.mxu0 %v1931
      %v2043 = vpop.f32.mrf.mxu0
      %v2044 = vadd.f32 %v1835, %v2043
      %2045 = vmatmul.f32.gmra.mxu0 %v1934
      %v2046 = vpop.f32.mrf.mxu0
      %v2047 = vadd.f32 %v1838, %v2046
      %2048 = vmatmul.f32.gmra.mxu0 %v1937
      %v2049 = vpop.f32.mrf.mxu0
      %v2050 = vadd.f32 %v1841, %v2049
      %2051 = vmatmul.f32.gmra.mxu0 %v1940
      %v2052 = vpop.f32.mrf.mxu0
      %v2053 = vadd.f32 %v1844, %v2052
      %2054 = vmatmul.f32.gmra.mxu0 %v1943
      %v2055 = vpop.f32.mrf.mxu0
      %v2056 = vadd.f32 %v1847, %v2055
      %2057 = vmatmul.f32.gmra.mxu0 %v1946
      %v2058 = vpop.f32.mrf.mxu0
      %v2059 = vadd.f32 %v1850, %v2058
      %2060 = vmatmul.f32.gmra.mxu0 %v1949
      %v2061 = vpop.f32.mrf.mxu0
      %v2062 = vadd.f32 %v1853, %v2061
      %2063 = vmatmul.f32.gmra.mxu0 %v1952
      %v2064 = vpop.f32.mrf.mxu0
      %v2065 = vadd.f32 %v1856, %v2064
      %2066 = vmatmul.f32.gmra.mxu0 %v1955
      %v2067 = vpop.f32.mrf.mxu0
      %v2068 = vadd.f32 %v1859, %v2067
      %2069 = vmatmul.f32.gmra.mxu0 %v1958
      %v2070 = vpop.f32.mrf.mxu0
      %v2071 = vadd.f32 %v1862, %v2070
      %2072 = vmatmul.f32.gmra.mxu0 %v1961
      %v2073 = vpop.f32.mrf.mxu0
      %v2074 = vadd.f32 %v1865, %v2073
      %2075 = vmatmul.f32.gmra.mxu0 %v1964
      %v2076 = vpop.f32.mrf.mxu0
      %v2077 = vadd.f32 %v1868, %v2076
      %2078 = vdwg.mxu0
      %v2079 = vld [vmem:[#allocation2 + $0x2] sm:$0xff]
      %v2080 = vld [vmem:[#allocation2 + $0xa] sm:$0xff]
      %v2081 = vld [vmem:[#allocation2 + $0x1a] sm:$0xff]
      %v2082 = vld [vmem:[#allocation2 + $0x22] sm:$0xff]
      %v2083 = vld [vmem:[#allocation2 + $0x32] sm:$0xff]
      %v2084 = vld [vmem:[#allocation2 + $0x3a] sm:$0xff]
      %v2085 = vld [vmem:[#allocation2 + $0x4a] sm:$0xff]
      %v2086 = vld [vmem:[#allocation2 + $0x52] sm:$0xff]
      %v2087 = vld [vmem:[#allocation2 + $0x62] sm:$0xff]
      %v2088 = vld [vmem:[#allocation2 + $0x6a] sm:$0xff]
      %v2089 = vld [vmem:[#allocation2 + $0x7a] sm:$0xff]
      %v2090 = vld [vmem:[#allocation2 + $0x82] sm:$0xff]
      %v2091 = vld [vmem:[#allocation2 + $0x92] sm:$0xff]
      %v2092 = vld [vmem:[#allocation2 + $0x9a] sm:$0xff]
      %v2093 = vld [vmem:[#allocation2 + $0xaa] sm:$0xff]
      %v2094 = vld [vmem:[#allocation2 + $0xb2] sm:$0xff]
      %v2095 = vld [vmem:[#allocation2 + $0xc2] sm:$0xff]
      %v2096 = vld [vmem:[#allocation2 + $0xca] sm:$0xff]
      %v2097 = vld [vmem:[#allocation2 + $0xda] sm:$0xff]
      %v2098 = vld [vmem:[#allocation2 + $0xe2] sm:$0xff]
      %v2099 = vld [vmem:[#allocation2 + $0xf2] sm:$0xff]
      %v2100 = vld [vmem:[#allocation2 + $0xfa] sm:$0xff]
      %v2101 = vld [vmem:[#allocation2 + $0x10a] sm:$0xff]
      %v2102 = vld [vmem:[#allocation2 + $0x112] sm:$0xff]
      %v2103 = vld [vmem:[#allocation2 + $0x122] sm:$0xff]
      %v2104 = vld [vmem:[#allocation2 + $0x12a] sm:$0xff]
      %v2105 = vld [vmem:[#allocation2 + $0x13a] sm:$0xff]
      %v2106 = vld [vmem:[#allocation2 + $0x142] sm:$0xff]
      %v2107 = vld [vmem:[#allocation2 + $0x152] sm:$0xff]
      %v2108 = vld [vmem:[#allocation2 + $0x15a] sm:$0xff]
      %v2109 = vld [vmem:[#allocation2 + $0x16a] sm:$0xff]
      %v2110 = vld [vmem:[#allocation2 + $0x172] sm:$0xff]
      %s2111 = scalar_lea.vmem %s3, 16
      %v2112 = vld [vmem:[%s2111] sm:$0xff]
      %v2114 = vsel %vm557, %v2079, 0
      %v2117 = vsel %vm557, %v2080, 0
      %v2120 = vsel %vm557, %v2081, 0
      %v2123 = vsel %vm557, %v2082, 0
      %v2126 = vsel %vm557, %v2083, 0
      %v2129 = vsel %vm557, %v2084, 0
      %v2132 = vsel %vm557, %v2085, 0
      %v2135 = vsel %vm557, %v2086, 0
      %v2138 = vsel %vm557, %v2087, 0
      %v2141 = vsel %vm557, %v2088, 0
      %v2144 = vsel %vm557, %v2089, 0
      %v2147 = vsel %vm557, %v2090, 0
      %v2150 = vsel %vm557, %v2091, 0
      %v2153 = vsel %vm557, %v2092, 0
      %v2156 = vsel %vm557, %v2093, 0
      %v2159 = vsel %vm557, %v2094, 0
      %v2162 = vsel %vm557, %v2095, 0
      %v2165 = vsel %vm557, %v2096, 0
      %v2168 = vsel %vm557, %v2097, 0
      %v2171 = vsel %vm557, %v2098, 0
      %v2174 = vsel %vm557, %v2099, 0
      %v2177 = vsel %vm557, %v2100, 0
      %v2180 = vsel %vm557, %v2101, 0
      %v2183 = vsel %vm557, %v2102, 0
      %v2186 = vsel %vm557, %v2103, 0
      %v2189 = vsel %vm557, %v2104, 0
      %v2192 = vsel %vm557, %v2105, 0
      %v2195 = vsel %vm557, %v2106, 0
      %v2198 = vsel %vm557, %v2107, 0
      %v2201 = vsel %vm557, %v2108, 0
      %v2204 = vsel %vm557, %v2109, 0
      %v2207 = vsel %vm557, %v2110, 0
      %2209 = vmatpush.msra.mxu0 0.0
      %2210 = vmatpush.msra.mxu0 0.0
      %2211 = vmatpush.msra.mxu0 0.0
      %2212 = vmatpush.msra.mxu0 0.0
      %2213 = vmatpush.msra.mxu0 0.0
      %2214 = vmatpush.msra.mxu0 0.0
      %2215 = vmatpush.msra.mxu0 0.0
      %2216 = vmatpush.msra.mxu0 0.0
      %2217 = vmatpush.msra.mxu0 0.0
      %2218 = vmatpush.msra.mxu0 0.0
      %2219 = vmatpush.msra.mxu0 0.0
      %2220 = vmatpush.msra.mxu0 0.0
      %2221 = vmatpush.msra.mxu0 0.0
      %2222 = vmatpush.msra.mxu0 0.0
      %2223 = vmatpush.msra.mxu0 0.0
      %2224 = vmatpush.msra.mxu0 %v2112
      %2225 = vmatmul.f32.gmra.mxu0 %v2114
      %v2226 = vpop.f32.mrf.mxu0
      %v2227 = vadd.f32 0.0, %v2226
      %2228 = vmatmul.f32.gmra.mxu0 %v2117
      %v2229 = vpop.f32.mrf.mxu0
      %v2230 = vadd.f32 0.0, %v2229
      %2231 = vmatmul.f32.gmra.mxu0 %v2120
      %v2232 = vpop.f32.mrf.mxu0
      %v2233 = vadd.f32 0.0, %v2232
      %2234 = vmatmul.f32.gmra.mxu0 %v2123
      %v2235 = vpop.f32.mrf.mxu0
      %v2236 = vadd.f32 0.0, %v2235
      %2237 = vmatmul.f32.gmra.mxu0 %v2126
      %v2238 = vpop.f32.mrf.mxu0
      %v2239 = vadd.f32 0.0, %v2238
      %2240 = vmatmul.f32.gmra.mxu0 %v2129
      %v2241 = vpop.f32.mrf.mxu0
      %v2242 = vadd.f32 0.0, %v2241
      %2243 = vmatmul.f32.gmra.mxu0 %v2132
      %v2244 = vpop.f32.mrf.mxu0
      %v2245 = vadd.f32 0.0, %v2244
      %2246 = vmatmul.f32.gmra.mxu0 %v2135
      %v2247 = vpop.f32.mrf.mxu0
      %v2248 = vadd.f32 0.0, %v2247
      %2249 = vmatmul.f32.gmra.mxu0 %v2138
      %v2250 = vpop.f32.mrf.mxu0
      %v2251 = vadd.f32 0.0, %v2250
      %2252 = vmatmul.f32.gmra.mxu0 %v2141
      %v2253 = vpop.f32.mrf.mxu0
      %v2254 = vadd.f32 0.0, %v2253
      %2255 = vmatmul.f32.gmra.mxu0 %v2144
      %v2256 = vpop.f32.mrf.mxu0
      %v2257 = vadd.f32 0.0, %v2256
      %2258 = vmatmul.f32.gmra.mxu0 %v2147
      %v2259 = vpop.f32.mrf.mxu0
      %v2260 = vadd.f32 0.0, %v2259
      %2261 = vmatmul.f32.gmra.mxu0 %v2150
      %v2262 = vpop.f32.mrf.mxu0
      %v2263 = vadd.f32 0.0, %v2262
      %2264 = vmatmul.f32.gmra.mxu0 %v2153
      %v2265 = vpop.f32.mrf.mxu0
      %v2266 = vadd.f32 0.0, %v2265
      %2267 = vmatmul.f32.gmra.mxu0 %v2156
      %v2268 = vpop.f32.mrf.mxu0
      %v2269 = vadd.f32 0.0, %v2268
      %2270 = vmatmul.f32.gmra.mxu0 %v2159
      %v2271 = vpop.f32.mrf.mxu0
      %v2272 = vadd.f32 0.0, %v2271
      %2273 = vmatmul.f32.gmra.mxu0 %v2162
      %v2274 = vpop.f32.mrf.mxu0
      %v2275 = vadd.f32 0.0, %v2274
      %2276 = vmatmul.f32.gmra.mxu0 %v2165
      %v2277 = vpop.f32.mrf.mxu0
      %v2278 = vadd.f32 0.0, %v2277
      %2279 = vmatmul.f32.gmra.mxu0 %v2168
      %v2280 = vpop.f32.mrf.mxu0
      %v2281 = vadd.f32 0.0, %v2280
      %2282 = vmatmul.f32.gmra.mxu0 %v2171
      %v2283 = vpop.f32.mrf.mxu0
      %v2284 = vadd.f32 0.0, %v2283
      %2285 = vmatmul.f32.gmra.mxu0 %v2174
      %v2286 = vpop.f32.mrf.mxu0
      %v2287 = vadd.f32 0.0, %v2286
      %2288 = vmatmul.f32.gmra.mxu0 %v2177
      %v2289 = vpop.f32.mrf.mxu0
      %v2290 = vadd.f32 0.0, %v2289
      %2291 = vmatmul.f32.gmra.mxu0 %v2180
      %v2292 = vpop.f32.mrf.mxu0
      %v2293 = vadd.f32 0.0, %v2292
      %2294 = vmatmul.f32.gmra.mxu0 %v2183
      %v2295 = vpop.f32.mrf.mxu0
      %v2296 = vadd.f32 0.0, %v2295
      %2297 = vmatmul.f32.gmra.mxu0 %v2186
      %v2298 = vpop.f32.mrf.mxu0
      %v2299 = vadd.f32 0.0, %v2298
      %2300 = vmatmul.f32.gmra.mxu0 %v2189
      %v2301 = vpop.f32.mrf.mxu0
      %v2302 = vadd.f32 0.0, %v2301
      %2303 = vmatmul.f32.gmra.mxu0 %v2192
      %v2304 = vpop.f32.mrf.mxu0
      %v2305 = vadd.f32 0.0, %v2304
      %2306 = vmatmul.f32.gmra.mxu0 %v2195
      %v2307 = vpop.f32.mrf.mxu0
      %v2308 = vadd.f32 0.0, %v2307
      %2309 = vmatmul.f32.gmra.mxu0 %v2198
      %v2310 = vpop.f32.mrf.mxu0
      %v2311 = vadd.f32 0.0, %v2310
      %2312 = vmatmul.f32.gmra.mxu0 %v2201
      %v2313 = vpop.f32.mrf.mxu0
      %v2314 = vadd.f32 0.0, %v2313
      %2315 = vmatmul.f32.gmra.mxu0 %v2204
      %v2316 = vpop.f32.mrf.mxu0
      %v2317 = vadd.f32 0.0, %v2316
      %2318 = vmatmul.f32.gmra.mxu0 %v2207
      %v2319 = vpop.f32.mrf.mxu0
      %v2320 = vadd.f32 0.0, %v2319
      %2321 = vdwg.mxu0
      %v2322 = vadd.f32 %v1984, %v2227
      %v2323 = vadd.f32 %v1987, %v2230
      %v2324 = vadd.f32 %v1990, %v2233
      %v2325 = vadd.f32 %v1993, %v2236
      %v2326 = vadd.f32 %v1996, %v2239
      %v2327 = vadd.f32 %v1999, %v2242
      %v2328 = vadd.f32 %v2002, %v2245
      %v2329 = vadd.f32 %v2005, %v2248
      %v2330 = vadd.f32 %v2008, %v2251
      %v2331 = vadd.f32 %v2011, %v2254
      %v2332 = vadd.f32 %v2014, %v2257
      %v2333 = vadd.f32 %v2017, %v2260
      %v2334 = vadd.f32 %v2020, %v2263
      %v2335 = vadd.f32 %v2023, %v2266
      %v2336 = vadd.f32 %v2026, %v2269
      %v2337 = vadd.f32 %v2029, %v2272
      %v2338 = vadd.f32 %v2032, %v2275
      %v2339 = vadd.f32 %v2035, %v2278
      %v2340 = vadd.f32 %v2038, %v2281
      %v2341 = vadd.f32 %v2041, %v2284
      %v2342 = vadd.f32 %v2044, %v2287
      %v2343 = vadd.f32 %v2047, %v2290
      %v2344 = vadd.f32 %v2050, %v2293
      %v2345 = vadd.f32 %v2053, %v2296
      %v2346 = vadd.f32 %v2056, %v2299
      %v2347 = vadd.f32 %v2059, %v2302
      %v2348 = vadd.f32 %v2062, %v2305
      %v2349 = vadd.f32 %v2065, %v2308
      %v2350 = vadd.f32 %v2068, %v2311
      %v2351 = vadd.f32 %v2071, %v2314
      %v2352 = vadd.f32 %v2074, %v2317
      %v2353 = vadd.f32 %v2077, %v2320
      %v2354 = vld [vmem:[%s490] sm:$0xff]
      %v2355 = vld [vmem:[%s490 + $0x8] sm:$0xff]
      %v2356 = vld [vmem:[%s490 + $0x18] sm:$0xff]
      %v2357 = vld [vmem:[%s490 + $0x20] sm:$0xff]
      %v2358 = vld [vmem:[%s490 + $0x30] sm:$0xff]
      %v2359 = vld [vmem:[%s490 + $0x38] sm:$0xff]
      %v2360 = vld [vmem:[%s490 + $0x48] sm:$0xff]
      %v2361 = vld [vmem:[%s490 + $0x50] sm:$0xff]
      %v2362 = vld [vmem:[%s490 + $0x60] sm:$0xff]
      %v2363 = vld [vmem:[%s490 + $0x68] sm:$0xff]
      %v2364 = vld [vmem:[%s490 + $0x78] sm:$0xff]
      %v2365 = vld [vmem:[%s490 + $0x80] sm:$0xff]
      %v2366 = vld [vmem:[%s490 + $0x90] sm:$0xff]
      %v2367 = vld [vmem:[%s490 + $0x98] sm:$0xff]
      %v2368 = vld [vmem:[%s490 + $0xa8] sm:$0xff]
      %v2369 = vld [vmem:[%s490 + $0xb0] sm:$0xff]
      %v2370 = vld [vmem:[%s490 + $0xc0] sm:$0xff]
      %v2371 = vld [vmem:[%s490 + $0xc8] sm:$0xff]
      %v2372 = vld [vmem:[%s490 + $0xd8] sm:$0xff]
      %v2373 = vld [vmem:[%s490 + $0xe0] sm:$0xff]
      %v2374 = vld [vmem:[%s490 + $0xf0] sm:$0xff]
      %v2375 = vld [vmem:[%s490 + $0xf8] sm:$0xff]
      %v2376 = vld [vmem:[%s490 + $0x108] sm:$0xff]
      %v2377 = vld [vmem:[%s490 + $0x110] sm:$0xff]
      %v2378 = vld [vmem:[%s490 + $0x120] sm:$0xff]
      %v2379 = vld [vmem:[%s490 + $0x128] sm:$0xff]
      %v2380 = vld [vmem:[%s490 + $0x138] sm:$0xff]
      %v2381 = vld [vmem:[%s490 + $0x140] sm:$0xff]
      %v2382 = vld [vmem:[%s490 + $0x150] sm:$0xff]
      %v2383 = vld [vmem:[%s490 + $0x158] sm:$0xff]
      %v2384 = vld [vmem:[%s490 + $0x168] sm:$0xff]
      %v2385 = vld [vmem:[%s490 + $0x170] sm:$0xff]
      %s2386 = scalar_lea.vmem %s3, 24
      %v2387 = vld [vmem:[%s2386] sm:$0xff]
      %v2389 = vsel %vm557, %v2354, 0
      %v2392 = vsel %vm557, %v2355, 0
      %v2395 = vsel %vm557, %v2356, 0
      %v2398 = vsel %vm557, %v2357, 0
      %v2401 = vsel %vm557, %v2358, 0
      %v2404 = vsel %vm557, %v2359, 0
      %v2407 = vsel %vm557, %v2360, 0
      %v2410 = vsel %vm557, %v2361, 0
      %v2413 = vsel %vm557, %v2362, 0
      %v2416 = vsel %vm557, %v2363, 0
      %v2419 = vsel %vm557, %v2364, 0
      %v2422 = vsel %vm557, %v2365, 0
      %v2425 = vsel %vm557, %v2366, 0
      %v2428 = vsel %vm557, %v2367, 0
      %v2431 = vsel %vm557, %v2368, 0
      %v2434 = vsel %vm557, %v2369, 0
      %v2437 = vsel %vm557, %v2370, 0
      %v2440 = vsel %vm557, %v2371, 0
      %v2443 = vsel %vm557, %v2372, 0
      %v2446 = vsel %vm557, %v2373, 0
      %v2449 = vsel %vm557, %v2374, 0
      %v2452 = vsel %vm557, %v2375, 0
      %v2455 = vsel %vm557, %v2376, 0
      %v2458 = vsel %vm557, %v2377, 0
      %v2461 = vsel %vm557, %v2378, 0
      %v2464 = vsel %vm557, %v2379, 0
      %v2467 = vsel %vm557, %v2380, 0
      %v2470 = vsel %vm557, %v2381, 0
      %v2473 = vsel %vm557, %v2382, 0
      %v2476 = vsel %vm557, %v2383, 0
      %v2479 = vsel %vm557, %v2384, 0
      %v2482 = vsel %vm557, %v2385, 0
      %2484 = vmatpush.msra.mxu0 0.0
      %2485 = vmatpush.msra.mxu0 0.0
      %2486 = vmatpush.msra.mxu0 0.0
      %2487 = vmatpush.msra.mxu0 0.0
      %2488 = vmatpush.msra.mxu0 0.0
      %2489 = vmatpush.msra.mxu0 0.0
      %2490 = vmatpush.msra.mxu0 0.0
      %2491 = vmatpush.msra.mxu0 0.0
      %2492 = vmatpush.msra.mxu0 0.0
      %2493 = vmatpush.msra.mxu0 0.0
      %2494 = vmatpush.msra.mxu0 0.0
      %2495 = vmatpush.msra.mxu0 0.0
      %2496 = vmatpush.msra.mxu0 0.0
      %2497 = vmatpush.msra.mxu0 0.0
      %2498 = vmatpush.msra.mxu0 0.0
      %2499 = vmatpush.msra.mxu0 %v2387
      %2500 = vmatmul.f32.gmra.mxu0 %v2389
      %v2501 = vpop.f32.mrf.mxu0
      %v2502 = vadd.f32 0.0, %v2501
      %2503 = vmatmul.f32.gmra.mxu0 %v2392
      %v2504 = vpop.f32.mrf.mxu0
      %v2505 = vadd.f32 0.0, %v2504
      %2506 = vmatmul.f32.gmra.mxu0 %v2395
      %v2507 = vpop.f32.mrf.mxu0
      %v2508 = vadd.f32 0.0, %v2507
      %2509 = vmatmul.f32.gmra.mxu0 %v2398
      %v2510 = vpop.f32.mrf.mxu0
      %v2511 = vadd.f32 0.0, %v2510
      %2512 = vmatmul.f32.gmra.mxu0 %v2401
      %v2513 = vpop.f32.mrf.mxu0
      %v2514 = vadd.f32 0.0, %v2513
      %2515 = vmatmul.f32.gmra.mxu0 %v2404
      %v2516 = vpop.f32.mrf.mxu0
      %v2517 = vadd.f32 0.0, %v2516
      %2518 = vmatmul.f32.gmra.mxu0 %v2407
      %v2519 = vpop.f32.mrf.mxu0
      %v2520 = vadd.f32 0.0, %v2519
      %2521 = vmatmul.f32.gmra.mxu0 %v2410
      %v2522 = vpop.f32.mrf.mxu0
      %v2523 = vadd.f32 0.0, %v2522
      %2524 = vmatmul.f32.gmra.mxu0 %v2413
      %v2525 = vpop.f32.mrf.mxu0
      %v2526 = vadd.f32 0.0, %v2525
      %2527 = vmatmul.f32.gmra.mxu0 %v2416
      %v2528 = vpop.f32.mrf.mxu0
      %v2529 = vadd.f32 0.0, %v2528
      %2530 = vmatmul.f32.gmra.mxu0 %v2419
      %v2531 = vpop.f32.mrf.mxu0
      %v2532 = vadd.f32 0.0, %v2531
      %2533 = vmatmul.f32.gmra.mxu0 %v2422
      %v2534 = vpop.f32.mrf.mxu0
      %v2535 = vadd.f32 0.0, %v2534
      %2536 = vmatmul.f32.gmra.mxu0 %v2425
      %v2537 = vpop.f32.mrf.mxu0
      %v2538 = vadd.f32 0.0, %v2537
      %2539 = vmatmul.f32.gmra.mxu0 %v2428
      %v2540 = vpop.f32.mrf.mxu0
      %v2541 = vadd.f32 0.0, %v2540
      %2542 = vmatmul.f32.gmra.mxu0 %v2431
      %v2543 = vpop.f32.mrf.mxu0
      %v2544 = vadd.f32 0.0, %v2543
      %2545 = vmatmul.f32.gmra.mxu0 %v2434
      %v2546 = vpop.f32.mrf.mxu0
      %v2547 = vadd.f32 0.0, %v2546
      %2548 = vmatmul.f32.gmra.mxu0 %v2437
      %v2549 = vpop.f32.mrf.mxu0
      %v2550 = vadd.f32 0.0, %v2549
      %2551 = vmatmul.f32.gmra.mxu0 %v2440
      %v2552 = vpop.f32.mrf.mxu0
      %v2553 = vadd.f32 0.0, %v2552
      %2554 = vmatmul.f32.gmra.mxu0 %v2443
      %v2555 = vpop.f32.mrf.mxu0
      %v2556 = vadd.f32 0.0, %v2555
      %2557 = vmatmul.f32.gmra.mxu0 %v2446
      %v2558 = vpop.f32.mrf.mxu0
      %v2559 = vadd.f32 0.0, %v2558
      %2560 = vmatmul.f32.gmra.mxu0 %v2449
      %v2561 = vpop.f32.mrf.mxu0
      %v2562 = vadd.f32 0.0, %v2561
      %2563 = vmatmul.f32.gmra.mxu0 %v2452
      %v2564 = vpop.f32.mrf.mxu0
      %v2565 = vadd.f32 0.0, %v2564
      %2566 = vmatmul.f32.gmra.mxu0 %v2455
      %v2567 = vpop.f32.mrf.mxu0
      %v2568 = vadd.f32 0.0, %v2567
      %2569 = vmatmul.f32.gmra.mxu0 %v2458
      %v2570 = vpop.f32.mrf.mxu0
      %v2571 = vadd.f32 0.0, %v2570
      %2572 = vmatmul.f32.gmra.mxu0 %v2461
      %v2573 = vpop.f32.mrf.mxu0
      %v2574 = vadd.f32 0.0, %v2573
      %2575 = vmatmul.f32.gmra.mxu0 %v2464
      %v2576 = vpop.f32.mrf.mxu0
      %v2577 = vadd.f32 0.0, %v2576
      %2578 = vmatmul.f32.gmra.mxu0 %v2467
      %v2579 = vpop.f32.mrf.mxu0
      %v2580 = vadd.f32 0.0, %v2579
      %2581 = vmatmul.f32.gmra.mxu0 %v2470
      %v2582 = vpop.f32.mrf.mxu0
      %v2583 = vadd.f32 0.0, %v2582
      %2584 = vmatmul.f32.gmra.mxu0 %v2473
      %v2585 = vpop.f32.mrf.mxu0
      %v2586 = vadd.f32 0.0, %v2585
      %2587 = vmatmul.f32.gmra.mxu0 %v2476
      %v2588 = vpop.f32.mrf.mxu0
      %v2589 = vadd.f32 0.0, %v2588
      %2590 = vmatmul.f32.gmra.mxu0 %v2479
      %v2591 = vpop.f32.mrf.mxu0
      %v2592 = vadd.f32 0.0, %v2591
      %2593 = vmatmul.f32.gmra.mxu0 %v2482
      %v2594 = vpop.f32.mrf.mxu0
      %v2595 = vadd.f32 0.0, %v2594
      %2596 = vdwg.mxu0
      %v2597 = vadd.f32 %v2322, %v2502
      %v2598 = vadd.f32 %v2323, %v2505
      %v2599 = vadd.f32 %v2324, %v2508
      %v2600 = vadd.f32 %v2325, %v2511
      %v2601 = vadd.f32 %v2326, %v2514
      %v2602 = vadd.f32 %v2327, %v2517
      %v2603 = vadd.f32 %v2328, %v2520
      %v2604 = vadd.f32 %v2329, %v2523
      %v2605 = vadd.f32 %v2330, %v2526
      %v2606 = vadd.f32 %v2331, %v2529
      %v2607 = vadd.f32 %v2332, %v2532
      %v2608 = vadd.f32 %v2333, %v2535
      %v2609 = vadd.f32 %v2334, %v2538
      %v2610 = vadd.f32 %v2335, %v2541
      %v2611 = vadd.f32 %v2336, %v2544
      %v2612 = vadd.f32 %v2337, %v2547
      %v2613 = vadd.f32 %v2338, %v2550
      %v2614 = vadd.f32 %v2339, %v2553
      %v2615 = vadd.f32 %v2340, %v2556
      %v2616 = vadd.f32 %v2341, %v2559
      %v2617 = vadd.f32 %v2342, %v2562
      %v2618 = vadd.f32 %v2343, %v2565
      %v2619 = vadd.f32 %v2344, %v2568
      %v2620 = vadd.f32 %v2345, %v2571
      %v2621 = vadd.f32 %v2346, %v2574
      %v2622 = vadd.f32 %v2347, %v2577
      %v2623 = vadd.f32 %v2348, %v2580
      %v2624 = vadd.f32 %v2349, %v2583
      %v2625 = vadd.f32 %v2350, %v2586
      %v2626 = vadd.f32 %v2351, %v2589
      %v2627 = vadd.f32 %v2352, %v2592
      %v2628 = vadd.f32 %v2353, %v2595
      %v2629 = vld [vmem:[%s490 + $0x1] sm:$0xff]
      %v2630 = vld [vmem:[%s490 + $0x9] sm:$0xff]
      %v2631 = vld [vmem:[%s490 + $0x19] sm:$0xff]
      %v2632 = vld [vmem:[%s490 + $0x21] sm:$0xff]
      %v2633 = vld [vmem:[%s490 + $0x31] sm:$0xff]
      %v2634 = vld [vmem:[%s490 + $0x39] sm:$0xff]
      %v2635 = vld [vmem:[%s490 + $0x49] sm:$0xff]
      %v2636 = vld [vmem:[%s490 + $0x51] sm:$0xff]
      %v2637 = vld [vmem:[%s490 + $0x61] sm:$0xff]
      %v2638 = vld [vmem:[%s490 + $0x69] sm:$0xff]
      %v2639 = vld [vmem:[%s490 + $0x79] sm:$0xff]
      %v2640 = vld [vmem:[%s490 + $0x81] sm:$0xff]
      %v2641 = vld [vmem:[%s490 + $0x91] sm:$0xff]
      %v2642 = vld [vmem:[%s490 + $0x99] sm:$0xff]
      %v2643 = vld [vmem:[%s490 + $0xa9] sm:$0xff]
      %v2644 = vld [vmem:[%s490 + $0xb1] sm:$0xff]
      %v2645 = vld [vmem:[%s490 + $0xc1] sm:$0xff]
      %v2646 = vld [vmem:[%s490 + $0xc9] sm:$0xff]
      %v2647 = vld [vmem:[%s490 + $0xd9] sm:$0xff]
      %v2648 = vld [vmem:[%s490 + $0xe1] sm:$0xff]
      %v2649 = vld [vmem:[%s490 + $0xf1] sm:$0xff]
      %v2650 = vld [vmem:[%s490 + $0xf9] sm:$0xff]
      %v2651 = vld [vmem:[%s490 + $0x109] sm:$0xff]
      %v2652 = vld [vmem:[%s490 + $0x111] sm:$0xff]
      %v2653 = vld [vmem:[%s490 + $0x121] sm:$0xff]
      %v2654 = vld [vmem:[%s490 + $0x129] sm:$0xff]
      %v2655 = vld [vmem:[%s490 + $0x139] sm:$0xff]
      %v2656 = vld [vmem:[%s490 + $0x141] sm:$0xff]
      %v2657 = vld [vmem:[%s490 + $0x151] sm:$0xff]
      %v2658 = vld [vmem:[%s490 + $0x159] sm:$0xff]
      %v2659 = vld [vmem:[%s490 + $0x169] sm:$0xff]
      %v2660 = vld [vmem:[%s490 + $0x171] sm:$0xff]
      %s2661 = scalar_lea.vmem %s3, 32
      %v2662 = vld [vmem:[%s2661] sm:$0xff]
      %v2664 = vsel %vm557, %v2629, 0
      %v2667 = vsel %vm557, %v2630, 0
      %v2670 = vsel %vm557, %v2631, 0
      %v2673 = vsel %vm557, %v2632, 0
      %v2676 = vsel %vm557, %v2633, 0
      %v2679 = vsel %vm557, %v2634, 0
      %v2682 = vsel %vm557, %v2635, 0
      %v2685 = vsel %vm557, %v2636, 0
      %v2688 = vsel %vm557, %v2637, 0
      %v2691 = vsel %vm557, %v2638, 0
      %v2694 = vsel %vm557, %v2639, 0
      %v2697 = vsel %vm557, %v2640, 0
      %v2700 = vsel %vm557, %v2641, 0
      %v2703 = vsel %vm557, %v2642, 0
      %v2706 = vsel %vm557, %v2643, 0
      %v2709 = vsel %vm557, %v2644, 0
      %v2712 = vsel %vm557, %v2645, 0
      %v2715 = vsel %vm557, %v2646, 0
      %v2718 = vsel %vm557, %v2647, 0
      %v2721 = vsel %vm557, %v2648, 0
      %v2724 = vsel %vm557, %v2649, 0
      %v2727 = vsel %vm557, %v2650, 0
      %v2730 = vsel %vm557, %v2651, 0
      %v2733 = vsel %vm557, %v2652, 0
      %v2736 = vsel %vm557, %v2653, 0
      %v2739 = vsel %vm557, %v2654, 0
      %v2742 = vsel %vm557, %v2655, 0
      %v2745 = vsel %vm557, %v2656, 0
      %v2748 = vsel %vm557, %v2657, 0
      %v2751 = vsel %vm557, %v2658, 0
      %v2754 = vsel %vm557, %v2659, 0
      %v2757 = vsel %vm557, %v2660, 0
      %2759 = vmatpush.msra.mxu0 0.0
      %2760 = vmatpush.msra.mxu0 0.0
      %2761 = vmatpush.msra.mxu0 0.0
      %2762 = vmatpush.msra.mxu0 0.0
      %2763 = vmatpush.msra.mxu0 0.0
      %2764 = vmatpush.msra.mxu0 0.0
      %2765 = vmatpush.msra.mxu0 0.0
      %2766 = vmatpush.msra.mxu0 0.0
      %2767 = vmatpush.msra.mxu0 0.0
      %2768 = vmatpush.msra.mxu0 0.0
      %2769 = vmatpush.msra.mxu0 0.0
      %2770 = vmatpush.msra.mxu0 0.0
      %2771 = vmatpush.msra.mxu0 0.0
      %2772 = vmatpush.msra.mxu0 0.0
      %2773 = vmatpush.msra.mxu0 0.0
      %2774 = vmatpush.msra.mxu0 %v2662
      %2775 = vmatmul.f32.gmra.mxu0 %v2664
      %v2776 = vpop.f32.mrf.mxu0
      %v2777 = vadd.f32 0.0, %v2776
      %2778 = vmatmul.f32.gmra.mxu0 %v2667
      %v2779 = vpop.f32.mrf.mxu0
      %v2780 = vadd.f32 0.0, %v2779
      %2781 = vmatmul.f32.gmra.mxu0 %v2670
      %v2782 = vpop.f32.mrf.mxu0
      %v2783 = vadd.f32 0.0, %v2782
      %2784 = vmatmul.f32.gmra.mxu0 %v2673
      %v2785 = vpop.f32.mrf.mxu0
      %v2786 = vadd.f32 0.0, %v2785
      %2787 = vmatmul.f32.gmra.mxu0 %v2676
      %v2788 = vpop.f32.mrf.mxu0
      %v2789 = vadd.f32 0.0, %v2788
      %2790 = vmatmul.f32.gmra.mxu0 %v2679
      %v2791 = vpop.f32.mrf.mxu0
      %v2792 = vadd.f32 0.0, %v2791
      %2793 = vmatmul.f32.gmra.mxu0 %v2682
      %v2794 = vpop.f32.mrf.mxu0
      %v2795 = vadd.f32 0.0, %v2794
      %2796 = vmatmul.f32.gmra.mxu0 %v2685
      %v2797 = vpop.f32.mrf.mxu0
      %v2798 = vadd.f32 0.0, %v2797
      %2799 = vmatmul.f32.gmra.mxu0 %v2688
      %v2800 = vpop.f32.mrf.mxu0
      %v2801 = vadd.f32 0.0, %v2800
      %2802 = vmatmul.f32.gmra.mxu0 %v2691
      %v2803 = vpop.f32.mrf.mxu0
      %v2804 = vadd.f32 0.0, %v2803
      %2805 = vmatmul.f32.gmra.mxu0 %v2694
      %v2806 = vpop.f32.mrf.mxu0
      %v2807 = vadd.f32 0.0, %v2806
      %2808 = vmatmul.f32.gmra.mxu0 %v2697
      %v2809 = vpop.f32.mrf.mxu0
      %v2810 = vadd.f32 0.0, %v2809
      %2811 = vmatmul.f32.gmra.mxu0 %v2700
      %v2812 = vpop.f32.mrf.mxu0
      %v2813 = vadd.f32 0.0, %v2812
      %2814 = vmatmul.f32.gmra.mxu0 %v2703
      %v2815 = vpop.f32.mrf.mxu0
      %v2816 = vadd.f32 0.0, %v2815
      %2817 = vmatmul.f32.gmra.mxu0 %v2706
      %v2818 = vpop.f32.mrf.mxu0
      %v2819 = vadd.f32 0.0, %v2818
      %2820 = vmatmul.f32.gmra.mxu0 %v2709
      %v2821 = vpop.f32.mrf.mxu0
      %v2822 = vadd.f32 0.0, %v2821
      %2823 = vmatmul.f32.gmra.mxu0 %v2712
      %v2824 = vpop.f32.mrf.mxu0
      %v2825 = vadd.f32 0.0, %v2824
      %2826 = vmatmul.f32.gmra.mxu0 %v2715
      %v2827 = vpop.f32.mrf.mxu0
      %v2828 = vadd.f32 0.0, %v2827
      %2829 = vmatmul.f32.gmra.mxu0 %v2718
      %v2830 = vpop.f32.mrf.mxu0
      %v2831 = vadd.f32 0.0, %v2830
      %2832 = vmatmul.f32.gmra.mxu0 %v2721
      %v2833 = vpop.f32.mrf.mxu0
      %v2834 = vadd.f32 0.0, %v2833
      %2835 = vmatmul.f32.gmra.mxu0 %v2724
      %v2836 = vpop.f32.mrf.mxu0
      %v2837 = vadd.f32 0.0, %v2836
      %2838 = vmatmul.f32.gmra.mxu0 %v2727
      %v2839 = vpop.f32.mrf.mxu0
      %v2840 = vadd.f32 0.0, %v2839
      %2841 = vmatmul.f32.gmra.mxu0 %v2730
      %v2842 = vpop.f32.mrf.mxu0
      %v2843 = vadd.f32 0.0, %v2842
      %2844 = vmatmul.f32.gmra.mxu0 %v2733
      %v2845 = vpop.f32.mrf.mxu0
      %v2846 = vadd.f32 0.0, %v2845
      %2847 = vmatmul.f32.gmra.mxu0 %v2736
      %v2848 = vpop.f32.mrf.mxu0
      %v2849 = vadd.f32 0.0, %v2848
      %2850 = vmatmul.f32.gmra.mxu0 %v2739
      %v2851 = vpop.f32.mrf.mxu0
      %v2852 = vadd.f32 0.0, %v2851
      %2853 = vmatmul.f32.gmra.mxu0 %v2742
      %v2854 = vpop.f32.mrf.mxu0
      %v2855 = vadd.f32 0.0, %v2854
      %2856 = vmatmul.f32.gmra.mxu0 %v2745
      %v2857 = vpop.f32.mrf.mxu0
      %v2858 = vadd.f32 0.0, %v2857
      %2859 = vmatmul.f32.gmra.mxu0 %v2748
      %v2860 = vpop.f32.mrf.mxu0
      %v2861 = vadd.f32 0.0, %v2860
      %2862 = vmatmul.f32.gmra.mxu0 %v2751
      %v2863 = vpop.f32.mrf.mxu0
      %v2864 = vadd.f32 0.0, %v2863
      %2865 = vmatmul.f32.gmra.mxu0 %v2754
      %v2866 = vpop.f32.mrf.mxu0
      %v2867 = vadd.f32 0.0, %v2866
      %2868 = vmatmul.f32.gmra.mxu0 %v2757
      %v2869 = vpop.f32.mrf.mxu0
      %v2870 = vadd.f32 0.0, %v2869
      %2871 = vdwg.mxu0
      %v2872 = vadd.f32 %v2597, %v2777
      %v2873 = vadd.f32 %v2598, %v2780
      %v2874 = vadd.f32 %v2599, %v2783
      %v2875 = vadd.f32 %v2600, %v2786
      %v2876 = vadd.f32 %v2601, %v2789
      %v2877 = vadd.f32 %v2602, %v2792
      %v2878 = vadd.f32 %v2603, %v2795
      %v2879 = vadd.f32 %v2604, %v2798
      %v2880 = vadd.f32 %v2605, %v2801
      %v2881 = vadd.f32 %v2606, %v2804
      %v2882 = vadd.f32 %v2607, %v2807
      %v2883 = vadd.f32 %v2608, %v2810
      %v2884 = vadd.f32 %v2609, %v2813
      %v2885 = vadd.f32 %v2610, %v2816
      %v2886 = vadd.f32 %v2611, %v2819
      %v2887 = vadd.f32 %v2612, %v2822
      %v2888 = vadd.f32 %v2613, %v2825
      %v2889 = vadd.f32 %v2614, %v2828
      %v2890 = vadd.f32 %v2615, %v2831
      %v2891 = vadd.f32 %v2616, %v2834
      %v2892 = vadd.f32 %v2617, %v2837
      %v2893 = vadd.f32 %v2618, %v2840
      %v2894 = vadd.f32 %v2619, %v2843
      %v2895 = vadd.f32 %v2620, %v2846
      %v2896 = vadd.f32 %v2621, %v2849
      %v2897 = vadd.f32 %v2622, %v2852
      %v2898 = vadd.f32 %v2623, %v2855
      %v2899 = vadd.f32 %v2624, %v2858
      %v2900 = vadd.f32 %v2625, %v2861
      %v2901 = vadd.f32 %v2626, %v2864
      %v2902 = vadd.f32 %v2627, %v2867
      %v2903 = vadd.f32 %v2628, %v2870
      %v2904 = vld [vmem:[%s490 + $0x2] sm:$0xff]
      %v2905 = vld [vmem:[%s490 + $0xa] sm:$0xff]
      %v2906 = vld [vmem:[%s490 + $0x1a] sm:$0xff]
      %v2907 = vld [vmem:[%s490 + $0x22] sm:$0xff]
      %v2908 = vld [vmem:[%s490 + $0x32] sm:$0xff]
      %v2909 = vld [vmem:[%s490 + $0x3a] sm:$0xff]
      %v2910 = vld [vmem:[%s490 + $0x4a] sm:$0xff]
      %v2911 = vld [vmem:[%s490 + $0x52] sm:$0xff]
      %v2912 = vld [vmem:[%s490 + $0x62] sm:$0xff]
      %v2913 = vld [vmem:[%s490 + $0x6a] sm:$0xff]
      %v2914 = vld [vmem:[%s490 + $0x7a] sm:$0xff]
      %v2915 = vld [vmem:[%s490 + $0x82] sm:$0xff]
      %v2916 = vld [vmem:[%s490 + $0x92] sm:$0xff]
      %v2917 = vld [vmem:[%s490 + $0x9a] sm:$0xff]
      %v2918 = vld [vmem:[%s490 + $0xaa] sm:$0xff]
      %v2919 = vld [vmem:[%s490 + $0xb2] sm:$0xff]
      %v2920 = vld [vmem:[%s490 + $0xc2] sm:$0xff]
      %v2921 = vld [vmem:[%s490 + $0xca] sm:$0xff]
      %v2922 = vld [vmem:[%s490 + $0xda] sm:$0xff]
      %v2923 = vld [vmem:[%s490 + $0xe2] sm:$0xff]
      %v2924 = vld [vmem:[%s490 + $0xf2] sm:$0xff]
      %v2925 = vld [vmem:[%s490 + $0xfa] sm:$0xff]
      %v2926 = vld [vmem:[%s490 + $0x10a] sm:$0xff]
      %v2927 = vld [vmem:[%s490 + $0x112] sm:$0xff]
      %v2928 = vld [vmem:[%s490 + $0x122] sm:$0xff]
      %v2929 = vld [vmem:[%s490 + $0x12a] sm:$0xff]
      %v2930 = vld [vmem:[%s490 + $0x13a] sm:$0xff]
      %v2931 = vld [vmem:[%s490 + $0x142] sm:$0xff]
      %v2932 = vld [vmem:[%s490 + $0x152] sm:$0xff]
      %v2933 = vld [vmem:[%s490 + $0x15a] sm:$0xff]
      %v2934 = vld [vmem:[%s490 + $0x16a] sm:$0xff]
      %v2935 = vld [vmem:[%s490 + $0x172] sm:$0xff]
      %s2936 = scalar_lea.vmem %s3, 40
      %v2937 = vld [vmem:[%s2936] sm:$0xff]
      %v2939 = vsel %vm557, %v2904, 0
      %v2942 = vsel %vm557, %v2905, 0
      %v2945 = vsel %vm557, %v2906, 0
      %v2948 = vsel %vm557, %v2907, 0
      %v2951 = vsel %vm557, %v2908, 0
      %v2954 = vsel %vm557, %v2909, 0
      %v2957 = vsel %vm557, %v2910, 0
      %v2960 = vsel %vm557, %v2911, 0
      %v2963 = vsel %vm557, %v2912, 0
      %v2966 = vsel %vm557, %v2913, 0
      %v2969 = vsel %vm557, %v2914, 0
      %v2972 = vsel %vm557, %v2915, 0
      %v2975 = vsel %vm557, %v2916, 0
      %v2978 = vsel %vm557, %v2917, 0
      %v2981 = vsel %vm557, %v2918, 0
      %v2984 = vsel %vm557, %v2919, 0
      %v2987 = vsel %vm557, %v2920, 0
      %v2990 = vsel %vm557, %v2921, 0
      %v2993 = vsel %vm557, %v2922, 0
      %v2996 = vsel %vm557, %v2923, 0
      %v2999 = vsel %vm557, %v2924, 0
      %v3002 = vsel %vm557, %v2925, 0
      %v3005 = vsel %vm557, %v2926, 0
      %v3008 = vsel %vm557, %v2927, 0
      %v3011 = vsel %vm557, %v2928, 0
      %v3014 = vsel %vm557, %v2929, 0
      %v3017 = vsel %vm557, %v2930, 0
      %v3020 = vsel %vm557, %v2931, 0
      %v3023 = vsel %vm557, %v2932, 0
      %v3026 = vsel %vm557, %v2933, 0
      %v3029 = vsel %vm557, %v2934, 0
      %v3032 = vsel %vm557, %v2935, 0
      %3034 = vmatpush.msra.mxu0 0.0
      %3035 = vmatpush.msra.mxu0 0.0
      %3036 = vmatpush.msra.mxu0 0.0
      %3037 = vmatpush.msra.mxu0 0.0
      %3038 = vmatpush.msra.mxu0 0.0
      %3039 = vmatpush.msra.mxu0 0.0
      %3040 = vmatpush.msra.mxu0 0.0
      %3041 = vmatpush.msra.mxu0 0.0
      %3042 = vmatpush.msra.mxu0 0.0
      %3043 = vmatpush.msra.mxu0 0.0
      %3044 = vmatpush.msra.mxu0 0.0
      %3045 = vmatpush.msra.mxu0 0.0
      %3046 = vmatpush.msra.mxu0 0.0
      %3047 = vmatpush.msra.mxu0 0.0
      %3048 = vmatpush.msra.mxu0 0.0
      %3049 = vmatpush.msra.mxu0 %v2937
      %3050 = vmatmul.f32.gmra.mxu0 %v2939
      %v3051 = vpop.f32.mrf.mxu0
      %v3052 = vadd.f32 0.0, %v3051
      %3053 = vmatmul.f32.gmra.mxu0 %v2942
      %v3054 = vpop.f32.mrf.mxu0
      %v3055 = vadd.f32 0.0, %v3054
      %3056 = vmatmul.f32.gmra.mxu0 %v2945
      %v3057 = vpop.f32.mrf.mxu0
      %v3058 = vadd.f32 0.0, %v3057
      %3059 = vmatmul.f32.gmra.mxu0 %v2948
      %v3060 = vpop.f32.mrf.mxu0
      %v3061 = vadd.f32 0.0, %v3060
      %3062 = vmatmul.f32.gmra.mxu0 %v2951
      %v3063 = vpop.f32.mrf.mxu0
      %v3064 = vadd.f32 0.0, %v3063
      %3065 = vmatmul.f32.gmra.mxu0 %v2954
      %v3066 = vpop.f32.mrf.mxu0
      %v3067 = vadd.f32 0.0, %v3066
      %3068 = vmatmul.f32.gmra.mxu0 %v2957
      %v3069 = vpop.f32.mrf.mxu0
      %v3070 = vadd.f32 0.0, %v3069
      %3071 = vmatmul.f32.gmra.mxu0 %v2960
      %v3072 = vpop.f32.mrf.mxu0
      %v3073 = vadd.f32 0.0, %v3072
      %3074 = vmatmul.f32.gmra.mxu0 %v2963
      %v3075 = vpop.f32.mrf.mxu0
      %v3076 = vadd.f32 0.0, %v3075
      %3077 = vmatmul.f32.gmra.mxu0 %v2966
      %v3078 = vpop.f32.mrf.mxu0
      %v3079 = vadd.f32 0.0, %v3078
      %3080 = vmatmul.f32.gmra.mxu0 %v2969
      %v3081 = vpop.f32.mrf.mxu0
      %v3082 = vadd.f32 0.0, %v3081
      %3083 = vmatmul.f32.gmra.mxu0 %v2972
      %v3084 = vpop.f32.mrf.mxu0
      %v3085 = vadd.f32 0.0, %v3084
      %3086 = vmatmul.f32.gmra.mxu0 %v2975
      %v3087 = vpop.f32.mrf.mxu0
      %v3088 = vadd.f32 0.0, %v3087
      %3089 = vmatmul.f32.gmra.mxu0 %v2978
      %v3090 = vpop.f32.mrf.mxu0
      %v3091 = vadd.f32 0.0, %v3090
      %3092 = vmatmul.f32.gmra.mxu0 %v2981
      %v3093 = vpop.f32.mrf.mxu0
      %v3094 = vadd.f32 0.0, %v3093
      %3095 = vmatmul.f32.gmra.mxu0 %v2984
      %v3096 = vpop.f32.mrf.mxu0
      %v3097 = vadd.f32 0.0, %v3096
      %3098 = vmatmul.f32.gmra.mxu0 %v2987
      %v3099 = vpop.f32.mrf.mxu0
      %v3100 = vadd.f32 0.0, %v3099
      %3101 = vmatmul.f32.gmra.mxu0 %v2990
      %v3102 = vpop.f32.mrf.mxu0
      %v3103 = vadd.f32 0.0, %v3102
      %3104 = vmatmul.f32.gmra.mxu0 %v2993
      %v3105 = vpop.f32.mrf.mxu0
      %v3106 = vadd.f32 0.0, %v3105
      %3107 = vmatmul.f32.gmra.mxu0 %v2996
      %v3108 = vpop.f32.mrf.mxu0
      %v3109 = vadd.f32 0.0, %v3108
      %3110 = vmatmul.f32.gmra.mxu0 %v2999
      %v3111 = vpop.f32.mrf.mxu0
      %v3112 = vadd.f32 0.0, %v3111
      %3113 = vmatmul.f32.gmra.mxu0 %v3002
      %v3114 = vpop.f32.mrf.mxu0
      %v3115 = vadd.f32 0.0, %v3114
      %3116 = vmatmul.f32.gmra.mxu0 %v3005
      %v3117 = vpop.f32.mrf.mxu0
      %v3118 = vadd.f32 0.0, %v3117
      %3119 = vmatmul.f32.gmra.mxu0 %v3008
      %v3120 = vpop.f32.mrf.mxu0
      %v3121 = vadd.f32 0.0, %v3120
      %3122 = vmatmul.f32.gmra.mxu0 %v3011
      %v3123 = vpop.f32.mrf.mxu0
      %v3124 = vadd.f32 0.0, %v3123
      %3125 = vmatmul.f32.gmra.mxu0 %v3014
      %v3126 = vpop.f32.mrf.mxu0
      %v3127 = vadd.f32 0.0, %v3126
      %3128 = vmatmul.f32.gmra.mxu0 %v3017
      %v3129 = vpop.f32.mrf.mxu0
      %v3130 = vadd.f32 0.0, %v3129
      %3131 = vmatmul.f32.gmra.mxu0 %v3020
      %v3132 = vpop.f32.mrf.mxu0
      %v3133 = vadd.f32 0.0, %v3132
      %3134 = vmatmul.f32.gmra.mxu0 %v3023
      %v3135 = vpop.f32.mrf.mxu0
      %v3136 = vadd.f32 0.0, %v3135
      %3137 = vmatmul.f32.gmra.mxu0 %v3026
      %v3138 = vpop.f32.mrf.mxu0
      %v3139 = vadd.f32 0.0, %v3138
      %3140 = vmatmul.f32.gmra.mxu0 %v3029
      %v3141 = vpop.f32.mrf.mxu0
      %v3142 = vadd.f32 0.0, %v3141
      %3143 = vmatmul.f32.gmra.mxu0 %v3032
      %v3144 = vpop.f32.mrf.mxu0
      %v3145 = vadd.f32 0.0, %v3144
      %3146 = vdwg.mxu0
      %v3147 = vadd.f32 %v2872, %v3052
      %v3148 = vadd.f32 %v2873, %v3055
      %v3149 = vadd.f32 %v2874, %v3058
      %v3150 = vadd.f32 %v2875, %v3061
      %v3151 = vadd.f32 %v2876, %v3064
      %v3152 = vadd.f32 %v2877, %v3067
      %v3153 = vadd.f32 %v2878, %v3070
      %v3154 = vadd.f32 %v2879, %v3073
      %v3155 = vadd.f32 %v2880, %v3076
      %v3156 = vadd.f32 %v2881, %v3079
      %v3157 = vadd.f32 %v2882, %v3082
      %v3158 = vadd.f32 %v2883, %v3085
      %v3159 = vadd.f32 %v2884, %v3088
      %v3160 = vadd.f32 %v2885, %v3091
      %v3161 = vadd.f32 %v2886, %v3094
      %v3162 = vadd.f32 %v2887, %v3097
      %v3163 = vadd.f32 %v2888, %v3100
      %v3164 = vadd.f32 %v2889, %v3103
      %v3165 = vadd.f32 %v2890, %v3106
      %v3166 = vadd.f32 %v2891, %v3109
      %v3167 = vadd.f32 %v2892, %v3112
      %v3168 = vadd.f32 %v2893, %v3115
      %v3169 = vadd.f32 %v2894, %v3118
      %v3170 = vadd.f32 %v2895, %v3121
      %v3171 = vadd.f32 %v2896, %v3124
      %v3172 = vadd.f32 %v2897, %v3127
      %v3173 = vadd.f32 %v2898, %v3130
      %v3174 = vadd.f32 %v2899, %v3133
      %v3175 = vadd.f32 %v2900, %v3136
      %v3176 = vadd.f32 %v2901, %v3139
      %v3177 = vadd.f32 %v2902, %v3142
      %v3178 = vadd.f32 %v2903, %v3145
      %s3179 = scalar_lea.vmem [#allocation2], 48
      %v3180 = vld [vmem:[%s3179] sm:$0xff]
      %v3181 = vld [vmem:[%s3179 + $0x8] sm:$0xff]
      %v3182 = vld [vmem:[%s3179 + $0x18] sm:$0xff]
      %v3183 = vld [vmem:[%s3179 + $0x20] sm:$0xff]
      %v3184 = vld [vmem:[%s3179 + $0x30] sm:$0xff]
      %v3185 = vld [vmem:[%s3179 + $0x38] sm:$0xff]
      %v3186 = vld [vmem:[%s3179 + $0x48] sm:$0xff]
      %v3187 = vld [vmem:[%s3179 + $0x50] sm:$0xff]
      %v3188 = vld [vmem:[%s3179 + $0x60] sm:$0xff]
      %v3189 = vld [vmem:[%s3179 + $0x68] sm:$0xff]
      %v3190 = vld [vmem:[%s3179 + $0x78] sm:$0xff]
      %v3191 = vld [vmem:[%s3179 + $0x80] sm:$0xff]
      %v3192 = vld [vmem:[%s3179 + $0x90] sm:$0xff]
      %v3193 = vld [vmem:[%s3179 + $0x98] sm:$0xff]
      %v3194 = vld [vmem:[%s3179 + $0xa8] sm:$0xff]
      %v3195 = vld [vmem:[%s3179 + $0xb0] sm:$0xff]
      %v3196 = vld [vmem:[%s3179 + $0xc0] sm:$0xff]
      %v3197 = vld [vmem:[%s3179 + $0xc8] sm:$0xff]
      %v3198 = vld [vmem:[%s3179 + $0xd8] sm:$0xff]
      %v3199 = vld [vmem:[%s3179 + $0xe0] sm:$0xff]
      %v3200 = vld [vmem:[%s3179 + $0xf0] sm:$0xff]
      %v3201 = vld [vmem:[%s3179 + $0xf8] sm:$0xff]
      %v3202 = vld [vmem:[%s3179 + $0x108] sm:$0xff]
      %v3203 = vld [vmem:[%s3179 + $0x110] sm:$0xff]
      %v3204 = vld [vmem:[%s3179 + $0x120] sm:$0xff]
      %v3205 = vld [vmem:[%s3179 + $0x128] sm:$0xff]
      %v3206 = vld [vmem:[%s3179 + $0x138] sm:$0xff]
      %v3207 = vld [vmem:[%s3179 + $0x140] sm:$0xff]
      %v3208 = vld [vmem:[%s3179 + $0x150] sm:$0xff]
      %v3209 = vld [vmem:[%s3179 + $0x158] sm:$0xff]
      %v3210 = vld [vmem:[%s3179 + $0x168] sm:$0xff]
      %v3211 = vld [vmem:[%s3179 + $0x170] sm:$0xff]
      %s3212 = scalar_lea.vmem %s3, 48
      %v3213 = vld [vmem:[%s3212] sm:$0xff]
      %v3215 = vsel %vm557, %v3180, 0
      %v3218 = vsel %vm557, %v3181, 0
      %v3221 = vsel %vm557, %v3182, 0
      %v3224 = vsel %vm557, %v3183, 0
      %v3227 = vsel %vm557, %v3184, 0
      %v3230 = vsel %vm557, %v3185, 0
      %v3233 = vsel %vm557, %v3186, 0
      %v3236 = vsel %vm557, %v3187, 0
      %v3239 = vsel %vm557, %v3188, 0
      %v3242 = vsel %vm557, %v3189, 0
      %v3245 = vsel %vm557, %v3190, 0
      %v3248 = vsel %vm557, %v3191, 0
      %v3251 = vsel %vm557, %v3192, 0
      %v3254 = vsel %vm557, %v3193, 0
      %v3257 = vsel %vm557, %v3194, 0
      %v3260 = vsel %vm557, %v3195, 0
      %v3263 = vsel %vm557, %v3196, 0
      %v3266 = vsel %vm557, %v3197, 0
      %v3269 = vsel %vm557, %v3198, 0
      %v3272 = vsel %vm557, %v3199, 0
      %v3275 = vsel %vm557, %v3200, 0
      %v3278 = vsel %vm557, %v3201, 0
      %v3281 = vsel %vm557, %v3202, 0
      %v3284 = vsel %vm557, %v3203, 0
      %v3287 = vsel %vm557, %v3204, 0
      %v3290 = vsel %vm557, %v3205, 0
      %v3293 = vsel %vm557, %v3206, 0
      %v3296 = vsel %vm557, %v3207, 0
      %v3299 = vsel %vm557, %v3208, 0
      %v3302 = vsel %vm557, %v3209, 0
      %v3305 = vsel %vm557, %v3210, 0
      %v3308 = vsel %vm557, %v3211, 0
      %3310 = vmatpush.msra.mxu0 0.0
      %3311 = vmatpush.msra.mxu0 0.0
      %3312 = vmatpush.msra.mxu0 0.0
      %3313 = vmatpush.msra.mxu0 0.0
      %3314 = vmatpush.msra.mxu0 0.0
      %3315 = vmatpush.msra.mxu0 0.0
      %3316 = vmatpush.msra.mxu0 0.0
      %3317 = vmatpush.msra.mxu0 0.0
      %3318 = vmatpush.msra.mxu0 0.0
      %3319 = vmatpush.msra.mxu0 0.0
      %3320 = vmatpush.msra.mxu0 0.0
      %3321 = vmatpush.msra.mxu0 0.0
      %3322 = vmatpush.msra.mxu0 0.0
      %3323 = vmatpush.msra.mxu0 0.0
      %3324 = vmatpush.msra.mxu0 0.0
      %3325 = vmatpush.msra.mxu0 %v3213
      %3326 = vmatmul.f32.gmra.mxu0 %v3215
      %v3327 = vpop.f32.mrf.mxu0
      %v3328 = vadd.f32 0.0, %v3327
      %3329 = vmatmul.f32.gmra.mxu0 %v3218
      %v3330 = vpop.f32.mrf.mxu0
      %v3331 = vadd.f32 0.0, %v3330
      %3332 = vmatmul.f32.gmra.mxu0 %v3221
      %v3333 = vpop.f32.mrf.mxu0
      %v3334 = vadd.f32 0.0, %v3333
      %3335 = vmatmul.f32.gmra.mxu0 %v3224
      %v3336 = vpop.f32.mrf.mxu0
      %v3337 = vadd.f32 0.0, %v3336
      %3338 = vmatmul.f32.gmra.mxu0 %v3227
      %v3339 = vpop.f32.mrf.mxu0
      %v3340 = vadd.f32 0.0, %v3339
      %3341 = vmatmul.f32.gmra.mxu0 %v3230
      %v3342 = vpop.f32.mrf.mxu0
      %v3343 = vadd.f32 0.0, %v3342
      %3344 = vmatmul.f32.gmra.mxu0 %v3233
      %v3345 = vpop.f32.mrf.mxu0
      %v3346 = vadd.f32 0.0, %v3345
      %3347 = vmatmul.f32.gmra.mxu0 %v3236
      %v3348 = vpop.f32.mrf.mxu0
      %v3349 = vadd.f32 0.0, %v3348
      %3350 = vmatmul.f32.gmra.mxu0 %v3239
      %v3351 = vpop.f32.mrf.mxu0
      %v3352 = vadd.f32 0.0, %v3351
      %3353 = vmatmul.f32.gmra.mxu0 %v3242
      %v3354 = vpop.f32.mrf.mxu0
      %v3355 = vadd.f32 0.0, %v3354
      %3356 = vmatmul.f32.gmra.mxu0 %v3245
      %v3357 = vpop.f32.mrf.mxu0
      %v3358 = vadd.f32 0.0, %v3357
      %3359 = vmatmul.f32.gmra.mxu0 %v3248
      %v3360 = vpop.f32.mrf.mxu0
      %v3361 = vadd.f32 0.0, %v3360
      %3362 = vmatmul.f32.gmra.mxu0 %v3251
      %v3363 = vpop.f32.mrf.mxu0
      %v3364 = vadd.f32 0.0, %v3363
      %3365 = vmatmul.f32.gmra.mxu0 %v3254
      %v3366 = vpop.f32.mrf.mxu0
      %v3367 = vadd.f32 0.0, %v3366
      %3368 = vmatmul.f32.gmra.mxu0 %v3257
      %v3369 = vpop.f32.mrf.mxu0
      %v3370 = vadd.f32 0.0, %v3369
      %3371 = vmatmul.f32.gmra.mxu0 %v3260
      %v3372 = vpop.f32.mrf.mxu0
      %v3373 = vadd.f32 0.0, %v3372
      %3374 = vmatmul.f32.gmra.mxu0 %v3263
      %v3375 = vpop.f32.mrf.mxu0
      %v3376 = vadd.f32 0.0, %v3375
      %3377 = vmatmul.f32.gmra.mxu0 %v3266
      %v3378 = vpop.f32.mrf.mxu0
      %v3379 = vadd.f32 0.0, %v3378
      %3380 = vmatmul.f32.gmra.mxu0 %v3269
      %v3381 = vpop.f32.mrf.mxu0
      %v3382 = vadd.f32 0.0, %v3381
      %3383 = vmatmul.f32.gmra.mxu0 %v3272
      %v3384 = vpop.f32.mrf.mxu0
      %v3385 = vadd.f32 0.0, %v3384
      %3386 = vmatmul.f32.gmra.mxu0 %v3275
      %v3387 = vpop.f32.mrf.mxu0
      %v3388 = vadd.f32 0.0, %v3387
      %3389 = vmatmul.f32.gmra.mxu0 %v3278
      %v3390 = vpop.f32.mrf.mxu0
      %v3391 = vadd.f32 0.0, %v3390
      %3392 = vmatmul.f32.gmra.mxu0 %v3281
      %v3393 = vpop.f32.mrf.mxu0
      %v3394 = vadd.f32 0.0, %v3393
      %3395 = vmatmul.f32.gmra.mxu0 %v3284
      %v3396 = vpop.f32.mrf.mxu0
      %v3397 = vadd.f32 0.0, %v3396
      %3398 = vmatmul.f32.gmra.mxu0 %v3287
      %v3399 = vpop.f32.mrf.mxu0
      %v3400 = vadd.f32 0.0, %v3399
      %3401 = vmatmul.f32.gmra.mxu0 %v3290
      %v3402 = vpop.f32.mrf.mxu0
      %v3403 = vadd.f32 0.0, %v3402
      %3404 = vmatmul.f32.gmra.mxu0 %v3293
      %v3405 = vpop.f32.mrf.mxu0
      %v3406 = vadd.f32 0.0, %v3405
      %3407 = vmatmul.f32.gmra.mxu0 %v3296
      %v3408 = vpop.f32.mrf.mxu0
      %v3409 = vadd.f32 0.0, %v3408
      %3410 = vmatmul.f32.gmra.mxu0 %v3299
      %v3411 = vpop.f32.mrf.mxu0
      %v3412 = vadd.f32 0.0, %v3411
      %3413 = vmatmul.f32.gmra.mxu0 %v3302
      %v3414 = vpop.f32.mrf.mxu0
      %v3415 = vadd.f32 0.0, %v3414
      %3416 = vmatmul.f32.gmra.mxu0 %v3305
      %v3417 = vpop.f32.mrf.mxu0
      %v3418 = vadd.f32 0.0, %v3417
      %3419 = vmatmul.f32.gmra.mxu0 %v3308
      %v3420 = vpop.f32.mrf.mxu0
      %v3421 = vadd.f32 0.0, %v3420
      %3422 = vdwg.mxu0
      %v3423 = vadd.f32 %v3147, %v3328
      %v3424 = vadd.f32 %v3148, %v3331
      %v3425 = vadd.f32 %v3149, %v3334
      %v3426 = vadd.f32 %v3150, %v3337
      %v3427 = vadd.f32 %v3151, %v3340
      %v3428 = vadd.f32 %v3152, %v3343
      %v3429 = vadd.f32 %v3153, %v3346
      %v3430 = vadd.f32 %v3154, %v3349
      %v3431 = vadd.f32 %v3155, %v3352
      %v3432 = vadd.f32 %v3156, %v3355
      %v3433 = vadd.f32 %v3157, %v3358
      %v3434 = vadd.f32 %v3158, %v3361
      %v3435 = vadd.f32 %v3159, %v3364
      %v3436 = vadd.f32 %v3160, %v3367
      %v3437 = vadd.f32 %v3161, %v3370
      %v3438 = vadd.f32 %v3162, %v3373
      %v3439 = vadd.f32 %v3163, %v3376
      %v3440 = vadd.f32 %v3164, %v3379
      %v3441 = vadd.f32 %v3165, %v3382
      %v3442 = vadd.f32 %v3166, %v3385
      %v3443 = vadd.f32 %v3167, %v3388
      %v3444 = vadd.f32 %v3168, %v3391
      %v3445 = vadd.f32 %v3169, %v3394
      %v3446 = vadd.f32 %v3170, %v3397
      %v3447 = vadd.f32 %v3171, %v3400
      %v3448 = vadd.f32 %v3172, %v3403
      %v3449 = vadd.f32 %v3173, %v3406
      %v3450 = vadd.f32 %v3174, %v3409
      %v3451 = vadd.f32 %v3175, %v3412
      %v3452 = vadd.f32 %v3176, %v3415
      %v3453 = vadd.f32 %v3177, %v3418
      %v3454 = vadd.f32 %v3178, %v3421
      %v3455 = vld [vmem:[%s3179 + $0x1] sm:$0xff]
      %v3456 = vld [vmem:[%s3179 + $0x9] sm:$0xff]
      %v3457 = vld [vmem:[%s3179 + $0x19] sm:$0xff]
      %v3458 = vld [vmem:[%s3179 + $0x21] sm:$0xff]
      %v3459 = vld [vmem:[%s3179 + $0x31] sm:$0xff]
      %v3460 = vld [vmem:[%s3179 + $0x39] sm:$0xff]
      %v3461 = vld [vmem:[%s3179 + $0x49] sm:$0xff]
      %v3462 = vld [vmem:[%s3179 + $0x51] sm:$0xff]
      %v3463 = vld [vmem:[%s3179 + $0x61] sm:$0xff]
      %v3464 = vld [vmem:[%s3179 + $0x69] sm:$0xff]
      %v3465 = vld [vmem:[%s3179 + $0x79] sm:$0xff]
      %v3466 = vld [vmem:[%s3179 + $0x81] sm:$0xff]
      %v3467 = vld [vmem:[%s3179 + $0x91] sm:$0xff]
      %v3468 = vld [vmem:[%s3179 + $0x99] sm:$0xff]
      %v3469 = vld [vmem:[%s3179 + $0xa9] sm:$0xff]
      %v3470 = vld [vmem:[%s3179 + $0xb1] sm:$0xff]
      %v3471 = vld [vmem:[%s3179 + $0xc1] sm:$0xff]
      %v3472 = vld [vmem:[%s3179 + $0xc9] sm:$0xff]
      %v3473 = vld [vmem:[%s3179 + $0xd9] sm:$0xff]
      %v3474 = vld [vmem:[%s3179 + $0xe1] sm:$0xff]
      %v3475 = vld [vmem:[%s3179 + $0xf1] sm:$0xff]
      %v3476 = vld [vmem:[%s3179 + $0xf9] sm:$0xff]
      %v3477 = vld [vmem:[%s3179 + $0x109] sm:$0xff]
      %v3478 = vld [vmem:[%s3179 + $0x111] sm:$0xff]
      %v3479 = vld [vmem:[%s3179 + $0x121] sm:$0xff]
      %v3480 = vld [vmem:[%s3179 + $0x129] sm:$0xff]
      %v3481 = vld [vmem:[%s3179 + $0x139] sm:$0xff]
      %v3482 = vld [vmem:[%s3179 + $0x141] sm:$0xff]
      %v3483 = vld [vmem:[%s3179 + $0x151] sm:$0xff]
      %v3484 = vld [vmem:[%s3179 + $0x159] sm:$0xff]
      %v3485 = vld [vmem:[%s3179 + $0x169] sm:$0xff]
      %v3486 = vld [vmem:[%s3179 + $0x171] sm:$0xff]
      %s3487 = scalar_lea.vmem %s3, 56
      %v3488 = vld [vmem:[%s3487] sm:$0xff]
      %v3490 = vsel %vm557, %v3455, 0
      %v3493 = vsel %vm557, %v3456, 0
      %v3496 = vsel %vm557, %v3457, 0
      %v3499 = vsel %vm557, %v3458, 0
      %v3502 = vsel %vm557, %v3459, 0
      %v3505 = vsel %vm557, %v3460, 0
      %v3508 = vsel %vm557, %v3461, 0
      %v3511 = vsel %vm557, %v3462, 0
      %v3514 = vsel %vm557, %v3463, 0
      %v3517 = vsel %vm557, %v3464, 0
      %v3520 = vsel %vm557, %v3465, 0
      %v3523 = vsel %vm557, %v3466, 0
      %v3526 = vsel %vm557, %v3467, 0
      %v3529 = vsel %vm557, %v3468, 0
      %v3532 = vsel %vm557, %v3469, 0
      %v3535 = vsel %vm557, %v3470, 0
      %v3538 = vsel %vm557, %v3471, 0
      %v3541 = vsel %vm557, %v3472, 0
      %v3544 = vsel %vm557, %v3473, 0
      %v3547 = vsel %vm557, %v3474, 0
      %v3550 = vsel %vm557, %v3475, 0
      %v3553 = vsel %vm557, %v3476, 0
      %v3556 = vsel %vm557, %v3477, 0
      %v3559 = vsel %vm557, %v3478, 0
      %v3562 = vsel %vm557, %v3479, 0
      %v3565 = vsel %vm557, %v3480, 0
      %v3568 = vsel %vm557, %v3481, 0
      %v3571 = vsel %vm557, %v3482, 0
      %v3574 = vsel %vm557, %v3483, 0
      %v3577 = vsel %vm557, %v3484, 0
      %v3580 = vsel %vm557, %v3485, 0
      %v3583 = vsel %vm557, %v3486, 0
      %3585 = vmatpush.msra.mxu0 0.0
      %3586 = vmatpush.msra.mxu0 0.0
      %3587 = vmatpush.msra.mxu0 0.0
      %3588 = vmatpush.msra.mxu0 0.0
      %3589 = vmatpush.msra.mxu0 0.0
      %3590 = vmatpush.msra.mxu0 0.0
      %3591 = vmatpush.msra.mxu0 0.0
      %3592 = vmatpush.msra.mxu0 0.0
      %3593 = vmatpush.msra.mxu0 0.0
      %3594 = vmatpush.msra.mxu0 0.0
      %3595 = vmatpush.msra.mxu0 0.0
      %3596 = vmatpush.msra.mxu0 0.0
      %3597 = vmatpush.msra.mxu0 0.0
      %3598 = vmatpush.msra.mxu0 0.0
      %3599 = vmatpush.msra.mxu0 0.0
      %3600 = vmatpush.msra.mxu0 %v3488
      %3601 = vmatmul.f32.gmra.mxu0 %v3490
      %v3602 = vpop.f32.mrf.mxu0
      %v3603 = vadd.f32 0.0, %v3602
      %3604 = vmatmul.f32.gmra.mxu0 %v3493
      %v3605 = vpop.f32.mrf.mxu0
      %v3606 = vadd.f32 0.0, %v3605
      %3607 = vmatmul.f32.gmra.mxu0 %v3496
      %v3608 = vpop.f32.mrf.mxu0
      %v3609 = vadd.f32 0.0, %v3608
      %3610 = vmatmul.f32.gmra.mxu0 %v3499
      %v3611 = vpop.f32.mrf.mxu0
      %v3612 = vadd.f32 0.0, %v3611
      %3613 = vmatmul.f32.gmra.mxu0 %v3502
      %v3614 = vpop.f32.mrf.mxu0
      %v3615 = vadd.f32 0.0, %v3614
      %3616 = vmatmul.f32.gmra.mxu0 %v3505
      %v3617 = vpop.f32.mrf.mxu0
      %v3618 = vadd.f32 0.0, %v3617
      %3619 = vmatmul.f32.gmra.mxu0 %v3508
      %v3620 = vpop.f32.mrf.mxu0
      %v3621 = vadd.f32 0.0, %v3620
      %3622 = vmatmul.f32.gmra.mxu0 %v3511
      %v3623 = vpop.f32.mrf.mxu0
      %v3624 = vadd.f32 0.0, %v3623
      %3625 = vmatmul.f32.gmra.mxu0 %v3514
      %v3626 = vpop.f32.mrf.mxu0
      %v3627 = vadd.f32 0.0, %v3626
      %3628 = vmatmul.f32.gmra.mxu0 %v3517
      %v3629 = vpop.f32.mrf.mxu0
      %v3630 = vadd.f32 0.0, %v3629
      %3631 = vmatmul.f32.gmra.mxu0 %v3520
      %v3632 = vpop.f32.mrf.mxu0
      %v3633 = vadd.f32 0.0, %v3632
      %3634 = vmatmul.f32.gmra.mxu0 %v3523
      %v3635 = vpop.f32.mrf.mxu0
      %v3636 = vadd.f32 0.0, %v3635
      %3637 = vmatmul.f32.gmra.mxu0 %v3526
      %v3638 = vpop.f32.mrf.mxu0
      %v3639 = vadd.f32 0.0, %v3638
      %3640 = vmatmul.f32.gmra.mxu0 %v3529
      %v3641 = vpop.f32.mrf.mxu0
      %v3642 = vadd.f32 0.0, %v3641
      %3643 = vmatmul.f32.gmra.mxu0 %v3532
      %v3644 = vpop.f32.mrf.mxu0
      %v3645 = vadd.f32 0.0, %v3644
      %3646 = vmatmul.f32.gmra.mxu0 %v3535
      %v3647 = vpop.f32.mrf.mxu0
      %v3648 = vadd.f32 0.0, %v3647
      %3649 = vmatmul.f32.gmra.mxu0 %v3538
      %v3650 = vpop.f32.mrf.mxu0
      %v3651 = vadd.f32 0.0, %v3650
      %3652 = vmatmul.f32.gmra.mxu0 %v3541
      %v3653 = vpop.f32.mrf.mxu0
      %v3654 = vadd.f32 0.0, %v3653
      %3655 = vmatmul.f32.gmra.mxu0 %v3544
      %v3656 = vpop.f32.mrf.mxu0
      %v3657 = vadd.f32 0.0, %v3656
      %3658 = vmatmul.f32.gmra.mxu0 %v3547
      %v3659 = vpop.f32.mrf.mxu0
      %v3660 = vadd.f32 0.0, %v3659
      %3661 = vmatmul.f32.gmra.mxu0 %v3550
      %v3662 = vpop.f32.mrf.mxu0
      %v3663 = vadd.f32 0.0, %v3662
      %3664 = vmatmul.f32.gmra.mxu0 %v3553
      %v3665 = vpop.f32.mrf.mxu0
      %v3666 = vadd.f32 0.0, %v3665
      %3667 = vmatmul.f32.gmra.mxu0 %v3556
      %v3668 = vpop.f32.mrf.mxu0
      %v3669 = vadd.f32 0.0, %v3668
      %3670 = vmatmul.f32.gmra.mxu0 %v3559
      %v3671 = vpop.f32.mrf.mxu0
      %v3672 = vadd.f32 0.0, %v3671
      %3673 = vmatmul.f32.gmra.mxu0 %v3562
      %v3674 = vpop.f32.mrf.mxu0
      %v3675 = vadd.f32 0.0, %v3674
      %3676 = vmatmul.f32.gmra.mxu0 %v3565
      %v3677 = vpop.f32.mrf.mxu0
      %v3678 = vadd.f32 0.0, %v3677
      %3679 = vmatmul.f32.gmra.mxu0 %v3568
      %v3680 = vpop.f32.mrf.mxu0
      %v3681 = vadd.f32 0.0, %v3680
      %3682 = vmatmul.f32.gmra.mxu0 %v3571
      %v3683 = vpop.f32.mrf.mxu0
      %v3684 = vadd.f32 0.0, %v3683
      %3685 = vmatmul.f32.gmra.mxu0 %v3574
      %v3686 = vpop.f32.mrf.mxu0
      %v3687 = vadd.f32 0.0, %v3686
      %3688 = vmatmul.f32.gmra.mxu0 %v3577
      %v3689 = vpop.f32.mrf.mxu0
      %v3690 = vadd.f32 0.0, %v3689
      %3691 = vmatmul.f32.gmra.mxu0 %v3580
      %v3692 = vpop.f32.mrf.mxu0
      %v3693 = vadd.f32 0.0, %v3692
      %3694 = vmatmul.f32.gmra.mxu0 %v3583
      %v3695 = vpop.f32.mrf.mxu0
      %v3696 = vadd.f32 0.0, %v3695
      %3697 = vdwg.mxu0
      %v3698 = vadd.f32 %v3423, %v3603
      %v3699 = vadd.f32 %v3424, %v3606
      %v3700 = vadd.f32 %v3425, %v3609
      %v3701 = vadd.f32 %v3426, %v3612
      %v3702 = vadd.f32 %v3427, %v3615
      %v3703 = vadd.f32 %v3428, %v3618
      %v3704 = vadd.f32 %v3429, %v3621
      %v3705 = vadd.f32 %v3430, %v3624
      %v3706 = vadd.f32 %v3431, %v3627
      %v3707 = vadd.f32 %v3432, %v3630
      %v3708 = vadd.f32 %v3433, %v3633
      %v3709 = vadd.f32 %v3434, %v3636
      %v3710 = vadd.f32 %v3435, %v3639
      %v3711 = vadd.f32 %v3436, %v3642
      %v3712 = vadd.f32 %v3437, %v3645
      %v3713 = vadd.f32 %v3438, %v3648
      %v3714 = vadd.f32 %v3439, %v3651
      %v3715 = vadd.f32 %v3440, %v3654
      %v3716 = vadd.f32 %v3441, %v3657
      %v3717 = vadd.f32 %v3442, %v3660
      %v3718 = vadd.f32 %v3443, %v3663
      %v3719 = vadd.f32 %v3444, %v3666
      %v3720 = vadd.f32 %v3445, %v3669
      %v3721 = vadd.f32 %v3446, %v3672
      %v3722 = vadd.f32 %v3447, %v3675
      %v3723 = vadd.f32 %v3448, %v3678
      %v3724 = vadd.f32 %v3449, %v3681
      %v3725 = vadd.f32 %v3450, %v3684
      %v3726 = vadd.f32 %v3451, %v3687
      %v3727 = vadd.f32 %v3452, %v3690
      %v3728 = vadd.f32 %v3453, %v3693
      %v3729 = vadd.f32 %v3454, %v3696
      %v3730 = vld [vmem:[%s3179 + $0x2] sm:$0xff]
      %v3731 = vld [vmem:[%s3179 + $0xa] sm:$0xff]
      %v3732 = vld [vmem:[%s3179 + $0x1a] sm:$0xff]
      %v3733 = vld [vmem:[%s3179 + $0x22] sm:$0xff]
      %v3734 = vld [vmem:[%s3179 + $0x32] sm:$0xff]
      %v3735 = vld [vmem:[%s3179 + $0x3a] sm:$0xff]
      %v3736 = vld [vmem:[%s3179 + $0x4a] sm:$0xff]
      %v3737 = vld [vmem:[%s3179 + $0x52] sm:$0xff]
      %v3738 = vld [vmem:[%s3179 + $0x62] sm:$0xff]
      %v3739 = vld [vmem:[%s3179 + $0x6a] sm:$0xff]
      %v3740 = vld [vmem:[%s3179 + $0x7a] sm:$0xff]
      %v3741 = vld [vmem:[%s3179 + $0x82] sm:$0xff]
      %v3742 = vld [vmem:[%s3179 + $0x92] sm:$0xff]
      %v3743 = vld [vmem:[%s3179 + $0x9a] sm:$0xff]
      %v3744 = vld [vmem:[%s3179 + $0xaa] sm:$0xff]
      %v3745 = vld [vmem:[%s3179 + $0xb2] sm:$0xff]
      %v3746 = vld [vmem:[%s3179 + $0xc2] sm:$0xff]
      %v3747 = vld [vmem:[%s3179 + $0xca] sm:$0xff]
      %v3748 = vld [vmem:[%s3179 + $0xda] sm:$0xff]
      %v3749 = vld [vmem:[%s3179 + $0xe2] sm:$0xff]
      %v3750 = vld [vmem:[%s3179 + $0xf2] sm:$0xff]
      %v3751 = vld [vmem:[%s3179 + $0xfa] sm:$0xff]
      %v3752 = vld [vmem:[%s3179 + $0x10a] sm:$0xff]
      %v3753 = vld [vmem:[%s3179 + $0x112] sm:$0xff]
      %v3754 = vld [vmem:[%s3179 + $0x122] sm:$0xff]
      %v3755 = vld [vmem:[%s3179 + $0x12a] sm:$0xff]
      %v3756 = vld [vmem:[%s3179 + $0x13a] sm:$0xff]
      %v3757 = vld [vmem:[%s3179 + $0x142] sm:$0xff]
      %v3758 = vld [vmem:[%s3179 + $0x152] sm:$0xff]
      %v3759 = vld [vmem:[%s3179 + $0x15a] sm:$0xff]
      %v3760 = vld [vmem:[%s3179 + $0x16a] sm:$0xff]
      %v3761 = vld [vmem:[%s3179 + $0x172] sm:$0xff]
      %s3762 = scalar_lea.vmem %s3, 64
      %v3763 = vld [vmem:[%s3762] sm:$0xff]
      %v3765 = vsel %vm557, %v3730, 0
      %v3768 = vsel %vm557, %v3731, 0
      %v3771 = vsel %vm557, %v3732, 0
      %v3774 = vsel %vm557, %v3733, 0
      %v3777 = vsel %vm557, %v3734, 0
      %v3780 = vsel %vm557, %v3735, 0
      %v3783 = vsel %vm557, %v3736, 0
      %v3786 = vsel %vm557, %v3737, 0
      %v3789 = vsel %vm557, %v3738, 0
      %v3792 = vsel %vm557, %v3739, 0
      %v3795 = vsel %vm557, %v3740, 0
      %v3798 = vsel %vm557, %v3741, 0
      %v3801 = vsel %vm557, %v3742, 0
      %v3804 = vsel %vm557, %v3743, 0
      %v3807 = vsel %vm557, %v3744, 0
      %v3810 = vsel %vm557, %v3745, 0
      %v3813 = vsel %vm557, %v3746, 0
      %v3816 = vsel %vm557, %v3747, 0
      %v3819 = vsel %vm557, %v3748, 0
      %v3822 = vsel %vm557, %v3749, 0
      %v3825 = vsel %vm557, %v3750, 0
      %v3828 = vsel %vm557, %v3751, 0
      %v3831 = vsel %vm557, %v3752, 0
      %v3834 = vsel %vm557, %v3753, 0
      %v3837 = vsel %vm557, %v3754, 0
      %v3840 = vsel %vm557, %v3755, 0
      %v3843 = vsel %vm557, %v3756, 0
      %v3846 = vsel %vm557, %v3757, 0
      %v3849 = vsel %vm557, %v3758, 0
      %v3852 = vsel %vm557, %v3759, 0
      %v3855 = vsel %vm557, %v3760, 0
      %v3858 = vsel %vm557, %v3761, 0
      %3860 = vmatpush.msra.mxu0 0.0
      %3861 = vmatpush.msra.mxu0 0.0
      %3862 = vmatpush.msra.mxu0 0.0
      %3863 = vmatpush.msra.mxu0 0.0
      %3864 = vmatpush.msra.mxu0 0.0
      %3865 = vmatpush.msra.mxu0 0.0
      %3866 = vmatpush.msra.mxu0 0.0
      %3867 = vmatpush.msra.mxu0 0.0
      %3868 = vmatpush.msra.mxu0 0.0
      %3869 = vmatpush.msra.mxu0 0.0
      %3870 = vmatpush.msra.mxu0 0.0
      %3871 = vmatpush.msra.mxu0 0.0
      %3872 = vmatpush.msra.mxu0 0.0
      %3873 = vmatpush.msra.mxu0 0.0
      %3874 = vmatpush.msra.mxu0 0.0
      %3875 = vmatpush.msra.mxu0 %v3763
      %3876 = vmatmul.f32.gmra.mxu0 %v3765
      %v3877 = vpop.f32.mrf.mxu0
      %v3878 = vadd.f32 0.0, %v3877
      %3879 = vmatmul.f32.gmra.mxu0 %v3768
      %v3880 = vpop.f32.mrf.mxu0
      %v3881 = vadd.f32 0.0, %v3880
      %3882 = vmatmul.f32.gmra.mxu0 %v3771
      %v3883 = vpop.f32.mrf.mxu0
      %v3884 = vadd.f32 0.0, %v3883
      %3885 = vmatmul.f32.gmra.mxu0 %v3774
      %v3886 = vpop.f32.mrf.mxu0
      %v3887 = vadd.f32 0.0, %v3886
      %3888 = vmatmul.f32.gmra.mxu0 %v3777
      %v3889 = vpop.f32.mrf.mxu0
      %v3890 = vadd.f32 0.0, %v3889
      %3891 = vmatmul.f32.gmra.mxu0 %v3780
      %v3892 = vpop.f32.mrf.mxu0
      %v3893 = vadd.f32 0.0, %v3892
      %3894 = vmatmul.f32.gmra.mxu0 %v3783
      %v3895 = vpop.f32.mrf.mxu0
      %v3896 = vadd.f32 0.0, %v3895
      %3897 = vmatmul.f32.gmra.mxu0 %v3786
      %v3898 = vpop.f32.mrf.mxu0
      %v3899 = vadd.f32 0.0, %v3898
      %3900 = vmatmul.f32.gmra.mxu0 %v3789
      %v3901 = vpop.f32.mrf.mxu0
      %v3902 = vadd.f32 0.0, %v3901
      %3903 = vmatmul.f32.gmra.mxu0 %v3792
      %v3904 = vpop.f32.mrf.mxu0
      %v3905 = vadd.f32 0.0, %v3904
      %3906 = vmatmul.f32.gmra.mxu0 %v3795
      %v3907 = vpop.f32.mrf.mxu0
      %v3908 = vadd.f32 0.0, %v3907
      %3909 = vmatmul.f32.gmra.mxu0 %v3798
      %v3910 = vpop.f32.mrf.mxu0
      %v3911 = vadd.f32 0.0, %v3910
      %3912 = vmatmul.f32.gmra.mxu0 %v3801
      %v3913 = vpop.f32.mrf.mxu0
      %v3914 = vadd.f32 0.0, %v3913
      %3915 = vmatmul.f32.gmra.mxu0 %v3804
      %v3916 = vpop.f32.mrf.mxu0
      %v3917 = vadd.f32 0.0, %v3916
      %3918 = vmatmul.f32.gmra.mxu0 %v3807
      %v3919 = vpop.f32.mrf.mxu0
      %v3920 = vadd.f32 0.0, %v3919
      %3921 = vmatmul.f32.gmra.mxu0 %v3810
      %v3922 = vpop.f32.mrf.mxu0
      %v3923 = vadd.f32 0.0, %v3922
      %3924 = vmatmul.f32.gmra.mxu0 %v3813
      %v3925 = vpop.f32.mrf.mxu0
      %v3926 = vadd.f32 0.0, %v3925
      %3927 = vmatmul.f32.gmra.mxu0 %v3816
      %v3928 = vpop.f32.mrf.mxu0
      %v3929 = vadd.f32 0.0, %v3928
      %3930 = vmatmul.f32.gmra.mxu0 %v3819
      %v3931 = vpop.f32.mrf.mxu0
      %v3932 = vadd.f32 0.0, %v3931
      %3933 = vmatmul.f32.gmra.mxu0 %v3822
      %v3934 = vpop.f32.mrf.mxu0
      %v3935 = vadd.f32 0.0, %v3934
      %3936 = vmatmul.f32.gmra.mxu0 %v3825
      %v3937 = vpop.f32.mrf.mxu0
      %v3938 = vadd.f32 0.0, %v3937
      %3939 = vmatmul.f32.gmra.mxu0 %v3828
      %v3940 = vpop.f32.mrf.mxu0
      %v3941 = vadd.f32 0.0, %v3940
      %3942 = vmatmul.f32.gmra.mxu0 %v3831
      %v3943 = vpop.f32.mrf.mxu0
      %v3944 = vadd.f32 0.0, %v3943
      %3945 = vmatmul.f32.gmra.mxu0 %v3834
      %v3946 = vpop.f32.mrf.mxu0
      %v3947 = vadd.f32 0.0, %v3946
      %3948 = vmatmul.f32.gmra.mxu0 %v3837
      %v3949 = vpop.f32.mrf.mxu0
      %v3950 = vadd.f32 0.0, %v3949
      %3951 = vmatmul.f32.gmra.mxu0 %v3840
      %v3952 = vpop.f32.mrf.mxu0
      %v3953 = vadd.f32 0.0, %v3952
      %3954 = vmatmul.f32.gmra.mxu0 %v3843
      %v3955 = vpop.f32.mrf.mxu0
      %v3956 = vadd.f32 0.0, %v3955
      %3957 = vmatmul.f32.gmra.mxu0 %v3846
      %v3958 = vpop.f32.mrf.mxu0
      %v3959 = vadd.f32 0.0, %v3958
      %3960 = vmatmul.f32.gmra.mxu0 %v3849
      %v3961 = vpop.f32.mrf.mxu0
      %v3962 = vadd.f32 0.0, %v3961
      %3963 = vmatmul.f32.gmra.mxu0 %v3852
      %v3964 = vpop.f32.mrf.mxu0
      %v3965 = vadd.f32 0.0, %v3964
      %3966 = vmatmul.f32.gmra.mxu0 %v3855
      %v3967 = vpop.f32.mrf.mxu0
      %v3968 = vadd.f32 0.0, %v3967
      %3969 = vmatmul.f32.gmra.mxu0 %v3858
      %v3970 = vpop.f32.mrf.mxu0
      %v3971 = vadd.f32 0.0, %v3970
      %3972 = vdwg.mxu0
      %v3973 = vadd.f32 %v3698, %v3878
      %v3974 = vadd.f32 %v3699, %v3881
      %v3975 = vadd.f32 %v3700, %v3884
      %v3976 = vadd.f32 %v3701, %v3887
      %v3977 = vadd.f32 %v3702, %v3890
      %v3978 = vadd.f32 %v3703, %v3893
      %v3979 = vadd.f32 %v3704, %v3896
      %v3980 = vadd.f32 %v3705, %v3899
      %v3981 = vadd.f32 %v3706, %v3902
      %v3982 = vadd.f32 %v3707, %v3905
      %v3983 = vadd.f32 %v3708, %v3908
      %v3984 = vadd.f32 %v3709, %v3911
      %v3985 = vadd.f32 %v3710, %v3914
      %v3986 = vadd.f32 %v3711, %v3917
      %v3987 = vadd.f32 %v3712, %v3920
      %v3988 = vadd.f32 %v3713, %v3923
      %v3989 = vadd.f32 %v3714, %v3926
      %v3990 = vadd.f32 %v3715, %v3929
      %v3991 = vadd.f32 %v3716, %v3932
      %v3992 = vadd.f32 %v3717, %v3935
      %v3993 = vadd.f32 %v3718, %v3938
      %v3994 = vadd.f32 %v3719, %v3941
      %v3995 = vadd.f32 %v3720, %v3944
      %v3996 = vadd.f32 %v3721, %v3947
      %v3997 = vadd.f32 %v3722, %v3950
      %v3998 = vadd.f32 %v3723, %v3953
      %v3999 = vadd.f32 %v3724, %v3956
      %v4000 = vadd.f32 %v3725, %v3959
      %v4001 = vadd.f32 %v3726, %v3962
      %v4002 = vadd.f32 %v3727, %v3965
      %v4003 = vadd.f32 %v3728, %v3968
      %v4004 = vadd.f32 %v3729, %v3971
      %v4005 = vld [vmem:[%s5] sm:$0x1]
      %v4007 = vperm.slane %v4005, 0
      %v4009 = vadd.f32 %v3973, %v4007
      %v4010 = vadd.f32 %v3974, %v4007
      %v4011 = vadd.f32 %v3975, %v4007
      %v4012 = vadd.f32 %v3976, %v4007
      %v4013 = vadd.f32 %v3977, %v4007
      %v4014 = vadd.f32 %v3978, %v4007
      %v4015 = vadd.f32 %v3979, %v4007
      %v4016 = vadd.f32 %v3980, %v4007
      %v4017 = vadd.f32 %v3981, %v4007
      %v4018 = vadd.f32 %v3982, %v4007
      %v4019 = vadd.f32 %v3983, %v4007
      %v4020 = vadd.f32 %v3984, %v4007
      %v4021 = vadd.f32 %v3985, %v4007
      %v4022 = vadd.f32 %v3986, %v4007
      %v4023 = vadd.f32 %v3987, %v4007
      %v4024 = vadd.f32 %v3988, %v4007
      %v4025 = vadd.f32 %v3989, %v4007
      %v4026 = vadd.f32 %v3990, %v4007
      %v4027 = vadd.f32 %v3991, %v4007
      %v4028 = vadd.f32 %v3992, %v4007
      %v4029 = vadd.f32 %v3993, %v4007
      %v4030 = vadd.f32 %v3994, %v4007
      %v4031 = vadd.f32 %v3995, %v4007
      %v4032 = vadd.f32 %v3996, %v4007
      %v4033 = vadd.f32 %v3997, %v4007
      %v4034 = vadd.f32 %v3998, %v4007
      %v4035 = vadd.f32 %v3999, %v4007
      %v4036 = vadd.f32 %v4000, %v4007
      %v4037 = vadd.f32 %v4001, %v4007
      %v4038 = vadd.f32 %v4002, %v4007
      %v4039 = vadd.f32 %v4003, %v4007
      %v4040 = vadd.f32 %v4004, %v4007
      %v4041 = vld [vmem:[%s475] sm:$0xff]
      %v4042 = vld [vmem:[%s475 + $0x8] sm:$0xff]
      %v4043 = vld [vmem:[%s475 + $0x10] sm:$0xff]
      %v4044 = vld [vmem:[%s475 + $0x18] sm:$0xff]
      %v4045 = vld [vmem:[%s475 + $0x20] sm:$0xff]
      %v4046 = vld [vmem:[%s475 + $0x28] sm:$0xff]
      %v4047 = vld [vmem:[%s475 + $0x30] sm:$0xff]
      %v4048 = vld [vmem:[%s475 + $0x38] sm:$0xff]
      %v4049 = vld [vmem:[%s475 + $0x40] sm:$0xff]
      %v4050 = vld [vmem:[%s475 + $0x48] sm:$0xff]
      %v4051 = vld [vmem:[%s475 + $0x50] sm:$0xff]
      %v4052 = vld [vmem:[%s475 + $0x58] sm:$0xff]
      %v4053 = vld [vmem:[%s475 + $0x60] sm:$0xff]
      %v4054 = vld [vmem:[%s475 + $0x68] sm:$0xff]
      %v4055 = vld [vmem:[%s475 + $0x70] sm:$0xff]
      %v4056 = vld [vmem:[%s475 + $0x78] sm:$0xff]
      %v4057 = vld [vmem:[%s475 + $0x80] sm:$0xff]
      %v4058 = vld [vmem:[%s475 + $0x88] sm:$0xff]
      %v4059 = vld [vmem:[%s475 + $0x90] sm:$0xff]
      %v4060 = vld [vmem:[%s475 + $0x98] sm:$0xff]
      %v4061 = vld [vmem:[%s475 + $0xa0] sm:$0xff]
      %v4062 = vld [vmem:[%s475 + $0xa8] sm:$0xff]
      %v4063 = vld [vmem:[%s475 + $0xb0] sm:$0xff]
      %v4064 = vld [vmem:[%s475 + $0xb8] sm:$0xff]
      %v4065 = vld [vmem:[%s475 + $0xc0] sm:$0xff]
      %v4066 = vld [vmem:[%s475 + $0xc8] sm:$0xff]
      %v4067 = vld [vmem:[%s475 + $0xd0] sm:$0xff]
      %v4068 = vld [vmem:[%s475 + $0xd8] sm:$0xff]
      %v4069 = vld [vmem:[%s475 + $0xe0] sm:$0xff]
      %v4070 = vld [vmem:[%s475 + $0xe8] sm:$0xff]
      %v4071 = vld [vmem:[%s475 + $0xf0] sm:$0xff]
      %v4072 = vld [vmem:[%s475 + $0xf8] sm:$0xff]
      %v4073 = vld [vmem:[%s12] sm:$0xff]
      %v4074 = vld [vmem:[%s12 + $0x8] sm:$0xff]
      %v4075 = vsel %vm481, %v4041, 0.0
      %v4076 = vsel %vm481, %v4042, 0.0
      %v4077 = vadd.f32 %v4075, %v4076
      %v4078 = vsel %vm481, %v4043, 0.0
      %v4079 = vadd.f32 %v4077, %v4078
      %v4080 = vsel %vm481, %v4044, 0.0
      %v4081 = vadd.f32 %v4079, %v4080
      %v4082 = vsel %vm481, %v4045, 0.0
      %v4083 = vadd.f32 %v4081, %v4082
      %v4084 = vsel %vm481, %v4046, 0.0
      %v4085 = vadd.f32 %v4083, %v4084
      %v4086 = vsel %vm481, %v4047, 0.0
      %v4087 = vadd.f32 %v4085, %v4086
      %v4088 = vsel %vm481, %v4048, 0.0
      %v4089 = vadd.f32 %v4087, %v4088
      %v4090 = vsel %vm481, %v4049, 0.0
      %v4091 = vadd.f32 %v4089, %v4090
      %v4092 = vsel %vm481, %v4050, 0.0
      %v4093 = vadd.f32 %v4091, %v4092
      %v4094 = vsel %vm481, %v4051, 0.0
      %v4095 = vadd.f32 %v4093, %v4094
      %v4096 = vsel %vm481, %v4052, 0.0
      %v4097 = vadd.f32 %v4095, %v4096
      %v4098 = vsel %vm481, %v4053, 0.0
      %v4099 = vadd.f32 %v4097, %v4098
      %v4100 = vsel %vm481, %v4054, 0.0
      %v4101 = vadd.f32 %v4099, %v4100
      %v4102 = vsel %vm481, %v4055, 0.0
      %v4103 = vadd.f32 %v4101, %v4102
      %v4104 = vsel %vm481, %v4056, 0.0
      %v4105 = vadd.f32 %v4103, %v4104
      %v4106 = vsel %vm481, %v4057, 0.0
      %v4107 = vadd.f32 %v4105, %v4106
      %v4108 = vsel %vm481, %v4058, 0.0
      %v4109 = vadd.f32 %v4107, %v4108
      %v4110 = vsel %vm481, %v4059, 0.0
      %v4111 = vadd.f32 %v4109, %v4110
      %v4112 = vsel %vm481, %v4060, 0.0
      %v4113 = vadd.f32 %v4111, %v4112
      %v4114 = vsel %vm481, %v4061, 0.0
      %v4115 = vadd.f32 %v4113, %v4114
      %v4116 = vsel %vm481, %v4062, 0.0
      %v4117 = vadd.f32 %v4115, %v4116
      %v4118 = vsel %vm481, %v4063, 0.0
      %v4119 = vadd.f32 %v4117, %v4118
      %v4120 = vsel %vm481, %v4064, 0.0
      %v4121 = vadd.f32 %v4119, %v4120
      %v4122 = vsel %vm481, %v4065, 0.0
      %v4123 = vadd.f32 %v4121, %v4122
      %v4124 = vsel %vm481, %v4066, 0.0
      %v4125 = vadd.f32 %v4123, %v4124
      %v4126 = vsel %vm481, %v4067, 0.0
      %v4127 = vadd.f32 %v4125, %v4126
      %v4128 = vsel %vm481, %v4068, 0.0
      %v4129 = vadd.f32 %v4127, %v4128
      %v4130 = vsel %vm481, %v4069, 0.0
      %v4131 = vadd.f32 %v4129, %v4130
      %v4132 = vsel %vm481, %v4070, 0.0
      %v4133 = vadd.f32 %v4131, %v4132
      %v4134 = vsel %vm481, %v4071, 0.0
      %v4135 = vadd.f32 %v4133, %v4134
      %v4136 = vsel %vm481, %v4072, 0.0
      %v4137 = vadd.f32 %v4135, %v4136
      %v4138 = vrot.slane %v4137, 4
      %v4139 = vadd.f32 %v4137, %v4138
      %v4140 = vrot.slane %v4139, 2
      %v4141 = vadd.f32 %v4139, %v4140
      %v4142 = vrot.slane %v4141, 1
      %v4143 = vadd.f32 %v4141, %v4142
      %v4145 = vsel %vm481, %v4143, 0
      %4147 = vmatpush.msra.mxu0 0.0
      %4148 = vmatpush.msra.mxu0 0.0
      %4149 = vmatpush.msra.mxu0 0.0
      %4150 = vmatpush.msra.mxu0 0.0
      %4151 = vmatpush.msra.mxu0 0.0
      %4152 = vmatpush.msra.mxu0 0.0
      %4153 = vmatpush.msra.mxu0 0.0
      %4154 = vmatpush.msra.mxu0 0.0
      %4155 = vmatpush.msra.mxu0 0.0
      %4156 = vmatpush.msra.mxu0 0.0
      %4157 = vmatpush.msra.mxu0 0.0
      %4158 = vmatpush.msra.mxu0 0.0
      %4159 = vmatpush.msra.mxu0 0.0
      %4160 = vmatpush.msra.mxu0 0.0
      %4161 = vmatpush.msra.mxu0 %v4074
      %4162 = vmatpush.msra.mxu0 %v4073
      %4163 = vmatmul.f32.gmra.mxu0 %v4145
      %v4164 = vpop.f32.mrf.mxu0
      %v4165 = vadd.f32 0.0, %v4164
      %4166 = vdwg.mxu0
      %v4167 = vperm.slane %v4165, 0
      %v4168 = vsub.f32 %v4041, %v4167
      %v4169 = vsub.f32 %v4042, %v4167
      %v4170 = vsub.f32 %v4043, %v4167
      %v4171 = vsub.f32 %v4044, %v4167
      %v4172 = vsub.f32 %v4045, %v4167
      %v4173 = vsub.f32 %v4046, %v4167
      %v4174 = vsub.f32 %v4047, %v4167
      %v4175 = vsub.f32 %v4048, %v4167
      %v4176 = vsub.f32 %v4049, %v4167
      %v4177 = vsub.f32 %v4050, %v4167
      %v4178 = vsub.f32 %v4051, %v4167
      %v4179 = vsub.f32 %v4052, %v4167
      %v4180 = vsub.f32 %v4053, %v4167
      %v4181 = vsub.f32 %v4054, %v4167
      %v4182 = vsub.f32 %v4055, %v4167
      %v4183 = vsub.f32 %v4056, %v4167
      %v4184 = vsub.f32 %v4057, %v4167
      %v4185 = vsub.f32 %v4058, %v4167
      %v4186 = vsub.f32 %v4059, %v4167
      %v4187 = vsub.f32 %v4060, %v4167
      %v4188 = vsub.f32 %v4061, %v4167
      %v4189 = vsub.f32 %v4062, %v4167
      %v4190 = vsub.f32 %v4063, %v4167
      %v4191 = vsub.f32 %v4064, %v4167
      %v4192 = vsub.f32 %v4065, %v4167
      %v4193 = vsub.f32 %v4066, %v4167
      %v4194 = vsub.f32 %v4067, %v4167
      %v4195 = vsub.f32 %v4068, %v4167
      %v4196 = vsub.f32 %v4069, %v4167
      %v4197 = vsub.f32 %v4070, %v4167
      %v4198 = vsub.f32 %v4071, %v4167
      %v4199 = vsub.f32 %v4072, %v4167
      %v4200 = vmul.f32 %v4168, %v4168
      %v4201 = vmul.f32 %v4169, %v4169
      %v4202 = vmul.f32 %v4170, %v4170
      %v4203 = vmul.f32 %v4171, %v4171
      %v4204 = vmul.f32 %v4172, %v4172
      %v4205 = vmul.f32 %v4173, %v4173
      %v4206 = vmul.f32 %v4174, %v4174
      %v4207 = vmul.f32 %v4175, %v4175
      %v4208 = vmul.f32 %v4176, %v4176
      %v4209 = vmul.f32 %v4177, %v4177
      %v4210 = vmul.f32 %v4178, %v4178
      %v4211 = vmul.f32 %v4179, %v4179
      %v4212 = vmul.f32 %v4180, %v4180
      %v4213 = vmul.f32 %v4181, %v4181
      %v4214 = vmul.f32 %v4182, %v4182
      %v4215 = vmul.f32 %v4183, %v4183
      %v4216 = vmul.f32 %v4184, %v4184
      %v4217 = vmul.f32 %v4185, %v4185
      %v4218 = vmul.f32 %v4186, %v4186
      %v4219 = vmul.f32 %v4187, %v4187
      %v4220 = vmul.f32 %v4188, %v4188
      %v4221 = vmul.f32 %v4189, %v4189
      %v4222 = vmul.f32 %v4190, %v4190
      %v4223 = vmul.f32 %v4191, %v4191
      %v4224 = vmul.f32 %v4192, %v4192
      %v4225 = vmul.f32 %v4193, %v4193
      %v4226 = vmul.f32 %v4194, %v4194
      %v4227 = vmul.f32 %v4195, %v4195
      %v4228 = vmul.f32 %v4196, %v4196
      %v4229 = vmul.f32 %v4197, %v4197
      %v4230 = vmul.f32 %v4198, %v4198
      %v4231 = vmul.f32 %v4199, %v4199
      %v4232 = vsel %vm481, %v4200, 0.0
      %v4233 = vsel %vm481, %v4201, 0.0
      %v4234 = vadd.f32 %v4232, %v4233
      %v4235 = vsel %vm481, %v4202, 0.0
      %v4236 = vadd.f32 %v4234, %v4235
      %v4237 = vsel %vm481, %v4203, 0.0
      %v4238 = vadd.f32 %v4236, %v4237
      %v4239 = vsel %vm481, %v4204, 0.0
      %v4240 = vadd.f32 %v4238, %v4239
      %v4241 = vsel %vm481, %v4205, 0.0
      %v4242 = vadd.f32 %v4240, %v4241
      %v4243 = vsel %vm481, %v4206, 0.0
      %v4244 = vadd.f32 %v4242, %v4243
      %v4245 = vsel %vm481, %v4207, 0.0
      %v4246 = vadd.f32 %v4244, %v4245
      %v4247 = vsel %vm481, %v4208, 0.0
      %v4248 = vadd.f32 %v4246, %v4247
      %v4249 = vsel %vm481, %v4209, 0.0
      %v4250 = vadd.f32 %v4248, %v4249
      %v4251 = vsel %vm481, %v4210, 0.0
      %v4252 = vadd.f32 %v4250, %v4251
      %v4253 = vsel %vm481, %v4211, 0.0
      %v4254 = vadd.f32 %v4252, %v4253
      %v4255 = vsel %vm481, %v4212, 0.0
      %v4256 = vadd.f32 %v4254, %v4255
      %v4257 = vsel %vm481, %v4213, 0.0
      %v4258 = vadd.f32 %v4256, %v4257
      %v4259 = vsel %vm481, %v4214, 0.0
      %v4260 = vadd.f32 %v4258, %v4259
      %v4261 = vsel %vm481, %v4215, 0.0
      %v4262 = vadd.f32 %v4260, %v4261
      %v4263 = vsel %vm481, %v4216, 0.0
      %v4264 = vadd.f32 %v4262, %v4263
      %v4265 = vsel %vm481, %v4217, 0.0
      %v4266 = vadd.f32 %v4264, %v4265
      %v4267 = vsel %vm481, %v4218, 0.0
      %v4268 = vadd.f32 %v4266, %v4267
      %v4269 = vsel %vm481, %v4219, 0.0
      %v4270 = vadd.f32 %v4268, %v4269
      %v4271 = vsel %vm481, %v4220, 0.0
      %v4272 = vadd.f32 %v4270, %v4271
      %v4273 = vsel %vm481, %v4221, 0.0
      %v4274 = vadd.f32 %v4272, %v4273
      %v4275 = vsel %vm481, %v4222, 0.0
      %v4276 = vadd.f32 %v4274, %v4275
      %v4277 = vsel %vm481, %v4223, 0.0
      %v4278 = vadd.f32 %v4276, %v4277
      %v4279 = vsel %vm481, %v4224, 0.0
      %v4280 = vadd.f32 %v4278, %v4279
      %v4281 = vsel %vm481, %v4225, 0.0
      %v4282 = vadd.f32 %v4280, %v4281
      %v4283 = vsel %vm481, %v4226, 0.0
      %v4284 = vadd.f32 %v4282, %v4283
      %v4285 = vsel %vm481, %v4227, 0.0
      %v4286 = vadd.f32 %v4284, %v4285
      %v4287 = vsel %vm481, %v4228, 0.0
      %v4288 = vadd.f32 %v4286, %v4287
      %v4289 = vsel %vm481, %v4229, 0.0
      %v4290 = vadd.f32 %v4288, %v4289
      %v4291 = vsel %vm481, %v4230, 0.0
      %v4292 = vadd.f32 %v4290, %v4291
      %v4293 = vsel %vm481, %v4231, 0.0
      %v4294 = vadd.f32 %v4292, %v4293
      %v4295 = vrot.slane %v4294, 4
      %v4296 = vadd.f32 %v4294, %v4295
      %v4297 = vrot.slane %v4296, 2
      %v4298 = vadd.f32 %v4296, %v4297
      %v4299 = vrot.slane %v4298, 1
      %v4300 = vadd.f32 %v4298, %v4299
      %v4302 = vsel %vm481, %v4300, 0
      %4304 = vmatpush.msra.mxu0 0.0
      %4305 = vmatpush.msra.mxu0 0.0
      %4306 = vmatpush.msra.mxu0 0.0
      %4307 = vmatpush.msra.mxu0 0.0
      %4308 = vmatpush.msra.mxu0 0.0
      %4309 = vmatpush.msra.mxu0 0.0
      %4310 = vmatpush.msra.mxu0 0.0
      %4311 = vmatpush.msra.mxu0 0.0
      %4312 = vmatpush.msra.mxu0 0.0
      %4313 = vmatpush.msra.mxu0 0.0
      %4314 = vmatpush.msra.mxu0 0.0
      %4315 = vmatpush.msra.mxu0 0.0
      %4316 = vmatpush.msra.mxu0 0.0
      %4317 = vmatpush.msra.mxu0 0.0
      %4318 = vmatpush.msra.mxu0 %v4074
      %4319 = vmatpush.msra.mxu0 %v4073
      %4320 = vmatmul.f32.gmra.mxu0 %v4302
      %v4321 = vpop.f32.mrf.mxu0
      %v4322 = vadd.f32 1e-05, %v4321
      %4323 = vdwg.mxu0
      %v4324 = vrsqrt.pop %v4322
      %v4325 = vmul.f32 %v4324, %v4322
      %v4326 = vmul.f32 %v4325, %v4324
      %v4327 = vmul.f32 0.5, %v4326
      %v4328 = vsub.f32 1.5, %v4327
      %v4329 = vmul.f32 %v4324, %v4328
      %vm4330 = vweird.f32 %v4322
      %vm4331 = vweird.f32 %v4324
      %vm4332 = vmor %vm4330, %vm4331
      %v4333 = vsel %vm4332, %v4324, %v4329
      %v4334 = vperm.slane %v4333, 0
      %v4335 = vmul.f32 %v4168, %v4334
      %v4336 = vmul.f32 %v4169, %v4334
      %v4337 = vmul.f32 %v4170, %v4334
      %v4338 = vmul.f32 %v4171, %v4334
      %v4339 = vmul.f32 %v4172, %v4334
      %v4340 = vmul.f32 %v4173, %v4334
      %v4341 = vmul.f32 %v4174, %v4334
      %v4342 = vmul.f32 %v4175, %v4334
      %v4343 = vmul.f32 %v4176, %v4334
      %v4344 = vmul.f32 %v4177, %v4334
      %v4345 = vmul.f32 %v4178, %v4334
      %v4346 = vmul.f32 %v4179, %v4334
      %v4347 = vmul.f32 %v4180, %v4334
      %v4348 = vmul.f32 %v4181, %v4334
      %v4349 = vmul.f32 %v4182, %v4334
      %v4350 = vmul.f32 %v4183, %v4334
      %v4351 = vmul.f32 %v4184, %v4334
      %v4352 = vmul.f32 %v4185, %v4334
      %v4353 = vmul.f32 %v4186, %v4334
      %v4354 = vmul.f32 %v4187, %v4334
      %v4355 = vmul.f32 %v4188, %v4334
      %v4356 = vmul.f32 %v4189, %v4334
      %v4357 = vmul.f32 %v4190, %v4334
      %v4358 = vmul.f32 %v4191, %v4334
      %v4359 = vmul.f32 %v4192, %v4334
      %v4360 = vmul.f32 %v4193, %v4334
      %v4361 = vmul.f32 %v4194, %v4334
      %v4362 = vmul.f32 %v4195, %v4334
      %v4363 = vmul.f32 %v4196, %v4334
      %v4364 = vmul.f32 %v4197, %v4334
      %v4365 = vmul.f32 %v4198, %v4334
      %v4366 = vmul.f32 %v4199, %v4334
      %v4367 = vld [vmem:[%s8] sm:$0x1]
      %v4369 = vperm.slane %v4367, 0
      %v4371 = vmul.f32 %v4335, %v4369
      %v4372 = vmul.f32 %v4336, %v4369
      %v4373 = vmul.f32 %v4337, %v4369
      %v4374 = vmul.f32 %v4338, %v4369
      %v4375 = vmul.f32 %v4339, %v4369
      %v4376 = vmul.f32 %v4340, %v4369
      %v4377 = vmul.f32 %v4341, %v4369
      %v4378 = vmul.f32 %v4342, %v4369
      %v4379 = vmul.f32 %v4343, %v4369
      %v4380 = vmul.f32 %v4344, %v4369
      %v4381 = vmul.f32 %v4345, %v4369
      %v4382 = vmul.f32 %v4346, %v4369
      %v4383 = vmul.f32 %v4347, %v4369
      %v4384 = vmul.f32 %v4348, %v4369
      %v4385 = vmul.f32 %v4349, %v4369
      %v4386 = vmul.f32 %v4350, %v4369
      %v4387 = vmul.f32 %v4351, %v4369
      %v4388 = vmul.f32 %v4352, %v4369
      %v4389 = vmul.f32 %v4353, %v4369
      %v4390 = vmul.f32 %v4354, %v4369
      %v4391 = vmul.f32 %v4355, %v4369
      %v4392 = vmul.f32 %v4356, %v4369
      %v4393 = vmul.f32 %v4357, %v4369
      %v4394 = vmul.f32 %v4358, %v4369
      %v4395 = vmul.f32 %v4359, %v4369
      %v4396 = vmul.f32 %v4360, %v4369
      %v4397 = vmul.f32 %v4361, %v4369
      %v4398 = vmul.f32 %v4362, %v4369
      %v4399 = vmul.f32 %v4363, %v4369
      %v4400 = vmul.f32 %v4364, %v4369
      %v4401 = vmul.f32 %v4365, %v4369
      %v4402 = vmul.f32 %v4366, %v4369
      %v4403 = vld [vmem:[%s10] sm:$0x1]
      %v4405 = vperm.slane %v4403, 0
      %v4407 = vadd.f32 %v4371, %v4405
      %v4408 = vadd.f32 %v4372, %v4405
      %v4409 = vadd.f32 %v4373, %v4405
      %v4410 = vadd.f32 %v4374, %v4405
      %v4411 = vadd.f32 %v4375, %v4405
      %v4412 = vadd.f32 %v4376, %v4405
      %v4413 = vadd.f32 %v4377, %v4405
      %v4414 = vadd.f32 %v4378, %v4405
      %v4415 = vadd.f32 %v4379, %v4405
      %v4416 = vadd.f32 %v4380, %v4405
      %v4417 = vadd.f32 %v4381, %v4405
      %v4418 = vadd.f32 %v4382, %v4405
      %v4419 = vadd.f32 %v4383, %v4405
      %v4420 = vadd.f32 %v4384, %v4405
      %v4421 = vadd.f32 %v4385, %v4405
      %v4422 = vadd.f32 %v4386, %v4405
      %v4423 = vadd.f32 %v4387, %v4405
      %v4424 = vadd.f32 %v4388, %v4405
      %v4425 = vadd.f32 %v4389, %v4405
      %v4426 = vadd.f32 %v4390, %v4405
      %v4427 = vadd.f32 %v4391, %v4405
      %v4428 = vadd.f32 %v4392, %v4405
      %v4429 = vadd.f32 %v4393, %v4405
      %v4430 = vadd.f32 %v4394, %v4405
      %v4431 = vadd.f32 %v4395, %v4405
      %v4432 = vadd.f32 %v4396, %v4405
      %v4433 = vadd.f32 %v4397, %v4405
      %v4434 = vadd.f32 %v4398, %v4405
      %v4435 = vadd.f32 %v4399, %v4405
      %v4436 = vadd.f32 %v4400, %v4405
      %v4437 = vadd.f32 %v4401, %v4405
      %v4438 = vadd.f32 %v4402, %v4405
      %v4439 = vxor.u32 %v4407, 2147483648
      %v4440 = vxor.u32 %v4408, 2147483648
      %v4441 = vxor.u32 %v4409, 2147483648
      %v4442 = vxor.u32 %v4410, 2147483648
      %v4443 = vxor.u32 %v4411, 2147483648
      %v4444 = vxor.u32 %v4412, 2147483648
      %v4445 = vxor.u32 %v4413, 2147483648
      %v4446 = vxor.u32 %v4414, 2147483648
      %v4447 = vxor.u32 %v4415, 2147483648
      %v4448 = vxor.u32 %v4416, 2147483648
      %v4449 = vxor.u32 %v4417, 2147483648
      %v4450 = vxor.u32 %v4418, 2147483648
      %v4451 = vxor.u32 %v4419, 2147483648
      %v4452 = vxor.u32 %v4420, 2147483648
      %v4453 = vxor.u32 %v4421, 2147483648
      %v4454 = vxor.u32 %v4422, 2147483648
      %v4455 = vxor.u32 %v4423, 2147483648
      %v4456 = vxor.u32 %v4424, 2147483648
      %v4457 = vxor.u32 %v4425, 2147483648
      %v4458 = vxor.u32 %v4426, 2147483648
      %v4459 = vxor.u32 %v4427, 2147483648
      %v4460 = vxor.u32 %v4428, 2147483648
      %v4461 = vxor.u32 %v4429, 2147483648
      %v4462 = vxor.u32 %v4430, 2147483648
      %v4463 = vxor.u32 %v4431, 2147483648
      %v4464 = vxor.u32 %v4432, 2147483648
      %v4465 = vxor.u32 %v4433, 2147483648
      %v4466 = vxor.u32 %v4434, 2147483648
      %v4467 = vxor.u32 %v4435, 2147483648
      %v4468 = vxor.u32 %v4436, 2147483648
      %v4469 = vxor.u32 %v4437, 2147483648
      %v4470 = vxor.u32 %v4438, 2147483648
      %v4471 = vmul.f32 %v4439, 1.442695
      %v4472 = vpow.pop %v4471
      %v4473 = vmul.f32 %v4440, 1.442695
      %v4474 = vpow.pop %v4473
      %v4475 = vmul.f32 %v4441, 1.442695
      %v4476 = vpow.pop %v4475
      %v4477 = vmul.f32 %v4442, 1.442695
      %v4478 = vpow.pop %v4477
      %v4479 = vmul.f32 %v4443, 1.442695
      %v4480 = vpow.pop %v4479
      %v4481 = vmul.f32 %v4444, 1.442695
      %v4482 = vpow.pop %v4481
      %v4483 = vmul.f32 %v4445, 1.442695
      %v4484 = vpow.pop %v4483
      %v4485 = vmul.f32 %v4446, 1.442695
      %v4486 = vpow.pop %v4485
      %v4487 = vmul.f32 %v4447, 1.442695
      %v4488 = vpow.pop %v4487
      %v4489 = vmul.f32 %v4448, 1.442695
      %v4490 = vpow.pop %v4489
      %v4491 = vmul.f32 %v4449, 1.442695
      %v4492 = vpow.pop %v4491
      %v4493 = vmul.f32 %v4450, 1.442695
      %v4494 = vpow.pop %v4493
      %v4495 = vmul.f32 %v4451, 1.442695
      %v4496 = vpow.pop %v4495
      %v4497 = vmul.f32 %v4452, 1.442695
      %v4498 = vpow.pop %v4497
      %v4499 = vmul.f32 %v4453, 1.442695
      %v4500 = vpow.pop %v4499
      %v4501 = vmul.f32 %v4454, 1.442695
      %v4502 = vpow.pop %v4501
      %v4503 = vmul.f32 %v4455, 1.442695
      %v4504 = vpow.pop %v4503
      %v4505 = vmul.f32 %v4456, 1.442695
      %v4506 = vpow.pop %v4505
      %v4507 = vmul.f32 %v4457, 1.442695
      %v4508 = vpow.pop %v4507
      %v4509 = vmul.f32 %v4458, 1.442695
      %v4510 = vpow.pop %v4509
      %v4511 = vmul.f32 %v4459, 1.442695
      %v4512 = vpow.pop %v4511
      %v4513 = vmul.f32 %v4460, 1.442695
      %v4514 = vpow.pop %v4513
      %v4515 = vmul.f32 %v4461, 1.442695
      %v4516 = vpow.pop %v4515
      %v4517 = vmul.f32 %v4462, 1.442695
      %v4518 = vpow.pop %v4517
      %v4519 = vmul.f32 %v4463, 1.442695
      %v4520 = vpow.pop %v4519
      %v4521 = vmul.f32 %v4464, 1.442695
      %v4522 = vpow.pop %v4521
      %v4523 = vmul.f32 %v4465, 1.442695
      %v4524 = vpow.pop %v4523
      %v4525 = vmul.f32 %v4466, 1.442695
      %v4526 = vpow.pop %v4525
      %v4527 = vmul.f32 %v4467, 1.442695
      %v4528 = vpow.pop %v4527
      %v4529 = vmul.f32 %v4468, 1.442695
      %v4530 = vpow.pop %v4529
      %v4531 = vmul.f32 %v4469, 1.442695
      %v4532 = vpow.pop %v4531
      %v4533 = vmul.f32 %v4470, 1.442695
      %v4534 = vpow.pop %v4533
      %v4535 = vadd.f32 %v4472, 1.0
      %v4536 = vadd.f32 %v4474, 1.0
      %v4537 = vadd.f32 %v4476, 1.0
      %v4538 = vadd.f32 %v4478, 1.0
      %v4539 = vadd.f32 %v4480, 1.0
      %v4540 = vadd.f32 %v4482, 1.0
      %v4541 = vadd.f32 %v4484, 1.0
      %v4542 = vadd.f32 %v4486, 1.0
      %v4543 = vadd.f32 %v4488, 1.0
      %v4544 = vadd.f32 %v4490, 1.0
      %v4545 = vadd.f32 %v4492, 1.0
      %v4546 = vadd.f32 %v4494, 1.0
      %v4547 = vadd.f32 %v4496, 1.0
      %v4548 = vadd.f32 %v4498, 1.0
      %v4549 = vadd.f32 %v4500, 1.0
      %v4550 = vadd.f32 %v4502, 1.0
      %v4551 = vadd.f32 %v4504, 1.0
      %v4552 = vadd.f32 %v4506, 1.0
      %v4553 = vadd.f32 %v4508, 1.0
      %v4554 = vadd.f32 %v4510, 1.0
      %v4555 = vadd.f32 %v4512, 1.0
      %v4556 = vadd.f32 %v4514, 1.0
      %v4557 = vadd.f32 %v4516, 1.0
      %v4558 = vadd.f32 %v4518, 1.0
      %v4559 = vadd.f32 %v4520, 1.0
      %v4560 = vadd.f32 %v4522, 1.0
      %v4561 = vadd.f32 %v4524, 1.0
      %v4562 = vadd.f32 %v4526, 1.0
      %v4563 = vadd.f32 %v4528, 1.0
      %v4564 = vadd.f32 %v4530, 1.0
      %v4565 = vadd.f32 %v4532, 1.0
      %v4566 = vadd.f32 %v4534, 1.0
      %v4567 = vrcp.pop %v4535
      %v4568 = vmul.f32 %v4535, %v4567
      %v4569 = vsub.f32 1.0, %v4568
      %v4570 = vmul.f32 %v4567, %v4569
      %v4571 = vadd.f32 %v4567, %v4570
      %vm4572 = vweird.f32 %v4535
      %vm4573 = vweird.f32 %v4567
      %vm4574 = vmor %vm4572, %vm4573
      %v4575 = vsel %vm4574, %v4567, %v4571
      %v4576 = vand.u32 2147483647, %v4535
      %vm4577 = vcmp.eq.f32.partialorder %v4576, 8.507059e+37
      %v4578 = vand.u32 %v4535, 2147483648
      %v4579 = vor.u32 1.1754944e-38, %v4578
      %v4580 = vsel %vm4577, %v4579, %v4575
      %v4581 = vmul.f32 1.0, %v4580
      %v4582 = vrcp.pop %v4536
      %v4583 = vmul.f32 %v4536, %v4582
      %v4584 = vsub.f32 1.0, %v4583
      %v4585 = vmul.f32 %v4582, %v4584
      %v4586 = vadd.f32 %v4582, %v4585
      %vm4587 = vweird.f32 %v4536
      %vm4588 = vweird.f32 %v4582
      %vm4589 = vmor %vm4587, %vm4588
      %v4590 = vsel %vm4589, %v4582, %v4586
      %v4591 = vand.u32 2147483647, %v4536
      %vm4592 = vcmp.eq.f32.partialorder %v4591, 8.507059e+37
      %v4593 = vand.u32 %v4536, 2147483648
      %v4594 = vor.u32 1.1754944e-38, %v4593
      %v4595 = vsel %vm4592, %v4594, %v4590
      %v4596 = vmul.f32 1.0, %v4595
      %v4597 = vrcp.pop %v4537
      %v4598 = vmul.f32 %v4537, %v4597
      %v4599 = vsub.f32 1.0, %v4598
      %v4600 = vmul.f32 %v4597, %v4599
      %v4601 = vadd.f32 %v4597, %v4600
      %vm4602 = vweird.f32 %v4537
      %vm4603 = vweird.f32 %v4597
      %vm4604 = vmor %vm4602, %vm4603
      %v4605 = vsel %vm4604, %v4597, %v4601
      %v4606 = vand.u32 2147483647, %v4537
      %vm4607 = vcmp.eq.f32.partialorder %v4606, 8.507059e+37
      %v4608 = vand.u32 %v4537, 2147483648
      %v4609 = vor.u32 1.1754944e-38, %v4608
      %v4610 = vsel %vm4607, %v4609, %v4605
      %v4611 = vmul.f32 1.0, %v4610
      %v4612 = vrcp.pop %v4538
      %v4613 = vmul.f32 %v4538, %v4612
      %v4614 = vsub.f32 1.0, %v4613
      %v4615 = vmul.f32 %v4612, %v4614
      %v4616 = vadd.f32 %v4612, %v4615
      %vm4617 = vweird.f32 %v4538
      %vm4618 = vweird.f32 %v4612
      %vm4619 = vmor %vm4617, %vm4618
      %v4620 = vsel %vm4619, %v4612, %v4616
      %v4621 = vand.u32 2147483647, %v4538
      %vm4622 = vcmp.eq.f32.partialorder %v4621, 8.507059e+37
      %v4623 = vand.u32 %v4538, 2147483648
      %v4624 = vor.u32 1.1754944e-38, %v4623
      %v4625 = vsel %vm4622, %v4624, %v4620
      %v4626 = vmul.f32 1.0, %v4625
      %v4627 = vrcp.pop %v4539
      %v4628 = vmul.f32 %v4539, %v4627
      %v4629 = vsub.f32 1.0, %v4628
      %v4630 = vmul.f32 %v4627, %v4629
      %v4631 = vadd.f32 %v4627, %v4630
      %vm4632 = vweird.f32 %v4539
      %vm4633 = vweird.f32 %v4627
      %vm4634 = vmor %vm4632, %vm4633
      %v4635 = vsel %vm4634, %v4627, %v4631
      %v4636 = vand.u32 2147483647, %v4539
      %vm4637 = vcmp.eq.f32.partialorder %v4636, 8.507059e+37
      %v4638 = vand.u32 %v4539, 2147483648
      %v4639 = vor.u32 1.1754944e-38, %v4638
      %v4640 = vsel %vm4637, %v4639, %v4635
      %v4641 = vmul.f32 1.0, %v4640
      %v4642 = vrcp.pop %v4540
      %v4643 = vmul.f32 %v4540, %v4642
      %v4644 = vsub.f32 1.0, %v4643
      %v4645 = vmul.f32 %v4642, %v4644
      %v4646 = vadd.f32 %v4642, %v4645
      %vm4647 = vweird.f32 %v4540
      %vm4648 = vweird.f32 %v4642
      %vm4649 = vmor %vm4647, %vm4648
      %v4650 = vsel %vm4649, %v4642, %v4646
      %v4651 = vand.u32 2147483647, %v4540
      %vm4652 = vcmp.eq.f32.partialorder %v4651, 8.507059e+37
      %v4653 = vand.u32 %v4540, 2147483648
      %v4654 = vor.u32 1.1754944e-38, %v4653
      %v4655 = vsel %vm4652, %v4654, %v4650
      %v4656 = vmul.f32 1.0, %v4655
      %v4657 = vrcp.pop %v4541
      %v4658 = vmul.f32 %v4541, %v4657
      %v4659 = vsub.f32 1.0, %v4658
      %v4660 = vmul.f32 %v4657, %v4659
      %v4661 = vadd.f32 %v4657, %v4660
      %vm4662 = vweird.f32 %v4541
      %vm4663 = vweird.f32 %v4657
      %vm4664 = vmor %vm4662, %vm4663
      %v4665 = vsel %vm4664, %v4657, %v4661
      %v4666 = vand.u32 2147483647, %v4541
      %vm4667 = vcmp.eq.f32.partialorder %v4666, 8.507059e+37
      %v4668 = vand.u32 %v4541, 2147483648
      %v4669 = vor.u32 1.1754944e-38, %v4668
      %v4670 = vsel %vm4667, %v4669, %v4665
      %v4671 = vmul.f32 1.0, %v4670
      %v4672 = vrcp.pop %v4542
      %v4673 = vmul.f32 %v4542, %v4672
      %v4674 = vsub.f32 1.0, %v4673
      %v4675 = vmul.f32 %v4672, %v4674
      %v4676 = vadd.f32 %v4672, %v4675
      %vm4677 = vweird.f32 %v4542
      %vm4678 = vweird.f32 %v4672
      %vm4679 = vmor %vm4677, %vm4678
      %v4680 = vsel %vm4679, %v4672, %v4676
      %v4681 = vand.u32 2147483647, %v4542
      %vm4682 = vcmp.eq.f32.partialorder %v4681, 8.507059e+37
      %v4683 = vand.u32 %v4542, 2147483648
      %v4684 = vor.u32 1.1754944e-38, %v4683
      %v4685 = vsel %vm4682, %v4684, %v4680
      %v4686 = vmul.f32 1.0, %v4685
      %v4687 = vrcp.pop %v4543
      %v4688 = vmul.f32 %v4543, %v4687
      %v4689 = vsub.f32 1.0, %v4688
      %v4690 = vmul.f32 %v4687, %v4689
      %v4691 = vadd.f32 %v4687, %v4690
      %vm4692 = vweird.f32 %v4543
      %vm4693 = vweird.f32 %v4687
      %vm4694 = vmor %vm4692, %vm4693
      %v4695 = vsel %vm4694, %v4687, %v4691
      %v4696 = vand.u32 2147483647, %v4543
      %vm4697 = vcmp.eq.f32.partialorder %v4696, 8.507059e+37
      %v4698 = vand.u32 %v4543, 2147483648
      %v4699 = vor.u32 1.1754944e-38, %v4698
      %v4700 = vsel %vm4697, %v4699, %v4695
      %v4701 = vmul.f32 1.0, %v4700
      %v4702 = vrcp.pop %v4544
      %v4703 = vmul.f32 %v4544, %v4702
      %v4704 = vsub.f32 1.0, %v4703
      %v4705 = vmul.f32 %v4702, %v4704
      %v4706 = vadd.f32 %v4702, %v4705
      %vm4707 = vweird.f32 %v4544
      %vm4708 = vweird.f32 %v4702
      %vm4709 = vmor %vm4707, %vm4708
      %v4710 = vsel %vm4709, %v4702, %v4706
      %v4711 = vand.u32 2147483647, %v4544
      %vm4712 = vcmp.eq.f32.partialorder %v4711, 8.507059e+37
      %v4713 = vand.u32 %v4544, 2147483648
      %v4714 = vor.u32 1.1754944e-38, %v4713
      %v4715 = vsel %vm4712, %v4714, %v4710
      %v4716 = vmul.f32 1.0, %v4715
      %v4717 = vrcp.pop %v4545
      %v4718 = vmul.f32 %v4545, %v4717
      %v4719 = vsub.f32 1.0, %v4718
      %v4720 = vmul.f32 %v4717, %v4719
      %v4721 = vadd.f32 %v4717, %v4720
      %vm4722 = vweird.f32 %v4545
      %vm4723 = vweird.f32 %v4717
      %vm4724 = vmor %vm4722, %vm4723
      %v4725 = vsel %vm4724, %v4717, %v4721
      %v4726 = vand.u32 2147483647, %v4545
      %vm4727 = vcmp.eq.f32.partialorder %v4726, 8.507059e+37
      %v4728 = vand.u32 %v4545, 2147483648
      %v4729 = vor.u32 1.1754944e-38, %v4728
      %v4730 = vsel %vm4727, %v4729, %v4725
      %v4731 = vmul.f32 1.0, %v4730
      %v4732 = vrcp.pop %v4546
      %v4733 = vmul.f32 %v4546, %v4732
      %v4734 = vsub.f32 1.0, %v4733
      %v4735 = vmul.f32 %v4732, %v4734
      %v4736 = vadd.f32 %v4732, %v4735
      %vm4737 = vweird.f32 %v4546
      %vm4738 = vweird.f32 %v4732
      %vm4739 = vmor %vm4737, %vm4738
      %v4740 = vsel %vm4739, %v4732, %v4736
      %v4741 = vand.u32 2147483647, %v4546
      %vm4742 = vcmp.eq.f32.partialorder %v4741, 8.507059e+37
      %v4743 = vand.u32 %v4546, 2147483648
      %v4744 = vor.u32 1.1754944e-38, %v4743
      %v4745 = vsel %vm4742, %v4744, %v4740
      %v4746 = vmul.f32 1.0, %v4745
      %v4747 = vrcp.pop %v4547
      %v4748 = vmul.f32 %v4547, %v4747
      %v4749 = vsub.f32 1.0, %v4748
      %v4750 = vmul.f32 %v4747, %v4749
      %v4751 = vadd.f32 %v4747, %v4750
      %vm4752 = vweird.f32 %v4547
      %vm4753 = vweird.f32 %v4747
      %vm4754 = vmor %vm4752, %vm4753
      %v4755 = vsel %vm4754, %v4747, %v4751
      %v4756 = vand.u32 2147483647, %v4547
      %vm4757 = vcmp.eq.f32.partialorder %v4756, 8.507059e+37
      %v4758 = vand.u32 %v4547, 2147483648
      %v4759 = vor.u32 1.1754944e-38, %v4758
      %v4760 = vsel %vm4757, %v4759, %v4755
      %v4761 = vmul.f32 1.0, %v4760
      %v4762 = vrcp.pop %v4548
      %v4763 = vmul.f32 %v4548, %v4762
      %v4764 = vsub.f32 1.0, %v4763
      %v4765 = vmul.f32 %v4762, %v4764
      %v4766 = vadd.f32 %v4762, %v4765
      %vm4767 = vweird.f32 %v4548
      %vm4768 = vweird.f32 %v4762
      %vm4769 = vmor %vm4767, %vm4768
      %v4770 = vsel %vm4769, %v4762, %v4766
      %v4771 = vand.u32 2147483647, %v4548
      %vm4772 = vcmp.eq.f32.partialorder %v4771, 8.507059e+37
      %v4773 = vand.u32 %v4548, 2147483648
      %v4774 = vor.u32 1.1754944e-38, %v4773
      %v4775 = vsel %vm4772, %v4774, %v4770
      %v4776 = vmul.f32 1.0, %v4775
      %v4777 = vrcp.pop %v4549
      %v4778 = vmul.f32 %v4549, %v4777
      %v4779 = vsub.f32 1.0, %v4778
      %v4780 = vmul.f32 %v4777, %v4779
      %v4781 = vadd.f32 %v4777, %v4780
      %vm4782 = vweird.f32 %v4549
      %vm4783 = vweird.f32 %v4777
      %vm4784 = vmor %vm4782, %vm4783
      %v4785 = vsel %vm4784, %v4777, %v4781
      %v4786 = vand.u32 2147483647, %v4549
      %vm4787 = vcmp.eq.f32.partialorder %v4786, 8.507059e+37
      %v4788 = vand.u32 %v4549, 2147483648
      %v4789 = vor.u32 1.1754944e-38, %v4788
      %v4790 = vsel %vm4787, %v4789, %v4785
      %v4791 = vmul.f32 1.0, %v4790
      %v4792 = vrcp.pop %v4550
      %v4793 = vmul.f32 %v4550, %v4792
      %v4794 = vsub.f32 1.0, %v4793
      %v4795 = vmul.f32 %v4792, %v4794
      %v4796 = vadd.f32 %v4792, %v4795
      %vm4797 = vweird.f32 %v4550
      %vm4798 = vweird.f32 %v4792
      %vm4799 = vmor %vm4797, %vm4798
      %v4800 = vsel %vm4799, %v4792, %v4796
      %v4801 = vand.u32 2147483647, %v4550
      %vm4802 = vcmp.eq.f32.partialorder %v4801, 8.507059e+37
      %v4803 = vand.u32 %v4550, 2147483648
      %v4804 = vor.u32 1.1754944e-38, %v4803
      %v4805 = vsel %vm4802, %v4804, %v4800
      %v4806 = vmul.f32 1.0, %v4805
      %v4807 = vrcp.pop %v4551
      %v4808 = vmul.f32 %v4551, %v4807
      %v4809 = vsub.f32 1.0, %v4808
      %v4810 = vmul.f32 %v4807, %v4809
      %v4811 = vadd.f32 %v4807, %v4810
      %vm4812 = vweird.f32 %v4551
      %vm4813 = vweird.f32 %v4807
      %vm4814 = vmor %vm4812, %vm4813
      %v4815 = vsel %vm4814, %v4807, %v4811
      %v4816 = vand.u32 2147483647, %v4551
      %vm4817 = vcmp.eq.f32.partialorder %v4816, 8.507059e+37
      %v4818 = vand.u32 %v4551, 2147483648
      %v4819 = vor.u32 1.1754944e-38, %v4818
      %v4820 = vsel %vm4817, %v4819, %v4815
      %v4821 = vmul.f32 1.0, %v4820
      %v4822 = vrcp.pop %v4552
      %v4823 = vmul.f32 %v4552, %v4822
      %v4824 = vsub.f32 1.0, %v4823
      %v4825 = vmul.f32 %v4822, %v4824
      %v4826 = vadd.f32 %v4822, %v4825
      %vm4827 = vweird.f32 %v4552
      %vm4828 = vweird.f32 %v4822
      %vm4829 = vmor %vm4827, %vm4828
      %v4830 = vsel %vm4829, %v4822, %v4826
      %v4831 = vand.u32 2147483647, %v4552
      %vm4832 = vcmp.eq.f32.partialorder %v4831, 8.507059e+37
      %v4833 = vand.u32 %v4552, 2147483648
      %v4834 = vor.u32 1.1754944e-38, %v4833
      %v4835 = vsel %vm4832, %v4834, %v4830
      %v4836 = vmul.f32 1.0, %v4835
      %v4837 = vrcp.pop %v4553
      %v4838 = vmul.f32 %v4553, %v4837
      %v4839 = vsub.f32 1.0, %v4838
      %v4840 = vmul.f32 %v4837, %v4839
      %v4841 = vadd.f32 %v4837, %v4840
      %vm4842 = vweird.f32 %v4553
      %vm4843 = vweird.f32 %v4837
      %vm4844 = vmor %vm4842, %vm4843
      %v4845 = vsel %vm4844, %v4837, %v4841
      %v4846 = vand.u32 2147483647, %v4553
      %vm4847 = vcmp.eq.f32.partialorder %v4846, 8.507059e+37
      %v4848 = vand.u32 %v4553, 2147483648
      %v4849 = vor.u32 1.1754944e-38, %v4848
      %v4850 = vsel %vm4847, %v4849, %v4845
      %v4851 = vmul.f32 1.0, %v4850
      %v4852 = vrcp.pop %v4554
      %v4853 = vmul.f32 %v4554, %v4852
      %v4854 = vsub.f32 1.0, %v4853
      %v4855 = vmul.f32 %v4852, %v4854
      %v4856 = vadd.f32 %v4852, %v4855
      %vm4857 = vweird.f32 %v4554
      %vm4858 = vweird.f32 %v4852
      %vm4859 = vmor %vm4857, %vm4858
      %v4860 = vsel %vm4859, %v4852, %v4856
      %v4861 = vand.u32 2147483647, %v4554
      %vm4862 = vcmp.eq.f32.partialorder %v4861, 8.507059e+37
      %v4863 = vand.u32 %v4554, 2147483648
      %v4864 = vor.u32 1.1754944e-38, %v4863
      %v4865 = vsel %vm4862, %v4864, %v4860
      %v4866 = vmul.f32 1.0, %v4865
      %v4867 = vrcp.pop %v4555
      %v4868 = vmul.f32 %v4555, %v4867
      %v4869 = vsub.f32 1.0, %v4868
      %v4870 = vmul.f32 %v4867, %v4869
      %v4871 = vadd.f32 %v4867, %v4870
      %vm4872 = vweird.f32 %v4555
      %vm4873 = vweird.f32 %v4867
      %vm4874 = vmor %vm4872, %vm4873
      %v4875 = vsel %vm4874, %v4867, %v4871
      %v4876 = vand.u32 2147483647, %v4555
      %vm4877 = vcmp.eq.f32.partialorder %v4876, 8.507059e+37
      %v4878 = vand.u32 %v4555, 2147483648
      %v4879 = vor.u32 1.1754944e-38, %v4878
      %v4880 = vsel %vm4877, %v4879, %v4875
      %v4881 = vmul.f32 1.0, %v4880
      %v4882 = vrcp.pop %v4556
      %v4883 = vmul.f32 %v4556, %v4882
      %v4884 = vsub.f32 1.0, %v4883
      %v4885 = vmul.f32 %v4882, %v4884
      %v4886 = vadd.f32 %v4882, %v4885
      %vm4887 = vweird.f32 %v4556
      %vm4888 = vweird.f32 %v4882
      %vm4889 = vmor %vm4887, %vm4888
      %v4890 = vsel %vm4889, %v4882, %v4886
      %v4891 = vand.u32 2147483647, %v4556
      %vm4892 = vcmp.eq.f32.partialorder %v4891, 8.507059e+37
      %v4893 = vand.u32 %v4556, 2147483648
      %v4894 = vor.u32 1.1754944e-38, %v4893
      %v4895 = vsel %vm4892, %v4894, %v4890
      %v4896 = vmul.f32 1.0, %v4895
      %v4897 = vrcp.pop %v4557
      %v4898 = vmul.f32 %v4557, %v4897
      %v4899 = vsub.f32 1.0, %v4898
      %v4900 = vmul.f32 %v4897, %v4899
      %v4901 = vadd.f32 %v4897, %v4900
      %vm4902 = vweird.f32 %v4557
      %vm4903 = vweird.f32 %v4897
      %vm4904 = vmor %vm4902, %vm4903
      %v4905 = vsel %vm4904, %v4897, %v4901
      %v4906 = vand.u32 2147483647, %v4557
      %vm4907 = vcmp.eq.f32.partialorder %v4906, 8.507059e+37
      %v4908 = vand.u32 %v4557, 2147483648
      %v4909 = vor.u32 1.1754944e-38, %v4908
      %v4910 = vsel %vm4907, %v4909, %v4905
      %v4911 = vmul.f32 1.0, %v4910
      %v4912 = vrcp.pop %v4558
      %v4913 = vmul.f32 %v4558, %v4912
      %v4914 = vsub.f32 1.0, %v4913
      %v4915 = vmul.f32 %v4912, %v4914
      %v4916 = vadd.f32 %v4912, %v4915
      %vm4917 = vweird.f32 %v4558
      %vm4918 = vweird.f32 %v4912
      %vm4919 = vmor %vm4917, %vm4918
      %v4920 = vsel %vm4919, %v4912, %v4916
      %v4921 = vand.u32 2147483647, %v4558
      %vm4922 = vcmp.eq.f32.partialorder %v4921, 8.507059e+37
      %v4923 = vand.u32 %v4558, 2147483648
      %v4924 = vor.u32 1.1754944e-38, %v4923
      %v4925 = vsel %vm4922, %v4924, %v4920
      %v4926 = vmul.f32 1.0, %v4925
      %v4927 = vrcp.pop %v4559
      %v4928 = vmul.f32 %v4559, %v4927
      %v4929 = vsub.f32 1.0, %v4928
      %v4930 = vmul.f32 %v4927, %v4929
      %v4931 = vadd.f32 %v4927, %v4930
      %vm4932 = vweird.f32 %v4559
      %vm4933 = vweird.f32 %v4927
      %vm4934 = vmor %vm4932, %vm4933
      %v4935 = vsel %vm4934, %v4927, %v4931
      %v4936 = vand.u32 2147483647, %v4559
      %vm4937 = vcmp.eq.f32.partialorder %v4936, 8.507059e+37
      %v4938 = vand.u32 %v4559, 2147483648
      %v4939 = vor.u32 1.1754944e-38, %v4938
      %v4940 = vsel %vm4937, %v4939, %v4935
      %v4941 = vmul.f32 1.0, %v4940
      %v4942 = vrcp.pop %v4560
      %v4943 = vmul.f32 %v4560, %v4942
      %v4944 = vsub.f32 1.0, %v4943
      %v4945 = vmul.f32 %v4942, %v4944
      %v4946 = vadd.f32 %v4942, %v4945
      %vm4947 = vweird.f32 %v4560
      %vm4948 = vweird.f32 %v4942
      %vm4949 = vmor %vm4947, %vm4948
      %v4950 = vsel %vm4949, %v4942, %v4946
      %v4951 = vand.u32 2147483647, %v4560
      %vm4952 = vcmp.eq.f32.partialorder %v4951, 8.507059e+37
      %v4953 = vand.u32 %v4560, 2147483648
      %v4954 = vor.u32 1.1754944e-38, %v4953
      %v4955 = vsel %vm4952, %v4954, %v4950
      %v4956 = vmul.f32 1.0, %v4955
      %v4957 = vrcp.pop %v4561
      %v4958 = vmul.f32 %v4561, %v4957
      %v4959 = vsub.f32 1.0, %v4958
      %v4960 = vmul.f32 %v4957, %v4959
      %v4961 = vadd.f32 %v4957, %v4960
      %vm4962 = vweird.f32 %v4561
      %vm4963 = vweird.f32 %v4957
      %vm4964 = vmor %vm4962, %vm4963
      %v4965 = vsel %vm4964, %v4957, %v4961
      %v4966 = vand.u32 2147483647, %v4561
      %vm4967 = vcmp.eq.f32.partialorder %v4966, 8.507059e+37
      %v4968 = vand.u32 %v4561, 2147483648
      %v4969 = vor.u32 1.1754944e-38, %v4968
      %v4970 = vsel %vm4967, %v4969, %v4965
      %v4971 = vmul.f32 1.0, %v4970
      %v4972 = vrcp.pop %v4562
      %v4973 = vmul.f32 %v4562, %v4972
      %v4974 = vsub.f32 1.0, %v4973
      %v4975 = vmul.f32 %v4972, %v4974
      %v4976 = vadd.f32 %v4972, %v4975
      %vm4977 = vweird.f32 %v4562
      %vm4978 = vweird.f32 %v4972
      %vm4979 = vmor %vm4977, %vm4978
      %v4980 = vsel %vm4979, %v4972, %v4976
      %v4981 = vand.u32 2147483647, %v4562
      %vm4982 = vcmp.eq.f32.partialorder %v4981, 8.507059e+37
      %v4983 = vand.u32 %v4562, 2147483648
      %v4984 = vor.u32 1.1754944e-38, %v4983
      %v4985 = vsel %vm4982, %v4984, %v4980
      %v4986 = vmul.f32 1.0, %v4985
      %v4987 = vrcp.pop %v4563
      %v4988 = vmul.f32 %v4563, %v4987
      %v4989 = vsub.f32 1.0, %v4988
      %v4990 = vmul.f32 %v4987, %v4989
      %v4991 = vadd.f32 %v4987, %v4990
      %vm4992 = vweird.f32 %v4563
      %vm4993 = vweird.f32 %v4987
      %vm4994 = vmor %vm4992, %vm4993
      %v4995 = vsel %vm4994, %v4987, %v4991
      %v4996 = vand.u32 2147483647, %v4563
      %vm4997 = vcmp.eq.f32.partialorder %v4996, 8.507059e+37
      %v4998 = vand.u32 %v4563, 2147483648
      %v4999 = vor.u32 1.1754944e-38, %v4998
      %v5000 = vsel %vm4997, %v4999, %v4995
      %v5001 = vmul.f32 1.0, %v5000
      %v5002 = vrcp.pop %v4564
      %v5003 = vmul.f32 %v4564, %v5002
      %v5004 = vsub.f32 1.0, %v5003
      %v5005 = vmul.f32 %v5002, %v5004
      %v5006 = vadd.f32 %v5002, %v5005
      %vm5007 = vweird.f32 %v4564
      %vm5008 = vweird.f32 %v5002
      %vm5009 = vmor %vm5007, %vm5008
      %v5010 = vsel %vm5009, %v5002, %v5006
      %v5011 = vand.u32 2147483647, %v4564
      %vm5012 = vcmp.eq.f32.partialorder %v5011, 8.507059e+37
      %v5013 = vand.u32 %v4564, 2147483648
      %v5014 = vor.u32 1.1754944e-38, %v5013
      %v5015 = vsel %vm5012, %v5014, %v5010
      %v5016 = vmul.f32 1.0, %v5015
      %v5017 = vrcp.pop %v4565
      %v5018 = vmul.f32 %v4565, %v5017
      %v5019 = vsub.f32 1.0, %v5018
      %v5020 = vmul.f32 %v5017, %v5019
      %v5021 = vadd.f32 %v5017, %v5020
      %vm5022 = vweird.f32 %v4565
      %vm5023 = vweird.f32 %v5017
      %vm5024 = vmor %vm5022, %vm5023
      %v5025 = vsel %vm5024, %v5017, %v5021
      %v5026 = vand.u32 2147483647, %v4565
      %vm5027 = vcmp.eq.f32.partialorder %v5026, 8.507059e+37
      %v5028 = vand.u32 %v4565, 2147483648
      %v5029 = vor.u32 1.1754944e-38, %v5028
      %v5030 = vsel %vm5027, %v5029, %v5025
      %v5031 = vmul.f32 1.0, %v5030
      %v5032 = vrcp.pop %v4566
      %v5033 = vmul.f32 %v4566, %v5032
      %v5034 = vsub.f32 1.0, %v5033
      %v5035 = vmul.f32 %v5032, %v5034
      %v5036 = vadd.f32 %v5032, %v5035
      %vm5037 = vweird.f32 %v4566
      %vm5038 = vweird.f32 %v5032
      %vm5039 = vmor %vm5037, %vm5038
      %v5040 = vsel %vm5039, %v5032, %v5036
      %v5041 = vand.u32 2147483647, %v4566
      %vm5042 = vcmp.eq.f32.partialorder %v5041, 8.507059e+37
      %v5043 = vand.u32 %v4566, 2147483648
      %v5044 = vor.u32 1.1754944e-38, %v5043
      %v5045 = vsel %vm5042, %v5044, %v5040
      %v5046 = vmul.f32 1.0, %v5045
      %v5047 = vmul.f32 %v4407, %v4581
      %v5048 = vmul.f32 %v4408, %v4596
      %v5049 = vmul.f32 %v4409, %v4611
      %v5050 = vmul.f32 %v4410, %v4626
      %v5051 = vmul.f32 %v4411, %v4641
      %v5052 = vmul.f32 %v4412, %v4656
      %v5053 = vmul.f32 %v4413, %v4671
      %v5054 = vmul.f32 %v4414, %v4686
      %v5055 = vmul.f32 %v4415, %v4701
      %v5056 = vmul.f32 %v4416, %v4716
      %v5057 = vmul.f32 %v4417, %v4731
      %v5058 = vmul.f32 %v4418, %v4746
      %v5059 = vmul.f32 %v4419, %v4761
      %v5060 = vmul.f32 %v4420, %v4776
      %v5061 = vmul.f32 %v4421, %v4791
      %v5062 = vmul.f32 %v4422, %v4806
      %v5063 = vmul.f32 %v4423, %v4821
      %v5064 = vmul.f32 %v4424, %v4836
      %v5065 = vmul.f32 %v4425, %v4851
      %v5066 = vmul.f32 %v4426, %v4866
      %v5067 = vmul.f32 %v4427, %v4881
      %v5068 = vmul.f32 %v4428, %v4896
      %v5069 = vmul.f32 %v4429, %v4911
      %v5070 = vmul.f32 %v4430, %v4926
      %v5071 = vmul.f32 %v4431, %v4941
      %v5072 = vmul.f32 %v4432, %v4956
      %v5073 = vmul.f32 %v4433, %v4971
      %v5074 = vmul.f32 %v4434, %v4986
      %v5075 = vmul.f32 %v4435, %v5001
      %v5076 = vmul.f32 %v4436, %v5016
      %v5077 = vmul.f32 %v4437, %v5031
      %v5078 = vmul.f32 %v4438, %v5046
      %5079 = vst.msk [vmem:[%s490 + $0x1] sm:$0xff] %vm481, %v5047
      %5080 = vst.msk [vmem:[%s490 + $0x9] sm:$0xff] %vm481, %v5048
      %5081 = vst.msk [vmem:[%s490 + $0x19] sm:$0xff] %vm481, %v5049
      %5082 = vst.msk [vmem:[%s490 + $0x21] sm:$0xff] %vm481, %v5050
      %5083 = vst.msk [vmem:[%s490 + $0x31] sm:$0xff] %vm481, %v5051
      %5084 = vst.msk [vmem:[%s490 + $0x39] sm:$0xff] %vm481, %v5052
      %5085 = vst.msk [vmem:[%s490 + $0x49] sm:$0xff] %vm481, %v5053
      %5086 = vst.msk [vmem:[%s490 + $0x51] sm:$0xff] %vm481, %v5054
      %5087 = vst.msk [vmem:[%s490 + $0x61] sm:$0xff] %vm481, %v5055
      %5088 = vst.msk [vmem:[%s490 + $0x69] sm:$0xff] %vm481, %v5056
      %5089 = vst.msk [vmem:[%s490 + $0x79] sm:$0xff] %vm481, %v5057
      %5090 = vst.msk [vmem:[%s490 + $0x81] sm:$0xff] %vm481, %v5058
      %5091 = vst.msk [vmem:[%s490 + $0x91] sm:$0xff] %vm481, %v5059
      %5092 = vst.msk [vmem:[%s490 + $0x99] sm:$0xff] %vm481, %v5060
      %5093 = vst.msk [vmem:[%s490 + $0xa9] sm:$0xff] %vm481, %v5061
      %5094 = vst.msk [vmem:[%s490 + $0xb1] sm:$0xff] %vm481, %v5062
      %5095 = vst.msk [vmem:[%s490 + $0xc1] sm:$0xff] %vm481, %v5063
      %5096 = vst.msk [vmem:[%s490 + $0xc9] sm:$0xff] %vm481, %v5064
      %5097 = vst.msk [vmem:[%s490 + $0xd9] sm:$0xff] %vm481, %v5065
      %5098 = vst.msk [vmem:[%s490 + $0xe1] sm:$0xff] %vm481, %v5066
      %5099 = vst.msk [vmem:[%s490 + $0xf1] sm:$0xff] %vm481, %v5067
      %5100 = vst.msk [vmem:[%s490 + $0xf9] sm:$0xff] %vm481, %v5068
      %5101 = vst.msk [vmem:[%s490 + $0x109] sm:$0xff] %vm481, %v5069
      %5102 = vst.msk [vmem:[%s490 + $0x111] sm:$0xff] %vm481, %v5070
      %5103 = vst.msk [vmem:[%s490 + $0x121] sm:$0xff] %vm481, %v5071
      %5104 = vst.msk [vmem:[%s490 + $0x129] sm:$0xff] %vm481, %v5072
      %5105 = vst.msk [vmem:[%s490 + $0x139] sm:$0xff] %vm481, %v5073
      %5106 = vst.msk [vmem:[%s490 + $0x141] sm:$0xff] %vm481, %v5074
      %5107 = vst.msk [vmem:[%s490 + $0x151] sm:$0xff] %vm481, %v5075
      %5108 = vst.msk [vmem:[%s490 + $0x159] sm:$0xff] %vm481, %v5076
      %5109 = vst.msk [vmem:[%s490 + $0x169] sm:$0xff] %vm481, %v5077
      %5110 = vst.msk [vmem:[%s490 + $0x171] sm:$0xff] %vm481, %v5078
      %v5111 = vld [vmem:[#allocation2] sm:$0xff]
      %v5112 = vld [vmem:[#allocation2 + $0x8] sm:$0xff]
      %v5113 = vld [vmem:[#allocation2 + $0x18] sm:$0xff]
      %v5114 = vld [vmem:[#allocation2 + $0x20] sm:$0xff]
      %v5115 = vld [vmem:[#allocation2 + $0x30] sm:$0xff]
      %v5116 = vld [vmem:[#allocation2 + $0x38] sm:$0xff]
      %v5117 = vld [vmem:[#allocation2 + $0x48] sm:$0xff]
      %v5118 = vld [vmem:[#allocation2 + $0x50] sm:$0xff]
      %v5119 = vld [vmem:[#allocation2 + $0x60] sm:$0xff]
      %v5120 = vld [vmem:[#allocation2 + $0x68] sm:$0xff]
      %v5121 = vld [vmem:[#allocation2 + $0x78] sm:$0xff]
      %v5122 = vld [vmem:[#allocation2 + $0x80] sm:$0xff]
      %v5123 = vld [vmem:[#allocation2 + $0x90] sm:$0xff]
      %v5124 = vld [vmem:[#allocation2 + $0x98] sm:$0xff]
      %v5125 = vld [vmem:[#allocation2 + $0xa8] sm:$0xff]
      %v5126 = vld [vmem:[#allocation2 + $0xb0] sm:$0xff]
      %v5127 = vld [vmem:[#allocation2 + $0xc0] sm:$0xff]
      %v5128 = vld [vmem:[#allocation2 + $0xc8] sm:$0xff]
      %v5129 = vld [vmem:[#allocation2 + $0xd8] sm:$0xff]
      %v5130 = vld [vmem:[#allocation2 + $0xe0] sm:$0xff]
      %v5131 = vld [vmem:[#allocation2 + $0xf0] sm:$0xff]
      %v5132 = vld [vmem:[#allocation2 + $0xf8] sm:$0xff]
      %v5133 = vld [vmem:[#allocation2 + $0x108] sm:$0xff]
      %v5134 = vld [vmem:[#allocation2 + $0x110] sm:$0xff]
      %v5135 = vld [vmem:[#allocation2 + $0x120] sm:$0xff]
      %v5136 = vld [vmem:[#allocation2 + $0x128] sm:$0xff]
      %v5137 = vld [vmem:[#allocation2 + $0x138] sm:$0xff]
      %v5138 = vld [vmem:[#allocation2 + $0x140] sm:$0xff]
      %v5139 = vld [vmem:[#allocation2 + $0x150] sm:$0xff]
      %v5140 = vld [vmem:[#allocation2 + $0x158] sm:$0xff]
      %v5141 = vld [vmem:[#allocation2 + $0x168] sm:$0xff]
      %v5142 = vld [vmem:[#allocation2 + $0x170] sm:$0xff]
      %v5143 = vld [vmem:[%s4] sm:$0xff]
      %v5144 = vld [vmem:[%s4 + $0x8] sm:$0xff]
      %v5145 = vld [vmem:[#allocation2 + $0x1] sm:$0xff]
      %v5146 = vld [vmem:[#allocation2 + $0x9] sm:$0xff]
      %v5147 = vld [vmem:[#allocation2 + $0x19] sm:$0xff]
      %v5148 = vld [vmem:[#allocation2 + $0x21] sm:$0xff]
      %v5149 = vld [vmem:[#allocation2 + $0x31] sm:$0xff]
      %v5150 = vld [vmem:[#allocation2 + $0x39] sm:$0xff]
      %v5151 = vld [vmem:[#allocation2 + $0x49] sm:$0xff]
      %v5152 = vld [vmem:[#allocation2 + $0x51] sm:$0xff]
      %v5153 = vld [vmem:[#allocation2 + $0x61] sm:$0xff]
      %v5154 = vld [vmem:[#allocation2 + $0x69] sm:$0xff]
      %v5155 = vld [vmem:[#allocation2 + $0x79] sm:$0xff]
      %v5156 = vld [vmem:[#allocation2 + $0x81] sm:$0xff]
      %v5157 = vld [vmem:[#allocation2 + $0x91] sm:$0xff]
      %v5158 = vld [vmem:[#allocation2 + $0x99] sm:$0xff]
      %v5159 = vld [vmem:[#allocation2 + $0xa9] sm:$0xff]
      %v5160 = vld [vmem:[#allocation2 + $0xb1] sm:$0xff]
      %v5161 = vld [vmem:[#allocation2 + $0xc1] sm:$0xff]
      %v5162 = vld [vmem:[#allocation2 + $0xc9] sm:$0xff]
      %v5163 = vld [vmem:[#allocation2 + $0xd9] sm:$0xff]
      %v5164 = vld [vmem:[#allocation2 + $0xe1] sm:$0xff]
      %v5165 = vld [vmem:[#allocation2 + $0xf1] sm:$0xff]
      %v5166 = vld [vmem:[#allocation2 + $0xf9] sm:$0xff]
      %v5167 = vld [vmem:[#allocation2 + $0x109] sm:$0xff]
      %v5168 = vld [vmem:[#allocation2 + $0x111] sm:$0xff]
      %v5169 = vld [vmem:[#allocation2 + $0x121] sm:$0xff]
      %v5170 = vld [vmem:[#allocation2 + $0x129] sm:$0xff]
      %v5171 = vld [vmem:[#allocation2 + $0x139] sm:$0xff]
      %v5172 = vld [vmem:[#allocation2 + $0x141] sm:$0xff]
      %v5173 = vld [vmem:[#allocation2 + $0x151] sm:$0xff]
      %v5174 = vld [vmem:[#allocation2 + $0x159] sm:$0xff]
      %v5175 = vld [vmem:[#allocation2 + $0x169] sm:$0xff]
      %v5176 = vld [vmem:[#allocation2 + $0x171] sm:$0xff]
      %s5177 = scalar_lea.vmem %s4, 16
      %v5178 = vld [vmem:[%s5177] sm:$0xff]
      %v5179 = vld [vmem:[%s5177 + $0x8] sm:$0xff]
      %v5181 = vsel %vm481, %v5145, 0
      %v5184 = vsel %vm481, %v5146, 0
      %v5187 = vsel %vm481, %v5147, 0
      %v5190 = vsel %vm481, %v5148, 0
      %v5193 = vsel %vm481, %v5149, 0
      %v5196 = vsel %vm481, %v5150, 0
      %v5199 = vsel %vm481, %v5151, 0
      %v5202 = vsel %vm481, %v5152, 0
      %v5205 = vsel %vm481, %v5153, 0
      %v5208 = vsel %vm481, %v5154, 0
      %v5211 = vsel %vm481, %v5155, 0
      %v5214 = vsel %vm481, %v5156, 0
      %v5217 = vsel %vm481, %v5157, 0
      %v5220 = vsel %vm481, %v5158, 0
      %v5223 = vsel %vm481, %v5159, 0
      %v5226 = vsel %vm481, %v5160, 0
      %v5229 = vsel %vm481, %v5161, 0
      %v5232 = vsel %vm481, %v5162, 0
      %v5235 = vsel %vm481, %v5163, 0
      %v5238 = vsel %vm481, %v5164, 0
      %v5241 = vsel %vm481, %v5165, 0
      %v5244 = vsel %vm481, %v5166, 0
      %v5247 = vsel %vm481, %v5167, 0
      %v5250 = vsel %vm481, %v5168, 0
      %v5253 = vsel %vm481, %v5169, 0
      %v5256 = vsel %vm481, %v5170, 0
      %v5259 = vsel %vm481, %v5171, 0
      %v5262 = vsel %vm481, %v5172, 0
      %v5265 = vsel %vm481, %v5173, 0
      %v5268 = vsel %vm481, %v5174, 0
      %v5271 = vsel %vm481, %v5175, 0
      %v5274 = vsel %vm481, %v5176, 0
      %5276 = vmatpush.msra.mxu0 0.0
      %5277 = vmatpush.msra.mxu0 0.0
      %5278 = vmatpush.msra.mxu0 0.0
      %5279 = vmatpush.msra.mxu0 0.0
      %5280 = vmatpush.msra.mxu0 0.0
      %5281 = vmatpush.msra.mxu0 0.0
      %5282 = vmatpush.msra.mxu0 0.0
      %5283 = vmatpush.msra.mxu0 0.0
      %5284 = vmatpush.msra.mxu0 0.0
      %5285 = vmatpush.msra.mxu0 0.0
      %5286 = vmatpush.msra.mxu0 0.0
      %5287 = vmatpush.msra.mxu0 0.0
      %5288 = vmatpush.msra.mxu0 0.0
      %5289 = vmatpush.msra.mxu0 0.0
      %5290 = vmatpush.msra.mxu0 %v5179
      %5291 = vmatpush.msra.mxu0 %v5178
      %5292 = vmatmul.f32.gmra.mxu0 %v5181
      %v5293 = vpop.f32.mrf.mxu0
      %v5294 = vadd.f32 0.0, %v5293
      %5295 = vmatmul.f32.gmra.mxu0 %v5184
      %v5296 = vpop.f32.mrf.mxu0
      %v5297 = vadd.f32 0.0, %v5296
      %5298 = vmatmul.f32.gmra.mxu0 %v5187
      %v5299 = vpop.f32.mrf.mxu0
      %v5300 = vadd.f32 0.0, %v5299
      %5301 = vmatmul.f32.gmra.mxu0 %v5190
      %v5302 = vpop.f32.mrf.mxu0
      %v5303 = vadd.f32 0.0, %v5302
      %5304 = vmatmul.f32.gmra.mxu0 %v5193
      %v5305 = vpop.f32.mrf.mxu0
      %v5306 = vadd.f32 0.0, %v5305
      %5307 = vmatmul.f32.gmra.mxu0 %v5196
      %v5308 = vpop.f32.mrf.mxu0
      %v5309 = vadd.f32 0.0, %v5308
      %5310 = vmatmul.f32.gmra.mxu0 %v5199
      %v5311 = vpop.f32.mrf.mxu0
      %v5312 = vadd.f32 0.0, %v5311
      %5313 = vmatmul.f32.gmra.mxu0 %v5202
      %v5314 = vpop.f32.mrf.mxu0
      %v5315 = vadd.f32 0.0, %v5314
      %5316 = vmatmul.f32.gmra.mxu0 %v5205
      %v5317 = vpop.f32.mrf.mxu0
      %v5318 = vadd.f32 0.0, %v5317
      %5319 = vmatmul.f32.gmra.mxu0 %v5208
      %v5320 = vpop.f32.mrf.mxu0
      %v5321 = vadd.f32 0.0, %v5320
      %5322 = vmatmul.f32.gmra.mxu0 %v5211
      %v5323 = vpop.f32.mrf.mxu0
      %v5324 = vadd.f32 0.0, %v5323
      %5325 = vmatmul.f32.gmra.mxu0 %v5214
      %v5326 = vpop.f32.mrf.mxu0
      %v5327 = vadd.f32 0.0, %v5326
      %5328 = vmatmul.f32.gmra.mxu0 %v5217
      %v5329 = vpop.f32.mrf.mxu0
      %v5330 = vadd.f32 0.0, %v5329
      %5331 = vmatmul.f32.gmra.mxu0 %v5220
      %v5332 = vpop.f32.mrf.mxu0
      %v5333 = vadd.f32 0.0, %v5332
      %5334 = vmatmul.f32.gmra.mxu0 %v5223
      %v5335 = vpop.f32.mrf.mxu0
      %v5336 = vadd.f32 0.0, %v5335
      %5337 = vmatmul.f32.gmra.mxu0 %v5226
      %v5338 = vpop.f32.mrf.mxu0
      %v5339 = vadd.f32 0.0, %v5338
      %5340 = vmatmul.f32.gmra.mxu0 %v5229
      %v5341 = vpop.f32.mrf.mxu0
      %v5342 = vadd.f32 0.0, %v5341
      %5343 = vmatmul.f32.gmra.mxu0 %v5232
      %v5344 = vpop.f32.mrf.mxu0
      %v5345 = vadd.f32 0.0, %v5344
      %5346 = vmatmul.f32.gmra.mxu0 %v5235
      %v5347 = vpop.f32.mrf.mxu0
      %v5348 = vadd.f32 0.0, %v5347
      %5349 = vmatmul.f32.gmra.mxu0 %v5238
      %v5350 = vpop.f32.mrf.mxu0
      %v5351 = vadd.f32 0.0, %v5350
      %5352 = vmatmul.f32.gmra.mxu0 %v5241
      %v5353 = vpop.f32.mrf.mxu0
      %v5354 = vadd.f32 0.0, %v5353
      %5355 = vmatmul.f32.gmra.mxu0 %v5244
      %v5356 = vpop.f32.mrf.mxu0
      %v5357 = vadd.f32 0.0, %v5356
      %5358 = vmatmul.f32.gmra.mxu0 %v5247
      %v5359 = vpop.f32.mrf.mxu0
      %v5360 = vadd.f32 0.0, %v5359
      %5361 = vmatmul.f32.gmra.mxu0 %v5250
      %v5362 = vpop.f32.mrf.mxu0
      %v5363 = vadd.f32 0.0, %v5362
      %5364 = vmatmul.f32.gmra.mxu0 %v5253
      %v5365 = vpop.f32.mrf.mxu0
      %v5366 = vadd.f32 0.0, %v5365
      %5367 = vmatmul.f32.gmra.mxu0 %v5256
      %v5368 = vpop.f32.mrf.mxu0
      %v5369 = vadd.f32 0.0, %v5368
      %5370 = vmatmul.f32.gmra.mxu0 %v5259
      %v5371 = vpop.f32.mrf.mxu0
      %v5372 = vadd.f32 0.0, %v5371
      %5373 = vmatmul.f32.gmra.mxu0 %v5262
      %v5374 = vpop.f32.mrf.mxu0
      %v5375 = vadd.f32 0.0, %v5374
      %5376 = vmatmul.f32.gmra.mxu0 %v5265
      %v5377 = vpop.f32.mrf.mxu0
      %v5378 = vadd.f32 0.0, %v5377
      %5379 = vmatmul.f32.gmra.mxu0 %v5268
      %v5380 = vpop.f32.mrf.mxu0
      %v5381 = vadd.f32 0.0, %v5380
      %5382 = vmatmul.f32.gmra.mxu0 %v5271
      %v5383 = vpop.f32.mrf.mxu0
      %v5384 = vadd.f32 0.0, %v5383
      %5385 = vmatmul.f32.gmra.mxu0 %v5274
      %v5386 = vpop.f32.mrf.mxu0
      %v5387 = vadd.f32 0.0, %v5386
      %5388 = vdwg.mxu0
      %v5390 = vsel %vm481, %v5111, 0
      %v5393 = vsel %vm481, %v5112, 0
      %v5396 = vsel %vm481, %v5113, 0
      %v5399 = vsel %vm481, %v5114, 0
      %v5402 = vsel %vm481, %v5115, 0
      %v5405 = vsel %vm481, %v5116, 0
      %v5408 = vsel %vm481, %v5117, 0
      %v5411 = vsel %vm481, %v5118, 0
      %v5414 = vsel %vm481, %v5119, 0
      %v5417 = vsel %vm481, %v5120, 0
      %v5420 = vsel %vm481, %v5121, 0
      %v5423 = vsel %vm481, %v5122, 0
      %v5426 = vsel %vm481, %v5123, 0
      %v5429 = vsel %vm481, %v5124, 0
      %v5432 = vsel %vm481, %v5125, 0
      %v5435 = vsel %vm481, %v5126, 0
      %v5438 = vsel %vm481, %v5127, 0
      %v5441 = vsel %vm481, %v5128, 0
      %v5444 = vsel %vm481, %v5129, 0
      %v5447 = vsel %vm481, %v5130, 0
      %v5450 = vsel %vm481, %v5131, 0
      %v5453 = vsel %vm481, %v5132, 0
      %v5456 = vsel %vm481, %v5133, 0
      %v5459 = vsel %vm481, %v5134, 0
      %v5462 = vsel %vm481, %v5135, 0
      %v5465 = vsel %vm481, %v5136, 0
      %v5468 = vsel %vm481, %v5137, 0
      %v5471 = vsel %vm481, %v5138, 0
      %v5474 = vsel %vm481, %v5139, 0
      %v5477 = vsel %vm481, %v5140, 0
      %v5480 = vsel %vm481, %v5141, 0
      %v5483 = vsel %vm481, %v5142, 0
      %5485 = vmatpush.msra.mxu0 0.0
      %5486 = vmatpush.msra.mxu0 0.0
      %5487 = vmatpush.msra.mxu0 0.0
      %5488 = vmatpush.msra.mxu0 0.0
      %5489 = vmatpush.msra.mxu0 0.0
      %5490 = vmatpush.msra.mxu0 0.0
      %5491 = vmatpush.msra.mxu0 0.0
      %5492 = vmatpush.msra.mxu0 0.0
      %5493 = vmatpush.msra.mxu0 0.0
      %5494 = vmatpush.msra.mxu0 0.0
      %5495 = vmatpush.msra.mxu0 0.0
      %5496 = vmatpush.msra.mxu0 0.0
      %5497 = vmatpush.msra.mxu0 0.0
      %5498 = vmatpush.msra.mxu0 0.0
      %5499 = vmatpush.msra.mxu0 %v5144
      %5500 = vmatpush.msra.mxu0 %v5143
      %5501 = vmatmul.f32.gmra.mxu0 %v5390
      %v5502 = vpop.f32.mrf.mxu0
      %v5503 = vadd.f32 %v5294, %v5502
      %5504 = vmatmul.f32.gmra.mxu0 %v5393
      %v5505 = vpop.f32.mrf.mxu0
      %v5506 = vadd.f32 %v5297, %v5505
      %5507 = vmatmul.f32.gmra.mxu0 %v5396
      %v5508 = vpop.f32.mrf.mxu0
      %v5509 = vadd.f32 %v5300, %v5508
      %5510 = vmatmul.f32.gmra.mxu0 %v5399
      %v5511 = vpop.f32.mrf.mxu0
      %v5512 = vadd.f32 %v5303, %v5511
      %5513 = vmatmul.f32.gmra.mxu0 %v5402
      %v5514 = vpop.f32.mrf.mxu0
      %v5515 = vadd.f32 %v5306, %v5514
      %5516 = vmatmul.f32.gmra.mxu0 %v5405
      %v5517 = vpop.f32.mrf.mxu0
      %v5518 = vadd.f32 %v5309, %v5517
      %5519 = vmatmul.f32.gmra.mxu0 %v5408
      %v5520 = vpop.f32.mrf.mxu0
      %v5521 = vadd.f32 %v5312, %v5520
      %5522 = vmatmul.f32.gmra.mxu0 %v5411
      %v5523 = vpop.f32.mrf.mxu0
      %v5524 = vadd.f32 %v5315, %v5523
      %5525 = vmatmul.f32.gmra.mxu0 %v5414
      %v5526 = vpop.f32.mrf.mxu0
      %v5527 = vadd.f32 %v5318, %v5526
      %5528 = vmatmul.f32.gmra.mxu0 %v5417
      %v5529 = vpop.f32.mrf.mxu0
      %v5530 = vadd.f32 %v5321, %v5529
      %5531 = vmatmul.f32.gmra.mxu0 %v5420
      %v5532 = vpop.f32.mrf.mxu0
      %v5533 = vadd.f32 %v5324, %v5532
      %5534 = vmatmul.f32.gmra.mxu0 %v5423
      %v5535 = vpop.f32.mrf.mxu0
      %v5536 = vadd.f32 %v5327, %v5535
      %5537 = vmatmul.f32.gmra.mxu0 %v5426
      %v5538 = vpop.f32.mrf.mxu0
      %v5539 = vadd.f32 %v5330, %v5538
      %5540 = vmatmul.f32.gmra.mxu0 %v5429
      %v5541 = vpop.f32.mrf.mxu0
      %v5542 = vadd.f32 %v5333, %v5541
      %5543 = vmatmul.f32.gmra.mxu0 %v5432
      %v5544 = vpop.f32.mrf.mxu0
      %v5545 = vadd.f32 %v5336, %v5544
      %5546 = vmatmul.f32.gmra.mxu0 %v5435
      %v5547 = vpop.f32.mrf.mxu0
      %v5548 = vadd.f32 %v5339, %v5547
      %5549 = vmatmul.f32.gmra.mxu0 %v5438
      %v5550 = vpop.f32.mrf.mxu0
      %v5551 = vadd.f32 %v5342, %v5550
      %5552 = vmatmul.f32.gmra.mxu0 %v5441
      %v5553 = vpop.f32.mrf.mxu0
      %v5554 = vadd.f32 %v5345, %v5553
      %5555 = vmatmul.f32.gmra.mxu0 %v5444
      %v5556 = vpop.f32.mrf.mxu0
      %v5557 = vadd.f32 %v5348, %v5556
      %5558 = vmatmul.f32.gmra.mxu0 %v5447
      %v5559 = vpop.f32.mrf.mxu0
      %v5560 = vadd.f32 %v5351, %v5559
      %5561 = vmatmul.f32.gmra.mxu0 %v5450
      %v5562 = vpop.f32.mrf.mxu0
      %v5563 = vadd.f32 %v5354, %v5562
      %5564 = vmatmul.f32.gmra.mxu0 %v5453
      %v5565 = vpop.f32.mrf.mxu0
      %v5566 = vadd.f32 %v5357, %v5565
      %5567 = vmatmul.f32.gmra.mxu0 %v5456
      %v5568 = vpop.f32.mrf.mxu0
      %v5569 = vadd.f32 %v5360, %v5568
      %5570 = vmatmul.f32.gmra.mxu0 %v5459
      %v5571 = vpop.f32.mrf.mxu0
      %v5572 = vadd.f32 %v5363, %v5571
      %5573 = vmatmul.f32.gmra.mxu0 %v5462
      %v5574 = vpop.f32.mrf.mxu0
      %v5575 = vadd.f32 %v5366, %v5574
      %5576 = vmatmul.f32.gmra.mxu0 %v5465
      %v5577 = vpop.f32.mrf.mxu0
      %v5578 = vadd.f32 %v5369, %v5577
      %5579 = vmatmul.f32.gmra.mxu0 %v5468
      %v5580 = vpop.f32.mrf.mxu0
      %v5581 = vadd.f32 %v5372, %v5580
      %5582 = vmatmul.f32.gmra.mxu0 %v5471
      %v5583 = vpop.f32.mrf.mxu0
      %v5584 = vadd.f32 %v5375, %v5583
      %5585 = vmatmul.f32.gmra.mxu0 %v5474
      %v5586 = vpop.f32.mrf.mxu0
      %v5587 = vadd.f32 %v5378, %v5586
      %5588 = vmatmul.f32.gmra.mxu0 %v5477
      %v5589 = vpop.f32.mrf.mxu0
      %v5590 = vadd.f32 %v5381, %v5589
      %5591 = vmatmul.f32.gmra.mxu0 %v5480
      %v5592 = vpop.f32.mrf.mxu0
      %v5593 = vadd.f32 %v5384, %v5592
      %5594 = vmatmul.f32.gmra.mxu0 %v5483
      %v5595 = vpop.f32.mrf.mxu0
      %v5596 = vadd.f32 %v5387, %v5595
      %5597 = vdwg.mxu0
      %v5598 = vld [vmem:[#allocation2 + $0x2] sm:$0xff]
      %v5599 = vld [vmem:[#allocation2 + $0xa] sm:$0xff]
      %v5600 = vld [vmem:[#allocation2 + $0x1a] sm:$0xff]
      %v5601 = vld [vmem:[#allocation2 + $0x22] sm:$0xff]
      %v5602 = vld [vmem:[#allocation2 + $0x32] sm:$0xff]
      %v5603 = vld [vmem:[#allocation2 + $0x3a] sm:$0xff]
      %v5604 = vld [vmem:[#allocation2 + $0x4a] sm:$0xff]
      %v5605 = vld [vmem:[#allocation2 + $0x52] sm:$0xff]
      %v5606 = vld [vmem:[#allocation2 + $0x62] sm:$0xff]
      %v5607 = vld [vmem:[#allocation2 + $0x6a] sm:$0xff]
      %v5608 = vld [vmem:[#allocation2 + $0x7a] sm:$0xff]
      %v5609 = vld [vmem:[#allocation2 + $0x82] sm:$0xff]
      %v5610 = vld [vmem:[#allocation2 + $0x92] sm:$0xff]
      %v5611 = vld [vmem:[#allocation2 + $0x9a] sm:$0xff]
      %v5612 = vld [vmem:[#allocation2 + $0xaa] sm:$0xff]
      %v5613 = vld [vmem:[#allocation2 + $0xb2] sm:$0xff]
      %v5614 = vld [vmem:[#allocation2 + $0xc2] sm:$0xff]
      %v5615 = vld [vmem:[#allocation2 + $0xca] sm:$0xff]
      %v5616 = vld [vmem:[#allocation2 + $0xda] sm:$0xff]
      %v5617 = vld [vmem:[#allocation2 + $0xe2] sm:$0xff]
      %v5618 = vld [vmem:[#allocation2 + $0xf2] sm:$0xff]
      %v5619 = vld [vmem:[#allocation2 + $0xfa] sm:$0xff]
      %v5620 = vld [vmem:[#allocation2 + $0x10a] sm:$0xff]
      %v5621 = vld [vmem:[#allocation2 + $0x112] sm:$0xff]
      %v5622 = vld [vmem:[#allocation2 + $0x122] sm:$0xff]
      %v5623 = vld [vmem:[#allocation2 + $0x12a] sm:$0xff]
      %v5624 = vld [vmem:[#allocation2 + $0x13a] sm:$0xff]
      %v5625 = vld [vmem:[#allocation2 + $0x142] sm:$0xff]
      %v5626 = vld [vmem:[#allocation2 + $0x152] sm:$0xff]
      %v5627 = vld [vmem:[#allocation2 + $0x15a] sm:$0xff]
      %v5628 = vld [vmem:[#allocation2 + $0x16a] sm:$0xff]
      %v5629 = vld [vmem:[#allocation2 + $0x172] sm:$0xff]
      %s5630 = scalar_lea.vmem %s4, 32
      %v5631 = vld [vmem:[%s5630] sm:$0xff]
      %v5632 = vld [vmem:[%s5630 + $0x8] sm:$0xff]
      %v5634 = vsel %vm481, %v5598, 0
      %v5637 = vsel %vm481, %v5599, 0
      %v5640 = vsel %vm481, %v5600, 0
      %v5643 = vsel %vm481, %v5601, 0
      %v5646 = vsel %vm481, %v5602, 0
      %v5649 = vsel %vm481, %v5603, 0
      %v5652 = vsel %vm481, %v5604, 0
      %v5655 = vsel %vm481, %v5605, 0
      %v5658 = vsel %vm481, %v5606, 0
      %v5661 = vsel %vm481, %v5607, 0
      %v5664 = vsel %vm481, %v5608, 0
      %v5667 = vsel %vm481, %v5609, 0
      %v5670 = vsel %vm481, %v5610, 0
      %v5673 = vsel %vm481, %v5611, 0
      %v5676 = vsel %vm481, %v5612, 0
      %v5679 = vsel %vm481, %v5613, 0
      %v5682 = vsel %vm481, %v5614, 0
      %v5685 = vsel %vm481, %v5615, 0
      %v5688 = vsel %vm481, %v5616, 0
      %v5691 = vsel %vm481, %v5617, 0
      %v5694 = vsel %vm481, %v5618, 0
      %v5697 = vsel %vm481, %v5619, 0
      %v5700 = vsel %vm481, %v5620, 0
      %v5703 = vsel %vm481, %v5621, 0
      %v5706 = vsel %vm481, %v5622, 0
      %v5709 = vsel %vm481, %v5623, 0
      %v5712 = vsel %vm481, %v5624, 0
      %v5715 = vsel %vm481, %v5625, 0
      %v5718 = vsel %vm481, %v5626, 0
      %v5721 = vsel %vm481, %v5627, 0
      %v5724 = vsel %vm481, %v5628, 0
      %v5727 = vsel %vm481, %v5629, 0
      %5729 = vmatpush.msra.mxu0 0.0
      %5730 = vmatpush.msra.mxu0 0.0
      %5731 = vmatpush.msra.mxu0 0.0
      %5732 = vmatpush.msra.mxu0 0.0
      %5733 = vmatpush.msra.mxu0 0.0
      %5734 = vmatpush.msra.mxu0 0.0
      %5735 = vmatpush.msra.mxu0 0.0
      %5736 = vmatpush.msra.mxu0 0.0
      %5737 = vmatpush.msra.mxu0 0.0
      %5738 = vmatpush.msra.mxu0 0.0
      %5739 = vmatpush.msra.mxu0 0.0
      %5740 = vmatpush.msra.mxu0 0.0
      %5741 = vmatpush.msra.mxu0 0.0
      %5742 = vmatpush.msra.mxu0 0.0
      %5743 = vmatpush.msra.mxu0 %v5632
      %5744 = vmatpush.msra.mxu0 %v5631
      %5745 = vmatmul.f32.gmra.mxu0 %v5634
      %v5746 = vpop.f32.mrf.mxu0
      %v5747 = vadd.f32 0.0, %v5746
      %5748 = vmatmul.f32.gmra.mxu0 %v5637
      %v5749 = vpop.f32.mrf.mxu0
      %v5750 = vadd.f32 0.0, %v5749
      %5751 = vmatmul.f32.gmra.mxu0 %v5640
      %v5752 = vpop.f32.mrf.mxu0
      %v5753 = vadd.f32 0.0, %v5752
      %5754 = vmatmul.f32.gmra.mxu0 %v5643
      %v5755 = vpop.f32.mrf.mxu0
      %v5756 = vadd.f32 0.0, %v5755
      %5757 = vmatmul.f32.gmra.mxu0 %v5646
      %v5758 = vpop.f32.mrf.mxu0
      %v5759 = vadd.f32 0.0, %v5758
      %5760 = vmatmul.f32.gmra.mxu0 %v5649
      %v5761 = vpop.f32.mrf.mxu0
      %v5762 = vadd.f32 0.0, %v5761
      %5763 = vmatmul.f32.gmra.mxu0 %v5652
      %v5764 = vpop.f32.mrf.mxu0
      %v5765 = vadd.f32 0.0, %v5764
      %5766 = vmatmul.f32.gmra.mxu0 %v5655
      %v5767 = vpop.f32.mrf.mxu0
      %v5768 = vadd.f32 0.0, %v5767
      %5769 = vmatmul.f32.gmra.mxu0 %v5658
      %v5770 = vpop.f32.mrf.mxu0
      %v5771 = vadd.f32 0.0, %v5770
      %5772 = vmatmul.f32.gmra.mxu0 %v5661
      %v5773 = vpop.f32.mrf.mxu0
      %v5774 = vadd.f32 0.0, %v5773
      %5775 = vmatmul.f32.gmra.mxu0 %v5664
      %v5776 = vpop.f32.mrf.mxu0
      %v5777 = vadd.f32 0.0, %v5776
      %5778 = vmatmul.f32.gmra.mxu0 %v5667
      %v5779 = vpop.f32.mrf.mxu0
      %v5780 = vadd.f32 0.0, %v5779
      %5781 = vmatmul.f32.gmra.mxu0 %v5670
      %v5782 = vpop.f32.mrf.mxu0
      %v5783 = vadd.f32 0.0, %v5782
      %5784 = vmatmul.f32.gmra.mxu0 %v5673
      %v5785 = vpop.f32.mrf.mxu0
      %v5786 = vadd.f32 0.0, %v5785
      %5787 = vmatmul.f32.gmra.mxu0 %v5676
      %v5788 = vpop.f32.mrf.mxu0
      %v5789 = vadd.f32 0.0, %v5788
      %5790 = vmatmul.f32.gmra.mxu0 %v5679
      %v5791 = vpop.f32.mrf.mxu0
      %v5792 = vadd.f32 0.0, %v5791
      %5793 = vmatmul.f32.gmra.mxu0 %v5682
      %v5794 = vpop.f32.mrf.mxu0
      %v5795 = vadd.f32 0.0, %v5794
      %5796 = vmatmul.f32.gmra.mxu0 %v5685
      %v5797 = vpop.f32.mrf.mxu0
      %v5798 = vadd.f32 0.0, %v5797
      %5799 = vmatmul.f32.gmra.mxu0 %v5688
      %v5800 = vpop.f32.mrf.mxu0
      %v5801 = vadd.f32 0.0, %v5800
      %5802 = vmatmul.f32.gmra.mxu0 %v5691
      %v5803 = vpop.f32.mrf.mxu0
      %v5804 = vadd.f32 0.0, %v5803
      %5805 = vmatmul.f32.gmra.mxu0 %v5694
      %v5806 = vpop.f32.mrf.mxu0
      %v5807 = vadd.f32 0.0, %v5806
      %5808 = vmatmul.f32.gmra.mxu0 %v5697
      %v5809 = vpop.f32.mrf.mxu0
      %v5810 = vadd.f32 0.0, %v5809
      %5811 = vmatmul.f32.gmra.mxu0 %v5700
      %v5812 = vpop.f32.mrf.mxu0
      %v5813 = vadd.f32 0.0, %v5812
      %5814 = vmatmul.f32.gmra.mxu0 %v5703
      %v5815 = vpop.f32.mrf.mxu0
      %v5816 = vadd.f32 0.0, %v5815
      %5817 = vmatmul.f32.gmra.mxu0 %v5706
      %v5818 = vpop.f32.mrf.mxu0
      %v5819 = vadd.f32 0.0, %v5818
      %5820 = vmatmul.f32.gmra.mxu0 %v5709
      %v5821 = vpop.f32.mrf.mxu0
      %v5822 = vadd.f32 0.0, %v5821
      %5823 = vmatmul.f32.gmra.mxu0 %v5712
      %v5824 = vpop.f32.mrf.mxu0
      %v5825 = vadd.f32 0.0, %v5824
      %5826 = vmatmul.f32.gmra.mxu0 %v5715
      %v5827 = vpop.f32.mrf.mxu0
      %v5828 = vadd.f32 0.0, %v5827
      %5829 = vmatmul.f32.gmra.mxu0 %v5718
      %v5830 = vpop.f32.mrf.mxu0
      %v5831 = vadd.f32 0.0, %v5830
      %5832 = vmatmul.f32.gmra.mxu0 %v5721
      %v5833 = vpop.f32.mrf.mxu0
      %v5834 = vadd.f32 0.0, %v5833
      %5835 = vmatmul.f32.gmra.mxu0 %v5724
      %v5836 = vpop.f32.mrf.mxu0
      %v5837 = vadd.f32 0.0, %v5836
      %5838 = vmatmul.f32.gmra.mxu0 %v5727
      %v5839 = vpop.f32.mrf.mxu0
      %v5840 = vadd.f32 0.0, %v5839
      %5841 = vdwg.mxu0
      %v5842 = vadd.f32 %v5503, %v5747
      %v5843 = vadd.f32 %v5506, %v5750
      %v5844 = vadd.f32 %v5509, %v5753
      %v5845 = vadd.f32 %v5512, %v5756
      %v5846 = vadd.f32 %v5515, %v5759
      %v5847 = vadd.f32 %v5518, %v5762
      %v5848 = vadd.f32 %v5521, %v5765
      %v5849 = vadd.f32 %v5524, %v5768
      %v5850 = vadd.f32 %v5527, %v5771
      %v5851 = vadd.f32 %v5530, %v5774
      %v5852 = vadd.f32 %v5533, %v5777
      %v5853 = vadd.f32 %v5536, %v5780
      %v5854 = vadd.f32 %v5539, %v5783
      %v5855 = vadd.f32 %v5542, %v5786
      %v5856 = vadd.f32 %v5545, %v5789
      %v5857 = vadd.f32 %v5548, %v5792
      %v5858 = vadd.f32 %v5551, %v5795
      %v5859 = vadd.f32 %v5554, %v5798
      %v5860 = vadd.f32 %v5557, %v5801
      %v5861 = vadd.f32 %v5560, %v5804
      %v5862 = vadd.f32 %v5563, %v5807
      %v5863 = vadd.f32 %v5566, %v5810
      %v5864 = vadd.f32 %v5569, %v5813
      %v5865 = vadd.f32 %v5572, %v5816
      %v5866 = vadd.f32 %v5575, %v5819
      %v5867 = vadd.f32 %v5578, %v5822
      %v5868 = vadd.f32 %v5581, %v5825
      %v5869 = vadd.f32 %v5584, %v5828
      %v5870 = vadd.f32 %v5587, %v5831
      %v5871 = vadd.f32 %v5590, %v5834
      %v5872 = vadd.f32 %v5593, %v5837
      %v5873 = vadd.f32 %v5596, %v5840
      %v5874 = vld [vmem:[%s490] sm:$0xff]
      %v5875 = vld [vmem:[%s490 + $0x8] sm:$0xff]
      %v5876 = vld [vmem:[%s490 + $0x18] sm:$0xff]
      %v5877 = vld [vmem:[%s490 + $0x20] sm:$0xff]
      %v5878 = vld [vmem:[%s490 + $0x30] sm:$0xff]
      %v5879 = vld [vmem:[%s490 + $0x38] sm:$0xff]
      %v5880 = vld [vmem:[%s490 + $0x48] sm:$0xff]
      %v5881 = vld [vmem:[%s490 + $0x50] sm:$0xff]
      %v5882 = vld [vmem:[%s490 + $0x60] sm:$0xff]
      %v5883 = vld [vmem:[%s490 + $0x68] sm:$0xff]
      %v5884 = vld [vmem:[%s490 + $0x78] sm:$0xff]
      %v5885 = vld [vmem:[%s490 + $0x80] sm:$0xff]
      %v5886 = vld [vmem:[%s490 + $0x90] sm:$0xff]
      %v5887 = vld [vmem:[%s490 + $0x98] sm:$0xff]
      %v5888 = vld [vmem:[%s490 + $0xa8] sm:$0xff]
      %v5889 = vld [vmem:[%s490 + $0xb0] sm:$0xff]
      %v5890 = vld [vmem:[%s490 + $0xc0] sm:$0xff]
      %v5891 = vld [vmem:[%s490 + $0xc8] sm:$0xff]
      %v5892 = vld [vmem:[%s490 + $0xd8] sm:$0xff]
      %v5893 = vld [vmem:[%s490 + $0xe0] sm:$0xff]
      %v5894 = vld [vmem:[%s490 + $0xf0] sm:$0xff]
      %v5895 = vld [vmem:[%s490 + $0xf8] sm:$0xff]
      %v5896 = vld [vmem:[%s490 + $0x108] sm:$0xff]
      %v5897 = vld [vmem:[%s490 + $0x110] sm:$0xff]
      %v5898 = vld [vmem:[%s490 + $0x120] sm:$0xff]
      %v5899 = vld [vmem:[%s490 + $0x128] sm:$0xff]
      %v5900 = vld [vmem:[%s490 + $0x138] sm:$0xff]
      %v5901 = vld [vmem:[%s490 + $0x140] sm:$0xff]
      %v5902 = vld [vmem:[%s490 + $0x150] sm:$0xff]
      %v5903 = vld [vmem:[%s490 + $0x158] sm:$0xff]
      %v5904 = vld [vmem:[%s490 + $0x168] sm:$0xff]
      %v5905 = vld [vmem:[%s490 + $0x170] sm:$0xff]
      %s5906 = scalar_lea.vmem %s4, 48
      %v5907 = vld [vmem:[%s5906] sm:$0xff]
      %v5908 = vld [vmem:[%s5906 + $0x8] sm:$0xff]
      %v5910 = vsel %vm481, %v5874, 0
      %v5913 = vsel %vm481, %v5875, 0
      %v5916 = vsel %vm481, %v5876, 0
      %v5919 = vsel %vm481, %v5877, 0
      %v5922 = vsel %vm481, %v5878, 0
      %v5925 = vsel %vm481, %v5879, 0
      %v5928 = vsel %vm481, %v5880, 0
      %v5931 = vsel %vm481, %v5881, 0
      %v5934 = vsel %vm481, %v5882, 0
      %v5937 = vsel %vm481, %v5883, 0
      %v5940 = vsel %vm481, %v5884, 0
      %v5943 = vsel %vm481, %v5885, 0
      %v5946 = vsel %vm481, %v5886, 0
      %v5949 = vsel %vm481, %v5887, 0
      %v5952 = vsel %vm481, %v5888, 0
      %v5955 = vsel %vm481, %v5889, 0
      %v5958 = vsel %vm481, %v5890, 0
      %v5961 = vsel %vm481, %v5891, 0
      %v5964 = vsel %vm481, %v5892, 0
      %v5967 = vsel %vm481, %v5893, 0
      %v5970 = vsel %vm481, %v5894, 0
      %v5973 = vsel %vm481, %v5895, 0
      %v5976 = vsel %vm481, %v5896, 0
      %v5979 = vsel %vm481, %v5897, 0
      %v5982 = vsel %vm481, %v5898, 0
      %v5985 = vsel %vm481, %v5899, 0
      %v5988 = vsel %vm481, %v5900, 0
      %v5991 = vsel %vm481, %v5901, 0
      %v5994 = vsel %vm481, %v5902, 0
      %v5997 = vsel %vm481, %v5903, 0
      %v6000 = vsel %vm481, %v5904, 0
      %v6003 = vsel %vm481, %v5905, 0
      %6005 = vmatpush.msra.mxu0 0.0
      %6006 = vmatpush.msra.mxu0 0.0
      %6007 = vmatpush.msra.mxu0 0.0
      %6008 = vmatpush.msra.mxu0 0.0
      %6009 = vmatpush.msra.mxu0 0.0
      %6010 = vmatpush.msra.mxu0 0.0
      %6011 = vmatpush.msra.mxu0 0.0
      %6012 = vmatpush.msra.mxu0 0.0
      %6013 = vmatpush.msra.mxu0 0.0
      %6014 = vmatpush.msra.mxu0 0.0
      %6015 = vmatpush.msra.mxu0 0.0
      %6016 = vmatpush.msra.mxu0 0.0
      %6017 = vmatpush.msra.mxu0 0.0
      %6018 = vmatpush.msra.mxu0 0.0
      %6019 = vmatpush.msra.mxu0 %v5908
      %6020 = vmatpush.msra.mxu0 %v5907
      %6021 = vmatmul.f32.gmra.mxu0 %v5910
      %v6022 = vpop.f32.mrf.mxu0
      %v6023 = vadd.f32 0.0, %v6022
      %6024 = vmatmul.f32.gmra.mxu0 %v5913
      %v6025 = vpop.f32.mrf.mxu0
      %v6026 = vadd.f32 0.0, %v6025
      %6027 = vmatmul.f32.gmra.mxu0 %v5916
      %v6028 = vpop.f32.mrf.mxu0
      %v6029 = vadd.f32 0.0, %v6028
      %6030 = vmatmul.f32.gmra.mxu0 %v5919
      %v6031 = vpop.f32.mrf.mxu0
      %v6032 = vadd.f32 0.0, %v6031
      %6033 = vmatmul.f32.gmra.mxu0 %v5922
      %v6034 = vpop.f32.mrf.mxu0
      %v6035 = vadd.f32 0.0, %v6034
      %6036 = vmatmul.f32.gmra.mxu0 %v5925
      %v6037 = vpop.f32.mrf.mxu0
      %v6038 = vadd.f32 0.0, %v6037
      %6039 = vmatmul.f32.gmra.mxu0 %v5928
      %v6040 = vpop.f32.mrf.mxu0
      %v6041 = vadd.f32 0.0, %v6040
      %6042 = vmatmul.f32.gmra.mxu0 %v5931
      %v6043 = vpop.f32.mrf.mxu0
      %v6044 = vadd.f32 0.0, %v6043
      %6045 = vmatmul.f32.gmra.mxu0 %v5934
      %v6046 = vpop.f32.mrf.mxu0
      %v6047 = vadd.f32 0.0, %v6046
      %6048 = vmatmul.f32.gmra.mxu0 %v5937
      %v6049 = vpop.f32.mrf.mxu0
      %v6050 = vadd.f32 0.0, %v6049
      %6051 = vmatmul.f32.gmra.mxu0 %v5940
      %v6052 = vpop.f32.mrf.mxu0
      %v6053 = vadd.f32 0.0, %v6052
      %6054 = vmatmul.f32.gmra.mxu0 %v5943
      %v6055 = vpop.f32.mrf.mxu0
      %v6056 = vadd.f32 0.0, %v6055
      %6057 = vmatmul.f32.gmra.mxu0 %v5946
      %v6058 = vpop.f32.mrf.mxu0
      %v6059 = vadd.f32 0.0, %v6058
      %6060 = vmatmul.f32.gmra.mxu0 %v5949
      %v6061 = vpop.f32.mrf.mxu0
      %v6062 = vadd.f32 0.0, %v6061
      %6063 = vmatmul.f32.gmra.mxu0 %v5952
      %v6064 = vpop.f32.mrf.mxu0
      %v6065 = vadd.f32 0.0, %v6064
      %6066 = vmatmul.f32.gmra.mxu0 %v5955
      %v6067 = vpop.f32.mrf.mxu0
      %v6068 = vadd.f32 0.0, %v6067
      %6069 = vmatmul.f32.gmra.mxu0 %v5958
      %v6070 = vpop.f32.mrf.mxu0
      %v6071 = vadd.f32 0.0, %v6070
      %6072 = vmatmul.f32.gmra.mxu0 %v5961
      %v6073 = vpop.f32.mrf.mxu0
      %v6074 = vadd.f32 0.0, %v6073
      %6075 = vmatmul.f32.gmra.mxu0 %v5964
      %v6076 = vpop.f32.mrf.mxu0
      %v6077 = vadd.f32 0.0, %v6076
      %6078 = vmatmul.f32.gmra.mxu0 %v5967
      %v6079 = vpop.f32.mrf.mxu0
      %v6080 = vadd.f32 0.0, %v6079
      %6081 = vmatmul.f32.gmra.mxu0 %v5970
      %v6082 = vpop.f32.mrf.mxu0
      %v6083 = vadd.f32 0.0, %v6082
      %6084 = vmatmul.f32.gmra.mxu0 %v5973
      %v6085 = vpop.f32.mrf.mxu0
      %v6086 = vadd.f32 0.0, %v6085
      %6087 = vmatmul.f32.gmra.mxu0 %v5976
      %v6088 = vpop.f32.mrf.mxu0
      %v6089 = vadd.f32 0.0, %v6088
      %6090 = vmatmul.f32.gmra.mxu0 %v5979
      %v6091 = vpop.f32.mrf.mxu0
      %v6092 = vadd.f32 0.0, %v6091
      %6093 = vmatmul.f32.gmra.mxu0 %v5982
      %v6094 = vpop.f32.mrf.mxu0
      %v6095 = vadd.f32 0.0, %v6094
      %6096 = vmatmul.f32.gmra.mxu0 %v5985
      %v6097 = vpop.f32.mrf.mxu0
      %v6098 = vadd.f32 0.0, %v6097
      %6099 = vmatmul.f32.gmra.mxu0 %v5988
      %v6100 = vpop.f32.mrf.mxu0
      %v6101 = vadd.f32 0.0, %v6100
      %6102 = vmatmul.f32.gmra.mxu0 %v5991
      %v6103 = vpop.f32.mrf.mxu0
      %v6104 = vadd.f32 0.0, %v6103
      %6105 = vmatmul.f32.gmra.mxu0 %v5994
      %v6106 = vpop.f32.mrf.mxu0
      %v6107 = vadd.f32 0.0, %v6106
      %6108 = vmatmul.f32.gmra.mxu0 %v5997
      %v6109 = vpop.f32.mrf.mxu0
      %v6110 = vadd.f32 0.0, %v6109
      %6111 = vmatmul.f32.gmra.mxu0 %v6000
      %v6112 = vpop.f32.mrf.mxu0
      %v6113 = vadd.f32 0.0, %v6112
      %6114 = vmatmul.f32.gmra.mxu0 %v6003
      %v6115 = vpop.f32.mrf.mxu0
      %v6116 = vadd.f32 0.0, %v6115
      %6117 = vdwg.mxu0
      %v6118 = vadd.f32 %v5842, %v6023
      %v6119 = vadd.f32 %v5843, %v6026
      %v6120 = vadd.f32 %v5844, %v6029
      %v6121 = vadd.f32 %v5845, %v6032
      %v6122 = vadd.f32 %v5846, %v6035
      %v6123 = vadd.f32 %v5847, %v6038
      %v6124 = vadd.f32 %v5848, %v6041
      %v6125 = vadd.f32 %v5849, %v6044
      %v6126 = vadd.f32 %v5850, %v6047
      %v6127 = vadd.f32 %v5851, %v6050
      %v6128 = vadd.f32 %v5852, %v6053
      %v6129 = vadd.f32 %v5853, %v6056
      %v6130 = vadd.f32 %v5854, %v6059
      %v6131 = vadd.f32 %v5855, %v6062
      %v6132 = vadd.f32 %v5856, %v6065
      %v6133 = vadd.f32 %v5857, %v6068
      %v6134 = vadd.f32 %v5858, %v6071
      %v6135 = vadd.f32 %v5859, %v6074
      %v6136 = vadd.f32 %v5860, %v6077
      %v6137 = vadd.f32 %v5861, %v6080
      %v6138 = vadd.f32 %v5862, %v6083
      %v6139 = vadd.f32 %v5863, %v6086
      %v6140 = vadd.f32 %v5864, %v6089
      %v6141 = vadd.f32 %v5865, %v6092
      %v6142 = vadd.f32 %v5866, %v6095
      %v6143 = vadd.f32 %v5867, %v6098
      %v6144 = vadd.f32 %v5868, %v6101
      %v6145 = vadd.f32 %v5869, %v6104
      %v6146 = vadd.f32 %v5870, %v6107
      %v6147 = vadd.f32 %v5871, %v6110
      %v6148 = vadd.f32 %v5872, %v6113
      %v6149 = vadd.f32 %v5873, %v6116
      %v6150 = vld [vmem:[%s490 + $0x1] sm:$0xff]
      %v6151 = vld [vmem:[%s490 + $0x9] sm:$0xff]
      %v6152 = vld [vmem:[%s490 + $0x19] sm:$0xff]
      %v6153 = vld [vmem:[%s490 + $0x21] sm:$0xff]
      %v6154 = vld [vmem:[%s490 + $0x31] sm:$0xff]
      %v6155 = vld [vmem:[%s490 + $0x39] sm:$0xff]
      %v6156 = vld [vmem:[%s490 + $0x49] sm:$0xff]
      %v6157 = vld [vmem:[%s490 + $0x51] sm:$0xff]
      %v6158 = vld [vmem:[%s490 + $0x61] sm:$0xff]
      %v6159 = vld [vmem:[%s490 + $0x69] sm:$0xff]
      %v6160 = vld [vmem:[%s490 + $0x79] sm:$0xff]
      %v6161 = vld [vmem:[%s490 + $0x81] sm:$0xff]
      %v6162 = vld [vmem:[%s490 + $0x91] sm:$0xff]
      %v6163 = vld [vmem:[%s490 + $0x99] sm:$0xff]
      %v6164 = vld [vmem:[%s490 + $0xa9] sm:$0xff]
      %v6165 = vld [vmem:[%s490 + $0xb1] sm:$0xff]
      %v6166 = vld [vmem:[%s490 + $0xc1] sm:$0xff]
      %v6167 = vld [vmem:[%s490 + $0xc9] sm:$0xff]
      %v6168 = vld [vmem:[%s490 + $0xd9] sm:$0xff]
      %v6169 = vld [vmem:[%s490 + $0xe1] sm:$0xff]
      %v6170 = vld [vmem:[%s490 + $0xf1] sm:$0xff]
      %v6171 = vld [vmem:[%s490 + $0xf9] sm:$0xff]
      %v6172 = vld [vmem:[%s490 + $0x109] sm:$0xff]
      %v6173 = vld [vmem:[%s490 + $0x111] sm:$0xff]
      %v6174 = vld [vmem:[%s490 + $0x121] sm:$0xff]
      %v6175 = vld [vmem:[%s490 + $0x129] sm:$0xff]
      %v6176 = vld [vmem:[%s490 + $0x139] sm:$0xff]
      %v6177 = vld [vmem:[%s490 + $0x141] sm:$0xff]
      %v6178 = vld [vmem:[%s490 + $0x151] sm:$0xff]
      %v6179 = vld [vmem:[%s490 + $0x159] sm:$0xff]
      %v6180 = vld [vmem:[%s490 + $0x169] sm:$0xff]
      %v6181 = vld [vmem:[%s490 + $0x171] sm:$0xff]
      %s6182 = scalar_lea.vmem %s4, 64
      %v6183 = vld [vmem:[%s6182] sm:$0xff]
      %v6184 = vld [vmem:[%s6182 + $0x8] sm:$0xff]
      %v6186 = vsel %vm481, %v6150, 0
      %v6189 = vsel %vm481, %v6151, 0
      %v6192 = vsel %vm481, %v6152, 0
      %v6195 = vsel %vm481, %v6153, 0
      %v6198 = vsel %vm481, %v6154, 0
      %v6201 = vsel %vm481, %v6155, 0
      %v6204 = vsel %vm481, %v6156, 0
      %v6207 = vsel %vm481, %v6157, 0
      %v6210 = vsel %vm481, %v6158, 0
      %v6213 = vsel %vm481, %v6159, 0
      %v6216 = vsel %vm481, %v6160, 0
      %v6219 = vsel %vm481, %v6161, 0
      %v6222 = vsel %vm481, %v6162, 0
      %v6225 = vsel %vm481, %v6163, 0
      %v6228 = vsel %vm481, %v6164, 0
      %v6231 = vsel %vm481, %v6165, 0
      %v6234 = vsel %vm481, %v6166, 0
      %v6237 = vsel %vm481, %v6167, 0
      %v6240 = vsel %vm481, %v6168, 0
      %v6243 = vsel %vm481, %v6169, 0
      %v6246 = vsel %vm481, %v6170, 0
      %v6249 = vsel %vm481, %v6171, 0
      %v6252 = vsel %vm481, %v6172, 0
      %v6255 = vsel %vm481, %v6173, 0
      %v6258 = vsel %vm481, %v6174, 0
      %v6261 = vsel %vm481, %v6175, 0
      %v6264 = vsel %vm481, %v6176, 0
      %v6267 = vsel %vm481, %v6177, 0
      %v6270 = vsel %vm481, %v6178, 0
      %v6273 = vsel %vm481, %v6179, 0
      %v6276 = vsel %vm481, %v6180, 0
      %v6279 = vsel %vm481, %v6181, 0
      %6281 = vmatpush.msra.mxu0 0.0
      %6282 = vmatpush.msra.mxu0 0.0
      %6283 = vmatpush.msra.mxu0 0.0
      %6284 = vmatpush.msra.mxu0 0.0
      %6285 = vmatpush.msra.mxu0 0.0
      %6286 = vmatpush.msra.mxu0 0.0
      %6287 = vmatpush.msra.mxu0 0.0
      %6288 = vmatpush.msra.mxu0 0.0
      %6289 = vmatpush.msra.mxu0 0.0
      %6290 = vmatpush.msra.mxu0 0.0
      %6291 = vmatpush.msra.mxu0 0.0
      %6292 = vmatpush.msra.mxu0 0.0
      %6293 = vmatpush.msra.mxu0 0.0
      %6294 = vmatpush.msra.mxu0 0.0
      %6295 = vmatpush.msra.mxu0 %v6184
      %6296 = vmatpush.msra.mxu0 %v6183
      %6297 = vmatmul.f32.gmra.mxu0 %v6186
      %v6298 = vpop.f32.mrf.mxu0
      %v6299 = vadd.f32 0.0, %v6298
      %6300 = vmatmul.f32.gmra.mxu0 %v6189
      %v6301 = vpop.f32.mrf.mxu0
      %v6302 = vadd.f32 0.0, %v6301
      %6303 = vmatmul.f32.gmra.mxu0 %v6192
      %v6304 = vpop.f32.mrf.mxu0
      %v6305 = vadd.f32 0.0, %v6304
      %6306 = vmatmul.f32.gmra.mxu0 %v6195
      %v6307 = vpop.f32.mrf.mxu0
      %v6308 = vadd.f32 0.0, %v6307
      %6309 = vmatmul.f32.gmra.mxu0 %v6198
      %v6310 = vpop.f32.mrf.mxu0
      %v6311 = vadd.f32 0.0, %v6310
      %6312 = vmatmul.f32.gmra.mxu0 %v6201
      %v6313 = vpop.f32.mrf.mxu0
      %v6314 = vadd.f32 0.0, %v6313
      %6315 = vmatmul.f32.gmra.mxu0 %v6204
      %v6316 = vpop.f32.mrf.mxu0
      %v6317 = vadd.f32 0.0, %v6316
      %6318 = vmatmul.f32.gmra.mxu0 %v6207
      %v6319 = vpop.f32.mrf.mxu0
      %v6320 = vadd.f32 0.0, %v6319
      %6321 = vmatmul.f32.gmra.mxu0 %v6210
      %v6322 = vpop.f32.mrf.mxu0
      %v6323 = vadd.f32 0.0, %v6322
      %6324 = vmatmul.f32.gmra.mxu0 %v6213
      %v6325 = vpop.f32.mrf.mxu0
      %v6326 = vadd.f32 0.0, %v6325
      %6327 = vmatmul.f32.gmra.mxu0 %v6216
      %v6328 = vpop.f32.mrf.mxu0
      %v6329 = vadd.f32 0.0, %v6328
      %6330 = vmatmul.f32.gmra.mxu0 %v6219
      %v6331 = vpop.f32.mrf.mxu0
      %v6332 = vadd.f32 0.0, %v6331
      %6333 = vmatmul.f32.gmra.mxu0 %v6222
      %v6334 = vpop.f32.mrf.mxu0
      %v6335 = vadd.f32 0.0, %v6334
      %6336 = vmatmul.f32.gmra.mxu0 %v6225
      %v6337 = vpop.f32.mrf.mxu0
      %v6338 = vadd.f32 0.0, %v6337
      %6339 = vmatmul.f32.gmra.mxu0 %v6228
      %v6340 = vpop.f32.mrf.mxu0
      %v6341 = vadd.f32 0.0, %v6340
      %6342 = vmatmul.f32.gmra.mxu0 %v6231
      %v6343 = vpop.f32.mrf.mxu0
      %v6344 = vadd.f32 0.0, %v6343
      %6345 = vmatmul.f32.gmra.mxu0 %v6234
      %v6346 = vpop.f32.mrf.mxu0
      %v6347 = vadd.f32 0.0, %v6346
      %6348 = vmatmul.f32.gmra.mxu0 %v6237
      %v6349 = vpop.f32.mrf.mxu0
      %v6350 = vadd.f32 0.0, %v6349
      %6351 = vmatmul.f32.gmra.mxu0 %v6240
      %v6352 = vpop.f32.mrf.mxu0
      %v6353 = vadd.f32 0.0, %v6352
      %6354 = vmatmul.f32.gmra.mxu0 %v6243
      %v6355 = vpop.f32.mrf.mxu0
      %v6356 = vadd.f32 0.0, %v6355
      %6357 = vmatmul.f32.gmra.mxu0 %v6246
      %v6358 = vpop.f32.mrf.mxu0
      %v6359 = vadd.f32 0.0, %v6358
      %6360 = vmatmul.f32.gmra.mxu0 %v6249
      %v6361 = vpop.f32.mrf.mxu0
      %v6362 = vadd.f32 0.0, %v6361
      %6363 = vmatmul.f32.gmra.mxu0 %v6252
      %v6364 = vpop.f32.mrf.mxu0
      %v6365 = vadd.f32 0.0, %v6364
      %6366 = vmatmul.f32.gmra.mxu0 %v6255
      %v6367 = vpop.f32.mrf.mxu0
      %v6368 = vadd.f32 0.0, %v6367
      %6369 = vmatmul.f32.gmra.mxu0 %v6258
      %v6370 = vpop.f32.mrf.mxu0
      %v6371 = vadd.f32 0.0, %v6370
      %6372 = vmatmul.f32.gmra.mxu0 %v6261
      %v6373 = vpop.f32.mrf.mxu0
      %v6374 = vadd.f32 0.0, %v6373
      %6375 = vmatmul.f32.gmra.mxu0 %v6264
      %v6376 = vpop.f32.mrf.mxu0
      %v6377 = vadd.f32 0.0, %v6376
      %6378 = vmatmul.f32.gmra.mxu0 %v6267
      %v6379 = vpop.f32.mrf.mxu0
      %v6380 = vadd.f32 0.0, %v6379
      %6381 = vmatmul.f32.gmra.mxu0 %v6270
      %v6382 = vpop.f32.mrf.mxu0
      %v6383 = vadd.f32 0.0, %v6382
      %6384 = vmatmul.f32.gmra.mxu0 %v6273
      %v6385 = vpop.f32.mrf.mxu0
      %v6386 = vadd.f32 0.0, %v6385
      %6387 = vmatmul.f32.gmra.mxu0 %v6276
      %v6388 = vpop.f32.mrf.mxu0
      %v6389 = vadd.f32 0.0, %v6388
      %6390 = vmatmul.f32.gmra.mxu0 %v6279
      %v6391 = vpop.f32.mrf.mxu0
      %v6392 = vadd.f32 0.0, %v6391
      %6393 = vdwg.mxu0
      %v6394 = vadd.f32 %v6118, %v6299
      %v6395 = vadd.f32 %v6119, %v6302
      %v6396 = vadd.f32 %v6120, %v6305
      %v6397 = vadd.f32 %v6121, %v6308
      %v6398 = vadd.f32 %v6122, %v6311
      %v6399 = vadd.f32 %v6123, %v6314
      %v6400 = vadd.f32 %v6124, %v6317
      %v6401 = vadd.f32 %v6125, %v6320
      %v6402 = vadd.f32 %v6126, %v6323
      %v6403 = vadd.f32 %v6127, %v6326
      %v6404 = vadd.f32 %v6128, %v6329
      %v6405 = vadd.f32 %v6129, %v6332
      %v6406 = vadd.f32 %v6130, %v6335
      %v6407 = vadd.f32 %v6131, %v6338
      %v6408 = vadd.f32 %v6132, %v6341
      %v6409 = vadd.f32 %v6133, %v6344
      %v6410 = vadd.f32 %v6134, %v6347
      %v6411 = vadd.f32 %v6135, %v6350
      %v6412 = vadd.f32 %v6136, %v6353
      %v6413 = vadd.f32 %v6137, %v6356
      %v6414 = vadd.f32 %v6138, %v6359
      %v6415 = vadd.f32 %v6139, %v6362
      %v6416 = vadd.f32 %v6140, %v6365
      %v6417 = vadd.f32 %v6141, %v6368
      %v6418 = vadd.f32 %v6142, %v6371
      %v6419 = vadd.f32 %v6143, %v6374
      %v6420 = vadd.f32 %v6144, %v6377
      %v6421 = vadd.f32 %v6145, %v6380
      %v6422 = vadd.f32 %v6146, %v6383
      %v6423 = vadd.f32 %v6147, %v6386
      %v6424 = vadd.f32 %v6148, %v6389
      %v6425 = vadd.f32 %v6149, %v6392
      %v6426 = vld [vmem:[%s490 + $0x2] sm:$0xff]
      %v6427 = vld [vmem:[%s490 + $0xa] sm:$0xff]
      %v6428 = vld [vmem:[%s490 + $0x1a] sm:$0xff]
      %v6429 = vld [vmem:[%s490 + $0x22] sm:$0xff]
      %v6430 = vld [vmem:[%s490 + $0x32] sm:$0xff]
      %v6431 = vld [vmem:[%s490 + $0x3a] sm:$0xff]
      %v6432 = vld [vmem:[%s490 + $0x4a] sm:$0xff]
      %v6433 = vld [vmem:[%s490 + $0x52] sm:$0xff]
      %v6434 = vld [vmem:[%s490 + $0x62] sm:$0xff]
      %v6435 = vld [vmem:[%s490 + $0x6a] sm:$0xff]
      %v6436 = vld [vmem:[%s490 + $0x7a] sm:$0xff]
      %v6437 = vld [vmem:[%s490 + $0x82] sm:$0xff]
      %v6438 = vld [vmem:[%s490 + $0x92] sm:$0xff]
      %v6439 = vld [vmem:[%s490 + $0x9a] sm:$0xff]
      %v6440 = vld [vmem:[%s490 + $0xaa] sm:$0xff]
      %v6441 = vld [vmem:[%s490 + $0xb2] sm:$0xff]
      %v6442 = vld [vmem:[%s490 + $0xc2] sm:$0xff]
      %v6443 = vld [vmem:[%s490 + $0xca] sm:$0xff]
      %v6444 = vld [vmem:[%s490 + $0xda] sm:$0xff]
      %v6445 = vld [vmem:[%s490 + $0xe2] sm:$0xff]
      %v6446 = vld [vmem:[%s490 + $0xf2] sm:$0xff]
      %v6447 = vld [vmem:[%s490 + $0xfa] sm:$0xff]
      %v6448 = vld [vmem:[%s490 + $0x10a] sm:$0xff]
      %v6449 = vld [vmem:[%s490 + $0x112] sm:$0xff]
      %v6450 = vld [vmem:[%s490 + $0x122] sm:$0xff]
      %v6451 = vld [vmem:[%s490 + $0x12a] sm:$0xff]
      %v6452 = vld [vmem:[%s490 + $0x13a] sm:$0xff]
      %v6453 = vld [vmem:[%s490 + $0x142] sm:$0xff]
      %v6454 = vld [vmem:[%s490 + $0x152] sm:$0xff]
      %v6455 = vld [vmem:[%s490 + $0x15a] sm:$0xff]
      %v6456 = vld [vmem:[%s490 + $0x16a] sm:$0xff]
      %v6457 = vld [vmem:[%s490 + $0x172] sm:$0xff]
      %s6458 = scalar_lea.vmem %s4, 80
      %v6459 = vld [vmem:[%s6458] sm:$0xff]
      %v6460 = vld [vmem:[%s6458 + $0x8] sm:$0xff]
      %v6462 = vsel %vm481, %v6426, 0
      %v6465 = vsel %vm481, %v6427, 0
      %v6468 = vsel %vm481, %v6428, 0
      %v6471 = vsel %vm481, %v6429, 0
      %v6474 = vsel %vm481, %v6430, 0
      %v6477 = vsel %vm481, %v6431, 0
      %v6480 = vsel %vm481, %v6432, 0
      %v6483 = vsel %vm481, %v6433, 0
      %v6486 = vsel %vm481, %v6434, 0
      %v6489 = vsel %vm481, %v6435, 0
      %v6492 = vsel %vm481, %v6436, 0
      %v6495 = vsel %vm481, %v6437, 0
      %v6498 = vsel %vm481, %v6438, 0
      %v6501 = vsel %vm481, %v6439, 0
      %v6504 = vsel %vm481, %v6440, 0
      %v6507 = vsel %vm481, %v6441, 0
      %v6510 = vsel %vm481, %v6442, 0
      %v6513 = vsel %vm481, %v6443, 0
      %v6516 = vsel %vm481, %v6444, 0
      %v6519 = vsel %vm481, %v6445, 0
      %v6522 = vsel %vm481, %v6446, 0
      %v6525 = vsel %vm481, %v6447, 0
      %v6528 = vsel %vm481, %v6448, 0
      %v6531 = vsel %vm481, %v6449, 0
      %v6534 = vsel %vm481, %v6450, 0
      %v6537 = vsel %vm481, %v6451, 0
      %v6540 = vsel %vm481, %v6452, 0
      %v6543 = vsel %vm481, %v6453, 0
      %v6546 = vsel %vm481, %v6454, 0
      %v6549 = vsel %vm481, %v6455, 0
      %v6552 = vsel %vm481, %v6456, 0
      %v6555 = vsel %vm481, %v6457, 0
      %6557 = vmatpush.msra.mxu0 0.0
      %6558 = vmatpush.msra.mxu0 0.0
      %6559 = vmatpush.msra.mxu0 0.0
      %6560 = vmatpush.msra.mxu0 0.0
      %6561 = vmatpush.msra.mxu0 0.0
      %6562 = vmatpush.msra.mxu0 0.0
      %6563 = vmatpush.msra.mxu0 0.0
      %6564 = vmatpush.msra.mxu0 0.0
      %6565 = vmatpush.msra.mxu0 0.0
      %6566 = vmatpush.msra.mxu0 0.0
      %6567 = vmatpush.msra.mxu0 0.0
      %6568 = vmatpush.msra.mxu0 0.0
      %6569 = vmatpush.msra.mxu0 0.0
      %6570 = vmatpush.msra.mxu0 0.0
      %6571 = vmatpush.msra.mxu0 %v6460
      %6572 = vmatpush.msra.mxu0 %v6459
      %6573 = vmatmul.f32.gmra.mxu0 %v6462
      %v6574 = vpop.f32.mrf.mxu0
      %v6575 = vadd.f32 0.0, %v6574
      %6576 = vmatmul.f32.gmra.mxu0 %v6465
      %v6577 = vpop.f32.mrf.mxu0
      %v6578 = vadd.f32 0.0, %v6577
      %6579 = vmatmul.f32.gmra.mxu0 %v6468
      %v6580 = vpop.f32.mrf.mxu0
      %v6581 = vadd.f32 0.0, %v6580
      %6582 = vmatmul.f32.gmra.mxu0 %v6471
      %v6583 = vpop.f32.mrf.mxu0
      %v6584 = vadd.f32 0.0, %v6583
      %6585 = vmatmul.f32.gmra.mxu0 %v6474
      %v6586 = vpop.f32.mrf.mxu0
      %v6587 = vadd.f32 0.0, %v6586
      %6588 = vmatmul.f32.gmra.mxu0 %v6477
      %v6589 = vpop.f32.mrf.mxu0
      %v6590 = vadd.f32 0.0, %v6589
      %6591 = vmatmul.f32.gmra.mxu0 %v6480
      %v6592 = vpop.f32.mrf.mxu0
      %v6593 = vadd.f32 0.0, %v6592
      %6594 = vmatmul.f32.gmra.mxu0 %v6483
      %v6595 = vpop.f32.mrf.mxu0
      %v6596 = vadd.f32 0.0, %v6595
      %6597 = vmatmul.f32.gmra.mxu0 %v6486
      %v6598 = vpop.f32.mrf.mxu0
      %v6599 = vadd.f32 0.0, %v6598
      %6600 = vmatmul.f32.gmra.mxu0 %v6489
      %v6601 = vpop.f32.mrf.mxu0
      %v6602 = vadd.f32 0.0, %v6601
      %6603 = vmatmul.f32.gmra.mxu0 %v6492
      %v6604 = vpop.f32.mrf.mxu0
      %v6605 = vadd.f32 0.0, %v6604
      %6606 = vmatmul.f32.gmra.mxu0 %v6495
      %v6607 = vpop.f32.mrf.mxu0
      %v6608 = vadd.f32 0.0, %v6607
      %6609 = vmatmul.f32.gmra.mxu0 %v6498
      %v6610 = vpop.f32.mrf.mxu0
      %v6611 = vadd.f32 0.0, %v6610
      %6612 = vmatmul.f32.gmra.mxu0 %v6501
      %v6613 = vpop.f32.mrf.mxu0
      %v6614 = vadd.f32 0.0, %v6613
      %6615 = vmatmul.f32.gmra.mxu0 %v6504
      %v6616 = vpop.f32.mrf.mxu0
      %v6617 = vadd.f32 0.0, %v6616
      %6618 = vmatmul.f32.gmra.mxu0 %v6507
      %v6619 = vpop.f32.mrf.mxu0
      %v6620 = vadd.f32 0.0, %v6619
      %6621 = vmatmul.f32.gmra.mxu0 %v6510
      %v6622 = vpop.f32.mrf.mxu0
      %v6623 = vadd.f32 0.0, %v6622
      %6624 = vmatmul.f32.gmra.mxu0 %v6513
      %v6625 = vpop.f32.mrf.mxu0
      %v6626 = vadd.f32 0.0, %v6625
      %6627 = vmatmul.f32.gmra.mxu0 %v6516
      %v6628 = vpop.f32.mrf.mxu0
      %v6629 = vadd.f32 0.0, %v6628
      %6630 = vmatmul.f32.gmra.mxu0 %v6519
      %v6631 = vpop.f32.mrf.mxu0
      %v6632 = vadd.f32 0.0, %v6631
      %6633 = vmatmul.f32.gmra.mxu0 %v6522
      %v6634 = vpop.f32.mrf.mxu0
      %v6635 = vadd.f32 0.0, %v6634
      %6636 = vmatmul.f32.gmra.mxu0 %v6525
      %v6637 = vpop.f32.mrf.mxu0
      %v6638 = vadd.f32 0.0, %v6637
      %6639 = vmatmul.f32.gmra.mxu0 %v6528
      %v6640 = vpop.f32.mrf.mxu0
      %v6641 = vadd.f32 0.0, %v6640
      %6642 = vmatmul.f32.gmra.mxu0 %v6531
      %v6643 = vpop.f32.mrf.mxu0
      %v6644 = vadd.f32 0.0, %v6643
      %6645 = vmatmul.f32.gmra.mxu0 %v6534
      %v6646 = vpop.f32.mrf.mxu0
      %v6647 = vadd.f32 0.0, %v6646
      %6648 = vmatmul.f32.gmra.mxu0 %v6537
      %v6649 = vpop.f32.mrf.mxu0
      %v6650 = vadd.f32 0.0, %v6649
      %6651 = vmatmul.f32.gmra.mxu0 %v6540
      %v6652 = vpop.f32.mrf.mxu0
      %v6653 = vadd.f32 0.0, %v6652
      %6654 = vmatmul.f32.gmra.mxu0 %v6543
      %v6655 = vpop.f32.mrf.mxu0
      %v6656 = vadd.f32 0.0, %v6655
      %6657 = vmatmul.f32.gmra.mxu0 %v6546
      %v6658 = vpop.f32.mrf.mxu0
      %v6659 = vadd.f32 0.0, %v6658
      %6660 = vmatmul.f32.gmra.mxu0 %v6549
      %v6661 = vpop.f32.mrf.mxu0
      %v6662 = vadd.f32 0.0, %v6661
      %6663 = vmatmul.f32.gmra.mxu0 %v6552
      %v6664 = vpop.f32.mrf.mxu0
      %v6665 = vadd.f32 0.0, %v6664
      %6666 = vmatmul.f32.gmra.mxu0 %v6555
      %v6667 = vpop.f32.mrf.mxu0
      %v6668 = vadd.f32 0.0, %v6667
      %6669 = vdwg.mxu0
      %v6670 = vadd.f32 %v6394, %v6575
      %v6671 = vadd.f32 %v6395, %v6578
      %v6672 = vadd.f32 %v6396, %v6581
      %v6673 = vadd.f32 %v6397, %v6584
      %v6674 = vadd.f32 %v6398, %v6587
      %v6675 = vadd.f32 %v6399, %v6590
      %v6676 = vadd.f32 %v6400, %v6593
      %v6677 = vadd.f32 %v6401, %v6596
      %v6678 = vadd.f32 %v6402, %v6599
      %v6679 = vadd.f32 %v6403, %v6602
      %v6680 = vadd.f32 %v6404, %v6605
      %v6681 = vadd.f32 %v6405, %v6608
      %v6682 = vadd.f32 %v6406, %v6611
      %v6683 = vadd.f32 %v6407, %v6614
      %v6684 = vadd.f32 %v6408, %v6617
      %v6685 = vadd.f32 %v6409, %v6620
      %v6686 = vadd.f32 %v6410, %v6623
      %v6687 = vadd.f32 %v6411, %v6626
      %v6688 = vadd.f32 %v6412, %v6629
      %v6689 = vadd.f32 %v6413, %v6632
      %v6690 = vadd.f32 %v6414, %v6635
      %v6691 = vadd.f32 %v6415, %v6638
      %v6692 = vadd.f32 %v6416, %v6641
      %v6693 = vadd.f32 %v6417, %v6644
      %v6694 = vadd.f32 %v6418, %v6647
      %v6695 = vadd.f32 %v6419, %v6650
      %v6696 = vadd.f32 %v6420, %v6653
      %v6697 = vadd.f32 %v6421, %v6656
      %v6698 = vadd.f32 %v6422, %v6659
      %v6699 = vadd.f32 %v6423, %v6662
      %v6700 = vadd.f32 %v6424, %v6665
      %v6701 = vadd.f32 %v6425, %v6668
      %v6702 = vld [vmem:[%s3179] sm:$0xff]
      %v6703 = vld [vmem:[%s3179 + $0x8] sm:$0xff]
      %v6704 = vld [vmem:[%s3179 + $0x18] sm:$0xff]
      %v6705 = vld [vmem:[%s3179 + $0x20] sm:$0xff]
      %v6706 = vld [vmem:[%s3179 + $0x30] sm:$0xff]
      %v6707 = vld [vmem:[%s3179 + $0x38] sm:$0xff]
      %v6708 = vld [vmem:[%s3179 + $0x48] sm:$0xff]
      %v6709 = vld [vmem:[%s3179 + $0x50] sm:$0xff]
      %v6710 = vld [vmem:[%s3179 + $0x60] sm:$0xff]
      %v6711 = vld [vmem:[%s3179 + $0x68] sm:$0xff]
      %v6712 = vld [vmem:[%s3179 + $0x78] sm:$0xff]
      %v6713 = vld [vmem:[%s3179 + $0x80] sm:$0xff]
      %v6714 = vld [vmem:[%s3179 + $0x90] sm:$0xff]
      %v6715 = vld [vmem:[%s3179 + $0x98] sm:$0xff]
      %v6716 = vld [vmem:[%s3179 + $0xa8] sm:$0xff]
      %v6717 = vld [vmem:[%s3179 + $0xb0] sm:$0xff]
      %v6718 = vld [vmem:[%s3179 + $0xc0] sm:$0xff]
      %v6719 = vld [vmem:[%s3179 + $0xc8] sm:$0xff]
      %v6720 = vld [vmem:[%s3179 + $0xd8] sm:$0xff]
      %v6721 = vld [vmem:[%s3179 + $0xe0] sm:$0xff]
      %v6722 = vld [vmem:[%s3179 + $0xf0] sm:$0xff]
      %v6723 = vld [vmem:[%s3179 + $0xf8] sm:$0xff]
      %v6724 = vld [vmem:[%s3179 + $0x108] sm:$0xff]
      %v6725 = vld [vmem:[%s3179 + $0x110] sm:$0xff]
      %v6726 = vld [vmem:[%s3179 + $0x120] sm:$0xff]
      %v6727 = vld [vmem:[%s3179 + $0x128] sm:$0xff]
      %v6728 = vld [vmem:[%s3179 + $0x138] sm:$0xff]
      %v6729 = vld [vmem:[%s3179 + $0x140] sm:$0xff]
      %v6730 = vld [vmem:[%s3179 + $0x150] sm:$0xff]
      %v6731 = vld [vmem:[%s3179 + $0x158] sm:$0xff]
      %v6732 = vld [vmem:[%s3179 + $0x168] sm:$0xff]
      %v6733 = vld [vmem:[%s3179 + $0x170] sm:$0xff]
      %s6734 = scalar_lea.vmem %s4, 96
      %v6735 = vld [vmem:[%s6734] sm:$0xff]
      %v6736 = vld [vmem:[%s6734 + $0x8] sm:$0xff]
      %v6738 = vsel %vm481, %v6702, 0
      %v6741 = vsel %vm481, %v6703, 0
      %v6744 = vsel %vm481, %v6704, 0
      %v6747 = vsel %vm481, %v6705, 0
      %v6750 = vsel %vm481, %v6706, 0
      %v6753 = vsel %vm481, %v6707, 0
      %v6756 = vsel %vm481, %v6708, 0
      %v6759 = vsel %vm481, %v6709, 0
      %v6762 = vsel %vm481, %v6710, 0
      %v6765 = vsel %vm481, %v6711, 0
      %v6768 = vsel %vm481, %v6712, 0
      %v6771 = vsel %vm481, %v6713, 0
      %v6774 = vsel %vm481, %v6714, 0
      %v6777 = vsel %vm481, %v6715, 0
      %v6780 = vsel %vm481, %v6716, 0
      %v6783 = vsel %vm481, %v6717, 0
      %v6786 = vsel %vm481, %v6718, 0
      %v6789 = vsel %vm481, %v6719, 0
      %v6792 = vsel %vm481, %v6720, 0
      %v6795 = vsel %vm481, %v6721, 0
      %v6798 = vsel %vm481, %v6722, 0
      %v6801 = vsel %vm481, %v6723, 0
      %v6804 = vsel %vm481, %v6724, 0
      %v6807 = vsel %vm481, %v6725, 0
      %v6810 = vsel %vm481, %v6726, 0
      %v6813 = vsel %vm481, %v6727, 0
      %v6816 = vsel %vm481, %v6728, 0
      %v6819 = vsel %vm481, %v6729, 0
      %v6822 = vsel %vm481, %v6730, 0
      %v6825 = vsel %vm481, %v6731, 0
      %v6828 = vsel %vm481, %v6732, 0
      %v6831 = vsel %vm481, %v6733, 0
      %6833 = vmatpush.msra.mxu0 0.0
      %6834 = vmatpush.msra.mxu0 0.0
      %6835 = vmatpush.msra.mxu0 0.0
      %6836 = vmatpush.msra.mxu0 0.0
      %6837 = vmatpush.msra.mxu0 0.0
      %6838 = vmatpush.msra.mxu0 0.0
      %6839 = vmatpush.msra.mxu0 0.0
      %6840 = vmatpush.msra.mxu0 0.0
      %6841 = vmatpush.msra.mxu0 0.0
      %6842 = vmatpush.msra.mxu0 0.0
      %6843 = vmatpush.msra.mxu0 0.0
      %6844 = vmatpush.msra.mxu0 0.0
      %6845 = vmatpush.msra.mxu0 0.0
      %6846 = vmatpush.msra.mxu0 0.0
      %6847 = vmatpush.msra.mxu0 %v6736
      %6848 = vmatpush.msra.mxu0 %v6735
      %6849 = vmatmul.f32.gmra.mxu0 %v6738
      %v6850 = vpop.f32.mrf.mxu0
      %v6851 = vadd.f32 0.0, %v6850
      %6852 = vmatmul.f32.gmra.mxu0 %v6741
      %v6853 = vpop.f32.mrf.mxu0
      %v6854 = vadd.f32 0.0, %v6853
      %6855 = vmatmul.f32.gmra.mxu0 %v6744
      %v6856 = vpop.f32.mrf.mxu0
      %v6857 = vadd.f32 0.0, %v6856
      %6858 = vmatmul.f32.gmra.mxu0 %v6747
      %v6859 = vpop.f32.mrf.mxu0
      %v6860 = vadd.f32 0.0, %v6859
      %6861 = vmatmul.f32.gmra.mxu0 %v6750
      %v6862 = vpop.f32.mrf.mxu0
      %v6863 = vadd.f32 0.0, %v6862
      %6864 = vmatmul.f32.gmra.mxu0 %v6753
      %v6865 = vpop.f32.mrf.mxu0
      %v6866 = vadd.f32 0.0, %v6865
      %6867 = vmatmul.f32.gmra.mxu0 %v6756
      %v6868 = vpop.f32.mrf.mxu0
      %v6869 = vadd.f32 0.0, %v6868
      %6870 = vmatmul.f32.gmra.mxu0 %v6759
      %v6871 = vpop.f32.mrf.mxu0
      %v6872 = vadd.f32 0.0, %v6871
      %6873 = vmatmul.f32.gmra.mxu0 %v6762
      %v6874 = vpop.f32.mrf.mxu0
      %v6875 = vadd.f32 0.0, %v6874
      %6876 = vmatmul.f32.gmra.mxu0 %v6765
      %v6877 = vpop.f32.mrf.mxu0
      %v6878 = vadd.f32 0.0, %v6877
      %6879 = vmatmul.f32.gmra.mxu0 %v6768
      %v6880 = vpop.f32.mrf.mxu0
      %v6881 = vadd.f32 0.0, %v6880
      %6882 = vmatmul.f32.gmra.mxu0 %v6771
      %v6883 = vpop.f32.mrf.mxu0
      %v6884 = vadd.f32 0.0, %v6883
      %6885 = vmatmul.f32.gmra.mxu0 %v6774
      %v6886 = vpop.f32.mrf.mxu0
      %v6887 = vadd.f32 0.0, %v6886
      %6888 = vmatmul.f32.gmra.mxu0 %v6777
      %v6889 = vpop.f32.mrf.mxu0
      %v6890 = vadd.f32 0.0, %v6889
      %6891 = vmatmul.f32.gmra.mxu0 %v6780
      %v6892 = vpop.f32.mrf.mxu0
      %v6893 = vadd.f32 0.0, %v6892
      %6894 = vmatmul.f32.gmra.mxu0 %v6783
      %v6895 = vpop.f32.mrf.mxu0
      %v6896 = vadd.f32 0.0, %v6895
      %6897 = vmatmul.f32.gmra.mxu0 %v6786
      %v6898 = vpop.f32.mrf.mxu0
      %v6899 = vadd.f32 0.0, %v6898
      %6900 = vmatmul.f32.gmra.mxu0 %v6789
      %v6901 = vpop.f32.mrf.mxu0
      %v6902 = vadd.f32 0.0, %v6901
      %6903 = vmatmul.f32.gmra.mxu0 %v6792
      %v6904 = vpop.f32.mrf.mxu0
      %v6905 = vadd.f32 0.0, %v6904
      %6906 = vmatmul.f32.gmra.mxu0 %v6795
      %v6907 = vpop.f32.mrf.mxu0
      %v6908 = vadd.f32 0.0, %v6907
      %6909 = vmatmul.f32.gmra.mxu0 %v6798
      %v6910 = vpop.f32.mrf.mxu0
      %v6911 = vadd.f32 0.0, %v6910
      %6912 = vmatmul.f32.gmra.mxu0 %v6801
      %v6913 = vpop.f32.mrf.mxu0
      %v6914 = vadd.f32 0.0, %v6913
      %6915 = vmatmul.f32.gmra.mxu0 %v6804
      %v6916 = vpop.f32.mrf.mxu0
      %v6917 = vadd.f32 0.0, %v6916
      %6918 = vmatmul.f32.gmra.mxu0 %v6807
      %v6919 = vpop.f32.mrf.mxu0
      %v6920 = vadd.f32 0.0, %v6919
      %6921 = vmatmul.f32.gmra.mxu0 %v6810
      %v6922 = vpop.f32.mrf.mxu0
      %v6923 = vadd.f32 0.0, %v6922
      %6924 = vmatmul.f32.gmra.mxu0 %v6813
      %v6925 = vpop.f32.mrf.mxu0
      %v6926 = vadd.f32 0.0, %v6925
      %6927 = vmatmul.f32.gmra.mxu0 %v6816
      %v6928 = vpop.f32.mrf.mxu0
      %v6929 = vadd.f32 0.0, %v6928
      %6930 = vmatmul.f32.gmra.mxu0 %v6819
      %v6931 = vpop.f32.mrf.mxu0
      %v6932 = vadd.f32 0.0, %v6931
      %6933 = vmatmul.f32.gmra.mxu0 %v6822
      %v6934 = vpop.f32.mrf.mxu0
      %v6935 = vadd.f32 0.0, %v6934
      %6936 = vmatmul.f32.gmra.mxu0 %v6825
      %v6937 = vpop.f32.mrf.mxu0
      %v6938 = vadd.f32 0.0, %v6937
      %6939 = vmatmul.f32.gmra.mxu0 %v6828
      %v6940 = vpop.f32.mrf.mxu0
      %v6941 = vadd.f32 0.0, %v6940
      %6942 = vmatmul.f32.gmra.mxu0 %v6831
      %v6943 = vpop.f32.mrf.mxu0
      %v6944 = vadd.f32 0.0, %v6943
      %6945 = vdwg.mxu0
      %v6946 = vadd.f32 %v6670, %v6851
      %v6947 = vadd.f32 %v6671, %v6854
      %v6948 = vadd.f32 %v6672, %v6857
      %v6949 = vadd.f32 %v6673, %v6860
      %v6950 = vadd.f32 %v6674, %v6863
      %v6951 = vadd.f32 %v6675, %v6866
      %v6952 = vadd.f32 %v6676, %v6869
      %v6953 = vadd.f32 %v6677, %v6872
      %v6954 = vadd.f32 %v6678, %v6875
      %v6955 = vadd.f32 %v6679, %v6878
      %v6956 = vadd.f32 %v6680, %v6881
      %v6957 = vadd.f32 %v6681, %v6884
      %v6958 = vadd.f32 %v6682, %v6887
      %v6959 = vadd.f32 %v6683, %v6890
      %v6960 = vadd.f32 %v6684, %v6893
      %v6961 = vadd.f32 %v6685, %v6896
      %v6962 = vadd.f32 %v6686, %v6899
      %v6963 = vadd.f32 %v6687, %v6902
      %v6964 = vadd.f32 %v6688, %v6905
      %v6965 = vadd.f32 %v6689, %v6908
      %v6966 = vadd.f32 %v6690, %v6911
      %v6967 = vadd.f32 %v6691, %v6914
      %v6968 = vadd.f32 %v6692, %v6917
      %v6969 = vadd.f32 %v6693, %v6920
      %v6970 = vadd.f32 %v6694, %v6923
      %v6971 = vadd.f32 %v6695, %v6926
      %v6972 = vadd.f32 %v6696, %v6929
      %v6973 = vadd.f32 %v6697, %v6932
      %v6974 = vadd.f32 %v6698, %v6935
      %v6975 = vadd.f32 %v6699, %v6938
      %v6976 = vadd.f32 %v6700, %v6941
      %v6977 = vadd.f32 %v6701, %v6944
      %v6978 = vld [vmem:[%s3179 + $0x1] sm:$0xff]
      %v6979 = vld [vmem:[%s3179 + $0x9] sm:$0xff]
      %v6980 = vld [vmem:[%s3179 + $0x19] sm:$0xff]
      %v6981 = vld [vmem:[%s3179 + $0x21] sm:$0xff]
      %v6982 = vld [vmem:[%s3179 + $0x31] sm:$0xff]
      %v6983 = vld [vmem:[%s3179 + $0x39] sm:$0xff]
      %v6984 = vld [vmem:[%s3179 + $0x49] sm:$0xff]
      %v6985 = vld [vmem:[%s3179 + $0x51] sm:$0xff]
      %v6986 = vld [vmem:[%s3179 + $0x61] sm:$0xff]
      %v6987 = vld [vmem:[%s3179 + $0x69] sm:$0xff]
      %v6988 = vld [vmem:[%s3179 + $0x79] sm:$0xff]
      %v6989 = vld [vmem:[%s3179 + $0x81] sm:$0xff]
      %v6990 = vld [vmem:[%s3179 + $0x91] sm:$0xff]
      %v6991 = vld [vmem:[%s3179 + $0x99] sm:$0xff]
      %v6992 = vld [vmem:[%s3179 + $0xa9] sm:$0xff]
      %v6993 = vld [vmem:[%s3179 + $0xb1] sm:$0xff]
      %v6994 = vld [vmem:[%s3179 + $0xc1] sm:$0xff]
      %v6995 = vld [vmem:[%s3179 + $0xc9] sm:$0xff]
      %v6996 = vld [vmem:[%s3179 + $0xd9] sm:$0xff]
      %v6997 = vld [vmem:[%s3179 + $0xe1] sm:$0xff]
      %v6998 = vld [vmem:[%s3179 + $0xf1] sm:$0xff]
      %v6999 = vld [vmem:[%s3179 + $0xf9] sm:$0xff]
      %v7000 = vld [vmem:[%s3179 + $0x109] sm:$0xff]
      %v7001 = vld [vmem:[%s3179 + $0x111] sm:$0xff]
      %v7002 = vld [vmem:[%s3179 + $0x121] sm:$0xff]
      %v7003 = vld [vmem:[%s3179 + $0x129] sm:$0xff]
      %v7004 = vld [vmem:[%s3179 + $0x139] sm:$0xff]
      %v7005 = vld [vmem:[%s3179 + $0x141] sm:$0xff]
      %v7006 = vld [vmem:[%s3179 + $0x151] sm:$0xff]
      %v7007 = vld [vmem:[%s3179 + $0x159] sm:$0xff]
      %v7008 = vld [vmem:[%s3179 + $0x169] sm:$0xff]
      %v7009 = vld [vmem:[%s3179 + $0x171] sm:$0xff]
      %s7010 = scalar_lea.vmem %s4, 112
      %v7011 = vld [vmem:[%s7010] sm:$0xff]
      %v7012 = vld [vmem:[%s7010 + $0x8] sm:$0xff]
      %v7014 = vsel %vm481, %v6978, 0
      %v7017 = vsel %vm481, %v6979, 0
      %v7020 = vsel %vm481, %v6980, 0
      %v7023 = vsel %vm481, %v6981, 0
      %v7026 = vsel %vm481, %v6982, 0
      %v7029 = vsel %vm481, %v6983, 0
      %v7032 = vsel %vm481, %v6984, 0
      %v7035 = vsel %vm481, %v6985, 0
      %v7038 = vsel %vm481, %v6986, 0
      %v7041 = vsel %vm481, %v6987, 0
      %v7044 = vsel %vm481, %v6988, 0
      %v7047 = vsel %vm481, %v6989, 0
      %v7050 = vsel %vm481, %v6990, 0
      %v7053 = vsel %vm481, %v6991, 0
      %v7056 = vsel %vm481, %v6992, 0
      %v7059 = vsel %vm481, %v6993, 0
      %v7062 = vsel %vm481, %v6994, 0
      %v7065 = vsel %vm481, %v6995, 0
      %v7068 = vsel %vm481, %v6996, 0
      %v7071 = vsel %vm481, %v6997, 0
      %v7074 = vsel %vm481, %v6998, 0
      %v7077 = vsel %vm481, %v6999, 0
      %v7080 = vsel %vm481, %v7000, 0
      %v7083 = vsel %vm481, %v7001, 0
      %v7086 = vsel %vm481, %v7002, 0
      %v7089 = vsel %vm481, %v7003, 0
      %v7092 = vsel %vm481, %v7004, 0
      %v7095 = vsel %vm481, %v7005, 0
      %v7098 = vsel %vm481, %v7006, 0
      %v7101 = vsel %vm481, %v7007, 0
      %v7104 = vsel %vm481, %v7008, 0
      %v7107 = vsel %vm481, %v7009, 0
      %7109 = vmatpush.msra.mxu0 0.0
      %7110 = vmatpush.msra.mxu0 0.0
      %7111 = vmatpush.msra.mxu0 0.0
      %7112 = vmatpush.msra.mxu0 0.0
      %7113 = vmatpush.msra.mxu0 0.0
      %7114 = vmatpush.msra.mxu0 0.0
      %7115 = vmatpush.msra.mxu0 0.0
      %7116 = vmatpush.msra.mxu0 0.0
      %7117 = vmatpush.msra.mxu0 0.0
      %7118 = vmatpush.msra.mxu0 0.0
      %7119 = vmatpush.msra.mxu0 0.0
      %7120 = vmatpush.msra.mxu0 0.0
      %7121 = vmatpush.msra.mxu0 0.0
      %7122 = vmatpush.msra.mxu0 0.0
      %7123 = vmatpush.msra.mxu0 %v7012
      %7124 = vmatpush.msra.mxu0 %v7011
      %7125 = vmatmul.f32.gmra.mxu0 %v7014
      %v7126 = vpop.f32.mrf.mxu0
      %v7127 = vadd.f32 0.0, %v7126
      %7128 = vmatmul.f32.gmra.mxu0 %v7017
      %v7129 = vpop.f32.mrf.mxu0
      %v7130 = vadd.f32 0.0, %v7129
      %7131 = vmatmul.f32.gmra.mxu0 %v7020
      %v7132 = vpop.f32.mrf.mxu0
      %v7133 = vadd.f32 0.0, %v7132
      %7134 = vmatmul.f32.gmra.mxu0 %v7023
      %v7135 = vpop.f32.mrf.mxu0
      %v7136 = vadd.f32 0.0, %v7135
      %7137 = vmatmul.f32.gmra.mxu0 %v7026
      %v7138 = vpop.f32.mrf.mxu0
      %v7139 = vadd.f32 0.0, %v7138
      %7140 = vmatmul.f32.gmra.mxu0 %v7029
      %v7141 = vpop.f32.mrf.mxu0
      %v7142 = vadd.f32 0.0, %v7141
      %7143 = vmatmul.f32.gmra.mxu0 %v7032
      %v7144 = vpop.f32.mrf.mxu0
      %v7145 = vadd.f32 0.0, %v7144
      %7146 = vmatmul.f32.gmra.mxu0 %v7035
      %v7147 = vpop.f32.mrf.mxu0
      %v7148 = vadd.f32 0.0, %v7147
      %7149 = vmatmul.f32.gmra.mxu0 %v7038
      %v7150 = vpop.f32.mrf.mxu0
      %v7151 = vadd.f32 0.0, %v7150
      %7152 = vmatmul.f32.gmra.mxu0 %v7041
      %v7153 = vpop.f32.mrf.mxu0
      %v7154 = vadd.f32 0.0, %v7153
      %7155 = vmatmul.f32.gmra.mxu0 %v7044
      %v7156 = vpop.f32.mrf.mxu0
      %v7157 = vadd.f32 0.0, %v7156
      %7158 = vmatmul.f32.gmra.mxu0 %v7047
      %v7159 = vpop.f32.mrf.mxu0
      %v7160 = vadd.f32 0.0, %v7159
      %7161 = vmatmul.f32.gmra.mxu0 %v7050
      %v7162 = vpop.f32.mrf.mxu0
      %v7163 = vadd.f32 0.0, %v7162
      %7164 = vmatmul.f32.gmra.mxu0 %v7053
      %v7165 = vpop.f32.mrf.mxu0
      %v7166 = vadd.f32 0.0, %v7165
      %7167 = vmatmul.f32.gmra.mxu0 %v7056
      %v7168 = vpop.f32.mrf.mxu0
      %v7169 = vadd.f32 0.0, %v7168
      %7170 = vmatmul.f32.gmra.mxu0 %v7059
      %v7171 = vpop.f32.mrf.mxu0
      %v7172 = vadd.f32 0.0, %v7171
      %7173 = vmatmul.f32.gmra.mxu0 %v7062
      %v7174 = vpop.f32.mrf.mxu0
      %v7175 = vadd.f32 0.0, %v7174
      %7176 = vmatmul.f32.gmra.mxu0 %v7065
      %v7177 = vpop.f32.mrf.mxu0
      %v7178 = vadd.f32 0.0, %v7177
      %7179 = vmatmul.f32.gmra.mxu0 %v7068
      %v7180 = vpop.f32.mrf.mxu0
      %v7181 = vadd.f32 0.0, %v7180
      %7182 = vmatmul.f32.gmra.mxu0 %v7071
      %v7183 = vpop.f32.mrf.mxu0
      %v7184 = vadd.f32 0.0, %v7183
      %7185 = vmatmul.f32.gmra.mxu0 %v7074
      %v7186 = vpop.f32.mrf.mxu0
      %v7187 = vadd.f32 0.0, %v7186
      %7188 = vmatmul.f32.gmra.mxu0 %v7077
      %v7189 = vpop.f32.mrf.mxu0
      %v7190 = vadd.f32 0.0, %v7189
      %7191 = vmatmul.f32.gmra.mxu0 %v7080
      %v7192 = vpop.f32.mrf.mxu0
      %v7193 = vadd.f32 0.0, %v7192
      %7194 = vmatmul.f32.gmra.mxu0 %v7083
      %v7195 = vpop.f32.mrf.mxu0
      %v7196 = vadd.f32 0.0, %v7195
      %7197 = vmatmul.f32.gmra.mxu0 %v7086
      %v7198 = vpop.f32.mrf.mxu0
      %v7199 = vadd.f32 0.0, %v7198
      %7200 = vmatmul.f32.gmra.mxu0 %v7089
      %v7201 = vpop.f32.mrf.mxu0
      %v7202 = vadd.f32 0.0, %v7201
      %7203 = vmatmul.f32.gmra.mxu0 %v7092
      %v7204 = vpop.f32.mrf.mxu0
      %v7205 = vadd.f32 0.0, %v7204
      %7206 = vmatmul.f32.gmra.mxu0 %v7095
      %v7207 = vpop.f32.mrf.mxu0
      %v7208 = vadd.f32 0.0, %v7207
      %7209 = vmatmul.f32.gmra.mxu0 %v7098
      %v7210 = vpop.f32.mrf.mxu0
      %v7211 = vadd.f32 0.0, %v7210
      %7212 = vmatmul.f32.gmra.mxu0 %v7101
      %v7213 = vpop.f32.mrf.mxu0
      %v7214 = vadd.f32 0.0, %v7213
      %7215 = vmatmul.f32.gmra.mxu0 %v7104
      %v7216 = vpop.f32.mrf.mxu0
      %v7217 = vadd.f32 0.0, %v7216
      %7218 = vmatmul.f32.gmra.mxu0 %v7107
      %v7219 = vpop.f32.mrf.mxu0
      %v7220 = vadd.f32 0.0, %v7219
      %7221 = vdwg.mxu0
      %v7222 = vadd.f32 %v6946, %v7127
      %v7223 = vadd.f32 %v6947, %v7130
      %v7224 = vadd.f32 %v6948, %v7133
      %v7225 = vadd.f32 %v6949, %v7136
      %v7226 = vadd.f32 %v6950, %v7139
      %v7227 = vadd.f32 %v6951, %v7142
      %v7228 = vadd.f32 %v6952, %v7145
      %v7229 = vadd.f32 %v6953, %v7148
      %v7230 = vadd.f32 %v6954, %v7151
      %v7231 = vadd.f32 %v6955, %v7154
      %v7232 = vadd.f32 %v6956, %v7157
      %v7233 = vadd.f32 %v6957, %v7160
      %v7234 = vadd.f32 %v6958, %v7163
      %v7235 = vadd.f32 %v6959, %v7166
      %v7236 = vadd.f32 %v6960, %v7169
      %v7237 = vadd.f32 %v6961, %v7172
      %v7238 = vadd.f32 %v6962, %v7175
      %v7239 = vadd.f32 %v6963, %v7178
      %v7240 = vadd.f32 %v6964, %v7181
      %v7241 = vadd.f32 %v6965, %v7184
      %v7242 = vadd.f32 %v6966, %v7187
      %v7243 = vadd.f32 %v6967, %v7190
      %v7244 = vadd.f32 %v6968, %v7193
      %v7245 = vadd.f32 %v6969, %v7196
      %v7246 = vadd.f32 %v6970, %v7199
      %v7247 = vadd.f32 %v6971, %v7202
      %v7248 = vadd.f32 %v6972, %v7205
      %v7249 = vadd.f32 %v6973, %v7208
      %v7250 = vadd.f32 %v6974, %v7211
      %v7251 = vadd.f32 %v6975, %v7214
      %v7252 = vadd.f32 %v6976, %v7217
      %v7253 = vadd.f32 %v6977, %v7220
      %v7254 = vld [vmem:[%s3179 + $0x2] sm:$0xff]
      %v7255 = vld [vmem:[%s3179 + $0xa] sm:$0xff]
      %v7256 = vld [vmem:[%s3179 + $0x1a] sm:$0xff]
      %v7257 = vld [vmem:[%s3179 + $0x22] sm:$0xff]
      %v7258 = vld [vmem:[%s3179 + $0x32] sm:$0xff]
      %v7259 = vld [vmem:[%s3179 + $0x3a] sm:$0xff]
      %v7260 = vld [vmem:[%s3179 + $0x4a] sm:$0xff]
      %v7261 = vld [vmem:[%s3179 + $0x52] sm:$0xff]
      %v7262 = vld [vmem:[%s3179 + $0x62] sm:$0xff]
      %v7263 = vld [vmem:[%s3179 + $0x6a] sm:$0xff]
      %v7264 = vld [vmem:[%s3179 + $0x7a] sm:$0xff]
      %v7265 = vld [vmem:[%s3179 + $0x82] sm:$0xff]
      %v7266 = vld [vmem:[%s3179 + $0x92] sm:$0xff]
      %v7267 = vld [vmem:[%s3179 + $0x9a] sm:$0xff]
      %v7268 = vld [vmem:[%s3179 + $0xaa] sm:$0xff]
      %v7269 = vld [vmem:[%s3179 + $0xb2] sm:$0xff]
      %v7270 = vld [vmem:[%s3179 + $0xc2] sm:$0xff]
      %v7271 = vld [vmem:[%s3179 + $0xca] sm:$0xff]
      %v7272 = vld [vmem:[%s3179 + $0xda] sm:$0xff]
      %v7273 = vld [vmem:[%s3179 + $0xe2] sm:$0xff]
      %v7274 = vld [vmem:[%s3179 + $0xf2] sm:$0xff]
      %v7275 = vld [vmem:[%s3179 + $0xfa] sm:$0xff]
      %v7276 = vld [vmem:[%s3179 + $0x10a] sm:$0xff]
      %v7277 = vld [vmem:[%s3179 + $0x112] sm:$0xff]
      %v7278 = vld [vmem:[%s3179 + $0x122] sm:$0xff]
      %v7279 = vld [vmem:[%s3179 + $0x12a] sm:$0xff]
      %v7280 = vld [vmem:[%s3179 + $0x13a] sm:$0xff]
      %v7281 = vld [vmem:[%s3179 + $0x142] sm:$0xff]
      %v7282 = vld [vmem:[%s3179 + $0x152] sm:$0xff]
      %v7283 = vld [vmem:[%s3179 + $0x15a] sm:$0xff]
      %v7284 = vld [vmem:[%s3179 + $0x16a] sm:$0xff]
      %v7285 = vld [vmem:[%s3179 + $0x172] sm:$0xff]
      %s7286 = scalar_lea.vmem %s4, 128
      %v7287 = vld [vmem:[%s7286] sm:$0xff]
      %v7288 = vld [vmem:[%s7286 + $0x8] sm:$0xff]
      %v7290 = vsel %vm481, %v7254, 0
      %v7293 = vsel %vm481, %v7255, 0
      %v7296 = vsel %vm481, %v7256, 0
      %v7299 = vsel %vm481, %v7257, 0
      %v7302 = vsel %vm481, %v7258, 0
      %v7305 = vsel %vm481, %v7259, 0
      %v7308 = vsel %vm481, %v7260, 0
      %v7311 = vsel %vm481, %v7261, 0
      %v7314 = vsel %vm481, %v7262, 0
      %v7317 = vsel %vm481, %v7263, 0
      %v7320 = vsel %vm481, %v7264, 0
      %v7323 = vsel %vm481, %v7265, 0
      %v7326 = vsel %vm481, %v7266, 0
      %v7329 = vsel %vm481, %v7267, 0
      %v7332 = vsel %vm481, %v7268, 0
      %v7335 = vsel %vm481, %v7269, 0
      %v7338 = vsel %vm481, %v7270, 0
      %v7341 = vsel %vm481, %v7271, 0
      %v7344 = vsel %vm481, %v7272, 0
      %v7347 = vsel %vm481, %v7273, 0
      %v7350 = vsel %vm481, %v7274, 0
      %v7353 = vsel %vm481, %v7275, 0
      %v7356 = vsel %vm481, %v7276, 0
      %v7359 = vsel %vm481, %v7277, 0
      %v7362 = vsel %vm481, %v7278, 0
      %v7365 = vsel %vm481, %v7279, 0
      %v7368 = vsel %vm481, %v7280, 0
      %v7371 = vsel %vm481, %v7281, 0
      %v7374 = vsel %vm481, %v7282, 0
      %v7377 = vsel %vm481, %v7283, 0
      %v7380 = vsel %vm481, %v7284, 0
      %v7383 = vsel %vm481, %v7285, 0
      %7385 = vmatpush.msra.mxu0 0.0
      %7386 = vmatpush.msra.mxu0 0.0
      %7387 = vmatpush.msra.mxu0 0.0
      %7388 = vmatpush.msra.mxu0 0.0
      %7389 = vmatpush.msra.mxu0 0.0
      %7390 = vmatpush.msra.mxu0 0.0
      %7391 = vmatpush.msra.mxu0 0.0
      %7392 = vmatpush.msra.mxu0 0.0
      %7393 = vmatpush.msra.mxu0 0.0
      %7394 = vmatpush.msra.mxu0 0.0
      %7395 = vmatpush.msra.mxu0 0.0
      %7396 = vmatpush.msra.mxu0 0.0
      %7397 = vmatpush.msra.mxu0 0.0
      %7398 = vmatpush.msra.mxu0 0.0
      %7399 = vmatpush.msra.mxu0 %v7288
      %7400 = vmatpush.msra.mxu0 %v7287
      %7401 = vmatmul.f32.gmra.mxu0 %v7290
      %v7402 = vpop.f32.mrf.mxu0
      %v7403 = vadd.f32 0.0, %v7402
      %7404 = vmatmul.f32.gmra.mxu0 %v7293
      %v7405 = vpop.f32.mrf.mxu0
      %v7406 = vadd.f32 0.0, %v7405
      %7407 = vmatmul.f32.gmra.mxu0 %v7296
      %v7408 = vpop.f32.mrf.mxu0
      %v7409 = vadd.f32 0.0, %v7408
      %7410 = vmatmul.f32.gmra.mxu0 %v7299
      %v7411 = vpop.f32.mrf.mxu0
      %v7412 = vadd.f32 0.0, %v7411
      %7413 = vmatmul.f32.gmra.mxu0 %v7302
      %v7414 = vpop.f32.mrf.mxu0
      %v7415 = vadd.f32 0.0, %v7414
      %7416 = vmatmul.f32.gmra.mxu0 %v7305
      %v7417 = vpop.f32.mrf.mxu0
      %v7418 = vadd.f32 0.0, %v7417
      %7419 = vmatmul.f32.gmra.mxu0 %v7308
      %v7420 = vpop.f32.mrf.mxu0
      %v7421 = vadd.f32 0.0, %v7420
      %7422 = vmatmul.f32.gmra.mxu0 %v7311
      %v7423 = vpop.f32.mrf.mxu0
      %v7424 = vadd.f32 0.0, %v7423
      %7425 = vmatmul.f32.gmra.mxu0 %v7314
      %v7426 = vpop.f32.mrf.mxu0
      %v7427 = vadd.f32 0.0, %v7426
      %7428 = vmatmul.f32.gmra.mxu0 %v7317
      %v7429 = vpop.f32.mrf.mxu0
      %v7430 = vadd.f32 0.0, %v7429
      %7431 = vmatmul.f32.gmra.mxu0 %v7320
      %v7432 = vpop.f32.mrf.mxu0
      %v7433 = vadd.f32 0.0, %v7432
      %7434 = vmatmul.f32.gmra.mxu0 %v7323
      %v7435 = vpop.f32.mrf.mxu0
      %v7436 = vadd.f32 0.0, %v7435
      %7437 = vmatmul.f32.gmra.mxu0 %v7326
      %v7438 = vpop.f32.mrf.mxu0
      %v7439 = vadd.f32 0.0, %v7438
      %7440 = vmatmul.f32.gmra.mxu0 %v7329
      %v7441 = vpop.f32.mrf.mxu0
      %v7442 = vadd.f32 0.0, %v7441
      %7443 = vmatmul.f32.gmra.mxu0 %v7332
      %v7444 = vpop.f32.mrf.mxu0
      %v7445 = vadd.f32 0.0, %v7444
      %7446 = vmatmul.f32.gmra.mxu0 %v7335
      %v7447 = vpop.f32.mrf.mxu0
      %v7448 = vadd.f32 0.0, %v7447
      %7449 = vmatmul.f32.gmra.mxu0 %v7338
      %v7450 = vpop.f32.mrf.mxu0
      %v7451 = vadd.f32 0.0, %v7450
      %7452 = vmatmul.f32.gmra.mxu0 %v7341
      %v7453 = vpop.f32.mrf.mxu0
      %v7454 = vadd.f32 0.0, %v7453
      %7455 = vmatmul.f32.gmra.mxu0 %v7344
      %v7456 = vpop.f32.mrf.mxu0
      %v7457 = vadd.f32 0.0, %v7456
      %7458 = vmatmul.f32.gmra.mxu0 %v7347
      %v7459 = vpop.f32.mrf.mxu0
      %v7460 = vadd.f32 0.0, %v7459
      %7461 = vmatmul.f32.gmra.mxu0 %v7350
      %v7462 = vpop.f32.mrf.mxu0
      %v7463 = vadd.f32 0.0, %v7462
      %7464 = vmatmul.f32.gmra.mxu0 %v7353
      %v7465 = vpop.f32.mrf.mxu0
      %v7466 = vadd.f32 0.0, %v7465
      %7467 = vmatmul.f32.gmra.mxu0 %v7356
      %v7468 = vpop.f32.mrf.mxu0
      %v7469 = vadd.f32 0.0, %v7468
      %7470 = vmatmul.f32.gmra.mxu0 %v7359
      %v7471 = vpop.f32.mrf.mxu0
      %v7472 = vadd.f32 0.0, %v7471
      %7473 = vmatmul.f32.gmra.mxu0 %v7362
      %v7474 = vpop.f32.mrf.mxu0
      %v7475 = vadd.f32 0.0, %v7474
      %7476 = vmatmul.f32.gmra.mxu0 %v7365
      %v7477 = vpop.f32.mrf.mxu0
      %v7478 = vadd.f32 0.0, %v7477
      %7479 = vmatmul.f32.gmra.mxu0 %v7368
      %v7480 = vpop.f32.mrf.mxu0
      %v7481 = vadd.f32 0.0, %v7480
      %7482 = vmatmul.f32.gmra.mxu0 %v7371
      %v7483 = vpop.f32.mrf.mxu0
      %v7484 = vadd.f32 0.0, %v7483
      %7485 = vmatmul.f32.gmra.mxu0 %v7374
      %v7486 = vpop.f32.mrf.mxu0
      %v7487 = vadd.f32 0.0, %v7486
      %7488 = vmatmul.f32.gmra.mxu0 %v7377
      %v7489 = vpop.f32.mrf.mxu0
      %v7490 = vadd.f32 0.0, %v7489
      %7491 = vmatmul.f32.gmra.mxu0 %v7380
      %v7492 = vpop.f32.mrf.mxu0
      %v7493 = vadd.f32 0.0, %v7492
      %7494 = vmatmul.f32.gmra.mxu0 %v7383
      %v7495 = vpop.f32.mrf.mxu0
      %v7496 = vadd.f32 0.0, %v7495
      %7497 = vdwg.mxu0
      %v7498 = vadd.f32 %v7222, %v7403
      %v7499 = vadd.f32 %v7223, %v7406
      %v7500 = vadd.f32 %v7224, %v7409
      %v7501 = vadd.f32 %v7225, %v7412
      %v7502 = vadd.f32 %v7226, %v7415
      %v7503 = vadd.f32 %v7227, %v7418
      %v7504 = vadd.f32 %v7228, %v7421
      %v7505 = vadd.f32 %v7229, %v7424
      %v7506 = vadd.f32 %v7230, %v7427
      %v7507 = vadd.f32 %v7231, %v7430
      %v7508 = vadd.f32 %v7232, %v7433
      %v7509 = vadd.f32 %v7233, %v7436
      %v7510 = vadd.f32 %v7234, %v7439
      %v7511 = vadd.f32 %v7235, %v7442
      %v7512 = vadd.f32 %v7236, %v7445
      %v7513 = vadd.f32 %v7237, %v7448
      %v7514 = vadd.f32 %v7238, %v7451
      %v7515 = vadd.f32 %v7239, %v7454
      %v7516 = vadd.f32 %v7240, %v7457
      %v7517 = vadd.f32 %v7241, %v7460
      %v7518 = vadd.f32 %v7242, %v7463
      %v7519 = vadd.f32 %v7243, %v7466
      %v7520 = vadd.f32 %v7244, %v7469
      %v7521 = vadd.f32 %v7245, %v7472
      %v7522 = vadd.f32 %v7246, %v7475
      %v7523 = vadd.f32 %v7247, %v7478
      %v7524 = vadd.f32 %v7248, %v7481
      %v7525 = vadd.f32 %v7249, %v7484
      %v7526 = vadd.f32 %v7250, %v7487
      %v7527 = vadd.f32 %v7251, %v7490
      %v7528 = vadd.f32 %v7252, %v7493
      %v7529 = vadd.f32 %v7253, %v7496
      %v7530 = vld [vmem:[%s6] sm:$0x1]
      %v7532 = vperm.slane %v7530, 0
      %v7534 = vadd.f32 %v7498, %v7532
      %v7535 = vadd.f32 %v7499, %v7532
      %v7536 = vadd.f32 %v7500, %v7532
      %v7537 = vadd.f32 %v7501, %v7532
      %v7538 = vadd.f32 %v7502, %v7532
      %v7539 = vadd.f32 %v7503, %v7532
      %v7540 = vadd.f32 %v7504, %v7532
      %v7541 = vadd.f32 %v7505, %v7532
      %v7542 = vadd.f32 %v7506, %v7532
      %v7543 = vadd.f32 %v7507, %v7532
      %v7544 = vadd.f32 %v7508, %v7532
      %v7545 = vadd.f32 %v7509, %v7532
      %v7546 = vadd.f32 %v7510, %v7532
      %v7547 = vadd.f32 %v7511, %v7532
      %v7548 = vadd.f32 %v7512, %v7532
      %v7549 = vadd.f32 %v7513, %v7532
      %v7550 = vadd.f32 %v7514, %v7532
      %v7551 = vadd.f32 %v7515, %v7532
      %v7552 = vadd.f32 %v7516, %v7532
      %v7553 = vadd.f32 %v7517, %v7532
      %v7554 = vadd.f32 %v7518, %v7532
      %v7555 = vadd.f32 %v7519, %v7532
      %v7556 = vadd.f32 %v7520, %v7532
      %v7557 = vadd.f32 %v7521, %v7532
      %v7558 = vadd.f32 %v7522, %v7532
      %v7559 = vadd.f32 %v7523, %v7532
      %v7560 = vadd.f32 %v7524, %v7532
      %v7561 = vadd.f32 %v7525, %v7532
      %v7562 = vadd.f32 %v7526, %v7532
      %v7563 = vadd.f32 %v7527, %v7532
      %v7564 = vadd.f32 %v7528, %v7532
      %v7565 = vadd.f32 %v7529, %v7532
      %v7566 = vld [vmem:[%s465] sm:$0xff]
      %v7567 = vld [vmem:[%s465 + $0x8] sm:$0xff]
      %v7568 = vld [vmem:[%s465 + $0x10] sm:$0xff]
      %v7569 = vld [vmem:[%s465 + $0x18] sm:$0xff]
      %v7570 = vld [vmem:[%s465 + $0x20] sm:$0xff]
      %v7571 = vld [vmem:[%s465 + $0x28] sm:$0xff]
      %v7572 = vld [vmem:[%s465 + $0x30] sm:$0xff]
      %v7573 = vld [vmem:[%s465 + $0x38] sm:$0xff]
      %v7574 = vld [vmem:[%s465 + $0x40] sm:$0xff]
      %v7575 = vld [vmem:[%s465 + $0x48] sm:$0xff]
      %v7576 = vld [vmem:[%s465 + $0x50] sm:$0xff]
      %v7577 = vld [vmem:[%s465 + $0x58] sm:$0xff]
      %v7578 = vld [vmem:[%s465 + $0x60] sm:$0xff]
      %v7579 = vld [vmem:[%s465 + $0x68] sm:$0xff]
      %v7580 = vld [vmem:[%s465 + $0x70] sm:$0xff]
      %v7581 = vld [vmem:[%s465 + $0x78] sm:$0xff]
      %v7582 = vld [vmem:[%s465 + $0x80] sm:$0xff]
      %v7583 = vld [vmem:[%s465 + $0x88] sm:$0xff]
      %v7584 = vld [vmem:[%s465 + $0x90] sm:$0xff]
      %v7585 = vld [vmem:[%s465 + $0x98] sm:$0xff]
      %v7586 = vld [vmem:[%s465 + $0xa0] sm:$0xff]
      %v7587 = vld [vmem:[%s465 + $0xa8] sm:$0xff]
      %v7588 = vld [vmem:[%s465 + $0xb0] sm:$0xff]
      %v7589 = vld [vmem:[%s465 + $0xb8] sm:$0xff]
      %v7590 = vld [vmem:[%s465 + $0xc0] sm:$0xff]
      %v7591 = vld [vmem:[%s465 + $0xc8] sm:$0xff]
      %v7592 = vld [vmem:[%s465 + $0xd0] sm:$0xff]
      %v7593 = vld [vmem:[%s465 + $0xd8] sm:$0xff]
      %v7594 = vld [vmem:[%s465 + $0xe0] sm:$0xff]
      %v7595 = vld [vmem:[%s465 + $0xe8] sm:$0xff]
      %v7596 = vld [vmem:[%s465 + $0xf0] sm:$0xff]
      %v7597 = vld [vmem:[%s465 + $0xf8] sm:$0xff]
      %7630 = vrot.lane.b32.xlu0 %v4009, 8
      %v7631 = vpop.permute.xlu0 %7630
      %7632 = vrot.lane.b32.xlu0 %v4010, 8
      %v7633 = vpop.permute.xlu0 %7632
      %7634 = vrot.lane.b32.xlu0 %v4011, 8
      %v7635 = vpop.permute.xlu0 %7634
      %7636 = vrot.lane.b32.xlu0 %v4012, 8
      %v7637 = vpop.permute.xlu0 %7636
      %7638 = vrot.lane.b32.xlu0 %v4013, 8
      %v7639 = vpop.permute.xlu0 %7638
      %7640 = vrot.lane.b32.xlu0 %v4014, 8
      %v7641 = vpop.permute.xlu0 %7640
      %7642 = vrot.lane.b32.xlu0 %v4015, 8
      %v7643 = vpop.permute.xlu0 %7642
      %7644 = vrot.lane.b32.xlu0 %v4016, 8
      %v7645 = vpop.permute.xlu0 %7644
      %7646 = vrot.lane.b32.xlu0 %v4017, 8
      %v7647 = vpop.permute.xlu0 %7646
      %7648 = vrot.lane.b32.xlu0 %v4018, 8
      %v7649 = vpop.permute.xlu0 %7648
      %7650 = vrot.lane.b32.xlu0 %v4019, 8
      %v7651 = vpop.permute.xlu0 %7650
      %7652 = vrot.lane.b32.xlu0 %v4020, 8
      %v7653 = vpop.permute.xlu0 %7652
      %7654 = vrot.lane.b32.xlu0 %v4021, 8
      %v7655 = vpop.permute.xlu0 %7654
      %7656 = vrot.lane.b32.xlu0 %v4022, 8
      %v7657 = vpop.permute.xlu0 %7656
      %7658 = vrot.lane.b32.xlu0 %v4023, 8
      %v7659 = vpop.permute.xlu0 %7658
      %7660 = vrot.lane.b32.xlu0 %v4024, 8
      %v7661 = vpop.permute.xlu0 %7660
      %7662 = vrot.lane.b32.xlu0 %v4025, 8
      %v7663 = vpop.permute.xlu0 %7662
      %7664 = vrot.lane.b32.xlu0 %v4026, 8
      %v7665 = vpop.permute.xlu0 %7664
      %7666 = vrot.lane.b32.xlu0 %v4027, 8
      %v7667 = vpop.permute.xlu0 %7666
      %7668 = vrot.lane.b32.xlu0 %v4028, 8
      %v7669 = vpop.permute.xlu0 %7668
      %7670 = vrot.lane.b32.xlu0 %v4029, 8
      %v7671 = vpop.permute.xlu0 %7670
      %7672 = vrot.lane.b32.xlu0 %v4030, 8
      %v7673 = vpop.permute.xlu0 %7672
      %7674 = vrot.lane.b32.xlu0 %v4031, 8
      %v7675 = vpop.permute.xlu0 %7674
      %7676 = vrot.lane.b32.xlu0 %v4032, 8
      %v7677 = vpop.permute.xlu0 %7676
      %7678 = vrot.lane.b32.xlu0 %v4033, 8
      %v7679 = vpop.permute.xlu0 %7678
      %7680 = vrot.lane.b32.xlu0 %v4034, 8
      %v7681 = vpop.permute.xlu0 %7680
      %7682 = vrot.lane.b32.xlu0 %v4035, 8
      %v7683 = vpop.permute.xlu0 %7682
      %7684 = vrot.lane.b32.xlu0 %v4036, 8
      %v7685 = vpop.permute.xlu0 %7684
      %7686 = vrot.lane.b32.xlu0 %v4037, 8
      %v7687 = vpop.permute.xlu0 %7686
      %7688 = vrot.lane.b32.xlu0 %v4038, 8
      %v7689 = vpop.permute.xlu0 %7688
      %7690 = vrot.lane.b32.xlu0 %v4039, 8
      %v7691 = vpop.permute.xlu0 %7690
      %7692 = vrot.lane.b32.xlu0 %v4040, 8
      %v7693 = vpop.permute.xlu0 %7692
      %7758 = vrot.lane.b32.xlu0 %v7534, 16
      %v7759 = vpop.permute.xlu0 %7758
      %7760 = vrot.lane.b32.xlu0 %v7535, 16
      %v7761 = vpop.permute.xlu0 %7760
      %7762 = vrot.lane.b32.xlu0 %v7536, 16
      %v7763 = vpop.permute.xlu0 %7762
      %7764 = vrot.lane.b32.xlu0 %v7537, 16
      %v7765 = vpop.permute.xlu0 %7764
      %7766 = vrot.lane.b32.xlu0 %v7538, 16
      %v7767 = vpop.permute.xlu0 %7766
      %7768 = vrot.lane.b32.xlu0 %v7539, 16
      %v7769 = vpop.permute.xlu0 %7768
      %7770 = vrot.lane.b32.xlu0 %v7540, 16
      %v7771 = vpop.permute.xlu0 %7770
      %7772 = vrot.lane.b32.xlu0 %v7541, 16
      %v7773 = vpop.permute.xlu0 %7772
      %7774 = vrot.lane.b32.xlu0 %v7542, 16
      %v7775 = vpop.permute.xlu0 %7774
      %7776 = vrot.lane.b32.xlu0 %v7543, 16
      %v7777 = vpop.permute.xlu0 %7776
      %7778 = vrot.lane.b32.xlu0 %v7544, 16
      %v7779 = vpop.permute.xlu0 %7778
      %7780 = vrot.lane.b32.xlu0 %v7545, 16
      %v7781 = vpop.permute.xlu0 %7780
      %7782 = vrot.lane.b32.xlu0 %v7546, 16
      %v7783 = vpop.permute.xlu0 %7782
      %7784 = vrot.lane.b32.xlu0 %v7547, 16
      %v7785 = vpop.permute.xlu0 %7784
      %7786 = vrot.lane.b32.xlu0 %v7548, 16
      %v7787 = vpop.permute.xlu0 %7786
      %7788 = vrot.lane.b32.xlu0 %v7549, 16
      %v7789 = vpop.permute.xlu0 %7788
      %7790 = vrot.lane.b32.xlu0 %v7550, 16
      %v7791 = vpop.permute.xlu0 %7790
      %7792 = vrot.lane.b32.xlu0 %v7551, 16
      %v7793 = vpop.permute.xlu0 %7792
      %7794 = vrot.lane.b32.xlu0 %v7552, 16
      %v7795 = vpop.permute.xlu0 %7794
      %7796 = vrot.lane.b32.xlu0 %v7553, 16
      %v7797 = vpop.permute.xlu0 %7796
      %7798 = vrot.lane.b32.xlu0 %v7554, 16
      %v7799 = vpop.permute.xlu0 %7798
      %7800 = vrot.lane.b32.xlu0 %v7555, 16
      %v7801 = vpop.permute.xlu0 %7800
      %7802 = vrot.lane.b32.xlu0 %v7556, 16
      %v7803 = vpop.permute.xlu0 %7802
      %7804 = vrot.lane.b32.xlu0 %v7557, 16
      %v7805 = vpop.permute.xlu0 %7804
      %7806 = vrot.lane.b32.xlu0 %v7558, 16
      %v7807 = vpop.permute.xlu0 %7806
      %7808 = vrot.lane.b32.xlu0 %v7559, 16
      %v7809 = vpop.permute.xlu0 %7808
      %7810 = vrot.lane.b32.xlu0 %v7560, 16
      %v7811 = vpop.permute.xlu0 %7810
      %7812 = vrot.lane.b32.xlu0 %v7561, 16
      %v7813 = vpop.permute.xlu0 %7812
      %7814 = vrot.lane.b32.xlu0 %v7562, 16
      %v7815 = vpop.permute.xlu0 %7814
      %7816 = vrot.lane.b32.xlu0 %v7563, 16
      %v7817 = vpop.permute.xlu0 %7816
      %7818 = vrot.lane.b32.xlu0 %v7564, 16
      %v7819 = vpop.permute.xlu0 %7818
      %7820 = vrot.lane.b32.xlu0 %v7565, 16
      %v7821 = vpop.permute.xlu0 %7820
      %v7854 = vsel %vm557, %v7566, %v7631
      %v7855 = vsel %vm557, %v7567, %v7633
      %v7856 = vsel %vm557, %v7568, %v7635
      %v7857 = vsel %vm557, %v7569, %v7637
      %v7858 = vsel %vm557, %v7570, %v7639
      %v7859 = vsel %vm557, %v7571, %v7641
      %v7860 = vsel %vm557, %v7572, %v7643
      %v7861 = vsel %vm557, %v7573, %v7645
      %v7862 = vsel %vm557, %v7574, %v7647
      %v7863 = vsel %vm557, %v7575, %v7649
      %v7864 = vsel %vm557, %v7576, %v7651
      %v7865 = vsel %vm557, %v7577, %v7653
      %v7866 = vsel %vm557, %v7578, %v7655
      %v7867 = vsel %vm557, %v7579, %v7657
      %v7868 = vsel %vm557, %v7580, %v7659
      %v7869 = vsel %vm557, %v7581, %v7661
      %v7870 = vsel %vm557, %v7582, %v7663
      %v7871 = vsel %vm557, %v7583, %v7665
      %v7872 = vsel %vm557, %v7584, %v7667
      %v7873 = vsel %vm557, %v7585, %v7669
      %v7874 = vsel %vm557, %v7586, %v7671
      %v7875 = vsel %vm557, %v7587, %v7673
      %v7876 = vsel %vm557, %v7588, %v7675
      %v7877 = vsel %vm557, %v7589, %v7677
      %v7878 = vsel %vm557, %v7590, %v7679
      %v7879 = vsel %vm557, %v7591, %v7681
      %v7880 = vsel %vm557, %v7592, %v7683
      %v7881 = vsel %vm557, %v7593, %v7685
      %v7882 = vsel %vm557, %v7594, %v7687
      %v7883 = vsel %vm557, %v7595, %v7689
      %v7884 = vsel %vm557, %v7596, %v7691
      %v7885 = vsel %vm557, %v7597, %v7693
      %v7886 = vsel %vm481, %v7854, %v7759
      %v7887 = vsel %vm481, %v7855, %v7761
      %v7888 = vsel %vm481, %v7856, %v7763
      %v7889 = vsel %vm481, %v7857, %v7765
      %v7890 = vsel %vm481, %v7858, %v7767
      %v7891 = vsel %vm481, %v7859, %v7769
      %v7892 = vsel %vm481, %v7860, %v7771
      %v7893 = vsel %vm481, %v7861, %v7773
      %v7894 = vsel %vm481, %v7862, %v7775
      %v7895 = vsel %vm481, %v7863, %v7777
      %v7896 = vsel %vm481, %v7864, %v7779
      %v7897 = vsel %vm481, %v7865, %v7781
      %v7898 = vsel %vm481, %v7866, %v7783
      %v7899 = vsel %vm481, %v7867, %v7785
      %v7900 = vsel %vm481, %v7868, %v7787
      %v7901 = vsel %vm481, %v7869, %v7789
      %v7902 = vsel %vm481, %v7870, %v7791
      %v7903 = vsel %vm481, %v7871, %v7793
      %v7904 = vsel %vm481, %v7872, %v7795
      %v7905 = vsel %vm481, %v7873, %v7797
      %v7906 = vsel %vm481, %v7874, %v7799
      %v7907 = vsel %vm481, %v7875, %v7801
      %v7908 = vsel %vm481, %v7876, %v7803
      %v7909 = vsel %vm481, %v7877, %v7805
      %v7910 = vsel %vm481, %v7878, %v7807
      %v7911 = vsel %vm481, %v7879, %v7809
      %v7912 = vsel %vm481, %v7880, %v7811
      %v7913 = vsel %vm481, %v7881, %v7813
      %v7914 = vsel %vm481, %v7882, %v7815
      %v7915 = vsel %vm481, %v7883, %v7817
      %v7916 = vsel %vm481, %v7884, %v7819
      %v7917 = vsel %vm481, %v7885, %v7821
      %vm7918 = vcmask 195584
      %7919 = vst.msk [vmem:[%s480] sm:$0xff] %vm7918, %v7886
      %7920 = vst.msk [vmem:[%s480 + $0x8] sm:$0xff] %vm7918, %v7887
      %7921 = vst.msk [vmem:[%s480 + $0x10] sm:$0xff] %vm7918, %v7888
      %7922 = vst.msk [vmem:[%s480 + $0x18] sm:$0xff] %vm7918, %v7889
      %7923 = vst.msk [vmem:[%s480 + $0x20] sm:$0xff] %vm7918, %v7890
      %7924 = vst.msk [vmem:[%s480 + $0x28] sm:$0xff] %vm7918, %v7891
      %7925 = vst.msk [vmem:[%s480 + $0x30] sm:$0xff] %vm7918, %v7892
      %7926 = vst.msk [vmem:[%s480 + $0x38] sm:$0xff] %vm7918, %v7893
      %7927 = vst.msk [vmem:[%s480 + $0x40] sm:$0xff] %vm7918, %v7894
      %7928 = vst.msk [vmem:[%s480 + $0x48] sm:$0xff] %vm7918, %v7895
      %7929 = vst.msk [vmem:[%s480 + $0x50] sm:$0xff] %vm7918, %v7896
      %7930 = vst.msk [vmem:[%s480 + $0x58] sm:$0xff] %vm7918, %v7897
      %7931 = vst.msk [vmem:[%s480 + $0x60] sm:$0xff] %vm7918, %v7898
      %7932 = vst.msk [vmem:[%s480 + $0x68] sm:$0xff] %vm7918, %v7899
      %7933 = vst.msk [vmem:[%s480 + $0x70] sm:$0xff] %vm7918, %v7900
      %7934 = vst.msk [vmem:[%s480 + $0x78] sm:$0xff] %vm7918, %v7901
      %7935 = vst.msk [vmem:[%s480 + $0x80] sm:$0xff] %vm7918, %v7902
      %7936 = vst.msk [vmem:[%s480 + $0x88] sm:$0xff] %vm7918, %v7903
      %7937 = vst.msk [vmem:[%s480 + $0x90] sm:$0xff] %vm7918, %v7904
      %7938 = vst.msk [vmem:[%s480 + $0x98] sm:$0xff] %vm7918, %v7905
      %7939 = vst.msk [vmem:[%s480 + $0xa0] sm:$0xff] %vm7918, %v7906
      %7940 = vst.msk [vmem:[%s480 + $0xa8] sm:$0xff] %vm7918, %v7907
      %7941 = vst.msk [vmem:[%s480 + $0xb0] sm:$0xff] %vm7918, %v7908
      %7942 = vst.msk [vmem:[%s480 + $0xb8] sm:$0xff] %vm7918, %v7909
      %7943 = vst.msk [vmem:[%s480 + $0xc0] sm:$0xff] %vm7918, %v7910
      %7944 = vst.msk [vmem:[%s480 + $0xc8] sm:$0xff] %vm7918, %v7911
      %7945 = vst.msk [vmem:[%s480 + $0xd0] sm:$0xff] %vm7918, %v7912
      %7946 = vst.msk [vmem:[%s480 + $0xd8] sm:$0xff] %vm7918, %v7913
      %7947 = vst.msk [vmem:[%s480 + $0xe0] sm:$0xff] %vm7918, %v7914
      %7948 = vst.msk [vmem:[%s480 + $0xe8] sm:$0xff] %vm7918, %v7915
      %7949 = vst.msk [vmem:[%s480 + $0xf0] sm:$0xff] %vm7918, %v7916
      %7950 = vst.msk [vmem:[%s480 + $0xf8] sm:$0xff] %vm7918, %v7917
      %p7951 = scmp.lt.s32.totalorder %s24, 1
      %s7952 = scalar_select %p7951, %s24, 1
      %s7953 = smul.addr %s7952, 32
      %s7954 = smul.addr %s7953, 8
      %s7955 = scalar_lea.vmem %s13, %s7954
      // Predicated region
      $region73: #{tpu_custom_call.1} parent=71 // pred_check
        %p7956 = pneg %p330
      $region74: #{tpu_custom_call.1} parent=71 // pred_check_branch
        %7958 = sbr.rel (%p7956) target = $region76
      $region75: #{tpu_custom_call.1} parent=71 // pred_region
        _
      $region76: #{tpu_custom_call.1} parent=71 // pred_fallthru
        _
    $region72: #{tpu_custom_call.1} parent=5 // pred_fallthru
      _
    %p7959 = scmp.le.s32.totalorder 2, %s19
    // Predicated region
    $region77: #{tpu_custom_call.1} parent=5 // pred_check
      %p7960 = pneg %p7959
    $region78: #{tpu_custom_call.1} parent=5 // pred_check_branch
      %7962 = sbr.rel (%p7960) target = $region80
    $region79: #{tpu_custom_call.1} parent=5 // pred_region
      %s7963 = ssub.s32 %s19, 2
      // Predicated region
      $region81: #{tpu_custom_call.1} parent=79 // pred_check
        %p7964 = pneg %p336
      $region82: #{tpu_custom_call.1} parent=79 // pred_check_branch
        %7966 = sbr.rel (%p7964) target = $region84
      $region83: #{tpu_custom_call.1} parent=79 // pred_region
        %p7967 = scmp.lt.s32.totalorder %s25, 1
        %s7968 = scalar_select %p7967, %s25, 1
        %s7969 = smul.addr %s7968, 32
        %s7970 = smul.addr %s7969, 8
        %s7971 = scalar_lea.vmem %s13, %s7970
      $region84: #{tpu_custom_call.1} parent=79 // pred_fallthru
        _
    $region80: #{tpu_custom_call.1} parent=5 // pred_fallthru
      _
  $region6: #{tpu_custom_call.1} parent=0 // loop_footer
    %s23 = sadd.s32 1, %s19
  $region7: #{tpu_custom_call.1} parent=0 // loop_footer_branch
    %18 = sbr.rel target = $region3
  $region8: #{tpu_custom_call.1} parent=0 // loop_exit
    _

</llo_original>
